<compile_context>
chip_gen: v5e
topology: v5e:2x2
jax: 0.10.0
libtpu: 0.0.40
codegen_flags: <defaults>
</compile_context>

<pallas_src>
import math

import numpy as np

import jax
import jax.numpy as jnp
from jax.experimental import pallas as pl
from jax.experimental.pallas import tpu as pltpu


# ----------------------------------------------------------------------------
# Fused whole-network Pallas kernel
# ----------------------------------------------------------------------------
def make_kernel(plan, n_weight_arrays, batch):
    """Kernel ref order: img2d, onehot, *weight_arrays, logits_out, loss_out."""

    def kernel(*refs):
        img_ref, oh_ref = refs[0], refs[1]
        wrefs = refs[2:2 + n_weight_arrays]
        logits_ref = refs[2 + n_weight_arrays]
        loss_ref = refs[3 + n_weight_arrays]
        it = iter(wrefs)

        def epilogue(acc, b_ref, residual, relu):
            acc = acc + b_ref[...]
            if residual is not None:
                acc = acc + residual
            if relu:
                acc = jnp.maximum(acc, 0.0)
            return acc

        def conv_s1(act, r_ref, b_ref, op, residual):
            # 3x3 stride-1 conv: row taps via sublane shifts + boundary mask (no
            # MXU shift matmuls), all 3 taps fused into ONE matmul against R_cat.
            M = act.shape[0]
            Himg = op["H"]
            row = jax.lax.broadcasted_iota(jnp.int32, (M, 1), 0) % Himg
            up = jnp.where(row != 0, jnp.roll(act, 1, axis=0), 0.0)        # x[i-1]
            dn = jnp.where(row != Himg - 1, jnp.roll(act, -1, axis=0), 0.0)  # x[i+1]
            xcat = jnp.concatenate(
                [up.astype(jnp.bfloat16), act.astype(jnp.bfloat16),
                 dn.astype(jnp.bfloat16)], axis=-1)                 # [M, 3*W*Cin]
            acc = jnp.dot(xcat, r_ref[...], preferred_element_type=jnp.float32)
            return epilogue(acc, b_ref, residual, op["relu"])

        def conv_strided(act, a_ref, r_ref, b_ref, op, residual):
            # Strided conv (3x3 s=2 or 1x1 s=2): row selection via tiny 0/1 A
            # matmuls, then all taps fused into one K-stacked matmul with R_cat.
            x_bf = act.astype(jnp.bfloat16)
            pieces = []
            for t in range(op["taps"]):
                y = jnp.dot(a_ref[t], x_bf, preferred_element_type=jnp.float32)
                pieces.append(y.astype(jnp.bfloat16))       # exact: A is 0/1 select
            ycat = pieces[0] if len(pieces) == 1 else jnp.concatenate(pieces, -1)
            acc = jnp.dot(ycat, r_ref[...], preferred_element_type=jnp.float32)
            return epilogue(acc, b_ref, residual, op["relu"])

        act = img_ref[...].astype(jnp.float32)          # [N*H, W*Cin_pad]
        identity = None
        for op in plan:
            kind = op["op"]
            if kind == "save":                          # identity shortcut
                identity = act
            elif kind == "down":                        # 1x1 strided projection
                a_ref, r_ref, b_ref = next(it), next(it), next(it)
                identity = conv_strided(act, a_ref, r_ref, b_ref, op, None)
            elif kind == "conv_s2":                     # 3x3 stride-2 conv
                a_ref, r_ref, b_ref = next(it), next(it), next(it)
                res = identity if op["add_identity"] else None
                act = conv_strided(act, a_ref, r_ref, b_ref, op, res)
            else:                                       # 3x3 stride-1 conv
                r_ref, b_ref = next(it), next(it)
                res = identity if op["add_identity"] else None
                act = conv_s1(act, r_ref, b_ref, op, res)

        # Head: global avg-pool folded into (Pleft @ act) @ Whead, then CE loss.
        p_ref, wh_ref, bfc_ref = next(it), next(it), next(it)
        pooled = jnp.dot(p_ref[...], act.astype(jnp.bfloat16),
                         preferred_element_type=jnp.float32)        # [N, W*C]
        logits = jnp.dot(pooled.astype(jnp.bfloat16), wh_ref[...],
                         preferred_element_type=jnp.float32) + bfc_ref[...]
        logits_ref[...] = logits                                    # [N, 128]
        m = jnp.max(logits, axis=-1, keepdims=True)
        lse = jnp.log(jnp.sum(jnp.exp(logits - m), axis=-1, keepdims=True)) + m
        picked = jnp.sum(logits * oh_ref[...], axis=-1, keepdims=True)
        loss = jnp.sum(lse - picked, axis=0, keepdims=True) / batch
        loss_ref[...] = loss

    return kernel


# ----------------------------------------------------------------------------
# Wrapper-side preparation: BN folding, shift matrices, folded conv weights
# ----------------------------------------------------------------------------
def fold_bn(bn, eps=1e-5):
    scale = bn["gamma"] / jnp.sqrt(bn["var"] + eps)
    bias = bn["beta"] - bn["mean"] * scale
    return scale, bias


def _shift_mat(out_size, in_size, tap, stride, pad):
    # m[i, y] = 1 iff y == stride*i + tap - pad (zero rows encode the zero padding).
    m = np.zeros((out_size, in_size), np.float32)
    for i in range(out_size):
        src = stride * i + tap - pad
        if 0 <= src < in_size:
            m[i, src] = 1.0
    return m


def prepare_network(params, batch, image_size, class_num, pad_classes):
    """Precompute all kernel weight arrays + the static execution plan."""
    N = batch
    arrays, plan = [], []

    def conv_mats(w_hwio, bn, H, W, stride):
        k, _, Cin, Cout = w_hwio.shape
        pad = (k - 1) // 2
        Ho = (H + 2 * pad - k) // stride + 1
        Wo = (W + 2 * pad - k) // stride + 1
        scale, bias = fold_bn(bn)
        w_f = w_hwio * scale                                     # BN scale folded in
        B_np = np.stack([_shift_mat(Wo, W, kj, stride, pad) for kj in range(k)])
        B = jnp.asarray(B_np)                                    # [k, Wo, W]
        # R_ki[w*Cin + c, j*Cout + o] = sum_kj B_kj[j, w] * w_f[ki, kj, c, o]
        R_taps = [jnp.einsum("kjx,kco->xcjo", B, w_f[ki]).reshape(W * Cin, Wo * Cout)
                  for ki in range(k)]
        R_cat = jnp.concatenate(R_taps, axis=0)                  # [k*W*Cin, Wo*Cout]
        bias_row = jnp.tile(bias, (Wo,)).reshape(1, Wo * Cout)
        return R_cat, bias_row, Ho, Wo, Cout, k, pad

    def add_conv_s1(w, bn, H, W, relu, add_identity):
        R_cat, b, Ho, Wo, Cout, _, _ = conv_mats(w, bn, H, W, 1)
        arrays.append(R_cat.astype(jnp.bfloat16))
        arrays.append(b.astype(jnp.float32))
        plan.append(dict(op="conv_s1", H=H, relu=relu, add_identity=add_identity))
        return Ho, Wo, Cout

    def add_conv_strided(kind, w, bn, H, W, stride, relu, add_identity):
        R_cat, b, Ho, Wo, Cout, k, pad = conv_mats(w, bn, H, W, stride)
        A_np = np.stack([np.kron(np.eye(N, dtype=np.float32),
                                 _shift_mat(Ho, H, ki, stride, pad))
                         for ki in range(k)])                    # [k, N*Ho, N*H]
        arrays.append(jnp.asarray(A_np).astype(jnp.bfloat16))
        arrays.append(R_cat.astype(jnp.bfloat16))
        arrays.append(b.astype(jnp.float32))
        plan.append(dict(op=kind, taps=k, relu=relu, add_identity=add_identity))
        return Ho, Wo, Cout

    H = W = image_size
    # Stem: conv1 -> bn1 -> relu.  Input channels padded so W*Cin is lane-dense.
    cin = params["conv1_w"].shape[2]
    step = 128 // math.gcd(W, 128)
    cin_pad = int(math.ceil(cin / step) * step)
    w1 = jnp.zeros(params["conv1_w"].shape[:2] + (cin_pad, params["conv1_w"].shape[3]),
                   jnp.float32).at[:, :, :cin, :].set(params["conv1_w"])
    H, W, C = add_conv_s1(w1, params["bn1"], H, W, relu=True, add_identity=False)

    # BasicBlocks
    for stage in ("layer1", "layer2", "layer3"):
        for blk in params[stage]:
            s = blk["stride"]
            if blk["down"] is not None:          # 1x1 strided projection of input
                add_conv_strided("down", blk["down"]["w"], blk["down"]["bn"],
                                 H, W, s, relu=False, add_identity=False)
            else:                                # identity shortcut
                plan.append(dict(op="save"))
            if s == 1:
                H, W, C = add_conv_s1(blk["conv1_w"], blk["bn1"], H, W,
                                      relu=True, add_identity=False)
            else:
                H, W, C = add_conv_strided("conv_s2", blk["conv1_w"], blk["bn1"],
                                           H, W, s, relu=True, add_identity=False)
            H, W, C = add_conv_s1(blk["conv2_w"], blk["bn2"], H, W,
                                  relu=True, add_identity=True)

    # Head: avgpool folded into (Pleft @ act) @ Whead; classes zero-padded to 128.
    Pleft = np.kron(np.eye(N, dtype=np.float32), np.ones((1, H), np.float32))
    arrays.append(jnp.asarray(Pleft).astype(jnp.bfloat16))             # [N, N*H]
    wh = jnp.tile(params["fc64_w"], (W, 1)) / float(H * W)             # [W*C, cls]
    wh_pad = jnp.zeros((W * C, pad_classes), jnp.float32).at[:, :class_num].set(wh)
    arrays.append(wh_pad.astype(jnp.bfloat16))
    bfc = jnp.full((1, pad_classes), -1e9, jnp.float32)    # pad cols never win softmax
    bfc = bfc.at[0, :class_num].set(params["fc64_b"])
    arrays.append(bfc)
    return arrays, plan, cin_pad


def build_forward(params, batch, image_size, class_num):
    pad_classes = ((class_num + 127) // 128) * 128
    arrays, plan, cin_pad = prepare_network(params, batch, image_size,
                                            class_num, pad_classes)
    n_w = len(arrays)
    kernel = make_kernel(plan, n_w, batch)
    vmem = pl.BlockSpec(memory_space=pltpu.MemorySpace.VMEM)
    call = pl.pallas_call(
        kernel,
        in_specs=[vmem] * (2 + n_w),
        out_specs=(vmem, vmem),
        out_shape=(jax.ShapeDtypeStruct((batch, pad_classes), jnp.float32),
                   jax.ShapeDtypeStruct((1, 1), jnp.float32)),
        compiler_params=pltpu.CompilerParams(vmem_limit_bytes=64 * 1024 * 1024),
    )

    def _forward(weight_arrays, img_nchw, target):
        x = jnp.transpose(img_nchw, (0, 2, 3, 1))              # NCHW -> NHWC
        n, h, w, c = x.shape
        x = jnp.pad(x, ((0, 0), (0, 0), (0, 0), (0, cin_pad - c)))
        act2d = x.reshape(n * h, w * cin_pad).astype(jnp.float32)   # [N*H, W*Cin_pad]
        onehot = jax.nn.one_hot(target, pad_classes, dtype=jnp.float32)
        logits_pad, loss = call(act2d, onehot, *weight_arrays)
        return logits_pad[:, :class_num], loss[0, 0]

    jitted = jax.jit(_forward)
    return lambda img, target: jitted(arrays, img, target)


# ----------------------------------------------------------------------------
# Pure-JAX reference (f32) of the eval-mode forward, for a sanity check
# ----------------------------------------------------------------------------
def reference_forward(params, img_nchw, target):
    x = jnp.transpose(img_nchw, (0, 2, 3, 1))                  # NHWC

    def conv_bn(x, w, bn, stride, pad):
        y = jax.lax.conv_general_dilated(
            x, w, (stride, stride), [(pad, pad), (pad, pad)],
            dimension_numbers=("NHWC", "HWIO", "NHWC"))
        scale, bias = fold_bn(bn)
        return y * scale + bias

    x = jax.nn.relu(conv_bn(x, params["conv1_w"], params["bn1"], 1, 1))
    for stage in ("layer1", "layer2", "layer3"):
        for blk in params[stage]:
            s = blk["stride"]
            idn = x
            if blk["down"] is not None:
                idn = conv_bn(x, blk["down"]["w"], blk["down"]["bn"], s, 0)
            y = jax.nn.relu(conv_bn(x, blk["conv1_w"], blk["bn1"], s, 1))
            y = conv_bn(y, blk["conv2_w"], blk["bn2"], 1, 1)
            x = jax.nn.relu(y + idn)
    pooled = jnp.mean(x, axis=(1, 2))
    logits = pooled @ params["fc64_w"] + params["fc64_b"]
    lse = jax.scipy.special.logsumexp(logits, axis=-1)
    picked = jnp.take_along_axis(logits, target[:, None], axis=-1)[:, 0]
    return logits, jnp.mean(lse - picked)


# ----------------------------------------------------------------------------
# Parameter construction (matches the module's __init__ init scheme)
# ----------------------------------------------------------------------------
def conv_init(key, ksize, cin, cout):
    n = ksize * ksize * cout
    return jax.random.normal(key, (ksize, ksize, cin, cout),
                             jnp.float32) * math.sqrt(2.0 / n)


def bn_init(c):
    return dict(gamma=jnp.ones((c,), jnp.float32), beta=jnp.zeros((c,), jnp.float32),
                mean=jnp.zeros((c,), jnp.float32), var=jnp.ones((c,), jnp.float32))


def make_params(key, wide_list=(16, 16, 32, 64), layers=(1, 1, 1), class_num=10):
    kit = iter(jax.random.split(key, 64))
    params = {}
    params["conv1_w"] = conv_init(next(kit), 3, 3, wide_list[0])
    params["bn1"] = bn_init(wide_list[0])
    inplanes = wide_list[0]
    for stage_idx, (planes, nblocks, stride) in enumerate(
            zip(wide_list[1:], layers, (1, 2, 2))):
        blocks = []
        for b in range(nblocks):
            s = stride if b == 0 else 1
            down = None
            if s != 1 or inplanes != planes:
                down = dict(w=conv_init(next(kit), 1, inplanes, planes),
                            bn=bn_init(planes))
            blocks.append(dict(
                conv1_w=conv_init(next(kit), 3, inplanes, planes), bn1=bn_init(planes),
                conv2_w=conv_init(next(kit), 3, planes, planes), bn2=bn_init(planes),
                down=down, stride=s))
            inplanes = planes
        params[f"layer{stage_idx + 1}"] = blocks
    # fc64 = nn.Linear(wide_list[3], class_num), PyTorch-Linear-style init
    bound = 1.0 / math.sqrt(wide_list[3])
    params["fc64_w"] = jax.random.uniform(next(kit), (wide_list[3], class_num),
                                          jnp.float32, -bound, bound)
    params["fc64_b"] = jax.random.uniform(next(kit), (class_num,),
                                          jnp.float32, -bound, bound)
    return params


# ----------------------------------------------------------------------------
if __name__ == "__main__":
    key = jax.random.PRNGKey(0)
    k_img, k_tgt, k_par = jax.random.split(key, 3)

    # Small test shapes (scaled-down resnet config); batch raised to 8 per the
    # review so matmul M is 32..128 rows instead of 8..32.
    B, IMG, CLASSES = 8, 16, 10
    img = jax.random.normal(k_img, (B, 3, IMG, IMG), jnp.float32)      # NCHW input
    target = jax.random.randint(k_tgt, (B,), 0, CLASSES)
    params = make_params(k_par, wide_list=(16, 16, 32, 64), layers=(1, 1, 1),
                         class_num=CLASSES)

    forward = build_forward(params, batch=B, image_size=IMG, class_num=CLASSES)
    logits, loss = forward(img, target)
    jax.block_until_ready((logits, loss))
    assert logits.shape == (B, CLASSES)
    assert loss.shape == ()

    # Sanity check against a pure-JAX f32 reference (loose tolerance: the kernel
    # runs activations/weights through bf16 on the MXU).
    ref_logits, ref_loss = reference_forward(params, img, target)
    np.testing.assert_allclose(np.asarray(logits), np.asarray(ref_logits),
                               rtol=8e-2, atol=8e-2)
    np.testing.assert_allclose(float(loss), float(ref_loss), rtol=5e-2, atol=5e-2)

    print("KERNEL_OK")
</pallas_src>

<mosaic_0001>
module attributes {stable_mosaic.version = 11 : i64} {
  func.func @kernel(%arg0: memref<128x128xf32, #tpu.memory_space<vmem>>, %arg1: memref<8x128xf32, #tpu.memory_space<vmem>>, %arg2: memref<384x256xbf16, #tpu.memory_space<vmem>>, %arg3: memref<1x256xf32, #tpu.memory_space<vmem>>, %arg4: memref<768x256xbf16, #tpu.memory_space<vmem>>, %arg5: memref<1x256xf32, #tpu.memory_space<vmem>>, %arg6: memref<768x256xbf16, #tpu.memory_space<vmem>>, %arg7: memref<1x256xf32, #tpu.memory_space<vmem>>, %arg8: memref<1x64x128xbf16, #tpu.memory_space<vmem>>, %arg9: memref<256x256xbf16, #tpu.memory_space<vmem>>, %arg10: memref<1x256xf32, #tpu.memory_space<vmem>>, %arg11: memref<3x64x128xbf16, #tpu.memory_space<vmem>>, %arg12: memref<768x256xbf16, #tpu.memory_space<vmem>>, %arg13: memref<1x256xf32, #tpu.memory_space<vmem>>, %arg14: memref<768x256xbf16, #tpu.memory_space<vmem>>, %arg15: memref<1x256xf32, #tpu.memory_space<vmem>>, %arg16: memref<1x32x64xbf16, #tpu.memory_space<vmem>>, %arg17: memref<256x256xbf16, #tpu.memory_space<vmem>>, %arg18: memref<1x256xf32, #tpu.memory_space<vmem>>, %arg19: memref<3x32x64xbf16, #tpu.memory_space<vmem>>, %arg20: memref<768x256xbf16, #tpu.memory_space<vmem>>, %arg21: memref<1x256xf32, #tpu.memory_space<vmem>>, %arg22: memref<768x256xbf16, #tpu.memory_space<vmem>>, %arg23: memref<1x256xf32, #tpu.memory_space<vmem>>, %arg24: memref<8x32xbf16, #tpu.memory_space<vmem>>, %arg25: memref<256x128xbf16, #tpu.memory_space<vmem>>, %arg26: memref<1x128xf32, #tpu.memory_space<vmem>>, %arg27: memref<8x128xf32, #tpu.memory_space<vmem>>, %arg28: memref<1x1xf32, #tpu.memory_space<vmem>>) attributes {dimension_semantics = [], scalar_prefetch = 0 : i64, scratch_operands = 0 : i64, tpu.core_type = #tpu.core_type<tc>} {
    %c0 = arith.constant 0 : index
    %c0_0 = arith.constant 0 : index
    %0 = vector.load %arg0[%c0, %c0_0] : memref<128x128xf32, #tpu.memory_space<vmem>>, vector<128x128xf32>
    %1 = tpu.iota {dimensions = array<i32: 0>} : vector<128x1xi32>
    %c16_i32 = arith.constant 16 : i32
    %c0_i32 = arith.constant 0 : i32
    %2 = arith.cmpi eq, %c16_i32, %c0_i32 : i32
    %c1_i32 = arith.constant 1 : i32
    %3 = arith.select %2, %c1_i32, %c16_i32 : i32
    %4 = vector.broadcast %3 : i32 to vector<128x1xi32>
    %5 = arith.remsi %1, %4 : vector<128x1xi32>
    %c0_i32_1 = arith.constant 0 : i32
    %6 = vector.broadcast %c0_i32_1 : i32 to vector<128x1xi32>
    %7 = arith.cmpi ne, %5, %6 : vector<128x1xi32>
    %c0_i32_2 = arith.constant 0 : i32
    %8 = vector.broadcast %c0_i32_2 : i32 to vector<128x1xi32>
    %9 = arith.cmpi slt, %5, %8 : vector<128x1xi32>
    %c0_i32_3 = arith.constant 0 : i32
    %10 = arith.cmpi slt, %3, %c0_i32_3 : i32
    %11 = vector.broadcast %10 : i1 to vector<128x1xi1>
    %12 = vector.broadcast %11 : vector<128x1xi1> to vector<128x1xi1>
    %13 = arith.xori %9, %12 : vector<128x1xi1>
    %14 = arith.andi %13, %7 : vector<128x1xi1>
    %15 = vector.broadcast %3 : i32 to vector<128x1xi32>
    %16 = arith.addi %5, %15 : vector<128x1xi32>
    %17 = arith.select %14, %16, %5 : vector<128x1xi1>, vector<128x1xi32>
    %c0_i32_4 = arith.constant 0 : i32
    %18 = vector.broadcast %c0_i32_4 : i32 to vector<128x1xi32>
    %19 = arith.cmpi ne, %17, %18 : vector<128x1xi32>
    %20 = vector.extract_strided_slice %0 {offsets = [127, 0], sizes = [1, 128], strides = [1, 1]} : vector<128x128xf32> to vector<1x128xf32>
    %21 = vector.extract_strided_slice %0 {offsets = [0, 0], sizes = [127, 128], strides = [1, 1]} : vector<128x128xf32> to vector<127x128xf32>
    %22 = tpu.concatenate %20, %21 in 0 : vector<1x128xf32>, vector<127x128xf32> -> vector<128x128xf32>
    %cst = arith.constant 0.000000e+00 : f32
    %23 = vector.shape_cast %19 : vector<128x1xi1> to vector<128x1xi1>
    %24 = vector.broadcast %23 : vector<128x1xi1> to vector<128x128xi1>
    %25 = vector.broadcast %cst : f32 to vector<128x128xf32>
    %26 = arith.select %24, %22, %25 : vector<128x128xi1>, vector<128x128xf32>
    %c15_i32 = arith.constant 15 : i32
    %27 = vector.broadcast %c15_i32 : i32 to vector<128x1xi32>
    %28 = arith.cmpi ne, %17, %27 : vector<128x1xi32>
    %29 = vector.extract_strided_slice %0 {offsets = [1, 0], sizes = [127, 128], strides = [1, 1]} : vector<128x128xf32> to vector<127x128xf32>
    %30 = vector.extract_strided_slice %0 {offsets = [0, 0], sizes = [1, 128], strides = [1, 1]} : vector<128x128xf32> to vector<1x128xf32>
    %31 = tpu.concatenate %29, %30 in 0 : vector<127x128xf32>, vector<1x128xf32> -> vector<128x128xf32>
    %cst_5 = arith.constant 0.000000e+00 : f32
    %32 = vector.shape_cast %28 : vector<128x1xi1> to vector<128x1xi1>
    %33 = vector.broadcast %32 : vector<128x1xi1> to vector<128x128xi1>
    %34 = vector.broadcast %cst_5 : f32 to vector<128x128xf32>
    %35 = arith.select %33, %31, %34 : vector<128x128xi1>, vector<128x128xf32>
    %36 = arith.truncf %26 : vector<128x128xf32> to vector<128x128xbf16>
    %37 = arith.truncf %0 : vector<128x128xf32> to vector<128x128xbf16>
    %38 = arith.truncf %35 : vector<128x128xf32> to vector<128x128xbf16>
    %39 = tpu.concatenate %36, %37, %38 in 1 : vector<128x128xbf16>, vector<128x128xbf16>, vector<128x128xbf16> -> vector<128x384xbf16>
    %c0_6 = arith.constant 0 : index
    %c0_7 = arith.constant 0 : index
    %40 = vector.load %arg2[%c0_6, %c0_7] : memref<384x256xbf16, #tpu.memory_space<vmem>>, vector<384x256xbf16>
    %cst_8 = arith.constant dense<0.000000e+00> : vector<128x256xf32>
    %41 = tpu.matmul %39, %40, %cst_8 {dimension_numbers = #tpu.dot_dimension_numbers<[1], [0], [0], [1], [0, 0, 1, 1], [], []>} : vector<128x384xbf16>, vector<384x256xbf16>, vector<128x256xf32> -> vector<128x256xf32>
    %c0_9 = arith.constant 0 : index
    %c0_10 = arith.constant 0 : index
    %42 = vector.load %arg3[%c0_9, %c0_10] : memref<1x256xf32, #tpu.memory_space<vmem>>, vector<1x256xf32>
    %43 = vector.broadcast %42 : vector<1x256xf32> to vector<128x256xf32>
    %44 = arith.addf %41, %43 : vector<128x256xf32>
    %cst_11 = arith.constant 0.000000e+00 : f32
    %45 = vector.broadcast %cst_11 : f32 to vector<128x256xf32>
    %46 = arith.maximumf %44, %45 : vector<128x256xf32>
    %47 = tpu.iota {dimensions = array<i32: 0>} : vector<128x1xi32>
    %c16_i32_12 = arith.constant 16 : i32
    %c0_i32_13 = arith.constant 0 : i32
    %48 = arith.cmpi eq, %c16_i32_12, %c0_i32_13 : i32
    %c1_i32_14 = arith.constant 1 : i32
    %49 = arith.select %48, %c1_i32_14, %c16_i32_12 : i32
    %50 = vector.broadcast %49 : i32 to vector<128x1xi32>
    %51 = arith.remsi %47, %50 : vector<128x1xi32>
    %c0_i32_15 = arith.constant 0 : i32
    %52 = vector.broadcast %c0_i32_15 : i32 to vector<128x1xi32>
    %53 = arith.cmpi ne, %51, %52 : vector<128x1xi32>
    %c0_i32_16 = arith.constant 0 : i32
    %54 = vector.broadcast %c0_i32_16 : i32 to vector<128x1xi32>
    %55 = arith.cmpi slt, %51, %54 : vector<128x1xi32>
    %c0_i32_17 = arith.constant 0 : i32
    %56 = arith.cmpi slt, %49, %c0_i32_17 : i32
    %57 = vector.broadcast %56 : i1 to vector<128x1xi1>
    %58 = vector.broadcast %57 : vector<128x1xi1> to vector<128x1xi1>
    %59 = arith.xori %55, %58 : vector<128x1xi1>
    %60 = arith.andi %59, %53 : vector<128x1xi1>
    %61 = vector.broadcast %49 : i32 to vector<128x1xi32>
    %62 = arith.addi %51, %61 : vector<128x1xi32>
    %63 = arith.select %60, %62, %51 : vector<128x1xi1>, vector<128x1xi32>
    %c0_i32_18 = arith.constant 0 : i32
    %64 = vector.broadcast %c0_i32_18 : i32 to vector<128x1xi32>
    %65 = arith.cmpi ne, %63, %64 : vector<128x1xi32>
    %66 = vector.extract_strided_slice %46 {offsets = [127, 0], sizes = [1, 256], strides = [1, 1]} : vector<128x256xf32> to vector<1x256xf32>
    %67 = vector.extract_strided_slice %46 {offsets = [0, 0], sizes = [127, 256], strides = [1, 1]} : vector<128x256xf32> to vector<127x256xf32>
    %68 = tpu.concatenate %66, %67 in 0 : vector<1x256xf32>, vector<127x256xf32> -> vector<128x256xf32>
    %cst_19 = arith.constant 0.000000e+00 : f32
    %69 = vector.shape_cast %65 : vector<128x1xi1> to vector<128x1xi1>
    %70 = vector.broadcast %69 : vector<128x1xi1> to vector<128x256xi1>
    %71 = vector.broadcast %cst_19 : f32 to vector<128x256xf32>
    %72 = arith.select %70, %68, %71 : vector<128x256xi1>, vector<128x256xf32>
    %c15_i32_20 = arith.constant 15 : i32
    %73 = vector.broadcast %c15_i32_20 : i32 to vector<128x1xi32>
    %74 = arith.cmpi ne, %63, %73 : vector<128x1xi32>
    %75 = vector.extract_strided_slice %46 {offsets = [1, 0], sizes = [127, 256], strides = [1, 1]} : vector<128x256xf32> to vector<127x256xf32>
    %76 = vector.extract_strided_slice %46 {offsets = [0, 0], sizes = [1, 256], strides = [1, 1]} : vector<128x256xf32> to vector<1x256xf32>
    %77 = tpu.concatenate %75, %76 in 0 : vector<127x256xf32>, vector<1x256xf32> -> vector<128x256xf32>
    %cst_21 = arith.constant 0.000000e+00 : f32
    %78 = vector.shape_cast %74 : vector<128x1xi1> to vector<128x1xi1>
    %79 = vector.broadcast %78 : vector<128x1xi1> to vector<128x256xi1>
    %80 = vector.broadcast %cst_21 : f32 to vector<128x256xf32>
    %81 = arith.select %79, %77, %80 : vector<128x256xi1>, vector<128x256xf32>
    %82 = arith.truncf %72 : vector<128x256xf32> to vector<128x256xbf16>
    %83 = arith.truncf %46 : vector<128x256xf32> to vector<128x256xbf16>
    %84 = arith.truncf %81 : vector<128x256xf32> to vector<128x256xbf16>
    %85 = tpu.concatenate %82, %83, %84 in 1 : vector<128x256xbf16>, vector<128x256xbf16>, vector<128x256xbf16> -> vector<128x768xbf16>
    %c0_22 = arith.constant 0 : index
    %c0_23 = arith.constant 0 : index
    %86 = vector.load %arg4[%c0_22, %c0_23] : memref<768x256xbf16, #tpu.memory_space<vmem>>, vector<768x256xbf16>
    %cst_24 = arith.constant dense<0.000000e+00> : vector<128x256xf32>
    %87 = tpu.matmul %85, %86, %cst_24 {dimension_numbers = #tpu.dot_dimension_numbers<[1], [0], [0], [1], [0, 0, 1, 1], [], []>} : vector<128x768xbf16>, vector<768x256xbf16>, vector<128x256xf32> -> vector<128x256xf32>
    %c0_25 = arith.constant 0 : index
    %c0_26 = arith.constant 0 : index
    %88 = vector.load %arg5[%c0_25, %c0_26] : memref<1x256xf32, #tpu.memory_space<vmem>>, vector<1x256xf32>
    %89 = vector.broadcast %88 : vector<1x256xf32> to vector<128x256xf32>
    %90 = arith.addf %87, %89 : vector<128x256xf32>
    %cst_27 = arith.constant 0.000000e+00 : f32
    %91 = vector.broadcast %cst_27 : f32 to vector<128x256xf32>
    %92 = arith.maximumf %90, %91 : vector<128x256xf32>
    %93 = tpu.iota {dimensions = array<i32: 0>} : vector<128x1xi32>
    %c16_i32_28 = arith.constant 16 : i32
    %c0_i32_29 = arith.constant 0 : i32
    %94 = arith.cmpi eq, %c16_i32_28, %c0_i32_29 : i32
    %c1_i32_30 = arith.constant 1 : i32
    %95 = arith.select %94, %c1_i32_30, %c16_i32_28 : i32
    %96 = vector.broadcast %95 : i32 to vector<128x1xi32>
    %97 = arith.remsi %93, %96 : vector<128x1xi32>
    %c0_i32_31 = arith.constant 0 : i32
    %98 = vector.broadcast %c0_i32_31 : i32 to vector<128x1xi32>
    %99 = arith.cmpi ne, %97, %98 : vector<128x1xi32>
    %c0_i32_32 = arith.constant 0 : i32
    %100 = vector.broadcast %c0_i32_32 : i32 to vector<128x1xi32>
    %101 = arith.cmpi slt, %97, %100 : vector<128x1xi32>
    %c0_i32_33 = arith.constant 0 : i32
    %102 = arith.cmpi slt, %95, %c0_i32_33 : i32
    %103 = vector.broadcast %102 : i1 to vector<128x1xi1>
    %104 = vector.broadcast %103 : vector<128x1xi1> to vector<128x1xi1>
    %105 = arith.xori %101, %104 : vector<128x1xi1>
    %106 = arith.andi %105, %99 : vector<128x1xi1>
    %107 = vector.broadcast %95 : i32 to vector<128x1xi32>
    %108 = arith.addi %97, %107 : vector<128x1xi32>
    %109 = arith.select %106, %108, %97 : vector<128x1xi1>, vector<128x1xi32>
    %c0_i32_34 = arith.constant 0 : i32
    %110 = vector.broadcast %c0_i32_34 : i32 to vector<128x1xi32>
    %111 = arith.cmpi ne, %109, %110 : vector<128x1xi32>
    %112 = vector.extract_strided_slice %92 {offsets = [127, 0], sizes = [1, 256], strides = [1, 1]} : vector<128x256xf32> to vector<1x256xf32>
    %113 = vector.extract_strided_slice %92 {offsets = [0, 0], sizes = [127, 256], strides = [1, 1]} : vector<128x256xf32> to vector<127x256xf32>
    %114 = tpu.concatenate %112, %113 in 0 : vector<1x256xf32>, vector<127x256xf32> -> vector<128x256xf32>
    %cst_35 = arith.constant 0.000000e+00 : f32
    %115 = vector.shape_cast %111 : vector<128x1xi1> to vector<128x1xi1>
    %116 = vector.broadcast %115 : vector<128x1xi1> to vector<128x256xi1>
    %117 = vector.broadcast %cst_35 : f32 to vector<128x256xf32>
    %118 = arith.select %116, %114, %117 : vector<128x256xi1>, vector<128x256xf32>
    %c15_i32_36 = arith.constant 15 : i32
    %119 = vector.broadcast %c15_i32_36 : i32 to vector<128x1xi32>
    %120 = arith.cmpi ne, %109, %119 : vector<128x1xi32>
    %121 = vector.extract_strided_slice %92 {offsets = [1, 0], sizes = [127, 256], strides = [1, 1]} : vector<128x256xf32> to vector<127x256xf32>
    %122 = vector.extract_strided_slice %92 {offsets = [0, 0], sizes = [1, 256], strides = [1, 1]} : vector<128x256xf32> to vector<1x256xf32>
    %123 = tpu.concatenate %121, %122 in 0 : vector<127x256xf32>, vector<1x256xf32> -> vector<128x256xf32>
    %cst_37 = arith.constant 0.000000e+00 : f32
    %124 = vector.shape_cast %120 : vector<128x1xi1> to vector<128x1xi1>
    %125 = vector.broadcast %124 : vector<128x1xi1> to vector<128x256xi1>
    %126 = vector.broadcast %cst_37 : f32 to vector<128x256xf32>
    %127 = arith.select %125, %123, %126 : vector<128x256xi1>, vector<128x256xf32>
    %128 = arith.truncf %118 : vector<128x256xf32> to vector<128x256xbf16>
    %129 = arith.truncf %92 : vector<128x256xf32> to vector<128x256xbf16>
    %130 = arith.truncf %127 : vector<128x256xf32> to vector<128x256xbf16>
    %131 = tpu.concatenate %128, %129, %130 in 1 : vector<128x256xbf16>, vector<128x256xbf16>, vector<128x256xbf16> -> vector<128x768xbf16>
    %c0_38 = arith.constant 0 : index
    %c0_39 = arith.constant 0 : index
    %132 = vector.load %arg6[%c0_38, %c0_39] : memref<768x256xbf16, #tpu.memory_space<vmem>>, vector<768x256xbf16>
    %cst_40 = arith.constant dense<0.000000e+00> : vector<128x256xf32>
    %133 = tpu.matmul %131, %132, %cst_40 {dimension_numbers = #tpu.dot_dimension_numbers<[1], [0], [0], [1], [0, 0, 1, 1], [], []>} : vector<128x768xbf16>, vector<768x256xbf16>, vector<128x256xf32> -> vector<128x256xf32>
    %c0_41 = arith.constant 0 : index
    %c0_42 = arith.constant 0 : index
    %134 = vector.load %arg7[%c0_41, %c0_42] : memref<1x256xf32, #tpu.memory_space<vmem>>, vector<1x256xf32>
    %135 = vector.broadcast %134 : vector<1x256xf32> to vector<128x256xf32>
    %136 = arith.addf %133, %135 : vector<128x256xf32>
    %137 = arith.addf %136, %46 : vector<128x256xf32>
    %cst_43 = arith.constant 0.000000e+00 : f32
    %138 = vector.broadcast %cst_43 : f32 to vector<128x256xf32>
    %139 = arith.maximumf %137, %138 : vector<128x256xf32>
    %140 = arith.truncf %139 : vector<128x256xf32> to vector<128x256xbf16>
    %c0_44 = arith.constant 0 : index
    %c0_45 = arith.constant 0 : index
    %c0_46 = arith.constant 0 : index
    %141 = vector.load %arg8[%c0_44, %c0_45, %c0_46] : memref<1x64x128xbf16, #tpu.memory_space<vmem>>, vector<1x64x128xbf16>
    %142 = vector.shape_cast %141 : vector<1x64x128xbf16> to vector<64x128xbf16>
    %cst_47 = arith.constant dense<0.000000e+00> : vector<64x256xf32>
    %143 = tpu.matmul %142, %140, %cst_47 {dimension_numbers = #tpu.dot_dimension_numbers<[1], [0], [0], [1], [0, 0, 1, 1], [], []>} : vector<64x128xbf16>, vector<128x256xbf16>, vector<64x256xf32> -> vector<64x256xf32>
    %144 = arith.truncf %143 : vector<64x256xf32> to vector<64x256xbf16>
    %c0_48 = arith.constant 0 : index
    %c0_49 = arith.constant 0 : index
    %145 = vector.load %arg9[%c0_48, %c0_49] : memref<256x256xbf16, #tpu.memory_space<vmem>>, vector<256x256xbf16>
    %cst_50 = arith.constant dense<0.000000e+00> : vector<64x256xf32>
    %146 = tpu.matmul %144, %145, %cst_50 {dimension_numbers = #tpu.dot_dimension_numbers<[1], [0], [0], [1], [0, 0, 1, 1], [], []>} : vector<64x256xbf16>, vector<256x256xbf16>, vector<64x256xf32> -> vector<64x256xf32>
    %c0_51 = arith.constant 0 : index
    %c0_52 = arith.constant 0 : index
    %147 = vector.load %arg10[%c0_51, %c0_52] : memref<1x256xf32, #tpu.memory_space<vmem>>, vector<1x256xf32>
    %148 = vector.broadcast %147 : vector<1x256xf32> to vector<64x256xf32>
    %149 = arith.addf %146, %148 : vector<64x256xf32>
    %150 = arith.truncf %139 : vector<128x256xf32> to vector<128x256xbf16>
    %c0_53 = arith.constant 0 : index
    %c0_54 = arith.constant 0 : index
    %c0_55 = arith.constant 0 : index
    %151 = vector.load %arg11[%c0_53, %c0_54, %c0_55] : memref<3x64x128xbf16, #tpu.memory_space<vmem>>, vector<1x64x128xbf16>
    %152 = vector.shape_cast %151 : vector<1x64x128xbf16> to vector<64x128xbf16>
    %cst_56 = arith.constant dense<0.000000e+00> : vector<64x256xf32>
    %153 = tpu.matmul %152, %150, %cst_56 {dimension_numbers = #tpu.dot_dimension_numbers<[1], [0], [0], [1], [0, 0, 1, 1], [], []>} : vector<64x128xbf16>, vector<128x256xbf16>, vector<64x256xf32> -> vector<64x256xf32>
    %154 = arith.truncf %153 : vector<64x256xf32> to vector<64x256xbf16>
    %c1 = arith.constant 1 : index
    %c0_57 = arith.constant 0 : index
    %c0_58 = arith.constant 0 : index
    %155 = vector.load %arg11[%c1, %c0_57, %c0_58] : memref<3x64x128xbf16, #tpu.memory_space<vmem>>, vector<1x64x128xbf16>
    %156 = vector.shape_cast %155 : vector<1x64x128xbf16> to vector<64x128xbf16>
    %cst_59 = arith.constant dense<0.000000e+00> : vector<64x256xf32>
    %157 = tpu.matmul %156, %150, %cst_59 {dimension_numbers = #tpu.dot_dimension_numbers<[1], [0], [0], [1], [0, 0, 1, 1], [], []>} : vector<64x128xbf16>, vector<128x256xbf16>, vector<64x256xf32> -> vector<64x256xf32>
    %158 = arith.truncf %157 : vector<64x256xf32> to vector<64x256xbf16>
    %c2 = arith.constant 2 : index
    %c0_60 = arith.constant 0 : index
    %c0_61 = arith.constant 0 : index
    %159 = vector.load %arg11[%c2, %c0_60, %c0_61] : memref<3x64x128xbf16, #tpu.memory_space<vmem>>, vector<1x64x128xbf16>
    %160 = vector.shape_cast %159 : vector<1x64x128xbf16> to vector<64x128xbf16>
    %cst_62 = arith.constant dense<0.000000e+00> : vector<64x256xf32>
    %161 = tpu.matmul %160, %150, %cst_62 {dimension_numbers = #tpu.dot_dimension_numbers<[1], [0], [0], [1], [0, 0, 1, 1], [], []>} : vector<64x128xbf16>, vector<128x256xbf16>, vector<64x256xf32> -> vector<64x256xf32>
    %162 = arith.truncf %161 : vector<64x256xf32> to vector<64x256xbf16>
    %163 = tpu.concatenate %154, %158, %162 in 1 : vector<64x256xbf16>, vector<64x256xbf16>, vector<64x256xbf16> -> vector<64x768xbf16>
    %c0_63 = arith.constant 0 : index
    %c0_64 = arith.constant 0 : index
    %164 = vector.load %arg12[%c0_63, %c0_64] : memref<768x256xbf16, #tpu.memory_space<vmem>>, vector<768x256xbf16>
    %cst_65 = arith.constant dense<0.000000e+00> : vector<64x256xf32>
    %165 = tpu.matmul %163, %164, %cst_65 {dimension_numbers = #tpu.dot_dimension_numbers<[1], [0], [0], [1], [0, 0, 1, 1], [], []>} : vector<64x768xbf16>, vector<768x256xbf16>, vector<64x256xf32> -> vector<64x256xf32>
    %c0_66 = arith.constant 0 : index
    %c0_67 = arith.constant 0 : index
    %166 = vector.load %arg13[%c0_66, %c0_67] : memref<1x256xf32, #tpu.memory_space<vmem>>, vector<1x256xf32>
    %167 = vector.broadcast %166 : vector<1x256xf32> to vector<64x256xf32>
    %168 = arith.addf %165, %167 : vector<64x256xf32>
    %cst_68 = arith.constant 0.000000e+00 : f32
    %169 = vector.broadcast %cst_68 : f32 to vector<64x256xf32>
    %170 = arith.maximumf %168, %169 : vector<64x256xf32>
    %171 = tpu.iota {dimensions = array<i32: 0>} : vector<64x1xi32>
    %c8_i32 = arith.constant 8 : i32
    %c0_i32_69 = arith.constant 0 : i32
    %172 = arith.cmpi eq, %c8_i32, %c0_i32_69 : i32
    %c1_i32_70 = arith.constant 1 : i32
    %173 = arith.select %172, %c1_i32_70, %c8_i32 : i32
    %174 = vector.broadcast %173 : i32 to vector<64x1xi32>
    %175 = arith.remsi %171, %174 : vector<64x1xi32>
    %c0_i32_71 = arith.constant 0 : i32
    %176 = vector.broadcast %c0_i32_71 : i32 to vector<64x1xi32>
    %177 = arith.cmpi ne, %175, %176 : vector<64x1xi32>
    %c0_i32_72 = arith.constant 0 : i32
    %178 = vector.broadcast %c0_i32_72 : i32 to vector<64x1xi32>
    %179 = arith.cmpi slt, %175, %178 : vector<64x1xi32>
    %c0_i32_73 = arith.constant 0 : i32
    %180 = arith.cmpi slt, %173, %c0_i32_73 : i32
    %181 = vector.broadcast %180 : i1 to vector<64x1xi1>
    %182 = vector.broadcast %181 : vector<64x1xi1> to vector<64x1xi1>
    %183 = arith.xori %179, %182 : vector<64x1xi1>
    %184 = arith.andi %183, %177 : vector<64x1xi1>
    %185 = vector.broadcast %173 : i32 to vector<64x1xi32>
    %186 = arith.addi %175, %185 : vector<64x1xi32>
    %187 = arith.select %184, %186, %175 : vector<64x1xi1>, vector<64x1xi32>
    %c0_i32_74 = arith.constant 0 : i32
    %188 = vector.broadcast %c0_i32_74 : i32 to vector<64x1xi32>
    %189 = arith.cmpi ne, %187, %188 : vector<64x1xi32>
    %190 = vector.extract_strided_slice %170 {offsets = [63, 0], sizes = [1, 256], strides = [1, 1]} : vector<64x256xf32> to vector<1x256xf32>
    %191 = vector.extract_strided_slice %170 {offsets = [0, 0], sizes = [63, 256], strides = [1, 1]} : vector<64x256xf32> to vector<63x256xf32>
    %192 = tpu.concatenate %190, %191 in 0 : vector<1x256xf32>, vector<63x256xf32> -> vector<64x256xf32>
    %cst_75 = arith.constant 0.000000e+00 : f32
    %193 = vector.shape_cast %189 : vector<64x1xi1> to vector<64x1xi1>
    %194 = vector.broadcast %193 : vector<64x1xi1> to vector<64x256xi1>
    %195 = vector.broadcast %cst_75 : f32 to vector<64x256xf32>
    %196 = arith.select %194, %192, %195 : vector<64x256xi1>, vector<64x256xf32>
    %c7_i32 = arith.constant 7 : i32
    %197 = vector.broadcast %c7_i32 : i32 to vector<64x1xi32>
    %198 = arith.cmpi ne, %187, %197 : vector<64x1xi32>
    %199 = vector.extract_strided_slice %170 {offsets = [1, 0], sizes = [63, 256], strides = [1, 1]} : vector<64x256xf32> to vector<63x256xf32>
    %200 = vector.extract_strided_slice %170 {offsets = [0, 0], sizes = [1, 256], strides = [1, 1]} : vector<64x256xf32> to vector<1x256xf32>
    %201 = tpu.concatenate %199, %200 in 0 : vector<63x256xf32>, vector<1x256xf32> -> vector<64x256xf32>
    %cst_76 = arith.constant 0.000000e+00 : f32
    %202 = vector.shape_cast %198 : vector<64x1xi1> to vector<64x1xi1>
    %203 = vector.broadcast %202 : vector<64x1xi1> to vector<64x256xi1>
    %204 = vector.broadcast %cst_76 : f32 to vector<64x256xf32>
    %205 = arith.select %203, %201, %204 : vector<64x256xi1>, vector<64x256xf32>
    %206 = arith.truncf %196 : vector<64x256xf32> to vector<64x256xbf16>
    %207 = arith.truncf %170 : vector<64x256xf32> to vector<64x256xbf16>
    %208 = arith.truncf %205 : vector<64x256xf32> to vector<64x256xbf16>
    %209 = tpu.concatenate %206, %207, %208 in 1 : vector<64x256xbf16>, vector<64x256xbf16>, vector<64x256xbf16> -> vector<64x768xbf16>
    %c0_77 = arith.constant 0 : index
    %c0_78 = arith.constant 0 : index
    %210 = vector.load %arg14[%c0_77, %c0_78] : memref<768x256xbf16, #tpu.memory_space<vmem>>, vector<768x256xbf16>
    %cst_79 = arith.constant dense<0.000000e+00> : vector<64x256xf32>
    %211 = tpu.matmul %209, %210, %cst_79 {dimension_numbers = #tpu.dot_dimension_numbers<[1], [0], [0], [1], [0, 0, 1, 1], [], []>} : vector<64x768xbf16>, vector<768x256xbf16>, vector<64x256xf32> -> vector<64x256xf32>
    %c0_80 = arith.constant 0 : index
    %c0_81 = arith.constant 0 : index
    %212 = vector.load %arg15[%c0_80, %c0_81] : memref<1x256xf32, #tpu.memory_space<vmem>>, vector<1x256xf32>
    %213 = vector.broadcast %212 : vector<1x256xf32> to vector<64x256xf32>
    %214 = arith.addf %211, %213 : vector<64x256xf32>
    %215 = arith.addf %214, %149 : vector<64x256xf32>
    %cst_82 = arith.constant 0.000000e+00 : f32
    %216 = vector.broadcast %cst_82 : f32 to vector<64x256xf32>
    %217 = arith.maximumf %215, %216 : vector<64x256xf32>
    %218 = arith.truncf %217 : vector<64x256xf32> to vector<64x256xbf16>
    %c0_83 = arith.constant 0 : index
    %c0_84 = arith.constant 0 : index
    %c0_85 = arith.constant 0 : index
    %219 = vector.load %arg16[%c0_83, %c0_84, %c0_85] : memref<1x32x64xbf16, #tpu.memory_space<vmem>>, vector<1x32x64xbf16>
    %220 = vector.shape_cast %219 : vector<1x32x64xbf16> to vector<32x64xbf16>
    %cst_86 = arith.constant dense<0.000000e+00> : vector<32x256xf32>
    %221 = tpu.matmul %220, %218, %cst_86 {dimension_numbers = #tpu.dot_dimension_numbers<[1], [0], [0], [1], [0, 0, 1, 1], [], []>} : vector<32x64xbf16>, vector<64x256xbf16>, vector<32x256xf32> -> vector<32x256xf32>
    %222 = arith.truncf %221 : vector<32x256xf32> to vector<32x256xbf16>
    %c0_87 = arith.constant 0 : index
    %c0_88 = arith.constant 0 : index
    %223 = vector.load %arg17[%c0_87, %c0_88] : memref<256x256xbf16, #tpu.memory_space<vmem>>, vector<256x256xbf16>
    %cst_89 = arith.constant dense<0.000000e+00> : vector<32x256xf32>
    %224 = tpu.matmul %222, %223, %cst_89 {dimension_numbers = #tpu.dot_dimension_numbers<[1], [0], [0], [1], [0, 0, 1, 1], [], []>} : vector<32x256xbf16>, vector<256x256xbf16>, vector<32x256xf32> -> vector<32x256xf32>
    %c0_90 = arith.constant 0 : index
    %c0_91 = arith.constant 0 : index
    %225 = vector.load %arg18[%c0_90, %c0_91] : memref<1x256xf32, #tpu.memory_space<vmem>>, vector<1x256xf32>
    %226 = vector.broadcast %225 : vector<1x256xf32> to vector<32x256xf32>
    %227 = arith.addf %224, %226 : vector<32x256xf32>
    %228 = arith.truncf %217 : vector<64x256xf32> to vector<64x256xbf16>
    %c0_92 = arith.constant 0 : index
    %c0_93 = arith.constant 0 : index
    %c0_94 = arith.constant 0 : index
    %229 = vector.load %arg19[%c0_92, %c0_93, %c0_94] : memref<3x32x64xbf16, #tpu.memory_space<vmem>>, vector<1x32x64xbf16>
    %230 = vector.shape_cast %229 : vector<1x32x64xbf16> to vector<32x64xbf16>
    %cst_95 = arith.constant dense<0.000000e+00> : vector<32x256xf32>
    %231 = tpu.matmul %230, %228, %cst_95 {dimension_numbers = #tpu.dot_dimension_numbers<[1], [0], [0], [1], [0, 0, 1, 1], [], []>} : vector<32x64xbf16>, vector<64x256xbf16>, vector<32x256xf32> -> vector<32x256xf32>
    %232 = arith.truncf %231 : vector<32x256xf32> to vector<32x256xbf16>
    %c1_96 = arith.constant 1 : index
    %c0_97 = arith.constant 0 : index
    %c0_98 = arith.constant 0 : index
    %233 = vector.load %arg19[%c1_96, %c0_97, %c0_98] : memref<3x32x64xbf16, #tpu.memory_space<vmem>>, vector<1x32x64xbf16>
    %234 = vector.shape_cast %233 : vector<1x32x64xbf16> to vector<32x64xbf16>
    %cst_99 = arith.constant dense<0.000000e+00> : vector<32x256xf32>
    %235 = tpu.matmul %234, %228, %cst_99 {dimension_numbers = #tpu.dot_dimension_numbers<[1], [0], [0], [1], [0, 0, 1, 1], [], []>} : vector<32x64xbf16>, vector<64x256xbf16>, vector<32x256xf32> -> vector<32x256xf32>
    %236 = arith.truncf %235 : vector<32x256xf32> to vector<32x256xbf16>
    %c2_100 = arith.constant 2 : index
    %c0_101 = arith.constant 0 : index
    %c0_102 = arith.constant 0 : index
    %237 = vector.load %arg19[%c2_100, %c0_101, %c0_102] : memref<3x32x64xbf16, #tpu.memory_space<vmem>>, vector<1x32x64xbf16>
    %238 = vector.shape_cast %237 : vector<1x32x64xbf16> to vector<32x64xbf16>
    %cst_103 = arith.constant dense<0.000000e+00> : vector<32x256xf32>
    %239 = tpu.matmul %238, %228, %cst_103 {dimension_numbers = #tpu.dot_dimension_numbers<[1], [0], [0], [1], [0, 0, 1, 1], [], []>} : vector<32x64xbf16>, vector<64x256xbf16>, vector<32x256xf32> -> vector<32x256xf32>
    %240 = arith.truncf %239 : vector<32x256xf32> to vector<32x256xbf16>
    %241 = tpu.concatenate %232, %236, %240 in 1 : vector<32x256xbf16>, vector<32x256xbf16>, vector<32x256xbf16> -> vector<32x768xbf16>
    %c0_104 = arith.constant 0 : index
    %c0_105 = arith.constant 0 : index
    %242 = vector.load %arg20[%c0_104, %c0_105] : memref<768x256xbf16, #tpu.memory_space<vmem>>, vector<768x256xbf16>
    %cst_106 = arith.constant dense<0.000000e+00> : vector<32x256xf32>
    %243 = tpu.matmul %241, %242, %cst_106 {dimension_numbers = #tpu.dot_dimension_numbers<[1], [0], [0], [1], [0, 0, 1, 1], [], []>} : vector<32x768xbf16>, vector<768x256xbf16>, vector<32x256xf32> -> vector<32x256xf32>
    %c0_107 = arith.constant 0 : index
    %c0_108 = arith.constant 0 : index
    %244 = vector.load %arg21[%c0_107, %c0_108] : memref<1x256xf32, #tpu.memory_space<vmem>>, vector<1x256xf32>
    %245 = vector.broadcast %244 : vector<1x256xf32> to vector<32x256xf32>
    %246 = arith.addf %243, %245 : vector<32x256xf32>
    %cst_109 = arith.constant 0.000000e+00 : f32
    %247 = vector.broadcast %cst_109 : f32 to vector<32x256xf32>
    %248 = arith.maximumf %246, %247 : vector<32x256xf32>
    %249 = tpu.iota {dimensions = array<i32: 0>} : vector<32x1xi32>
    %c4_i32 = arith.constant 4 : i32
    %c0_i32_110 = arith.constant 0 : i32
    %250 = arith.cmpi eq, %c4_i32, %c0_i32_110 : i32
    %c1_i32_111 = arith.constant 1 : i32
    %251 = arith.select %250, %c1_i32_111, %c4_i32 : i32
    %252 = vector.broadcast %251 : i32 to vector<32x1xi32>
    %253 = arith.remsi %249, %252 : vector<32x1xi32>
    %c0_i32_112 = arith.constant 0 : i32
    %254 = vector.broadcast %c0_i32_112 : i32 to vector<32x1xi32>
    %255 = arith.cmpi ne, %253, %254 : vector<32x1xi32>
    %c0_i32_113 = arith.constant 0 : i32
    %256 = vector.broadcast %c0_i32_113 : i32 to vector<32x1xi32>
    %257 = arith.cmpi slt, %253, %256 : vector<32x1xi32>
    %c0_i32_114 = arith.constant 0 : i32
    %258 = arith.cmpi slt, %251, %c0_i32_114 : i32
    %259 = vector.broadcast %258 : i1 to vector<32x1xi1>
    %260 = vector.broadcast %259 : vector<32x1xi1> to vector<32x1xi1>
    %261 = arith.xori %257, %260 : vector<32x1xi1>
    %262 = arith.andi %261, %255 : vector<32x1xi1>
    %263 = vector.broadcast %251 : i32 to vector<32x1xi32>
    %264 = arith.addi %253, %263 : vector<32x1xi32>
    %265 = arith.select %262, %264, %253 : vector<32x1xi1>, vector<32x1xi32>
    %c0_i32_115 = arith.constant 0 : i32
    %266 = vector.broadcast %c0_i32_115 : i32 to vector<32x1xi32>
    %267 = arith.cmpi ne, %265, %266 : vector<32x1xi32>
    %268 = vector.extract_strided_slice %248 {offsets = [31, 0], sizes = [1, 256], strides = [1, 1]} : vector<32x256xf32> to vector<1x256xf32>
    %269 = vector.extract_strided_slice %248 {offsets = [0, 0], sizes = [31, 256], strides = [1, 1]} : vector<32x256xf32> to vector<31x256xf32>
    %270 = tpu.concatenate %268, %269 in 0 : vector<1x256xf32>, vector<31x256xf32> -> vector<32x256xf32>
    %cst_116 = arith.constant 0.000000e+00 : f32
    %271 = vector.shape_cast %267 : vector<32x1xi1> to vector<32x1xi1>
    %272 = vector.broadcast %271 : vector<32x1xi1> to vector<32x256xi1>
    %273 = vector.broadcast %cst_116 : f32 to vector<32x256xf32>
    %274 = arith.select %272, %270, %273 : vector<32x256xi1>, vector<32x256xf32>
    %c3_i32 = arith.constant 3 : i32
    %275 = vector.broadcast %c3_i32 : i32 to vector<32x1xi32>
    %276 = arith.cmpi ne, %265, %275 : vector<32x1xi32>
    %277 = vector.extract_strided_slice %248 {offsets = [1, 0], sizes = [31, 256], strides = [1, 1]} : vector<32x256xf32> to vector<31x256xf32>
    %278 = vector.extract_strided_slice %248 {offsets = [0, 0], sizes = [1, 256], strides = [1, 1]} : vector<32x256xf32> to vector<1x256xf32>
    %279 = tpu.concatenate %277, %278 in 0 : vector<31x256xf32>, vector<1x256xf32> -> vector<32x256xf32>
    %cst_117 = arith.constant 0.000000e+00 : f32
    %280 = vector.shape_cast %276 : vector<32x1xi1> to vector<32x1xi1>
    %281 = vector.broadcast %280 : vector<32x1xi1> to vector<32x256xi1>
    %282 = vector.broadcast %cst_117 : f32 to vector<32x256xf32>
    %283 = arith.select %281, %279, %282 : vector<32x256xi1>, vector<32x256xf32>
    %284 = arith.truncf %274 : vector<32x256xf32> to vector<32x256xbf16>
    %285 = arith.truncf %248 : vector<32x256xf32> to vector<32x256xbf16>
    %286 = arith.truncf %283 : vector<32x256xf32> to vector<32x256xbf16>
    %287 = tpu.concatenate %284, %285, %286 in 1 : vector<32x256xbf16>, vector<32x256xbf16>, vector<32x256xbf16> -> vector<32x768xbf16>
    %c0_118 = arith.constant 0 : index
    %c0_119 = arith.constant 0 : index
    %288 = vector.load %arg22[%c0_118, %c0_119] : memref<768x256xbf16, #tpu.memory_space<vmem>>, vector<768x256xbf16>
    %cst_120 = arith.constant dense<0.000000e+00> : vector<32x256xf32>
    %289 = tpu.matmul %287, %288, %cst_120 {dimension_numbers = #tpu.dot_dimension_numbers<[1], [0], [0], [1], [0, 0, 1, 1], [], []>} : vector<32x768xbf16>, vector<768x256xbf16>, vector<32x256xf32> -> vector<32x256xf32>
    %c0_121 = arith.constant 0 : index
    %c0_122 = arith.constant 0 : index
    %290 = vector.load %arg23[%c0_121, %c0_122] : memref<1x256xf32, #tpu.memory_space<vmem>>, vector<1x256xf32>
    %291 = vector.broadcast %290 : vector<1x256xf32> to vector<32x256xf32>
    %292 = arith.addf %289, %291 : vector<32x256xf32>
    %293 = arith.addf %292, %227 : vector<32x256xf32>
    %cst_123 = arith.constant 0.000000e+00 : f32
    %294 = vector.broadcast %cst_123 : f32 to vector<32x256xf32>
    %295 = arith.maximumf %293, %294 : vector<32x256xf32>
    %c0_124 = arith.constant 0 : index
    %c0_125 = arith.constant 0 : index
    %296 = vector.load %arg24[%c0_124, %c0_125] : memref<8x32xbf16, #tpu.memory_space<vmem>>, vector<8x32xbf16>
    %297 = arith.truncf %295 : vector<32x256xf32> to vector<32x256xbf16>
    %cst_126 = arith.constant dense<0.000000e+00> : vector<8x256xf32>
    %298 = tpu.matmul %296, %297, %cst_126 {dimension_numbers = #tpu.dot_dimension_numbers<[1], [0], [0], [1], [0, 0, 1, 1], [], []>} : vector<8x32xbf16>, vector<32x256xbf16>, vector<8x256xf32> -> vector<8x256xf32>
    %299 = arith.truncf %298 : vector<8x256xf32> to vector<8x256xbf16>
    %c0_127 = arith.constant 0 : index
    %c0_128 = arith.constant 0 : index
    %300 = vector.load %arg25[%c0_127, %c0_128] : memref<256x128xbf16, #tpu.memory_space<vmem>>, vector<256x128xbf16>
    %cst_129 = arith.constant dense<0.000000e+00> : vector<8x128xf32>
    %301 = tpu.matmul %299, %300, %cst_129 {dimension_numbers = #tpu.dot_dimension_numbers<[1], [0], [0], [1], [0, 0, 1, 1], [], []>} : vector<8x256xbf16>, vector<256x128xbf16>, vector<8x128xf32> -> vector<8x128xf32>
    %c0_130 = arith.constant 0 : index
    %c0_131 = arith.constant 0 : index
    %302 = vector.load %arg26[%c0_130, %c0_131] : memref<1x128xf32, #tpu.memory_space<vmem>>, vector<1x128xf32>
    %303 = vector.broadcast %302 : vector<1x128xf32> to vector<8x128xf32>
    %304 = arith.addf %301, %303 : vector<8x128xf32>
    %c0_132 = arith.constant 0 : index
    %c0_133 = arith.constant 0 : index
    %305 = vector.load %arg27[%c0_132, %c0_133] : memref<8x128xf32, #tpu.memory_space<vmem>>, vector<8x128xf32>
    tpu.vector_store %arg27[%c0_132, %c0_133], %304 {strides = array<i32>} : memref<8x128xf32, #tpu.memory_space<vmem>>, vector<8x128xf32>,
    %cst_134 = arith.constant dense<0xFF800000> : vector<8xf32>
    %306 = vector.multi_reduction <maximumf>, %304, %cst_134 [1] : vector<8x128xf32> to vector<8xf32>
    %307 = vector.shape_cast %306 : vector<8xf32> to vector<8x1xf32>
    %308 = vector.broadcast %307 : vector<8x1xf32> to vector<8x128xf32>
    %309 = arith.subf %304, %308 : vector<8x128xf32>
    %310 = math.exp %309 : vector<8x128xf32>
    %cst_135 = arith.constant dense<0.000000e+00> : vector<8xf32>
    %311 = vector.multi_reduction <add>, %310, %cst_135 [1] : vector<8x128xf32> to vector<8xf32>
    %312 = vector.shape_cast %311 : vector<8xf32> to vector<8x1xf32>
    %313 = math.log %312 : vector<8x1xf32>
    %314 = arith.addf %313, %307 : vector<8x1xf32>
    %c0_136 = arith.constant 0 : index
    %c0_137 = arith.constant 0 : index
    %315 = vector.load %arg1[%c0_136, %c0_137] : memref<8x128xf32, #tpu.memory_space<vmem>>, vector<8x128xf32>
    %316 = arith.mulf %304, %315 : vector<8x128xf32>
    %cst_138 = arith.constant dense<0.000000e+00> : vector<8xf32>
    %317 = vector.multi_reduction <add>, %316, %cst_138 [1] : vector<8x128xf32> to vector<8xf32>
    %318 = vector.shape_cast %317 : vector<8xf32> to vector<8x1xf32>
    %319 = arith.subf %314, %318 : vector<8x1xf32>
    %cst_139 = arith.constant dense<0.000000e+00> : vector<1xf32>
    %320 = vector.multi_reduction <add>, %319, %cst_139 [0] : vector<8x1xf32> to vector<1xf32>
    %321 = vector.shape_cast %320 : vector<1xf32> to vector<1x1xf32>
    %cst_140 = arith.constant 8.000000e+00 : f32
    %322 = vector.broadcast %cst_140 : f32 to vector<1x1xf32>
    %323 = arith.divf %321, %322 : vector<1x1xf32>
    %c0_141 = arith.constant 0 : index
    %c0_142 = arith.constant 0 : index
    %324 = vector.load %arg28[%c0_141, %c0_142] : memref<1x1xf32, #tpu.memory_space<vmem>>, vector<1x1xf32>
    tpu.vector_store %arg28[%c0_141, %c0_142], %323 {strides = array<i32>} : memref<1x1xf32, #tpu.memory_space<vmem>>, vector<1x1xf32>,
    return
  }
}

</mosaic_0001>

<llo_original>
// kernel: _forward.1
$region0: #{_forward.1}
  #allocation0 [shape = 'u32[]', space=smem, size = 0x4, offset = 0x4, fixed_abs, tag = 'smem constant byte address 0x4 - core index']
  #allocation1 [shape = 'u32[72,128]{1,0:T(1,128)}', space=vmem, size = 0x9000, scoped, tag = 'internal scratch']
  %s0 = inlined_call_operand.vmem [shape: f32[128,128], index: 0, kind: input, shape index: {}]
  %s1 = inlined_call_operand.vmem [shape: f32[8,128], index: 1, kind: input, shape index: {}]
  %s2 = inlined_call_operand.vmem [shape: bf16[384,256], index: 2, kind: input, shape index: {}]
  %s3 = inlined_call_operand.vmem [shape: f32[1,256], index: 3, kind: input, shape index: {}]
  %s4 = inlined_call_operand.vmem [shape: bf16[768,256], index: 4, kind: input, shape index: {}]
  %s5 = inlined_call_operand.vmem [shape: f32[1,256], index: 5, kind: input, shape index: {}]
  %s6 = inlined_call_operand.vmem [shape: bf16[768,256], index: 6, kind: input, shape index: {}]
  %s7 = inlined_call_operand.hbm [shape: f32[1,256], index: 7, kind: input, shape index: {}]
  %s8 = inlined_call_operand.hbm [shape: bf16[1,64,128], index: 8, kind: input, shape index: {}]
  %s9 = inlined_call_operand.hbm [shape: bf16[256,256], index: 9, kind: input, shape index: {}]
  %s10 = inlined_call_operand.hbm [shape: f32[1,256], index: 10, kind: input, shape index: {}]
  %s11 = inlined_call_operand.hbm [shape: bf16[3,64,128], index: 11, kind: input, shape index: {}]
  %s12 = inlined_call_operand.vmem [shape: bf16[768,256], index: 12, kind: input, shape index: {}]
  %s13 = inlined_call_operand.hbm [shape: f32[1,256], index: 13, kind: input, shape index: {}]
  %s14 = inlined_call_operand.vmem [shape: bf16[768,256], index: 14, kind: input, shape index: {}]
  %s15 = inlined_call_operand.hbm [shape: f32[1,256], index: 15, kind: input, shape index: {}]
  %s16 = inlined_call_operand.hbm [shape: bf16[1,32,64], index: 16, kind: input, shape index: {}]
  %s17 = inlined_call_operand.hbm [shape: bf16[256,256], index: 17, kind: input, shape index: {}]
  %s18 = inlined_call_operand.hbm [shape: f32[1,256], index: 18, kind: input, shape index: {}]
  %s19 = inlined_call_operand.hbm [shape: bf16[3,32,64], index: 19, kind: input, shape index: {}]
  %s20 = inlined_call_operand.hbm [shape: bf16[768,256], index: 20, kind: input, shape index: {}]
  %s21 = inlined_call_operand.hbm [shape: f32[1,256], index: 21, kind: input, shape index: {}]
  %s22 = inlined_call_operand.hbm [shape: bf16[768,256], index: 22, kind: input, shape index: {}]
  %s23 = inlined_call_operand.hbm [shape: f32[1,256], index: 23, kind: input, shape index: {}]
  %s24 = inlined_call_operand.vmem [shape: bf16[8,32], index: 24, kind: input, shape index: {}]
  %s25 = inlined_call_operand.vmem [shape: bf16[256,128], index: 25, kind: input, shape index: {}]
  %s26 = inlined_call_operand.vmem [shape: f32[1,128], index: 26, kind: input, shape index: {}]
  %s27 = inlined_call_operand.hbm [shape: f32[8,128], index: 27, kind: output, shape index: {0}]
  %s28 = inlined_call_operand.hbm [shape: f32[1,1], index: 28, kind: output, shape index: {1}]
  %29 = xla_tuple %s27, %s28
  %s30 = sld [smem:[#allocation0]]
  $region186: #{_forward.1} parent=0
    _
  %s32 = ssub.s32 1, %s30
  %s33 = scalar_select 0, %s32, %s30
  $region1: #{_forward.1} parent=0
    #allocation2 [shape = 'u8[1024]{0}', space=vmem, size = 0x400, scoped, tag = 'input window, operand 7, single buffered']
    #allocation3 [shape = 's32[1]{0}', space=sflag, size = 0x4, scoped, tag = 'scoped memory for _forward.1']
    #allocation4 [shape = 's32[1]{0}', space=sflag, size = 0x4, scoped, tag = 'scoped memory for _forward.1']
    #allocation5 [shape = 'u8[16384]{0}', space=vmem, size = 0x4000, scoped, tag = 'input window, operand 8, single buffered']
    #allocation6 [shape = 's32[1]{0}', space=sflag, size = 0x4, scoped, tag = 'scoped memory for _forward.1']
    #allocation7 [shape = 'u8[131072]{0}', space=vmem, size = 0x20000, scoped, tag = 'input window, operand 9, single buffered']
    #allocation8 [shape = 'u8[1024]{0}', space=vmem, size = 0x400, scoped, tag = 'input window, operand 10, single buffered']
    #allocation9 [shape = 's32[1]{0}', space=sflag, size = 0x4, scoped, tag = 'scoped memory for _forward.1']
    #allocation10 [shape = 'u8[49152]{0}', space=vmem, size = 0xc000, scoped, tag = 'input window, operand 11, single buffered']
    #allocation11 [shape = 'u8[1024]{0}', space=vmem, size = 0x400, scoped, tag = 'input window, operand 13, single buffered']
    #allocation12 [shape = 's32[1]{0}', space=sflag, size = 0x4, scoped, tag = 'scoped memory for _forward.1']
    #allocation13 [shape = 'u8[1024]{0}', space=vmem, size = 0x400, scoped, tag = 'input window, operand 15, single buffered']
    #allocation14 [shape = 'u8[8192]{0}', space=vmem, size = 0x2000, scoped, tag = 'input window, operand 16, single buffered']
    #allocation15 [shape = 's32[1]{0}', space=sflag, size = 0x4, scoped, tag = 'scoped memory for _forward.1']
    #allocation16 [shape = 'u8[131072]{0}', space=vmem, size = 0x20000, scoped, tag = 'input window, operand 17, single buffered']
    #allocation17 [shape = 'u8[1024]{0}', space=vmem, size = 0x400, scoped, tag = 'input window, operand 18, single buffered']
    #allocation18 [shape = 's32[1]{0}', space=sflag, size = 0x4, scoped, tag = 'scoped memory for _forward.1']
    #allocation19 [shape = 'u8[24576]{0}', space=vmem, size = 0x6000, scoped, tag = 'input window, operand 19, single buffered']
    #allocation20 [shape = 'u8[393216]{0}', space=vmem, size = 0x60000, scoped, tag = 'input window, operand 20, single buffered']
    #allocation21 [shape = 's32[1]{0}', space=sflag, size = 0x4, scoped, tag = 'scoped memory for _forward.1']
    #allocation22 [shape = 'u8[1024]{0}', space=vmem, size = 0x400, scoped, tag = 'input window, operand 21, single buffered']
    #allocation23 [shape = 'u8[393216]{0}', space=vmem, size = 0x60000, scoped, tag = 'input window, operand 22, single buffered']
    #allocation24 [shape = 's32[1]{0}', space=sflag, size = 0x4, scoped, tag = 'scoped memory for _forward.1']
    #allocation25 [shape = 'u8[1024]{0}', space=vmem, size = 0x400, scoped, tag = 'input window, operand 23, single buffered']
    #allocation26 [shape = 'u8[4096]{0}', space=vmem, size = 0x1000, scoped, tag = 'output window, operand 0, single buffered']
    #allocation27 [shape = 'u8[512]{0}', space=vmem, size = 0x400, scoped, tag = 'output window, operand 1, single buffered']
    #allocation28 [shape = 's32[1]{0}', space=sflag, size = 0x4, scoped, tag = 'scoped memory for _forward.1']
    %34 = vsyncpa [#allocation3], 0
    %35 = vsyncpa [#allocation6], 0
    %36 = vsyncpa [#allocation9], 0
    %37 = vsyncpa [#allocation12], 0
    %38 = vsyncpa [#allocation15], 0
    %39 = vsyncpa [#allocation18], 0
    %40 = vsyncpa [#allocation21], 0
    %41 = vsyncpa [#allocation24], 0
    %42 = vsyncpa [#allocation4], 0
    %43 = vsyncpa [#allocation28], 0
    // Predicated region
    $region2: #{_forward.1} parent=1 // pred_check
      _
    $region3: #{_forward.1} parent=1 // pred_check_branch
      %45 = sbr.rel (0) target = $region5
    $region4: #{_forward.1} parent=1 // pred_region
      _
    $region5: #{_forward.1} parent=1 // pred_fallthru
      _
    // Predicated region
    $region6: #{_forward.1} parent=1 // pred_check
      _
    $region7: #{_forward.1} parent=1 // pred_check_branch
      %47 = sbr.rel (0) target = $region9
    $region8: #{_forward.1} parent=1 // pred_region
      _
    $region9: #{_forward.1} parent=1 // pred_fallthru
      _
    // Predicated region
    $region10: #{_forward.1} parent=1 // pred_check
      _
    $region11: #{_forward.1} parent=1 // pred_check_branch
      %49 = sbr.rel (0) target = $region13
    $region12: #{_forward.1} parent=1 // pred_region
      _
    $region13: #{_forward.1} parent=1 // pred_fallthru
      _
    // Predicated region
    $region14: #{_forward.1} parent=1 // pred_check
      _
    $region15: #{_forward.1} parent=1 // pred_check_branch
      %51 = sbr.rel (0) target = $region17
    $region16: #{_forward.1} parent=1 // pred_region
      _
    $region17: #{_forward.1} parent=1 // pred_fallthru
      _
    // Predicated region
    $region18: #{_forward.1} parent=1 // pred_check
      _
    $region19: #{_forward.1} parent=1 // pred_check_branch
      %53 = sbr.rel (0) target = $region21
    $region20: #{_forward.1} parent=1 // pred_region
      _
    $region21: #{_forward.1} parent=1 // pred_fallthru
      _
    // Predicated region
    $region22: #{_forward.1} parent=1 // pred_check
      _
    $region23: #{_forward.1} parent=1 // pred_check_branch
      %55 = sbr.rel (0) target = $region25
    $region24: #{_forward.1} parent=1 // pred_region
      _
    $region25: #{_forward.1} parent=1 // pred_fallthru
      _
    // Predicated region
    $region26: #{_forward.1} parent=1 // pred_check
      _
    $region27: #{_forward.1} parent=1 // pred_check_branch
      %57 = sbr.rel (0) target = $region29
    $region28: #{_forward.1} parent=1 // pred_region
      _
    $region29: #{_forward.1} parent=1 // pred_fallthru
      _
    // Predicated region
    $region30: #{_forward.1} parent=1 // pred_check
      _
    $region31: #{_forward.1} parent=1 // pred_check_branch
      %59 = sbr.rel (0) target = $region33
    $region32: #{_forward.1} parent=1 // pred_region
      %61 = vsyncadd [#allocation3], 0
      %s63 = sshll.u32 %s7, 4
      %s64 = int_to_ptr.hbm [resolvable:$true] %s63
      %s65 = sshll.u32 [#allocation2], 4
      %s66 = int_to_ptr.vmem [resolvable:$true] %s65
      %68 = dma.hbm_to_vmem [thread:$0]  %s64, 32, %s66, [#allocation3]
    $region33: #{_forward.1} parent=1 // pred_fallthru
      _
    // Predicated region
    $region34: #{_forward.1} parent=1 // pred_check
      _
    $region35: #{_forward.1} parent=1 // pred_check_branch
      %70 = sbr.rel (0) target = $region37
    $region36: #{_forward.1} parent=1 // pred_region
      %72 = vsyncadd [#allocation6], 0
      %s73 = sshll.u32 %s8, 4
      %s74 = int_to_ptr.hbm [resolvable:$true] %s73
      %s75 = sshll.u32 [#allocation5], 4
      %s76 = int_to_ptr.vmem [resolvable:$true] %s75
      %81 = dma.hbm_to_vmem [thread:$0]  %s74, 512, %s76, [#allocation6], 64, 64, 4
    $region37: #{_forward.1} parent=1 // pred_fallthru
      _
    // Predicated region
    $region38: #{_forward.1} parent=1 // pred_check
      _
    $region39: #{_forward.1} parent=1 // pred_check_branch
      %83 = sbr.rel (0) target = $region41
    $region40: #{_forward.1} parent=1 // pred_region
      %85 = vsyncadd [#allocation6], 0
      %s86 = sshll.u32 %s9, 4
      %s87 = int_to_ptr.hbm [resolvable:$true] %s86
      %s88 = sshll.u32 [#allocation7], 4
      %s89 = int_to_ptr.vmem [resolvable:$true] %s88
      %94 = dma.hbm_to_vmem [thread:$0]  %s87, 4096, %s89, [#allocation6], 128, 128, 8
    $region41: #{_forward.1} parent=1 // pred_fallthru
      _
    // Predicated region
    $region42: #{_forward.1} parent=1 // pred_check
      _
    $region43: #{_forward.1} parent=1 // pred_check_branch
      %96 = sbr.rel (0) target = $region45
    $region44: #{_forward.1} parent=1 // pred_region
      %98 = vsyncadd [#allocation9], 0
      %s100 = sshll.u32 %s10, 4
      %s101 = int_to_ptr.hbm [resolvable:$true] %s100
      %s102 = sshll.u32 [#allocation8], 4
      %s103 = int_to_ptr.vmem [resolvable:$true] %s102
      %105 = dma.hbm_to_vmem [thread:$0]  %s101, 32, %s103, [#allocation9]
    $region45: #{_forward.1} parent=1 // pred_fallthru
      _
    // Predicated region
    $region46: #{_forward.1} parent=1 // pred_check
      _
    $region47: #{_forward.1} parent=1 // pred_check_branch
      %107 = sbr.rel (0) target = $region49
    $region48: #{_forward.1} parent=1 // pred_region
      %109 = vsyncadd [#allocation9], 0
      %s110 = sshll.u32 %s11, 4
      %s111 = int_to_ptr.hbm [resolvable:$true] %s110
      %s112 = sshll.u32 [#allocation10], 4
      %s113 = int_to_ptr.vmem [resolvable:$true] %s112
      %118 = dma.hbm_to_vmem [thread:$0]  %s111, 1536, %s113, [#allocation9], 64, 64, 4
    $region49: #{_forward.1} parent=1 // pred_fallthru
      _
    // Predicated region
    $region50: #{_forward.1} parent=1 // pred_check
      _
    $region51: #{_forward.1} parent=1 // pred_check_branch
      %120 = sbr.rel (0) target = $region53
    $region52: #{_forward.1} parent=1 // pred_region
      _
    $region53: #{_forward.1} parent=1 // pred_fallthru
      _
    // Predicated region
    $region54: #{_forward.1} parent=1 // pred_check
      _
    $region55: #{_forward.1} parent=1 // pred_check_branch
      %122 = sbr.rel (0) target = $region57
    $region56: #{_forward.1} parent=1 // pred_region
      %124 = vsyncadd [#allocation12], 0
      %s126 = sshll.u32 %s13, 4
      %s127 = int_to_ptr.hbm [resolvable:$true] %s126
      %s128 = sshll.u32 [#allocation11], 4
      %s129 = int_to_ptr.vmem [resolvable:$true] %s128
      %131 = dma.hbm_to_vmem [thread:$0]  %s127, 32, %s129, [#allocation12]
    $region57: #{_forward.1} parent=1 // pred_fallthru
      _
    // Predicated region
    $region58: #{_forward.1} parent=1 // pred_check
      _
    $region59: #{_forward.1} parent=1 // pred_check_branch
      %133 = sbr.rel (0) target = $region61
    $region60: #{_forward.1} parent=1 // pred_region
      _
    $region61: #{_forward.1} parent=1 // pred_fallthru
      _
    // Predicated region
    $region62: #{_forward.1} parent=1 // pred_check
      _
    $region63: #{_forward.1} parent=1 // pred_check_branch
      %135 = sbr.rel (0) target = $region65
    $region64: #{_forward.1} parent=1 // pred_region
      %137 = vsyncadd [#allocation12], 0
      %s139 = sshll.u32 %s15, 4
      %s140 = int_to_ptr.hbm [resolvable:$true] %s139
      %s141 = sshll.u32 [#allocation13], 4
      %s142 = int_to_ptr.vmem [resolvable:$true] %s141
      %144 = dma.hbm_to_vmem [thread:$0]  %s140, 32, %s142, [#allocation12]
    $region65: #{_forward.1} parent=1 // pred_fallthru
      _
    // Predicated region
    $region66: #{_forward.1} parent=1 // pred_check
      _
    $region67: #{_forward.1} parent=1 // pred_check_branch
      %146 = sbr.rel (0) target = $region69
    $region68: #{_forward.1} parent=1 // pred_region
      %148 = vsyncadd [#allocation15], 0
      %s149 = sshll.u32 %s16, 4
      %s150 = int_to_ptr.hbm [resolvable:$true] %s149
      %s151 = sshll.u32 [#allocation14], 4
      %s152 = int_to_ptr.vmem [resolvable:$true] %s151
      %157 = dma.hbm_to_vmem [thread:$0]  %s150, 256, %s152, [#allocation15], 64, 64, 4
    $region69: #{_forward.1} parent=1 // pred_fallthru
      _
    // Predicated region
    $region70: #{_forward.1} parent=1 // pred_check
      _
    $region71: #{_forward.1} parent=1 // pred_check_branch
      %159 = sbr.rel (0) target = $region73
    $region72: #{_forward.1} parent=1 // pred_region
      %161 = vsyncadd [#allocation15], 0
      %s162 = sshll.u32 %s17, 4
      %s163 = int_to_ptr.hbm [resolvable:$true] %s162
      %s164 = sshll.u32 [#allocation16], 4
      %s165 = int_to_ptr.vmem [resolvable:$true] %s164
      %170 = dma.hbm_to_vmem [thread:$0]  %s163, 4096, %s165, [#allocation15], 128, 128, 8
    $region73: #{_forward.1} parent=1 // pred_fallthru
      _
    // Predicated region
    $region74: #{_forward.1} parent=1 // pred_check
      _
    $region75: #{_forward.1} parent=1 // pred_check_branch
      %172 = sbr.rel (0) target = $region77
    $region76: #{_forward.1} parent=1 // pred_region
      %174 = vsyncadd [#allocation18], 0
      %s176 = sshll.u32 %s18, 4
      %s177 = int_to_ptr.hbm [resolvable:$true] %s176
      %s178 = sshll.u32 [#allocation17], 4
      %s179 = int_to_ptr.vmem [resolvable:$true] %s178
      %181 = dma.hbm_to_vmem [thread:$0]  %s177, 32, %s179, [#allocation18]
    $region77: #{_forward.1} parent=1 // pred_fallthru
      _
    // Predicated region
    $region78: #{_forward.1} parent=1 // pred_check
      _
    $region79: #{_forward.1} parent=1 // pred_check_branch
      %183 = sbr.rel (0) target = $region81
    $region80: #{_forward.1} parent=1 // pred_region
      %185 = vsyncadd [#allocation18], 0
      %s186 = sshll.u32 %s19, 4
      %s187 = int_to_ptr.hbm [resolvable:$true] %s186
      %s188 = sshll.u32 [#allocation19], 4
      %s189 = int_to_ptr.vmem [resolvable:$true] %s188
      %194 = dma.hbm_to_vmem [thread:$0]  %s187, 768, %s189, [#allocation18], 64, 64, 4
    $region81: #{_forward.1} parent=1 // pred_fallthru
      _
    // Predicated region
    $region82: #{_forward.1} parent=1 // pred_check
      _
    $region83: #{_forward.1} parent=1 // pred_check_branch
      %196 = sbr.rel (0) target = $region85
    $region84: #{_forward.1} parent=1 // pred_region
      %198 = vsyncadd [#allocation21], 0
      %s199 = sshll.u32 %s20, 4
      %s200 = int_to_ptr.hbm [resolvable:$true] %s199
      %s201 = sshll.u32 [#allocation20], 4
      %s202 = int_to_ptr.vmem [resolvable:$true] %s201
      %207 = dma.hbm_to_vmem [thread:$0]  %s200, 12288, %s202, [#allocation21], 128, 128, 8
    $region85: #{_forward.1} parent=1 // pred_fallthru
      _
    // Predicated region
    $region86: #{_forward.1} parent=1 // pred_check
      _
    $region87: #{_forward.1} parent=1 // pred_check_branch
      %209 = sbr.rel (0) target = $region89
    $region88: #{_forward.1} parent=1 // pred_region
      %211 = vsyncadd [#allocation21], 0
      %s213 = sshll.u32 %s21, 4
      %s214 = int_to_ptr.hbm [resolvable:$true] %s213
      %s215 = sshll.u32 [#allocation22], 4
      %s216 = int_to_ptr.vmem [resolvable:$true] %s215
      %218 = dma.hbm_to_vmem [thread:$0]  %s214, 32, %s216, [#allocation21]
    $region89: #{_forward.1} parent=1 // pred_fallthru
      _
    // Predicated region
    $region90: #{_forward.1} parent=1 // pred_check
      _
    $region91: #{_forward.1} parent=1 // pred_check_branch
      %220 = sbr.rel (0) target = $region93
    $region92: #{_forward.1} parent=1 // pred_region
      %222 = vsyncadd [#allocation24], 0
      %s223 = sshll.u32 %s22, 4
      %s224 = int_to_ptr.hbm [resolvable:$true] %s223
      %s225 = sshll.u32 [#allocation23], 4
      %s226 = int_to_ptr.vmem [resolvable:$true] %s225
      %231 = dma.hbm_to_vmem [thread:$0]  %s224, 12288, %s226, [#allocation24], 128, 128, 8
    $region93: #{_forward.1} parent=1 // pred_fallthru
      _
    // Predicated region
    $region94: #{_forward.1} parent=1 // pred_check
      _
    $region95: #{_forward.1} parent=1 // pred_check_branch
      %233 = sbr.rel (0) target = $region97
    $region96: #{_forward.1} parent=1 // pred_region
      %235 = vsyncadd [#allocation24], 0
      %s237 = sshll.u32 %s23, 4
      %s238 = int_to_ptr.hbm [resolvable:$true] %s237
      %s239 = sshll.u32 [#allocation25], 4
      %s240 = int_to_ptr.vmem [resolvable:$true] %s239
      %242 = dma.hbm_to_vmem [thread:$0]  %s238, 32, %s240, [#allocation24]
    $region97: #{_forward.1} parent=1 // pred_fallthru
      _
    // Predicated region
    $region98: #{_forward.1} parent=1 // pred_check
      _
    $region99: #{_forward.1} parent=1 // pred_check_branch
      %244 = sbr.rel (0) target = $region101
    $region100: #{_forward.1} parent=1 // pred_region
      _
    $region101: #{_forward.1} parent=1 // pred_fallthru
      _
    // Predicated region
    $region102: #{_forward.1} parent=1 // pred_check
      _
    $region103: #{_forward.1} parent=1 // pred_check_branch
      %246 = sbr.rel (0) target = $region105
    $region104: #{_forward.1} parent=1 // pred_region
      _
    $region105: #{_forward.1} parent=1 // pred_fallthru
      _
    // Predicated region
    $region106: #{_forward.1} parent=1 // pred_check
      _
    $region107: #{_forward.1} parent=1 // pred_check_branch
      %248 = sbr.rel (0) target = $region109
    $region108: #{_forward.1} parent=1 // pred_region
      _
    $region109: #{_forward.1} parent=1 // pred_fallthru
      _
    // Predicated region
    $region110: #{_forward.1} parent=1 // pred_check
      _
    $region111: #{_forward.1} parent=1 // pred_check_branch
      %250 = sbr.rel (0) target = $region113
    $region112: #{_forward.1} parent=1 // pred_region
      %252 = dma.done [#allocation3], 32
    $region113: #{_forward.1} parent=1 // pred_fallthru
      _
    // Predicated region
    $region114: #{_forward.1} parent=1 // pred_check
      _
    $region115: #{_forward.1} parent=1 // pred_check_branch
      %254 = sbr.rel (0) target = $region117
    $region116: #{_forward.1} parent=1 // pred_region
      %256 = dma.done [#allocation6], 512
    $region117: #{_forward.1} parent=1 // pred_fallthru
      _
    // Predicated region
    $region118: #{_forward.1} parent=1 // pred_check
      _
    $region119: #{_forward.1} parent=1 // pred_check_branch
      %258 = sbr.rel (0) target = $region121
    $region120: #{_forward.1} parent=1 // pred_region
      %260 = dma.done [#allocation6], 4096
    $region121: #{_forward.1} parent=1 // pred_fallthru
      _
    // Predicated region
    $region122: #{_forward.1} parent=1 // pred_check
      _
    $region123: #{_forward.1} parent=1 // pred_check_branch
      %262 = sbr.rel (0) target = $region125
    $region124: #{_forward.1} parent=1 // pred_region
      %264 = dma.done [#allocation9], 32
    $region125: #{_forward.1} parent=1 // pred_fallthru
      _
    // Predicated region
    $region126: #{_forward.1} parent=1 // pred_check
      _
    $region127: #{_forward.1} parent=1 // pred_check_branch
      %266 = sbr.rel (0) target = $region129
    $region128: #{_forward.1} parent=1 // pred_region
      %268 = dma.done [#allocation9], 1536
    $region129: #{_forward.1} parent=1 // pred_fallthru
      _
    // Predicated region
    $region130: #{_forward.1} parent=1 // pred_check
      _
    $region131: #{_forward.1} parent=1 // pred_check_branch
      %270 = sbr.rel (0) target = $region133
    $region132: #{_forward.1} parent=1 // pred_region
      %272 = dma.done [#allocation12], 32
    $region133: #{_forward.1} parent=1 // pred_fallthru
      _
    // Predicated region
    $region134: #{_forward.1} parent=1 // pred_check
      _
    $region135: #{_forward.1} parent=1 // pred_check_branch
      %274 = sbr.rel (0) target = $region137
    $region136: #{_forward.1} parent=1 // pred_region
      %276 = dma.done [#allocation12], 32
    $region137: #{_forward.1} parent=1 // pred_fallthru
      _
    // Predicated region
    $region138: #{_forward.1} parent=1 // pred_check
      _
    $region139: #{_forward.1} parent=1 // pred_check_branch
      %278 = sbr.rel (0) target = $region141
    $region140: #{_forward.1} parent=1 // pred_region
      %280 = dma.done [#allocation15], 256
    $region141: #{_forward.1} parent=1 // pred_fallthru
      _
    // Predicated region
    $region142: #{_forward.1} parent=1 // pred_check
      _
    $region143: #{_forward.1} parent=1 // pred_check_branch
      %282 = sbr.rel (0) target = $region145
    $region144: #{_forward.1} parent=1 // pred_region
      %284 = dma.done [#allocation15], 4096
    $region145: #{_forward.1} parent=1 // pred_fallthru
      _
    // Predicated region
    $region146: #{_forward.1} parent=1 // pred_check
      _
    $region147: #{_forward.1} parent=1 // pred_check_branch
      %286 = sbr.rel (0) target = $region149
    $region148: #{_forward.1} parent=1 // pred_region
      %288 = dma.done [#allocation18], 32
    $region149: #{_forward.1} parent=1 // pred_fallthru
      _
    // Predicated region
    $region150: #{_forward.1} parent=1 // pred_check
      _
    $region151: #{_forward.1} parent=1 // pred_check_branch
      %290 = sbr.rel (0) target = $region153
    $region152: #{_forward.1} parent=1 // pred_region
      %292 = dma.done [#allocation18], 768
    $region153: #{_forward.1} parent=1 // pred_fallthru
      _
    // Predicated region
    $region154: #{_forward.1} parent=1 // pred_check
      _
    $region155: #{_forward.1} parent=1 // pred_check_branch
      %294 = sbr.rel (0) target = $region157
    $region156: #{_forward.1} parent=1 // pred_region
      %296 = dma.done [#allocation21], 12288
    $region157: #{_forward.1} parent=1 // pred_fallthru
      _
    // Predicated region
    $region158: #{_forward.1} parent=1 // pred_check
      _
    $region159: #{_forward.1} parent=1 // pred_check_branch
      %298 = sbr.rel (0) target = $region161
    $region160: #{_forward.1} parent=1 // pred_region
      %300 = dma.done [#allocation21], 32
    $region161: #{_forward.1} parent=1 // pred_fallthru
      _
    // Predicated region
    $region162: #{_forward.1} parent=1 // pred_check
      _
    $region163: #{_forward.1} parent=1 // pred_check_branch
      %302 = sbr.rel (0) target = $region165
    $region164: #{_forward.1} parent=1 // pred_region
      %304 = dma.done [#allocation24], 12288
    $region165: #{_forward.1} parent=1 // pred_fallthru
      _
    // Predicated region
    $region166: #{_forward.1} parent=1 // pred_check
      _
    $region167: #{_forward.1} parent=1 // pred_check_branch
      %306 = sbr.rel (0) target = $region169
    $region168: #{_forward.1} parent=1 // pred_region
      %308 = dma.done [#allocation24], 32
    $region169: #{_forward.1} parent=1 // pred_fallthru
      _
    %v310 = vld [vmem:[%s0] sm:$0xff]
    %v311 = vld [vmem:[%s0 + $0x8] sm:$0xff]
    %v312 = vld [vmem:[%s0 + $0x10] sm:$0xff]
    %v313 = vld [vmem:[%s0 + $0x18] sm:$0xff]
    %v314 = vld [vmem:[%s0 + $0x20] sm:$0xff]
    %v315 = vld [vmem:[%s0 + $0x28] sm:$0xff]
    %v316 = vld [vmem:[%s0 + $0x30] sm:$0xff]
    %v317 = vld [vmem:[%s0 + $0x38] sm:$0xff]
    %v318 = vld [vmem:[%s0 + $0x40] sm:$0xff]
    %v319 = vld [vmem:[%s0 + $0x48] sm:$0xff]
    %v320 = vld [vmem:[%s0 + $0x50] sm:$0xff]
    %v321 = vld [vmem:[%s0 + $0x58] sm:$0xff]
    %v322 = vld [vmem:[%s0 + $0x60] sm:$0xff]
    %v323 = vld [vmem:[%s0 + $0x68] sm:$0xff]
    %v324 = vld [vmem:[%s0 + $0x70] sm:$0xff]
    %v325 = vld [vmem:[%s0 + $0x78] sm:$0xff]
    %v326 = vlaneseq
    %v327 = vshrl.u32 %v326, 7
    %v328 = vadd.s32 %v327, 8
    %v329 = vadd.s32 %v327, 16
    %v330 = vadd.s32 %v327, 24
    %v331 = vadd.s32 %v327, 32
    %v332 = vadd.s32 %v327, 40
    %v333 = vadd.s32 %v327, 48
    %v334 = vadd.s32 %v327, 56
    %v335 = vadd.s32 %v327, 64
    %v336 = vadd.s32 %v327, 72
    %v337 = vadd.s32 %v327, 80
    %v338 = vadd.s32 %v327, 88
    %v339 = vadd.s32 %v327, 96
    %v340 = vadd.s32 %v327, 104
    %v341 = vadd.s32 %v327, 112
    %v342 = vadd.s32 %v327, 120
    %vm343 = vcmp.lt.s32.totalorder %v327, 0
    %v344 = vsub.s32 0, %v327
    %v345 = vsel %vm343, %v344, %v327
    %v346 = vshrl.u32 %v345, 4
    %v347 = vand.u32 %v345, 15
    %v348 = vsub.s32 0, %v347
    %v349 = vsel %vm343, %v348, %v347
    %vm350 = vcmp.lt.s32.totalorder %v328, 0
    %v351 = vsub.s32 0, %v328
    %v352 = vsel %vm350, %v351, %v328
    %v353 = vshrl.u32 %v352, 4
    %v354 = vand.u32 %v352, 15
    %v355 = vsub.s32 0, %v354
    %v356 = vsel %vm350, %v355, %v354
    %vm357 = vcmp.lt.s32.totalorder %v329, 0
    %v358 = vsub.s32 0, %v329
    %v359 = vsel %vm357, %v358, %v329
    %v360 = vshrl.u32 %v359, 4
    %v361 = vand.u32 %v359, 15
    %v362 = vsub.s32 0, %v361
    %v363 = vsel %vm357, %v362, %v361
    %vm364 = vcmp.lt.s32.totalorder %v330, 0
    %v365 = vsub.s32 0, %v330
    %v366 = vsel %vm364, %v365, %v330
    %v367 = vshrl.u32 %v366, 4
    %v368 = vand.u32 %v366, 15
    %v369 = vsub.s32 0, %v368
    %v370 = vsel %vm364, %v369, %v368
    %vm371 = vcmp.lt.s32.totalorder %v331, 0
    %v372 = vsub.s32 0, %v331
    %v373 = vsel %vm371, %v372, %v331
    %v374 = vshrl.u32 %v373, 4
    %v375 = vand.u32 %v373, 15
    %v376 = vsub.s32 0, %v375
    %v377 = vsel %vm371, %v376, %v375
    %vm378 = vcmp.lt.s32.totalorder %v332, 0
    %v379 = vsub.s32 0, %v332
    %v380 = vsel %vm378, %v379, %v332
    %v381 = vshrl.u32 %v380, 4
    %v382 = vand.u32 %v380, 15
    %v383 = vsub.s32 0, %v382
    %v384 = vsel %vm378, %v383, %v382
    %vm385 = vcmp.lt.s32.totalorder %v333, 0
    %v386 = vsub.s32 0, %v333
    %v387 = vsel %vm385, %v386, %v333
    %v388 = vshrl.u32 %v387, 4
    %v389 = vand.u32 %v387, 15
    %v390 = vsub.s32 0, %v389
    %v391 = vsel %vm385, %v390, %v389
    %vm392 = vcmp.lt.s32.totalorder %v334, 0
    %v393 = vsub.s32 0, %v334
    %v394 = vsel %vm392, %v393, %v334
    %v395 = vshrl.u32 %v394, 4
    %v396 = vand.u32 %v394, 15
    %v397 = vsub.s32 0, %v396
    %v398 = vsel %vm392, %v397, %v396
    %vm399 = vcmp.lt.s32.totalorder %v335, 0
    %v400 = vsub.s32 0, %v335
    %v401 = vsel %vm399, %v400, %v335
    %v402 = vshrl.u32 %v401, 4
    %v403 = vand.u32 %v401, 15
    %v404 = vsub.s32 0, %v403
    %v405 = vsel %vm399, %v404, %v403
    %vm406 = vcmp.lt.s32.totalorder %v336, 0
    %v407 = vsub.s32 0, %v336
    %v408 = vsel %vm406, %v407, %v336
    %v409 = vshrl.u32 %v408, 4
    %v410 = vand.u32 %v408, 15
    %v411 = vsub.s32 0, %v410
    %v412 = vsel %vm406, %v411, %v410
    %vm413 = vcmp.lt.s32.totalorder %v337, 0
    %v414 = vsub.s32 0, %v337
    %v415 = vsel %vm413, %v414, %v337
    %v416 = vshrl.u32 %v415, 4
    %v417 = vand.u32 %v415, 15
    %v418 = vsub.s32 0, %v417
    %v419 = vsel %vm413, %v418, %v417
    %vm420 = vcmp.lt.s32.totalorder %v338, 0
    %v421 = vsub.s32 0, %v338
    %v422 = vsel %vm420, %v421, %v338
    %v423 = vshrl.u32 %v422, 4
    %v424 = vand.u32 %v422, 15
    %v425 = vsub.s32 0, %v424
    %v426 = vsel %vm420, %v425, %v424
    %vm427 = vcmp.lt.s32.totalorder %v339, 0
    %v428 = vsub.s32 0, %v339
    %v429 = vsel %vm427, %v428, %v339
    %v430 = vshrl.u32 %v429, 4
    %v431 = vand.u32 %v429, 15
    %v432 = vsub.s32 0, %v431
    %v433 = vsel %vm427, %v432, %v431
    %vm434 = vcmp.lt.s32.totalorder %v340, 0
    %v435 = vsub.s32 0, %v340
    %v436 = vsel %vm434, %v435, %v340
    %v437 = vshrl.u32 %v436, 4
    %v438 = vand.u32 %v436, 15
    %v439 = vsub.s32 0, %v438
    %v440 = vsel %vm434, %v439, %v438
    %vm441 = vcmp.lt.s32.totalorder %v341, 0
    %v442 = vsub.s32 0, %v341
    %v443 = vsel %vm441, %v442, %v341
    %v444 = vshrl.u32 %v443, 4
    %v445 = vand.u32 %v443, 15
    %v446 = vsub.s32 0, %v445
    %v447 = vsel %vm441, %v446, %v445
    %vm448 = vcmp.lt.s32.totalorder %v342, 0
    %v449 = vsub.s32 0, %v342
    %v450 = vsel %vm448, %v449, %v342
    %v451 = vshrl.u32 %v450, 4
    %v452 = vand.u32 %v450, 15
    %v453 = vsub.s32 0, %v452
    %v454 = vsel %vm448, %v453, %v452
    %vm455 = vcmp.ne.s32.totalorder %v349, 0
    %vm456 = vcmp.ne.s32.totalorder %v356, 0
    %vm457 = vcmp.ne.s32.totalorder %v363, 0
    %vm458 = vcmp.ne.s32.totalorder %v370, 0
    %vm459 = vcmp.ne.s32.totalorder %v377, 0
    %vm460 = vcmp.ne.s32.totalorder %v384, 0
    %vm461 = vcmp.ne.s32.totalorder %v391, 0
    %vm462 = vcmp.ne.s32.totalorder %v398, 0
    %vm463 = vcmp.ne.s32.totalorder %v405, 0
    %vm464 = vcmp.ne.s32.totalorder %v412, 0
    %vm465 = vcmp.ne.s32.totalorder %v419, 0
    %vm466 = vcmp.ne.s32.totalorder %v426, 0
    %vm467 = vcmp.ne.s32.totalorder %v433, 0
    %vm468 = vcmp.ne.s32.totalorder %v440, 0
    %vm469 = vcmp.ne.s32.totalorder %v447, 0
    %vm470 = vcmp.ne.s32.totalorder %v454, 0
    %vm471 = vcmp.lt.s32.totalorder %v349, 0
    %vm472 = vcmp.lt.s32.totalorder %v356, 0
    %vm473 = vcmp.lt.s32.totalorder %v363, 0
    %vm474 = vcmp.lt.s32.totalorder %v370, 0
    %vm475 = vcmp.lt.s32.totalorder %v377, 0
    %vm476 = vcmp.lt.s32.totalorder %v384, 0
    %vm477 = vcmp.lt.s32.totalorder %v391, 0
    %vm478 = vcmp.lt.s32.totalorder %v398, 0
    %vm479 = vcmp.lt.s32.totalorder %v405, 0
    %vm480 = vcmp.lt.s32.totalorder %v412, 0
    %vm481 = vcmp.lt.s32.totalorder %v419, 0
    %vm482 = vcmp.lt.s32.totalorder %v426, 0
    %vm483 = vcmp.lt.s32.totalorder %v433, 0
    %vm484 = vcmp.lt.s32.totalorder %v440, 0
    %vm485 = vcmp.lt.s32.totalorder %v447, 0
    %vm486 = vcmp.lt.s32.totalorder %v454, 0
    %vm487 = vmand %vm471, %vm455
    %vm488 = vmand %vm472, %vm456
    %vm489 = vmand %vm473, %vm457
    %vm490 = vmand %vm474, %vm458
    %vm491 = vmand %vm475, %vm459
    %vm492 = vmand %vm476, %vm460
    %vm493 = vmand %vm477, %vm461
    %vm494 = vmand %vm478, %vm462
    %vm495 = vmand %vm479, %vm463
    %vm496 = vmand %vm480, %vm464
    %vm497 = vmand %vm481, %vm465
    %vm498 = vmand %vm482, %vm466
    %vm499 = vmand %vm483, %vm467
    %vm500 = vmand %vm484, %vm468
    %vm501 = vmand %vm485, %vm469
    %vm502 = vmand %vm486, %vm470
    %v503 = vadd.s32 %v349, 16
    %v504 = vadd.s32 %v356, 16
    %v505 = vadd.s32 %v363, 16
    %v506 = vadd.s32 %v370, 16
    %v507 = vadd.s32 %v377, 16
    %v508 = vadd.s32 %v384, 16
    %v509 = vadd.s32 %v391, 16
    %v510 = vadd.s32 %v398, 16
    %v511 = vadd.s32 %v405, 16
    %v512 = vadd.s32 %v412, 16
    %v513 = vadd.s32 %v419, 16
    %v514 = vadd.s32 %v426, 16
    %v515 = vadd.s32 %v433, 16
    %v516 = vadd.s32 %v440, 16
    %v517 = vadd.s32 %v447, 16
    %v518 = vadd.s32 %v454, 16
    %v519 = vsel %vm487, %v503, %v349
    %v520 = vsel %vm488, %v504, %v356
    %v521 = vsel %vm489, %v505, %v363
    %v522 = vsel %vm490, %v506, %v370
    %v523 = vsel %vm491, %v507, %v377
    %v524 = vsel %vm492, %v508, %v384
    %v525 = vsel %vm493, %v509, %v391
    %v526 = vsel %vm494, %v510, %v398
    %v527 = vsel %vm495, %v511, %v405
    %v528 = vsel %vm496, %v512, %v412
    %v529 = vsel %vm497, %v513, %v419
    %v530 = vsel %vm498, %v514, %v426
    %v531 = vsel %vm499, %v515, %v433
    %v532 = vsel %vm500, %v516, %v440
    %v533 = vsel %vm501, %v517, %v447
    %v534 = vsel %vm502, %v518, %v454
    %vm535 = vcmp.ne.s32.totalorder %v519, 0
    %vm536 = vcmp.ne.s32.totalorder %v520, 0
    %vm537 = vcmp.ne.s32.totalorder %v521, 0
    %vm538 = vcmp.ne.s32.totalorder %v522, 0
    %vm539 = vcmp.ne.s32.totalorder %v523, 0
    %vm540 = vcmp.ne.s32.totalorder %v524, 0
    %vm541 = vcmp.ne.s32.totalorder %v525, 0
    %vm542 = vcmp.ne.s32.totalorder %v526, 0
    %vm543 = vcmp.ne.s32.totalorder %v527, 0
    %vm544 = vcmp.ne.s32.totalorder %v528, 0
    %vm545 = vcmp.ne.s32.totalorder %v529, 0
    %vm546 = vcmp.ne.s32.totalorder %v530, 0
    %vm547 = vcmp.ne.s32.totalorder %v531, 0
    %vm548 = vcmp.ne.s32.totalorder %v532, 0
    %vm549 = vcmp.ne.s32.totalorder %v533, 0
    %vm550 = vcmp.ne.s32.totalorder %v534, 0
    %v552 = vrot.slane %v325, 7
    %vm569 = vcmask 1040384
    %v570 = vrot.slane %v310, 7
    %v571 = vrot.slane %v311, 7
    %v572 = vsel %vm569, %v570, %v571
    %v573 = vrot.slane %v312, 7
    %v574 = vsel %vm569, %v571, %v573
    %v575 = vrot.slane %v313, 7
    %v576 = vsel %vm569, %v573, %v575
    %v577 = vrot.slane %v314, 7
    %v578 = vsel %vm569, %v575, %v577
    %v579 = vrot.slane %v315, 7
    %v580 = vsel %vm569, %v577, %v579
    %v581 = vrot.slane %v316, 7
    %v582 = vsel %vm569, %v579, %v581
    %v583 = vrot.slane %v317, 7
    %v584 = vsel %vm569, %v581, %v583
    %v585 = vrot.slane %v318, 7
    %v586 = vsel %vm569, %v583, %v585
    %v587 = vrot.slane %v319, 7
    %v588 = vsel %vm569, %v585, %v587
    %v589 = vrot.slane %v320, 7
    %v590 = vsel %vm569, %v587, %v589
    %v591 = vrot.slane %v321, 7
    %v592 = vsel %vm569, %v589, %v591
    %v593 = vrot.slane %v322, 7
    %v594 = vsel %vm569, %v591, %v593
    %v595 = vrot.slane %v323, 7
    %v596 = vsel %vm569, %v593, %v595
    %v597 = vrot.slane %v324, 7
    %v598 = vsel %vm569, %v595, %v597
    %v599 = vsel %vm569, %v597, %v552
    %v616 = vsel %vm569, %v552, %v570
    %v617 = vsel %vm535, 1, 0
    %v618 = vsel %vm536, 1, 0
    %v619 = vsel %vm537, 1, 0
    %v620 = vsel %vm538, 1, 0
    %v621 = vsel %vm539, 1, 0
    %v622 = vsel %vm540, 1, 0
    %v623 = vsel %vm541, 1, 0
    %v624 = vsel %vm542, 1, 0
    %v625 = vsel %vm543, 1, 0
    %v626 = vsel %vm544, 1, 0
    %v627 = vsel %vm545, 1, 0
    %v628 = vsel %vm546, 1, 0
    %v629 = vsel %vm547, 1, 0
    %v630 = vsel %vm548, 1, 0
    %v631 = vsel %vm549, 1, 0
    %v632 = vsel %vm550, 1, 0
    %vm633 = vcmp.eq.s32.totalorder %v617, 1
    %vm634 = vcmp.eq.s32.totalorder %v618, 1
    %vm635 = vcmp.eq.s32.totalorder %v619, 1
    %vm636 = vcmp.eq.s32.totalorder %v620, 1
    %vm637 = vcmp.eq.s32.totalorder %v621, 1
    %vm638 = vcmp.eq.s32.totalorder %v622, 1
    %vm639 = vcmp.eq.s32.totalorder %v623, 1
    %vm640 = vcmp.eq.s32.totalorder %v624, 1
    %vm641 = vcmp.eq.s32.totalorder %v625, 1
    %vm642 = vcmp.eq.s32.totalorder %v626, 1
    %vm643 = vcmp.eq.s32.totalorder %v627, 1
    %vm644 = vcmp.eq.s32.totalorder %v628, 1
    %vm645 = vcmp.eq.s32.totalorder %v629, 1
    %vm646 = vcmp.eq.s32.totalorder %v630, 1
    %vm647 = vcmp.eq.s32.totalorder %v631, 1
    %vm648 = vcmp.eq.s32.totalorder %v632, 1
    %v649 = vsel %vm633, %v616, 0.0
    %v650 = vsel %vm634, %v572, 0.0
    %v651 = vsel %vm635, %v574, 0.0
    %v652 = vsel %vm636, %v576, 0.0
    %v653 = vsel %vm637, %v578, 0.0
    %v654 = vsel %vm638, %v580, 0.0
    %v655 = vsel %vm639, %v582, 0.0
    %v656 = vsel %vm640, %v584, 0.0
    %v657 = vsel %vm641, %v586, 0.0
    %v658 = vsel %vm642, %v588, 0.0
    %v659 = vsel %vm643, %v590, 0.0
    %v660 = vsel %vm644, %v592, 0.0
    %v661 = vsel %vm645, %v594, 0.0
    %v662 = vsel %vm646, %v596, 0.0
    %v663 = vsel %vm647, %v598, 0.0
    %v664 = vsel %vm648, %v599, 0.0
    %vm665 = vcmp.ne.s32.totalorder %v519, 15
    %vm666 = vcmp.ne.s32.totalorder %v520, 15
    %vm667 = vcmp.ne.s32.totalorder %v521, 15
    %vm668 = vcmp.ne.s32.totalorder %v522, 15
    %vm669 = vcmp.ne.s32.totalorder %v523, 15
    %vm670 = vcmp.ne.s32.totalorder %v524, 15
    %vm671 = vcmp.ne.s32.totalorder %v525, 15
    %vm672 = vcmp.ne.s32.totalorder %v526, 15
    %vm673 = vcmp.ne.s32.totalorder %v527, 15
    %vm674 = vcmp.ne.s32.totalorder %v528, 15
    %vm675 = vcmp.ne.s32.totalorder %v529, 15
    %vm676 = vcmp.ne.s32.totalorder %v530, 15
    %vm677 = vcmp.ne.s32.totalorder %v531, 15
    %vm678 = vcmp.ne.s32.totalorder %v532, 15
    %vm679 = vcmp.ne.s32.totalorder %v533, 15
    %vm680 = vcmp.ne.s32.totalorder %v534, 15
    %vm681 = vcmask 1046528
    %v682 = vrot.slane %v310, 1
    %v683 = vrot.slane %v311, 1
    %v684 = vsel %vm681, %v682, %v683
    %v685 = vrot.slane %v312, 1
    %v686 = vsel %vm681, %v683, %v685
    %v687 = vrot.slane %v313, 1
    %v688 = vsel %vm681, %v685, %v687
    %v689 = vrot.slane %v314, 1
    %v690 = vsel %vm681, %v687, %v689
    %v691 = vrot.slane %v315, 1
    %v692 = vsel %vm681, %v689, %v691
    %v693 = vrot.slane %v316, 1
    %v694 = vsel %vm681, %v691, %v693
    %v695 = vrot.slane %v317, 1
    %v696 = vsel %vm681, %v693, %v695
    %v697 = vrot.slane %v318, 1
    %v698 = vsel %vm681, %v695, %v697
    %v699 = vrot.slane %v319, 1
    %v700 = vsel %vm681, %v697, %v699
    %v701 = vrot.slane %v320, 1
    %v702 = vsel %vm681, %v699, %v701
    %v703 = vrot.slane %v321, 1
    %v704 = vsel %vm681, %v701, %v703
    %v705 = vrot.slane %v322, 1
    %v706 = vsel %vm681, %v703, %v705
    %v707 = vrot.slane %v323, 1
    %v708 = vsel %vm681, %v705, %v707
    %v709 = vrot.slane %v324, 1
    %v710 = vsel %vm681, %v707, %v709
    %v711 = vrot.slane %v325, 1
    %v712 = vsel %vm681, %v709, %v711
    %v730 = vsel %vm681, %v711, %v682
    %v731 = vsel %vm665, 1, 0
    %v732 = vsel %vm666, 1, 0
    %v733 = vsel %vm667, 1, 0
    %v734 = vsel %vm668, 1, 0
    %v735 = vsel %vm669, 1, 0
    %v736 = vsel %vm670, 1, 0
    %v737 = vsel %vm671, 1, 0
    %v738 = vsel %vm672, 1, 0
    %v739 = vsel %vm673, 1, 0
    %v740 = vsel %vm674, 1, 0
    %v741 = vsel %vm675, 1, 0
    %v742 = vsel %vm676, 1, 0
    %v743 = vsel %vm677, 1, 0
    %v744 = vsel %vm678, 1, 0
    %v745 = vsel %vm679, 1, 0
    %v746 = vsel %vm680, 1, 0
    %vm747 = vcmp.eq.s32.totalorder %v731, 1
    %vm748 = vcmp.eq.s32.totalorder %v732, 1
    %vm749 = vcmp.eq.s32.totalorder %v733, 1
    %vm750 = vcmp.eq.s32.totalorder %v734, 1
    %vm751 = vcmp.eq.s32.totalorder %v735, 1
    %vm752 = vcmp.eq.s32.totalorder %v736, 1
    %vm753 = vcmp.eq.s32.totalorder %v737, 1
    %vm754 = vcmp.eq.s32.totalorder %v738, 1
    %vm755 = vcmp.eq.s32.totalorder %v739, 1
    %vm756 = vcmp.eq.s32.totalorder %v740, 1
    %vm757 = vcmp.eq.s32.totalorder %v741, 1
    %vm758 = vcmp.eq.s32.totalorder %v742, 1
    %vm759 = vcmp.eq.s32.totalorder %v743, 1
    %vm760 = vcmp.eq.s32.totalorder %v744, 1
    %vm761 = vcmp.eq.s32.totalorder %v745, 1
    %vm762 = vcmp.eq.s32.totalorder %v746, 1
    %v763 = vsel %vm747, %v684, 0.0
    %v764 = vsel %vm748, %v686, 0.0
    %v765 = vsel %vm749, %v688, 0.0
    %v766 = vsel %vm750, %v690, 0.0
    %v767 = vsel %vm751, %v692, 0.0
    %v768 = vsel %vm752, %v694, 0.0
    %v769 = vsel %vm753, %v696, 0.0
    %v770 = vsel %vm754, %v698, 0.0
    %v771 = vsel %vm755, %v700, 0.0
    %v772 = vsel %vm756, %v702, 0.0
    %v773 = vsel %vm757, %v704, 0.0
    %v774 = vsel %vm758, %v706, 0.0
    %v775 = vsel %vm759, %v708, 0.0
    %v776 = vsel %vm760, %v710, 0.0
    %v777 = vsel %vm761, %v712, 0.0
    %v778 = vsel %vm762, %v730, 0.0
    %v779 = vpack.c.bf16 %v649, %v649
    %v780 = vpack.c.bf16 %v650, %v650
    %v781 = vpack.c.bf16 %v651, %v651
    %v782 = vpack.c.bf16 %v652, %v652
    %v783 = vpack.c.bf16 %v653, %v653
    %v784 = vpack.c.bf16 %v654, %v654
    %v785 = vpack.c.bf16 %v655, %v655
    %v786 = vpack.c.bf16 %v656, %v656
    %v787 = vpack.c.bf16 %v657, %v657
    %v788 = vpack.c.bf16 %v658, %v658
    %v789 = vpack.c.bf16 %v659, %v659
    %v790 = vpack.c.bf16 %v660, %v660
    %v791 = vpack.c.bf16 %v661, %v661
    %v792 = vpack.c.bf16 %v662, %v662
    %v793 = vpack.c.bf16 %v663, %v663
    %v794 = vpack.c.bf16 %v664, %v664
    %v795 = vpack.c.bf16 %v310, %v310
    %v796 = vpack.c.bf16 %v311, %v311
    %v797 = vpack.c.bf16 %v312, %v312
    %v798 = vpack.c.bf16 %v313, %v313
    %v799 = vpack.c.bf16 %v314, %v314
    %v800 = vpack.c.bf16 %v315, %v315
    %v801 = vpack.c.bf16 %v316, %v316
    %v802 = vpack.c.bf16 %v317, %v317
    %v803 = vpack.c.bf16 %v318, %v318
    %v804 = vpack.c.bf16 %v319, %v319
    %v805 = vpack.c.bf16 %v320, %v320
    %v806 = vpack.c.bf16 %v321, %v321
    %v807 = vpack.c.bf16 %v322, %v322
    %v808 = vpack.c.bf16 %v323, %v323
    %v809 = vpack.c.bf16 %v324, %v324
    %v810 = vpack.c.bf16 %v325, %v325
    %v811 = vpack.c.bf16 %v763, %v763
    %v812 = vpack.c.bf16 %v764, %v764
    %v813 = vpack.c.bf16 %v765, %v765
    %v814 = vpack.c.bf16 %v766, %v766
    %v815 = vpack.c.bf16 %v767, %v767
    %v816 = vpack.c.bf16 %v768, %v768
    %v817 = vpack.c.bf16 %v769, %v769
    %v818 = vpack.c.bf16 %v770, %v770
    %v819 = vpack.c.bf16 %v771, %v771
    %v820 = vpack.c.bf16 %v772, %v772
    %v821 = vpack.c.bf16 %v773, %v773
    %v822 = vpack.c.bf16 %v774, %v774
    %v823 = vpack.c.bf16 %v775, %v775
    %v824 = vpack.c.bf16 %v776, %v776
    %v825 = vpack.c.bf16 %v777, %v777
    %v826 = vpack.c.bf16 %v778, %v778
    %v843 = vunpack.c.l.b16 %v779
    %v844 = vunpack.c.l.b16 %v780
    %v845 = vunpack.c.l.b16 %v781
    %v846 = vunpack.c.l.b16 %v782
    %v847 = vunpack.c.l.b16 %v783
    %v848 = vunpack.c.l.b16 %v784
    %v849 = vunpack.c.l.b16 %v785
    %v850 = vunpack.c.l.b16 %v786
    %v851 = vunpack.c.l.b16 %v787
    %v852 = vunpack.c.l.b16 %v788
    %v853 = vunpack.c.l.b16 %v789
    %v854 = vunpack.c.l.b16 %v790
    %v855 = vunpack.c.l.b16 %v791
    %v856 = vunpack.c.l.b16 %v792
    %v857 = vunpack.c.l.b16 %v793
    %v858 = vunpack.c.l.b16 %v794
    %v859 = vpack.c.b16 %v844, %v843
    %v860 = vpack.c.b16 %v846, %v845
    %v861 = vpack.c.b16 %v848, %v847
    %v862 = vpack.c.b16 %v850, %v849
    %v863 = vpack.c.b16 %v852, %v851
    %v864 = vpack.c.b16 %v854, %v853
    %v865 = vpack.c.b16 %v856, %v855
    %v866 = vpack.c.b16 %v858, %v857
    %v891 = vunpack.c.l.b16 %v795
    %v892 = vunpack.c.l.b16 %v796
    %v893 = vunpack.c.l.b16 %v797
    %v894 = vunpack.c.l.b16 %v798
    %v895 = vunpack.c.l.b16 %v799
    %v896 = vunpack.c.l.b16 %v800
    %v897 = vunpack.c.l.b16 %v801
    %v898 = vunpack.c.l.b16 %v802
    %v899 = vunpack.c.l.b16 %v803
    %v900 = vunpack.c.l.b16 %v804
    %v901 = vunpack.c.l.b16 %v805
    %v902 = vunpack.c.l.b16 %v806
    %v903 = vunpack.c.l.b16 %v807
    %v904 = vunpack.c.l.b16 %v808
    %v905 = vunpack.c.l.b16 %v809
    %v906 = vunpack.c.l.b16 %v810
    %v907 = vpack.c.b16 %v892, %v891
    %v908 = vpack.c.b16 %v894, %v893
    %v909 = vpack.c.b16 %v896, %v895
    %v910 = vpack.c.b16 %v898, %v897
    %v911 = vpack.c.b16 %v900, %v899
    %v912 = vpack.c.b16 %v902, %v901
    %v913 = vpack.c.b16 %v904, %v903
    %v914 = vpack.c.b16 %v906, %v905
    %v939 = vunpack.c.l.b16 %v811
    %v940 = vunpack.c.l.b16 %v812
    %v941 = vunpack.c.l.b16 %v813
    %v942 = vunpack.c.l.b16 %v814
    %v943 = vunpack.c.l.b16 %v815
    %v944 = vunpack.c.l.b16 %v816
    %v945 = vunpack.c.l.b16 %v817
    %v946 = vunpack.c.l.b16 %v818
    %v947 = vunpack.c.l.b16 %v819
    %v948 = vunpack.c.l.b16 %v820
    %v949 = vunpack.c.l.b16 %v821
    %v950 = vunpack.c.l.b16 %v822
    %v951 = vunpack.c.l.b16 %v823
    %v952 = vunpack.c.l.b16 %v824
    %v953 = vunpack.c.l.b16 %v825
    %v954 = vunpack.c.l.b16 %v826
    %v955 = vpack.c.b16 %v940, %v939
    %v956 = vpack.c.b16 %v942, %v941
    %v957 = vpack.c.b16 %v944, %v943
    %v958 = vpack.c.b16 %v946, %v945
    %v959 = vpack.c.b16 %v948, %v947
    %v960 = vpack.c.b16 %v950, %v949
    %v961 = vpack.c.b16 %v952, %v951
    %v962 = vpack.c.b16 %v954, %v953
    %v971 = vld [vmem:[%s2] sm:$0xff]
    %v972 = vld [vmem:[%s2 + $0x8] sm:$0xff]
    %v973 = vld [vmem:[%s2 + $0x10] sm:$0xff]
    %v974 = vld [vmem:[%s2 + $0x18] sm:$0xff]
    %v975 = vld [vmem:[%s2 + $0x20] sm:$0xff]
    %v976 = vld [vmem:[%s2 + $0x28] sm:$0xff]
    %v977 = vld [vmem:[%s2 + $0x30] sm:$0xff]
    %v978 = vld [vmem:[%s2 + $0x38] sm:$0xff]
    %v979 = vld [vmem:[%s2 + $0x40] sm:$0xff]
    %v980 = vld [vmem:[%s2 + $0x48] sm:$0xff]
    %v981 = vld [vmem:[%s2 + $0x50] sm:$0xff]
    %v982 = vld [vmem:[%s2 + $0x58] sm:$0xff]
    %v983 = vld [vmem:[%s2 + $0x60] sm:$0xff]
    %v984 = vld [vmem:[%s2 + $0x68] sm:$0xff]
    %v985 = vld [vmem:[%s2 + $0x70] sm:$0xff]
    %v986 = vld [vmem:[%s2 + $0x78] sm:$0xff]
    %v987 = vld [vmem:[%s2 + $0x80] sm:$0xff]
    %v988 = vld [vmem:[%s2 + $0x88] sm:$0xff]
    %v989 = vld [vmem:[%s2 + $0x90] sm:$0xff]
    %v990 = vld [vmem:[%s2 + $0x98] sm:$0xff]
    %v991 = vld [vmem:[%s2 + $0xa0] sm:$0xff]
    %v992 = vld [vmem:[%s2 + $0xa8] sm:$0xff]
    %v993 = vld [vmem:[%s2 + $0xb0] sm:$0xff]
    %v994 = vld [vmem:[%s2 + $0xb8] sm:$0xff]
    %v995 = vld [vmem:[%s2 + $0xc0] sm:$0xff]
    %v996 = vld [vmem:[%s2 + $0xc8] sm:$0xff]
    %v997 = vld [vmem:[%s2 + $0xd0] sm:$0xff]
    %v998 = vld [vmem:[%s2 + $0xd8] sm:$0xff]
    %v999 = vld [vmem:[%s2 + $0xe0] sm:$0xff]
    %v1000 = vld [vmem:[%s2 + $0xe8] sm:$0xff]
    %v1001 = vld [vmem:[%s2 + $0xf0] sm:$0xff]
    %v1002 = vld [vmem:[%s2 + $0xf8] sm:$0xff]
    %v1003 = vld [vmem:[%s2 + $0x100] sm:$0xff]
    %v1004 = vld [vmem:[%s2 + $0x108] sm:$0xff]
    %v1005 = vld [vmem:[%s2 + $0x110] sm:$0xff]
    %v1006 = vld [vmem:[%s2 + $0x118] sm:$0xff]
    %v1007 = vld [vmem:[%s2 + $0x120] sm:$0xff]
    %v1008 = vld [vmem:[%s2 + $0x128] sm:$0xff]
    %v1009 = vld [vmem:[%s2 + $0x130] sm:$0xff]
    %v1010 = vld [vmem:[%s2 + $0x138] sm:$0xff]
    %v1011 = vld [vmem:[%s2 + $0x140] sm:$0xff]
    %v1012 = vld [vmem:[%s2 + $0x148] sm:$0xff]
    %v1013 = vld [vmem:[%s2 + $0x150] sm:$0xff]
    %v1014 = vld [vmem:[%s2 + $0x158] sm:$0xff]
    %v1015 = vld [vmem:[%s2 + $0x160] sm:$0xff]
    %v1016 = vld [vmem:[%s2 + $0x168] sm:$0xff]
    %v1017 = vld [vmem:[%s2 + $0x170] sm:$0xff]
    %v1018 = vld [vmem:[%s2 + $0x178] sm:$0xff]
    %v1019 = vld [vmem:[%s3] sm:$0x3]
    %v1021 = vperm.slane %v1019, 0
    %v1022 = vperm.slane %v1019, 1
    %v1073 = vunpack.c.l.b16 %v971
    %v1074 = vunpack.c.h.b16 %v971
    %v1075 = vunpack.c.l.b16 %v972
    %v1076 = vunpack.c.h.b16 %v972
    %v1077 = vunpack.c.l.b16 %v973
    %v1078 = vunpack.c.h.b16 %v973
    %v1079 = vunpack.c.l.b16 %v974
    %v1080 = vunpack.c.h.b16 %v974
    %v1081 = vunpack.c.l.b16 %v975
    %v1082 = vunpack.c.h.b16 %v975
    %v1083 = vunpack.c.l.b16 %v976
    %v1084 = vunpack.c.h.b16 %v976
    %v1085 = vunpack.c.l.b16 %v977
    %v1086 = vunpack.c.h.b16 %v977
    %v1087 = vunpack.c.l.b16 %v978
    %v1088 = vunpack.c.h.b16 %v978
    %v1089 = vunpack.c.l.b16 %v979
    %v1090 = vunpack.c.h.b16 %v979
    %v1091 = vunpack.c.l.b16 %v980
    %v1092 = vunpack.c.h.b16 %v980
    %v1093 = vunpack.c.l.b16 %v981
    %v1094 = vunpack.c.h.b16 %v981
    %v1095 = vunpack.c.l.b16 %v982
    %v1096 = vunpack.c.h.b16 %v982
    %v1097 = vunpack.c.l.b16 %v983
    %v1098 = vunpack.c.h.b16 %v983
    %v1099 = vunpack.c.l.b16 %v984
    %v1100 = vunpack.c.h.b16 %v984
    %v1101 = vunpack.c.l.b16 %v985
    %v1102 = vunpack.c.h.b16 %v985
    %v1103 = vunpack.c.l.b16 %v986
    %v1104 = vunpack.c.h.b16 %v986
    %v1105 = vunpack.c.l.b16 %v987
    %v1106 = vunpack.c.h.b16 %v987
    %v1107 = vunpack.c.l.b16 %v988
    %v1108 = vunpack.c.h.b16 %v988
    %v1109 = vunpack.c.l.b16 %v989
    %v1110 = vunpack.c.h.b16 %v989
    %v1111 = vunpack.c.l.b16 %v990
    %v1112 = vunpack.c.h.b16 %v990
    %v1113 = vunpack.c.l.b16 %v991
    %v1114 = vunpack.c.h.b16 %v991
    %v1115 = vunpack.c.l.b16 %v992
    %v1116 = vunpack.c.h.b16 %v992
    %v1117 = vunpack.c.l.b16 %v993
    %v1118 = vunpack.c.h.b16 %v993
    %v1119 = vunpack.c.l.b16 %v994
    %v1120 = vunpack.c.h.b16 %v994
    %v1121 = vunpack.c.l.b16 %v995
    %v1122 = vunpack.c.h.b16 %v995
    %v1123 = vunpack.c.l.b16 %v996
    %v1124 = vunpack.c.h.b16 %v996
    %v1125 = vunpack.c.l.b16 %v997
    %v1126 = vunpack.c.h.b16 %v997
    %v1127 = vunpack.c.l.b16 %v998
    %v1128 = vunpack.c.h.b16 %v998
    %v1129 = vunpack.c.l.b16 %v999
    %v1130 = vunpack.c.h.b16 %v999
    %v1131 = vunpack.c.l.b16 %v1000
    %v1132 = vunpack.c.h.b16 %v1000
    %v1133 = vunpack.c.l.b16 %v1001
    %v1134 = vunpack.c.h.b16 %v1001
    %v1135 = vunpack.c.l.b16 %v1002
    %v1136 = vunpack.c.h.b16 %v1002
    %v1137 = vunpack.c.l.b16 %v1003
    %v1138 = vunpack.c.h.b16 %v1003
    %v1139 = vunpack.c.l.b16 %v1004
    %v1140 = vunpack.c.h.b16 %v1004
    %v1141 = vunpack.c.l.b16 %v1005
    %v1142 = vunpack.c.h.b16 %v1005
    %v1143 = vunpack.c.l.b16 %v1006
    %v1144 = vunpack.c.h.b16 %v1006
    %v1145 = vunpack.c.l.b16 %v1007
    %v1146 = vunpack.c.h.b16 %v1007
    %v1147 = vunpack.c.l.b16 %v1008
    %v1148 = vunpack.c.h.b16 %v1008
    %v1149 = vunpack.c.l.b16 %v1009
    %v1150 = vunpack.c.h.b16 %v1009
    %v1151 = vunpack.c.l.b16 %v1010
    %v1152 = vunpack.c.h.b16 %v1010
    %v1153 = vunpack.c.l.b16 %v1011
    %v1154 = vunpack.c.h.b16 %v1011
    %v1155 = vunpack.c.l.b16 %v1012
    %v1156 = vunpack.c.h.b16 %v1012
    %v1157 = vunpack.c.l.b16 %v1013
    %v1158 = vunpack.c.h.b16 %v1013
    %v1159 = vunpack.c.l.b16 %v1014
    %v1160 = vunpack.c.h.b16 %v1014
    %v1161 = vunpack.c.l.b16 %v1015
    %v1162 = vunpack.c.h.b16 %v1015
    %v1163 = vunpack.c.l.b16 %v1016
    %v1164 = vunpack.c.h.b16 %v1016
    %v1165 = vunpack.c.l.b16 %v1017
    %v1166 = vunpack.c.h.b16 %v1017
    %v1167 = vunpack.c.l.b16 %v1018
    %v1168 = vunpack.c.h.b16 %v1018
    %v1169 = vpack.c.b16 %v1075, %v1073
    %v1170 = vpack.c.b16 %v1076, %v1074
    %v1171 = vpack.c.b16 %v1079, %v1077
    %v1172 = vpack.c.b16 %v1080, %v1078
    %v1173 = vpack.c.b16 %v1083, %v1081
    %v1174 = vpack.c.b16 %v1084, %v1082
    %v1175 = vpack.c.b16 %v1087, %v1085
    %v1176 = vpack.c.b16 %v1088, %v1086
    %v1177 = vpack.c.b16 %v1091, %v1089
    %v1178 = vpack.c.b16 %v1092, %v1090
    %v1179 = vpack.c.b16 %v1095, %v1093
    %v1180 = vpack.c.b16 %v1096, %v1094
    %v1181 = vpack.c.b16 %v1099, %v1097
    %v1182 = vpack.c.b16 %v1100, %v1098
    %v1183 = vpack.c.b16 %v1103, %v1101
    %v1184 = vpack.c.b16 %v1104, %v1102
    %v1185 = vpack.c.b16 %v1107, %v1105
    %v1186 = vpack.c.b16 %v1108, %v1106
    %v1187 = vpack.c.b16 %v1111, %v1109
    %v1188 = vpack.c.b16 %v1112, %v1110
    %v1189 = vpack.c.b16 %v1115, %v1113
    %v1190 = vpack.c.b16 %v1116, %v1114
    %v1191 = vpack.c.b16 %v1119, %v1117
    %v1192 = vpack.c.b16 %v1120, %v1118
    %v1193 = vpack.c.b16 %v1123, %v1121
    %v1194 = vpack.c.b16 %v1124, %v1122
    %v1195 = vpack.c.b16 %v1127, %v1125
    %v1196 = vpack.c.b16 %v1128, %v1126
    %v1197 = vpack.c.b16 %v1131, %v1129
    %v1198 = vpack.c.b16 %v1132, %v1130
    %v1199 = vpack.c.b16 %v1135, %v1133
    %v1200 = vpack.c.b16 %v1136, %v1134
    %v1201 = vpack.c.b16 %v1139, %v1137
    %v1202 = vpack.c.b16 %v1140, %v1138
    %v1203 = vpack.c.b16 %v1143, %v1141
    %v1204 = vpack.c.b16 %v1144, %v1142
    %v1205 = vpack.c.b16 %v1147, %v1145
    %v1206 = vpack.c.b16 %v1148, %v1146
    %v1207 = vpack.c.b16 %v1151, %v1149
    %v1208 = vpack.c.b16 %v1152, %v1150
    %v1209 = vpack.c.b16 %v1155, %v1153
    %v1210 = vpack.c.b16 %v1156, %v1154
    %v1211 = vpack.c.b16 %v1159, %v1157
    %v1212 = vpack.c.b16 %v1160, %v1158
    %v1213 = vpack.c.b16 %v1163, %v1161
    %v1214 = vpack.c.b16 %v1164, %v1162
    %v1215 = vpack.c.b16 %v1167, %v1165
    %v1216 = vpack.c.b16 %v1168, %v1166
    %1265 = vmatpush.bf16.msra.mxu0 %v1183
    %1266 = vmatpush.bf16.msra.mxu0 %v1181
    %1267 = vmatpush.bf16.msra.mxu0 %v1179
    %1268 = vmatpush.bf16.msra.mxu0 %v1177
    %1269 = vmatpush.bf16.msra.mxu0 %v1175
    %1270 = vmatpush.bf16.msra.mxu0 %v1173
    %1271 = vmatpush.bf16.msra.mxu0 %v1171
    %1272 = vmatpush.bf16.msra.mxu0 %v1169
    %1273 = vmatmul.bf16.gmra.mxu0 %v859
    %v1274 = vpop.f32.mrf.mxu0
    %v1275 = vadd.f32 %v1021, %v1274
    %v1276 = vpop.f32.mrf.mxu0
    %v1277 = vadd.f32 %v1021, %v1276
    %1278 = vmatmul.bf16.gmra.mxu0 %v860
    %v1279 = vpop.f32.mrf.mxu0
    %v1280 = vadd.f32 %v1021, %v1279
    %v1281 = vpop.f32.mrf.mxu0
    %v1282 = vadd.f32 %v1021, %v1281
    %1283 = vmatmul.bf16.gmra.mxu0 %v861
    %v1284 = vpop.f32.mrf.mxu0
    %v1285 = vadd.f32 %v1021, %v1284
    %v1286 = vpop.f32.mrf.mxu0
    %v1287 = vadd.f32 %v1021, %v1286
    %1288 = vmatmul.bf16.gmra.mxu0 %v862
    %v1289 = vpop.f32.mrf.mxu0
    %v1290 = vadd.f32 %v1021, %v1289
    %v1291 = vpop.f32.mrf.mxu0
    %v1292 = vadd.f32 %v1021, %v1291
    %1293 = vmatmul.bf16.gmra.mxu0 %v863
    %v1294 = vpop.f32.mrf.mxu0
    %v1295 = vadd.f32 %v1021, %v1294
    %v1296 = vpop.f32.mrf.mxu0
    %v1297 = vadd.f32 %v1021, %v1296
    %1298 = vmatmul.bf16.gmra.mxu0 %v864
    %v1299 = vpop.f32.mrf.mxu0
    %v1300 = vadd.f32 %v1021, %v1299
    %v1301 = vpop.f32.mrf.mxu0
    %v1302 = vadd.f32 %v1021, %v1301
    %1303 = vmatmul.bf16.gmra.mxu0 %v865
    %v1304 = vpop.f32.mrf.mxu0
    %v1305 = vadd.f32 %v1021, %v1304
    %v1306 = vpop.f32.mrf.mxu0
    %v1307 = vadd.f32 %v1021, %v1306
    %1308 = vmatmul.bf16.gmra.mxu0 %v866
    %v1309 = vpop.f32.mrf.mxu0
    %v1310 = vadd.f32 %v1021, %v1309
    %v1311 = vpop.f32.mrf.mxu0
    %v1312 = vadd.f32 %v1021, %v1311
    %1313 = vdwg.mxu0
    %1314 = vmatpush.bf16.msra.mxu0 %v1199
    %1315 = vmatpush.bf16.msra.mxu0 %v1197
    %1316 = vmatpush.bf16.msra.mxu0 %v1195
    %1317 = vmatpush.bf16.msra.mxu0 %v1193
    %1318 = vmatpush.bf16.msra.mxu0 %v1191
    %1319 = vmatpush.bf16.msra.mxu0 %v1189
    %1320 = vmatpush.bf16.msra.mxu0 %v1187
    %1321 = vmatpush.bf16.msra.mxu0 %v1185
    %1322 = vmatmul.bf16.gmra.mxu0 %v907
    %v1323 = vpop.f32.mrf.mxu0
    %v1324 = vadd.f32 %v1275, %v1323
    %v1325 = vpop.f32.mrf.mxu0
    %v1326 = vadd.f32 %v1277, %v1325
    %1327 = vmatmul.bf16.gmra.mxu0 %v908
    %v1328 = vpop.f32.mrf.mxu0
    %v1329 = vadd.f32 %v1280, %v1328
    %v1330 = vpop.f32.mrf.mxu0
    %v1331 = vadd.f32 %v1282, %v1330
    %1332 = vmatmul.bf16.gmra.mxu0 %v909
    %v1333 = vpop.f32.mrf.mxu0
    %v1334 = vadd.f32 %v1285, %v1333
    %v1335 = vpop.f32.mrf.mxu0
    %v1336 = vadd.f32 %v1287, %v1335
    %1337 = vmatmul.bf16.gmra.mxu0 %v910
    %v1338 = vpop.f32.mrf.mxu0
    %v1339 = vadd.f32 %v1290, %v1338
    %v1340 = vpop.f32.mrf.mxu0
    %v1341 = vadd.f32 %v1292, %v1340
    %1342 = vmatmul.bf16.gmra.mxu0 %v911
    %v1343 = vpop.f32.mrf.mxu0
    %v1344 = vadd.f32 %v1295, %v1343
    %v1345 = vpop.f32.mrf.mxu0
    %v1346 = vadd.f32 %v1297, %v1345
    %1347 = vmatmul.bf16.gmra.mxu0 %v912
    %v1348 = vpop.f32.mrf.mxu0
    %v1349 = vadd.f32 %v1300, %v1348
    %v1350 = vpop.f32.mrf.mxu0
    %v1351 = vadd.f32 %v1302, %v1350
    %1352 = vmatmul.bf16.gmra.mxu0 %v913
    %v1353 = vpop.f32.mrf.mxu0
    %v1354 = vadd.f32 %v1305, %v1353
    %v1355 = vpop.f32.mrf.mxu0
    %v1356 = vadd.f32 %v1307, %v1355
    %1357 = vmatmul.bf16.gmra.mxu0 %v914
    %v1358 = vpop.f32.mrf.mxu0
    %v1359 = vadd.f32 %v1310, %v1358
    %v1360 = vpop.f32.mrf.mxu0
    %v1361 = vadd.f32 %v1312, %v1360
    %1362 = vdwg.mxu0
    %1363 = vmatpush.bf16.msra.mxu0 %v1215
    %1364 = vmatpush.bf16.msra.mxu0 %v1213
    %1365 = vmatpush.bf16.msra.mxu0 %v1211
    %1366 = vmatpush.bf16.msra.mxu0 %v1209
    %1367 = vmatpush.bf16.msra.mxu0 %v1207
    %1368 = vmatpush.bf16.msra.mxu0 %v1205
    %1369 = vmatpush.bf16.msra.mxu0 %v1203
    %1370 = vmatpush.bf16.msra.mxu0 %v1201
    %1371 = vmatmul.bf16.gmra.mxu0 %v955
    %v1372 = vpop.f32.mrf.mxu0
    %v1373 = vadd.f32 %v1324, %v1372
    %v1374 = vpop.f32.mrf.mxu0
    %v1375 = vadd.f32 %v1326, %v1374
    %1376 = vmatmul.bf16.gmra.mxu0 %v956
    %v1377 = vpop.f32.mrf.mxu0
    %v1378 = vadd.f32 %v1329, %v1377
    %v1379 = vpop.f32.mrf.mxu0
    %v1380 = vadd.f32 %v1331, %v1379
    %1381 = vmatmul.bf16.gmra.mxu0 %v957
    %v1382 = vpop.f32.mrf.mxu0
    %v1383 = vadd.f32 %v1334, %v1382
    %v1384 = vpop.f32.mrf.mxu0
    %v1385 = vadd.f32 %v1336, %v1384
    %1386 = vmatmul.bf16.gmra.mxu0 %v958
    %v1387 = vpop.f32.mrf.mxu0
    %v1388 = vadd.f32 %v1339, %v1387
    %v1389 = vpop.f32.mrf.mxu0
    %v1390 = vadd.f32 %v1341, %v1389
    %1391 = vmatmul.bf16.gmra.mxu0 %v959
    %v1392 = vpop.f32.mrf.mxu0
    %v1393 = vadd.f32 %v1344, %v1392
    %v1394 = vpop.f32.mrf.mxu0
    %v1395 = vadd.f32 %v1346, %v1394
    %1396 = vmatmul.bf16.gmra.mxu0 %v960
    %v1397 = vpop.f32.mrf.mxu0
    %v1398 = vadd.f32 %v1349, %v1397
    %v1399 = vpop.f32.mrf.mxu0
    %v1400 = vadd.f32 %v1351, %v1399
    %1401 = vmatmul.bf16.gmra.mxu0 %v961
    %v1402 = vpop.f32.mrf.mxu0
    %v1403 = vadd.f32 %v1354, %v1402
    %v1404 = vpop.f32.mrf.mxu0
    %v1405 = vadd.f32 %v1356, %v1404
    %1406 = vmatmul.bf16.gmra.mxu0 %v962
    %v1407 = vpop.f32.mrf.mxu0
    %v1408 = vadd.f32 %v1359, %v1407
    %v1409 = vpop.f32.mrf.mxu0
    %v1410 = vadd.f32 %v1361, %v1409
    %1411 = vdwg.mxu0
    %1412 = vmatpush.bf16.msra.mxu0 %v1184
    %1413 = vmatpush.bf16.msra.mxu0 %v1182
    %1414 = vmatpush.bf16.msra.mxu0 %v1180
    %1415 = vmatpush.bf16.msra.mxu0 %v1178
    %1416 = vmatpush.bf16.msra.mxu0 %v1176
    %1417 = vmatpush.bf16.msra.mxu0 %v1174
    %1418 = vmatpush.bf16.msra.mxu0 %v1172
    %1419 = vmatpush.bf16.msra.mxu0 %v1170
    %1420 = vmatmul.bf16.gmra.mxu0 %v859
    %v1421 = vpop.f32.mrf.mxu0
    %v1422 = vadd.f32 %v1022, %v1421
    %v1423 = vpop.f32.mrf.mxu0
    %v1424 = vadd.f32 %v1022, %v1423
    %1425 = vmatmul.bf16.gmra.mxu0 %v860
    %v1426 = vpop.f32.mrf.mxu0
    %v1427 = vadd.f32 %v1022, %v1426
    %v1428 = vpop.f32.mrf.mxu0
    %v1429 = vadd.f32 %v1022, %v1428
    %1430 = vmatmul.bf16.gmra.mxu0 %v861
    %v1431 = vpop.f32.mrf.mxu0
    %v1432 = vadd.f32 %v1022, %v1431
    %v1433 = vpop.f32.mrf.mxu0
    %v1434 = vadd.f32 %v1022, %v1433
    %1435 = vmatmul.bf16.gmra.mxu0 %v862
    %v1436 = vpop.f32.mrf.mxu0
    %v1437 = vadd.f32 %v1022, %v1436
    %v1438 = vpop.f32.mrf.mxu0
    %v1439 = vadd.f32 %v1022, %v1438
    %1440 = vmatmul.bf16.gmra.mxu0 %v863
    %v1441 = vpop.f32.mrf.mxu0
    %v1442 = vadd.f32 %v1022, %v1441
    %v1443 = vpop.f32.mrf.mxu0
    %v1444 = vadd.f32 %v1022, %v1443
    %1445 = vmatmul.bf16.gmra.mxu0 %v864
    %v1446 = vpop.f32.mrf.mxu0
    %v1447 = vadd.f32 %v1022, %v1446
    %v1448 = vpop.f32.mrf.mxu0
    %v1449 = vadd.f32 %v1022, %v1448
    %1450 = vmatmul.bf16.gmra.mxu0 %v865
    %v1451 = vpop.f32.mrf.mxu0
    %v1452 = vadd.f32 %v1022, %v1451
    %v1453 = vpop.f32.mrf.mxu0
    %v1454 = vadd.f32 %v1022, %v1453
    %1455 = vmatmul.bf16.gmra.mxu0 %v866
    %v1456 = vpop.f32.mrf.mxu0
    %v1457 = vadd.f32 %v1022, %v1456
    %v1458 = vpop.f32.mrf.mxu0
    %v1459 = vadd.f32 %v1022, %v1458
    %1460 = vdwg.mxu0
    %1461 = vmatpush.bf16.msra.mxu0 %v1200
    %1462 = vmatpush.bf16.msra.mxu0 %v1198
    %1463 = vmatpush.bf16.msra.mxu0 %v1196
    %1464 = vmatpush.bf16.msra.mxu0 %v1194
    %1465 = vmatpush.bf16.msra.mxu0 %v1192
    %1466 = vmatpush.bf16.msra.mxu0 %v1190
    %1467 = vmatpush.bf16.msra.mxu0 %v1188
    %1468 = vmatpush.bf16.msra.mxu0 %v1186
    %1469 = vmatmul.bf16.gmra.mxu0 %v907
    %v1470 = vpop.f32.mrf.mxu0
    %v1471 = vadd.f32 %v1422, %v1470
    %v1472 = vpop.f32.mrf.mxu0
    %v1473 = vadd.f32 %v1424, %v1472
    %1474 = vmatmul.bf16.gmra.mxu0 %v908
    %v1475 = vpop.f32.mrf.mxu0
    %v1476 = vadd.f32 %v1427, %v1475
    %v1477 = vpop.f32.mrf.mxu0
    %v1478 = vadd.f32 %v1429, %v1477
    %1479 = vmatmul.bf16.gmra.mxu0 %v909
    %v1480 = vpop.f32.mrf.mxu0
    %v1481 = vadd.f32 %v1432, %v1480
    %v1482 = vpop.f32.mrf.mxu0
    %v1483 = vadd.f32 %v1434, %v1482
    %1484 = vmatmul.bf16.gmra.mxu0 %v910
    %v1485 = vpop.f32.mrf.mxu0
    %v1486 = vadd.f32 %v1437, %v1485
    %v1487 = vpop.f32.mrf.mxu0
    %v1488 = vadd.f32 %v1439, %v1487
    %1489 = vmatmul.bf16.gmra.mxu0 %v911
    %v1490 = vpop.f32.mrf.mxu0
    %v1491 = vadd.f32 %v1442, %v1490
    %v1492 = vpop.f32.mrf.mxu0
    %v1493 = vadd.f32 %v1444, %v1492
    %1494 = vmatmul.bf16.gmra.mxu0 %v912
    %v1495 = vpop.f32.mrf.mxu0
    %v1496 = vadd.f32 %v1447, %v1495
    %v1497 = vpop.f32.mrf.mxu0
    %v1498 = vadd.f32 %v1449, %v1497
    %1499 = vmatmul.bf16.gmra.mxu0 %v913
    %v1500 = vpop.f32.mrf.mxu0
    %v1501 = vadd.f32 %v1452, %v1500
    %v1502 = vpop.f32.mrf.mxu0
    %v1503 = vadd.f32 %v1454, %v1502
    %1504 = vmatmul.bf16.gmra.mxu0 %v914
    %v1505 = vpop.f32.mrf.mxu0
    %v1506 = vadd.f32 %v1457, %v1505
    %v1507 = vpop.f32.mrf.mxu0
    %v1508 = vadd.f32 %v1459, %v1507
    %1509 = vdwg.mxu0
    %1510 = vmatpush.bf16.msra.mxu0 %v1216
    %1511 = vmatpush.bf16.msra.mxu0 %v1214
    %1512 = vmatpush.bf16.msra.mxu0 %v1212
    %1513 = vmatpush.bf16.msra.mxu0 %v1210
    %1514 = vmatpush.bf16.msra.mxu0 %v1208
    %1515 = vmatpush.bf16.msra.mxu0 %v1206
    %1516 = vmatpush.bf16.msra.mxu0 %v1204
    %1517 = vmatpush.bf16.msra.mxu0 %v1202
    %1518 = vmatmul.bf16.gmra.mxu0 %v955
    %v1519 = vpop.f32.mrf.mxu0
    %v1520 = vadd.f32 %v1471, %v1519
    %v1521 = vpop.f32.mrf.mxu0
    %v1522 = vadd.f32 %v1473, %v1521
    %1523 = vmatmul.bf16.gmra.mxu0 %v956
    %v1524 = vpop.f32.mrf.mxu0
    %v1525 = vadd.f32 %v1476, %v1524
    %v1526 = vpop.f32.mrf.mxu0
    %v1527 = vadd.f32 %v1478, %v1526
    %1528 = vmatmul.bf16.gmra.mxu0 %v957
    %v1529 = vpop.f32.mrf.mxu0
    %v1530 = vadd.f32 %v1481, %v1529
    %v1531 = vpop.f32.mrf.mxu0
    %v1532 = vadd.f32 %v1483, %v1531
    %1533 = vmatmul.bf16.gmra.mxu0 %v958
    %v1534 = vpop.f32.mrf.mxu0
    %v1535 = vadd.f32 %v1486, %v1534
    %v1536 = vpop.f32.mrf.mxu0
    %v1537 = vadd.f32 %v1488, %v1536
    %1538 = vmatmul.bf16.gmra.mxu0 %v959
    %v1539 = vpop.f32.mrf.mxu0
    %v1540 = vadd.f32 %v1491, %v1539
    %v1541 = vpop.f32.mrf.mxu0
    %v1542 = vadd.f32 %v1493, %v1541
    %1543 = vmatmul.bf16.gmra.mxu0 %v960
    %v1544 = vpop.f32.mrf.mxu0
    %v1545 = vadd.f32 %v1496, %v1544
    %v1546 = vpop.f32.mrf.mxu0
    %v1547 = vadd.f32 %v1498, %v1546
    %1548 = vmatmul.bf16.gmra.mxu0 %v961
    %v1549 = vpop.f32.mrf.mxu0
    %v1550 = vadd.f32 %v1501, %v1549
    %v1551 = vpop.f32.mrf.mxu0
    %v1552 = vadd.f32 %v1503, %v1551
    %1553 = vmatmul.bf16.gmra.mxu0 %v962
    %v1554 = vpop.f32.mrf.mxu0
    %v1555 = vadd.f32 %v1506, %v1554
    %v1556 = vpop.f32.mrf.mxu0
    %v1557 = vadd.f32 %v1508, %v1556
    %1558 = vdwg.mxu0
    %v1559 = vmax.f32 %v1373, 0.0
    %v1560 = vmax.f32 %v1520, 0.0
    %v1561 = vmax.f32 %v1375, 0.0
    %v1562 = vmax.f32 %v1522, 0.0
    %v1563 = vmax.f32 %v1378, 0.0
    %v1564 = vmax.f32 %v1525, 0.0
    %v1565 = vmax.f32 %v1380, 0.0
    %v1566 = vmax.f32 %v1527, 0.0
    %v1567 = vmax.f32 %v1383, 0.0
    %v1568 = vmax.f32 %v1530, 0.0
    %v1569 = vmax.f32 %v1385, 0.0
    %v1570 = vmax.f32 %v1532, 0.0
    %v1571 = vmax.f32 %v1388, 0.0
    %v1572 = vmax.f32 %v1535, 0.0
    %v1573 = vmax.f32 %v1390, 0.0
    %v1574 = vmax.f32 %v1537, 0.0
    %v1575 = vmax.f32 %v1393, 0.0
    %v1576 = vmax.f32 %v1540, 0.0
    %v1577 = vmax.f32 %v1395, 0.0
    %v1578 = vmax.f32 %v1542, 0.0
    %v1579 = vmax.f32 %v1398, 0.0
    %v1580 = vmax.f32 %v1545, 0.0
    %v1581 = vmax.f32 %v1400, 0.0
    %v1582 = vmax.f32 %v1547, 0.0
    %v1583 = vmax.f32 %v1403, 0.0
    %v1584 = vmax.f32 %v1550, 0.0
    %v1585 = vmax.f32 %v1405, 0.0
    %v1586 = vmax.f32 %v1552, 0.0
    %v1587 = vmax.f32 %v1408, 0.0
    %v1588 = vmax.f32 %v1555, 0.0
    %v1589 = vmax.f32 %v1410, 0.0
    %v1590 = vmax.f32 %v1557, 0.0
    %v1593 = vrot.slane %v1589, 7
    %v1594 = vrot.slane %v1590, 7
    %v1627 = vrot.slane %v1559, 7
    %v1628 = vrot.slane %v1560, 7
    %v1629 = vrot.slane %v1561, 7
    %v1630 = vsel %vm569, %v1627, %v1629
    %v1631 = vrot.slane %v1562, 7
    %v1632 = vsel %vm569, %v1628, %v1631
    %v1633 = vrot.slane %v1563, 7
    %v1634 = vsel %vm569, %v1629, %v1633
    %v1635 = vrot.slane %v1564, 7
    %v1636 = vsel %vm569, %v1631, %v1635
    %v1637 = vrot.slane %v1565, 7
    %v1638 = vsel %vm569, %v1633, %v1637
    %v1639 = vrot.slane %v1566, 7
    %v1640 = vsel %vm569, %v1635, %v1639
    %v1641 = vrot.slane %v1567, 7
    %v1642 = vsel %vm569, %v1637, %v1641
    %v1643 = vrot.slane %v1568, 7
    %v1644 = vsel %vm569, %v1639, %v1643
    %v1645 = vrot.slane %v1569, 7
    %v1646 = vsel %vm569, %v1641, %v1645
    %v1647 = vrot.slane %v1570, 7
    %v1648 = vsel %vm569, %v1643, %v1647
    %v1649 = vrot.slane %v1571, 7
    %v1650 = vsel %vm569, %v1645, %v1649
    %v1651 = vrot.slane %v1572, 7
    %v1652 = vsel %vm569, %v1647, %v1651
    %v1653 = vrot.slane %v1573, 7
    %v1654 = vsel %vm569, %v1649, %v1653
    %v1655 = vrot.slane %v1574, 7
    %v1656 = vsel %vm569, %v1651, %v1655
    %v1657 = vrot.slane %v1575, 7
    %v1658 = vsel %vm569, %v1653, %v1657
    %v1659 = vrot.slane %v1576, 7
    %v1660 = vsel %vm569, %v1655, %v1659
    %v1661 = vrot.slane %v1577, 7
    %v1662 = vsel %vm569, %v1657, %v1661
    %v1663 = vrot.slane %v1578, 7
    %v1664 = vsel %vm569, %v1659, %v1663
    %v1665 = vrot.slane %v1579, 7
    %v1666 = vsel %vm569, %v1661, %v1665
    %v1667 = vrot.slane %v1580, 7
    %v1668 = vsel %vm569, %v1663, %v1667
    %v1669 = vrot.slane %v1581, 7
    %v1670 = vsel %vm569, %v1665, %v1669
    %v1671 = vrot.slane %v1582, 7
    %v1672 = vsel %vm569, %v1667, %v1671
    %v1673 = vrot.slane %v1583, 7
    %v1674 = vsel %vm569, %v1669, %v1673
    %v1675 = vrot.slane %v1584, 7
    %v1676 = vsel %vm569, %v1671, %v1675
    %v1677 = vrot.slane %v1585, 7
    %v1678 = vsel %vm569, %v1673, %v1677
    %v1679 = vrot.slane %v1586, 7
    %v1680 = vsel %vm569, %v1675, %v1679
    %v1681 = vrot.slane %v1587, 7
    %v1682 = vsel %vm569, %v1677, %v1681
    %v1683 = vrot.slane %v1588, 7
    %v1684 = vsel %vm569, %v1679, %v1683
    %v1685 = vsel %vm569, %v1681, %v1593
    %v1686 = vsel %vm569, %v1683, %v1594
    %v1719 = vsel %vm569, %v1593, %v1627
    %v1720 = vsel %vm569, %v1594, %v1628
    %v1721 = vsel %vm633, %v1719, 0.0
    %v1722 = vsel %vm633, %v1720, 0.0
    %v1723 = vsel %vm634, %v1630, 0.0
    %v1724 = vsel %vm634, %v1632, 0.0
    %v1725 = vsel %vm635, %v1634, 0.0
    %v1726 = vsel %vm635, %v1636, 0.0
    %v1727 = vsel %vm636, %v1638, 0.0
    %v1728 = vsel %vm636, %v1640, 0.0
    %v1729 = vsel %vm637, %v1642, 0.0
    %v1730 = vsel %vm637, %v1644, 0.0
    %v1731 = vsel %vm638, %v1646, 0.0
    %v1732 = vsel %vm638, %v1648, 0.0
    %v1733 = vsel %vm639, %v1650, 0.0
    %v1734 = vsel %vm639, %v1652, 0.0
    %v1735 = vsel %vm640, %v1654, 0.0
    %v1736 = vsel %vm640, %v1656, 0.0
    %v1737 = vsel %vm641, %v1658, 0.0
    %v1738 = vsel %vm641, %v1660, 0.0
    %v1739 = vsel %vm642, %v1662, 0.0
    %v1740 = vsel %vm642, %v1664, 0.0
    %v1741 = vsel %vm643, %v1666, 0.0
    %v1742 = vsel %vm643, %v1668, 0.0
    %v1743 = vsel %vm644, %v1670, 0.0
    %v1744 = vsel %vm644, %v1672, 0.0
    %v1745 = vsel %vm645, %v1674, 0.0
    %v1746 = vsel %vm645, %v1676, 0.0
    %v1747 = vsel %vm646, %v1678, 0.0
    %v1748 = vsel %vm646, %v1680, 0.0
    %v1749 = vsel %vm647, %v1682, 0.0
    %v1750 = vsel %vm647, %v1684, 0.0
    %v1751 = vsel %vm648, %v1685, 0.0
    %v1752 = vsel %vm648, %v1686, 0.0
    %v1753 = vrot.slane %v1559, 1
    %v1754 = vrot.slane %v1561, 1
    %v1755 = vsel %vm681, %v1753, %v1754
    %v1756 = vrot.slane %v1560, 1
    %v1757 = vrot.slane %v1562, 1
    %v1758 = vsel %vm681, %v1756, %v1757
    %v1759 = vrot.slane %v1563, 1
    %v1760 = vsel %vm681, %v1754, %v1759
    %v1761 = vrot.slane %v1564, 1
    %v1762 = vsel %vm681, %v1757, %v1761
    %v1763 = vrot.slane %v1565, 1
    %v1764 = vsel %vm681, %v1759, %v1763
    %v1765 = vrot.slane %v1566, 1
    %v1766 = vsel %vm681, %v1761, %v1765
    %v1767 = vrot.slane %v1567, 1
    %v1768 = vsel %vm681, %v1763, %v1767
    %v1769 = vrot.slane %v1568, 1
    %v1770 = vsel %vm681, %v1765, %v1769
    %v1771 = vrot.slane %v1569, 1
    %v1772 = vsel %vm681, %v1767, %v1771
    %v1773 = vrot.slane %v1570, 1
    %v1774 = vsel %vm681, %v1769, %v1773
    %v1775 = vrot.slane %v1571, 1
    %v1776 = vsel %vm681, %v1771, %v1775
    %v1777 = vrot.slane %v1572, 1
    %v1778 = vsel %vm681, %v1773, %v1777
    %v1779 = vrot.slane %v1573, 1
    %v1780 = vsel %vm681, %v1775, %v1779
    %v1781 = vrot.slane %v1574, 1
    %v1782 = vsel %vm681, %v1777, %v1781
    %v1783 = vrot.slane %v1575, 1
    %v1784 = vsel %vm681, %v1779, %v1783
    %v1785 = vrot.slane %v1576, 1
    %v1786 = vsel %vm681, %v1781, %v1785
    %v1787 = vrot.slane %v1577, 1
    %v1788 = vsel %vm681, %v1783, %v1787
    %v1789 = vrot.slane %v1578, 1
    %v1790 = vsel %vm681, %v1785, %v1789
    %v1791 = vrot.slane %v1579, 1
    %v1792 = vsel %vm681, %v1787, %v1791
    %v1793 = vrot.slane %v1580, 1
    %v1794 = vsel %vm681, %v1789, %v1793
    %v1795 = vrot.slane %v1581, 1
    %v1796 = vsel %vm681, %v1791, %v1795
    %v1797 = vrot.slane %v1582, 1
    %v1798 = vsel %vm681, %v1793, %v1797
    %v1799 = vrot.slane %v1583, 1
    %v1800 = vsel %vm681, %v1795, %v1799
    %v1801 = vrot.slane %v1584, 1
    %v1802 = vsel %vm681, %v1797, %v1801
    %v1803 = vrot.slane %v1585, 1
    %v1804 = vsel %vm681, %v1799, %v1803
    %v1805 = vrot.slane %v1586, 1
    %v1806 = vsel %vm681, %v1801, %v1805
    %v1807 = vrot.slane %v1587, 1
    %v1808 = vsel %vm681, %v1803, %v1807
    %v1809 = vrot.slane %v1588, 1
    %v1810 = vsel %vm681, %v1805, %v1809
    %v1811 = vrot.slane %v1589, 1
    %v1812 = vsel %vm681, %v1807, %v1811
    %v1813 = vrot.slane %v1590, 1
    %v1814 = vsel %vm681, %v1809, %v1813
    %v1849 = vsel %vm681, %v1811, %v1753
    %v1850 = vsel %vm681, %v1813, %v1756
    %v1851 = vsel %vm747, %v1755, 0.0
    %v1852 = vsel %vm747, %v1758, 0.0
    %v1853 = vsel %vm748, %v1760, 0.0
    %v1854 = vsel %vm748, %v1762, 0.0
    %v1855 = vsel %vm749, %v1764, 0.0
    %v1856 = vsel %vm749, %v1766, 0.0
    %v1857 = vsel %vm750, %v1768, 0.0
    %v1858 = vsel %vm750, %v1770, 0.0
    %v1859 = vsel %vm751, %v1772, 0.0
    %v1860 = vsel %vm751, %v1774, 0.0
    %v1861 = vsel %vm752, %v1776, 0.0
    %v1862 = vsel %vm752, %v1778, 0.0
    %v1863 = vsel %vm753, %v1780, 0.0
    %v1864 = vsel %vm753, %v1782, 0.0
    %v1865 = vsel %vm754, %v1784, 0.0
    %v1866 = vsel %vm754, %v1786, 0.0
    %v1867 = vsel %vm755, %v1788, 0.0
    %v1868 = vsel %vm755, %v1790, 0.0
    %v1869 = vsel %vm756, %v1792, 0.0
    %v1870 = vsel %vm756, %v1794, 0.0
    %v1871 = vsel %vm757, %v1796, 0.0
    %v1872 = vsel %vm757, %v1798, 0.0
    %v1873 = vsel %vm758, %v1800, 0.0
    %v1874 = vsel %vm758, %v1802, 0.0
    %v1875 = vsel %vm759, %v1804, 0.0
    %v1876 = vsel %vm759, %v1806, 0.0
    %v1877 = vsel %vm760, %v1808, 0.0
    %v1878 = vsel %vm760, %v1810, 0.0
    %v1879 = vsel %vm761, %v1812, 0.0
    %v1880 = vsel %vm761, %v1814, 0.0
    %v1881 = vsel %vm762, %v1849, 0.0
    %v1882 = vsel %vm762, %v1850, 0.0
    %v1883 = vpack.c.bf16 %v1722, %v1721
    %v1884 = vpack.c.bf16 %v1724, %v1723
    %v1885 = vpack.c.bf16 %v1726, %v1725
    %v1886 = vpack.c.bf16 %v1728, %v1727
    %v1887 = vpack.c.bf16 %v1730, %v1729
    %v1888 = vpack.c.bf16 %v1732, %v1731
    %v1889 = vpack.c.bf16 %v1734, %v1733
    %v1890 = vpack.c.bf16 %v1736, %v1735
    %v1891 = vpack.c.bf16 %v1738, %v1737
    %v1892 = vpack.c.bf16 %v1740, %v1739
    %v1893 = vpack.c.bf16 %v1742, %v1741
    %v1894 = vpack.c.bf16 %v1744, %v1743
    %v1895 = vpack.c.bf16 %v1746, %v1745
    %v1896 = vpack.c.bf16 %v1748, %v1747
    %v1897 = vpack.c.bf16 %v1750, %v1749
    %v1898 = vpack.c.bf16 %v1752, %v1751
    %v1899 = vpack.c.bf16 %v1560, %v1559
    %v1900 = vpack.c.bf16 %v1562, %v1561
    %v1901 = vpack.c.bf16 %v1564, %v1563
    %v1902 = vpack.c.bf16 %v1566, %v1565
    %v1903 = vpack.c.bf16 %v1568, %v1567
    %v1904 = vpack.c.bf16 %v1570, %v1569
    %v1905 = vpack.c.bf16 %v1572, %v1571
    %v1906 = vpack.c.bf16 %v1574, %v1573
    %v1907 = vpack.c.bf16 %v1576, %v1575
    %v1908 = vpack.c.bf16 %v1578, %v1577
    %v1909 = vpack.c.bf16 %v1580, %v1579
    %v1910 = vpack.c.bf16 %v1582, %v1581
    %v1911 = vpack.c.bf16 %v1584, %v1583
    %v1912 = vpack.c.bf16 %v1586, %v1585
    %v1913 = vpack.c.bf16 %v1588, %v1587
    %v1914 = vpack.c.bf16 %v1590, %v1589
    %v1915 = vpack.c.bf16 %v1852, %v1851
    %v1916 = vpack.c.bf16 %v1854, %v1853
    %v1917 = vpack.c.bf16 %v1856, %v1855
    %v1918 = vpack.c.bf16 %v1858, %v1857
    %v1919 = vpack.c.bf16 %v1860, %v1859
    %v1920 = vpack.c.bf16 %v1862, %v1861
    %v1921 = vpack.c.bf16 %v1864, %v1863
    %v1922 = vpack.c.bf16 %v1866, %v1865
    %v1923 = vpack.c.bf16 %v1868, %v1867
    %v1924 = vpack.c.bf16 %v1870, %v1869
    %v1925 = vpack.c.bf16 %v1872, %v1871
    %v1926 = vpack.c.bf16 %v1874, %v1873
    %v1927 = vpack.c.bf16 %v1876, %v1875
    %v1928 = vpack.c.bf16 %v1878, %v1877
    %v1929 = vpack.c.bf16 %v1880, %v1879
    %v1930 = vpack.c.bf16 %v1882, %v1881
    %v1947 = vunpack.c.l.b16 %v1883
    %v1948 = vunpack.c.h.b16 %v1883
    %v1949 = vunpack.c.l.b16 %v1884
    %v1950 = vunpack.c.h.b16 %v1884
    %v1951 = vunpack.c.l.b16 %v1885
    %v1952 = vunpack.c.h.b16 %v1885
    %v1953 = vunpack.c.l.b16 %v1886
    %v1954 = vunpack.c.h.b16 %v1886
    %v1955 = vunpack.c.l.b16 %v1887
    %v1956 = vunpack.c.h.b16 %v1887
    %v1957 = vunpack.c.l.b16 %v1888
    %v1958 = vunpack.c.h.b16 %v1888
    %v1959 = vunpack.c.l.b16 %v1889
    %v1960 = vunpack.c.h.b16 %v1889
    %v1961 = vunpack.c.l.b16 %v1890
    %v1962 = vunpack.c.h.b16 %v1890
    %v1963 = vunpack.c.l.b16 %v1891
    %v1964 = vunpack.c.h.b16 %v1891
    %v1965 = vunpack.c.l.b16 %v1892
    %v1966 = vunpack.c.h.b16 %v1892
    %v1967 = vunpack.c.l.b16 %v1893
    %v1968 = vunpack.c.h.b16 %v1893
    %v1969 = vunpack.c.l.b16 %v1894
    %v1970 = vunpack.c.h.b16 %v1894
    %v1971 = vunpack.c.l.b16 %v1895
    %v1972 = vunpack.c.h.b16 %v1895
    %v1973 = vunpack.c.l.b16 %v1896
    %v1974 = vunpack.c.h.b16 %v1896
    %v1975 = vunpack.c.l.b16 %v1897
    %v1976 = vunpack.c.h.b16 %v1897
    %v1977 = vunpack.c.l.b16 %v1898
    %v1978 = vunpack.c.h.b16 %v1898
    %v1979 = vpack.c.b16 %v1949, %v1947
    %v1980 = vpack.c.b16 %v1950, %v1948
    %v1981 = vpack.c.b16 %v1953, %v1951
    %v1982 = vpack.c.b16 %v1954, %v1952
    %v1983 = vpack.c.b16 %v1957, %v1955
    %v1984 = vpack.c.b16 %v1958, %v1956
    %v1985 = vpack.c.b16 %v1961, %v1959
    %v1986 = vpack.c.b16 %v1962, %v1960
    %v1987 = vpack.c.b16 %v1965, %v1963
    %v1988 = vpack.c.b16 %v1966, %v1964
    %v1989 = vpack.c.b16 %v1969, %v1967
    %v1990 = vpack.c.b16 %v1970, %v1968
    %v1991 = vpack.c.b16 %v1973, %v1971
    %v1992 = vpack.c.b16 %v1974, %v1972
    %v1993 = vpack.c.b16 %v1977, %v1975
    %v1994 = vpack.c.b16 %v1978, %v1976
    %v2027 = vunpack.c.l.b16 %v1899
    %v2028 = vunpack.c.h.b16 %v1899
    %v2029 = vunpack.c.l.b16 %v1900
    %v2030 = vunpack.c.h.b16 %v1900
    %v2031 = vunpack.c.l.b16 %v1901
    %v2032 = vunpack.c.h.b16 %v1901
    %v2033 = vunpack.c.l.b16 %v1902
    %v2034 = vunpack.c.h.b16 %v1902
    %v2035 = vunpack.c.l.b16 %v1903
    %v2036 = vunpack.c.h.b16 %v1903
    %v2037 = vunpack.c.l.b16 %v1904
    %v2038 = vunpack.c.h.b16 %v1904
    %v2039 = vunpack.c.l.b16 %v1905
    %v2040 = vunpack.c.h.b16 %v1905
    %v2041 = vunpack.c.l.b16 %v1906
    %v2042 = vunpack.c.h.b16 %v1906
    %v2043 = vunpack.c.l.b16 %v1907
    %v2044 = vunpack.c.h.b16 %v1907
    %v2045 = vunpack.c.l.b16 %v1908
    %v2046 = vunpack.c.h.b16 %v1908
    %v2047 = vunpack.c.l.b16 %v1909
    %v2048 = vunpack.c.h.b16 %v1909
    %v2049 = vunpack.c.l.b16 %v1910
    %v2050 = vunpack.c.h.b16 %v1910
    %v2051 = vunpack.c.l.b16 %v1911
    %v2052 = vunpack.c.h.b16 %v1911
    %v2053 = vunpack.c.l.b16 %v1912
    %v2054 = vunpack.c.h.b16 %v1912
    %v2055 = vunpack.c.l.b16 %v1913
    %v2056 = vunpack.c.h.b16 %v1913
    %v2057 = vunpack.c.l.b16 %v1914
    %v2058 = vunpack.c.h.b16 %v1914
    %v2059 = vpack.c.b16 %v2029, %v2027
    %v2060 = vpack.c.b16 %v2030, %v2028
    %v2061 = vpack.c.b16 %v2033, %v2031
    %v2062 = vpack.c.b16 %v2034, %v2032
    %v2063 = vpack.c.b16 %v2037, %v2035
    %v2064 = vpack.c.b16 %v2038, %v2036
    %v2065 = vpack.c.b16 %v2041, %v2039
    %v2066 = vpack.c.b16 %v2042, %v2040
    %v2067 = vpack.c.b16 %v2045, %v2043
    %v2068 = vpack.c.b16 %v2046, %v2044
    %v2069 = vpack.c.b16 %v2049, %v2047
    %v2070 = vpack.c.b16 %v2050, %v2048
    %v2071 = vpack.c.b16 %v2053, %v2051
    %v2072 = vpack.c.b16 %v2054, %v2052
    %v2073 = vpack.c.b16 %v2057, %v2055
    %v2074 = vpack.c.b16 %v2058, %v2056
    %v2107 = vunpack.c.l.b16 %v1915
    %v2108 = vunpack.c.h.b16 %v1915
    %v2109 = vunpack.c.l.b16 %v1916
    %v2110 = vunpack.c.h.b16 %v1916
    %v2111 = vunpack.c.l.b16 %v1917
    %v2112 = vunpack.c.h.b16 %v1917
    %v2113 = vunpack.c.l.b16 %v1918
    %v2114 = vunpack.c.h.b16 %v1918
    %v2115 = vunpack.c.l.b16 %v1919
    %v2116 = vunpack.c.h.b16 %v1919
    %v2117 = vunpack.c.l.b16 %v1920
    %v2118 = vunpack.c.h.b16 %v1920
    %v2119 = vunpack.c.l.b16 %v1921
    %v2120 = vunpack.c.h.b16 %v1921
    %v2121 = vunpack.c.l.b16 %v1922
    %v2122 = vunpack.c.h.b16 %v1922
    %v2123 = vunpack.c.l.b16 %v1923
    %v2124 = vunpack.c.h.b16 %v1923
    %v2125 = vunpack.c.l.b16 %v1924
    %v2126 = vunpack.c.h.b16 %v1924
    %v2127 = vunpack.c.l.b16 %v1925
    %v2128 = vunpack.c.h.b16 %v1925
    %v2129 = vunpack.c.l.b16 %v1926
    %v2130 = vunpack.c.h.b16 %v1926
    %v2131 = vunpack.c.l.b16 %v1927
    %v2132 = vunpack.c.h.b16 %v1927
    %v2133 = vunpack.c.l.b16 %v1928
    %v2134 = vunpack.c.h.b16 %v1928
    %v2135 = vunpack.c.l.b16 %v1929
    %v2136 = vunpack.c.h.b16 %v1929
    %v2137 = vunpack.c.l.b16 %v1930
    %v2138 = vunpack.c.h.b16 %v1930
    %v2139 = vpack.c.b16 %v2109, %v2107
    %v2140 = vpack.c.b16 %v2110, %v2108
    %v2141 = vpack.c.b16 %v2113, %v2111
    %v2142 = vpack.c.b16 %v2114, %v2112
    %v2143 = vpack.c.b16 %v2117, %v2115
    %v2144 = vpack.c.b16 %v2118, %v2116
    %v2145 = vpack.c.b16 %v2121, %v2119
    %v2146 = vpack.c.b16 %v2122, %v2120
    %v2147 = vpack.c.b16 %v2125, %v2123
    %v2148 = vpack.c.b16 %v2126, %v2124
    %v2149 = vpack.c.b16 %v2129, %v2127
    %v2150 = vpack.c.b16 %v2130, %v2128
    %v2151 = vpack.c.b16 %v2133, %v2131
    %v2152 = vpack.c.b16 %v2134, %v2132
    %v2153 = vpack.c.b16 %v2137, %v2135
    %v2154 = vpack.c.b16 %v2138, %v2136
    %v2171 = vld [vmem:[%s4] sm:$0xff]
    %v2172 = vld [vmem:[%s4 + $0x8] sm:$0xff]
    %v2173 = vld [vmem:[%s4 + $0x10] sm:$0xff]
    %v2174 = vld [vmem:[%s4 + $0x18] sm:$0xff]
    %v2175 = vld [vmem:[%s4 + $0x20] sm:$0xff]
    %v2176 = vld [vmem:[%s4 + $0x28] sm:$0xff]
    %v2177 = vld [vmem:[%s4 + $0x30] sm:$0xff]
    %v2178 = vld [vmem:[%s4 + $0x38] sm:$0xff]
    %v2179 = vld [vmem:[%s4 + $0x40] sm:$0xff]
    %v2180 = vld [vmem:[%s4 + $0x48] sm:$0xff]
    %v2181 = vld [vmem:[%s4 + $0x50] sm:$0xff]
    %v2182 = vld [vmem:[%s4 + $0x58] sm:$0xff]
    %v2183 = vld [vmem:[%s4 + $0x60] sm:$0xff]
    %v2184 = vld [vmem:[%s4 + $0x68] sm:$0xff]
    %v2185 = vld [vmem:[%s4 + $0x70] sm:$0xff]
    %v2186 = vld [vmem:[%s4 + $0x78] sm:$0xff]
    %v2187 = vld [vmem:[%s4 + $0x80] sm:$0xff]
    %v2188 = vld [vmem:[%s4 + $0x88] sm:$0xff]
    %v2189 = vld [vmem:[%s4 + $0x90] sm:$0xff]
    %v2190 = vld [vmem:[%s4 + $0x98] sm:$0xff]
    %v2191 = vld [vmem:[%s4 + $0xa0] sm:$0xff]
    %v2192 = vld [vmem:[%s4 + $0xa8] sm:$0xff]
    %v2193 = vld [vmem:[%s4 + $0xb0] sm:$0xff]
    %v2194 = vld [vmem:[%s4 + $0xb8] sm:$0xff]
    %v2195 = vld [vmem:[%s4 + $0xc0] sm:$0xff]
    %v2196 = vld [vmem:[%s4 + $0xc8] sm:$0xff]
    %v2197 = vld [vmem:[%s4 + $0xd0] sm:$0xff]
    %v2198 = vld [vmem:[%s4 + $0xd8] sm:$0xff]
    %v2199 = vld [vmem:[%s4 + $0xe0] sm:$0xff]
    %v2200 = vld [vmem:[%s4 + $0xe8] sm:$0xff]
    %v2201 = vld [vmem:[%s4 + $0xf0] sm:$0xff]
    %v2202 = vld [vmem:[%s4 + $0xf8] sm:$0xff]
    %v2203 = vld [vmem:[%s4 + $0x100] sm:$0xff]
    %v2204 = vld [vmem:[%s4 + $0x108] sm:$0xff]
    %v2205 = vld [vmem:[%s4 + $0x110] sm:$0xff]
    %v2206 = vld [vmem:[%s4 + $0x118] sm:$0xff]
    %v2207 = vld [vmem:[%s4 + $0x120] sm:$0xff]
    %v2208 = vld [vmem:[%s4 + $0x128] sm:$0xff]
    %v2209 = vld [vmem:[%s4 + $0x130] sm:$0xff]
    %v2210 = vld [vmem:[%s4 + $0x138] sm:$0xff]
    %v2211 = vld [vmem:[%s4 + $0x140] sm:$0xff]
    %v2212 = vld [vmem:[%s4 + $0x148] sm:$0xff]
    %v2213 = vld [vmem:[%s4 + $0x150] sm:$0xff]
    %v2214 = vld [vmem:[%s4 + $0x158] sm:$0xff]
    %v2215 = vld [vmem:[%s4 + $0x160] sm:$0xff]
    %v2216 = vld [vmem:[%s4 + $0x168] sm:$0xff]
    %v2217 = vld [vmem:[%s4 + $0x170] sm:$0xff]
    %v2218 = vld [vmem:[%s4 + $0x178] sm:$0xff]
    %v2219 = vld [vmem:[%s4 + $0x180] sm:$0xff]
    %v2220 = vld [vmem:[%s4 + $0x188] sm:$0xff]
    %v2221 = vld [vmem:[%s4 + $0x190] sm:$0xff]
    %v2222 = vld [vmem:[%s4 + $0x198] sm:$0xff]
    %v2223 = vld [vmem:[%s4 + $0x1a0] sm:$0xff]
    %v2224 = vld [vmem:[%s4 + $0x1a8] sm:$0xff]
    %v2225 = vld [vmem:[%s4 + $0x1b0] sm:$0xff]
    %v2226 = vld [vmem:[%s4 + $0x1b8] sm:$0xff]
    %v2227 = vld [vmem:[%s4 + $0x1c0] sm:$0xff]
    %v2228 = vld [vmem:[%s4 + $0x1c8] sm:$0xff]
    %v2229 = vld [vmem:[%s4 + $0x1d0] sm:$0xff]
    %v2230 = vld [vmem:[%s4 + $0x1d8] sm:$0xff]
    %v2231 = vld [vmem:[%s4 + $0x1e0] sm:$0xff]
    %v2232 = vld [vmem:[%s4 + $0x1e8] sm:$0xff]
    %v2233 = vld [vmem:[%s4 + $0x1f0] sm:$0xff]
    %v2234 = vld [vmem:[%s4 + $0x1f8] sm:$0xff]
    %v2235 = vld [vmem:[%s4 + $0x200] sm:$0xff]
    %v2236 = vld [vmem:[%s4 + $0x208] sm:$0xff]
    %v2237 = vld [vmem:[%s4 + $0x210] sm:$0xff]
    %v2238 = vld [vmem:[%s4 + $0x218] sm:$0xff]
    %v2239 = vld [vmem:[%s4 + $0x220] sm:$0xff]
    %v2240 = vld [vmem:[%s4 + $0x228] sm:$0xff]
    %v2241 = vld [vmem:[%s4 + $0x230] sm:$0xff]
    %v2242 = vld [vmem:[%s4 + $0x238] sm:$0xff]
    %v2243 = vld [vmem:[%s4 + $0x240] sm:$0xff]
    %v2244 = vld [vmem:[%s4 + $0x248] sm:$0xff]
    %v2245 = vld [vmem:[%s4 + $0x250] sm:$0xff]
    %v2246 = vld [vmem:[%s4 + $0x258] sm:$0xff]
    %v2247 = vld [vmem:[%s4 + $0x260] sm:$0xff]
    %v2248 = vld [vmem:[%s4 + $0x268] sm:$0xff]
    %v2249 = vld [vmem:[%s4 + $0x270] sm:$0xff]
    %v2250 = vld [vmem:[%s4 + $0x278] sm:$0xff]
    %v2251 = vld [vmem:[%s4 + $0x280] sm:$0xff]
    %v2252 = vld [vmem:[%s4 + $0x288] sm:$0xff]
    %v2253 = vld [vmem:[%s4 + $0x290] sm:$0xff]
    %v2254 = vld [vmem:[%s4 + $0x298] sm:$0xff]
    %v2255 = vld [vmem:[%s4 + $0x2a0] sm:$0xff]
    %v2256 = vld [vmem:[%s4 + $0x2a8] sm:$0xff]
    %v2257 = vld [vmem:[%s4 + $0x2b0] sm:$0xff]
    %v2258 = vld [vmem:[%s4 + $0x2b8] sm:$0xff]
    %v2259 = vld [vmem:[%s4 + $0x2c0] sm:$0xff]
    %v2260 = vld [vmem:[%s4 + $0x2c8] sm:$0xff]
    %v2261 = vld [vmem:[%s4 + $0x2d0] sm:$0xff]
    %v2262 = vld [vmem:[%s4 + $0x2d8] sm:$0xff]
    %v2263 = vld [vmem:[%s4 + $0x2e0] sm:$0xff]
    %v2264 = vld [vmem:[%s4 + $0x2e8] sm:$0xff]
    %v2265 = vld [vmem:[%s4 + $0x2f0] sm:$0xff]
    %v2266 = vld [vmem:[%s4 + $0x2f8] sm:$0xff]
    %v2267 = vld [vmem:[%s5] sm:$0x3]
    %v2269 = vperm.slane %v2267, 0
    %v2270 = vperm.slane %v2267, 1
    %v2369 = vunpack.c.l.b16 %v2171
    %v2370 = vunpack.c.h.b16 %v2171
    %v2371 = vunpack.c.l.b16 %v2172
    %v2372 = vunpack.c.h.b16 %v2172
    %v2373 = vunpack.c.l.b16 %v2173
    %v2374 = vunpack.c.h.b16 %v2173
    %v2375 = vunpack.c.l.b16 %v2174
    %v2376 = vunpack.c.h.b16 %v2174
    %v2377 = vunpack.c.l.b16 %v2175
    %v2378 = vunpack.c.h.b16 %v2175
    %v2379 = vunpack.c.l.b16 %v2176
    %v2380 = vunpack.c.h.b16 %v2176
    %v2381 = vunpack.c.l.b16 %v2177
    %v2382 = vunpack.c.h.b16 %v2177
    %v2383 = vunpack.c.l.b16 %v2178
    %v2384 = vunpack.c.h.b16 %v2178
    %v2385 = vunpack.c.l.b16 %v2179
    %v2386 = vunpack.c.h.b16 %v2179
    %v2387 = vunpack.c.l.b16 %v2180
    %v2388 = vunpack.c.h.b16 %v2180
    %v2389 = vunpack.c.l.b16 %v2181
    %v2390 = vunpack.c.h.b16 %v2181
    %v2391 = vunpack.c.l.b16 %v2182
    %v2392 = vunpack.c.h.b16 %v2182
    %v2393 = vunpack.c.l.b16 %v2183
    %v2394 = vunpack.c.h.b16 %v2183
    %v2395 = vunpack.c.l.b16 %v2184
    %v2396 = vunpack.c.h.b16 %v2184
    %v2397 = vunpack.c.l.b16 %v2185
    %v2398 = vunpack.c.h.b16 %v2185
    %v2399 = vunpack.c.l.b16 %v2186
    %v2400 = vunpack.c.h.b16 %v2186
    %v2401 = vunpack.c.l.b16 %v2187
    %v2402 = vunpack.c.h.b16 %v2187
    %v2403 = vunpack.c.l.b16 %v2188
    %v2404 = vunpack.c.h.b16 %v2188
    %v2405 = vunpack.c.l.b16 %v2189
    %v2406 = vunpack.c.h.b16 %v2189
    %v2407 = vunpack.c.l.b16 %v2190
    %v2408 = vunpack.c.h.b16 %v2190
    %v2409 = vunpack.c.l.b16 %v2191
    %v2410 = vunpack.c.h.b16 %v2191
    %v2411 = vunpack.c.l.b16 %v2192
    %v2412 = vunpack.c.h.b16 %v2192
    %v2413 = vunpack.c.l.b16 %v2193
    %v2414 = vunpack.c.h.b16 %v2193
    %v2415 = vunpack.c.l.b16 %v2194
    %v2416 = vunpack.c.h.b16 %v2194
    %v2417 = vunpack.c.l.b16 %v2195
    %v2418 = vunpack.c.h.b16 %v2195
    %v2419 = vunpack.c.l.b16 %v2196
    %v2420 = vunpack.c.h.b16 %v2196
    %v2421 = vunpack.c.l.b16 %v2197
    %v2422 = vunpack.c.h.b16 %v2197
    %v2423 = vunpack.c.l.b16 %v2198
    %v2424 = vunpack.c.h.b16 %v2198
    %v2425 = vunpack.c.l.b16 %v2199
    %v2426 = vunpack.c.h.b16 %v2199
    %v2427 = vunpack.c.l.b16 %v2200
    %v2428 = vunpack.c.h.b16 %v2200
    %v2429 = vunpack.c.l.b16 %v2201
    %v2430 = vunpack.c.h.b16 %v2201
    %v2431 = vunpack.c.l.b16 %v2202
    %v2432 = vunpack.c.h.b16 %v2202
    %v2433 = vunpack.c.l.b16 %v2203
    %v2434 = vunpack.c.h.b16 %v2203
    %v2435 = vunpack.c.l.b16 %v2204
    %v2436 = vunpack.c.h.b16 %v2204
    %v2437 = vunpack.c.l.b16 %v2205
    %v2438 = vunpack.c.h.b16 %v2205
    %v2439 = vunpack.c.l.b16 %v2206
    %v2440 = vunpack.c.h.b16 %v2206
    %v2441 = vunpack.c.l.b16 %v2207
    %v2442 = vunpack.c.h.b16 %v2207
    %v2443 = vunpack.c.l.b16 %v2208
    %v2444 = vunpack.c.h.b16 %v2208
    %v2445 = vunpack.c.l.b16 %v2209
    %v2446 = vunpack.c.h.b16 %v2209
    %v2447 = vunpack.c.l.b16 %v2210
    %v2448 = vunpack.c.h.b16 %v2210
    %v2449 = vunpack.c.l.b16 %v2211
    %v2450 = vunpack.c.h.b16 %v2211
    %v2451 = vunpack.c.l.b16 %v2212
    %v2452 = vunpack.c.h.b16 %v2212
    %v2453 = vunpack.c.l.b16 %v2213
    %v2454 = vunpack.c.h.b16 %v2213
    %v2455 = vunpack.c.l.b16 %v2214
    %v2456 = vunpack.c.h.b16 %v2214
    %v2457 = vunpack.c.l.b16 %v2215
    %v2458 = vunpack.c.h.b16 %v2215
    %v2459 = vunpack.c.l.b16 %v2216
    %v2460 = vunpack.c.h.b16 %v2216
    %v2461 = vunpack.c.l.b16 %v2217
    %v2462 = vunpack.c.h.b16 %v2217
    %v2463 = vunpack.c.l.b16 %v2218
    %v2464 = vunpack.c.h.b16 %v2218
    %v2465 = vunpack.c.l.b16 %v2219
    %v2466 = vunpack.c.h.b16 %v2219
    %v2467 = vunpack.c.l.b16 %v2220
    %v2468 = vunpack.c.h.b16 %v2220
    %v2469 = vunpack.c.l.b16 %v2221
    %v2470 = vunpack.c.h.b16 %v2221
    %v2471 = vunpack.c.l.b16 %v2222
    %v2472 = vunpack.c.h.b16 %v2222
    %v2473 = vunpack.c.l.b16 %v2223
    %v2474 = vunpack.c.h.b16 %v2223
    %v2475 = vunpack.c.l.b16 %v2224
    %v2476 = vunpack.c.h.b16 %v2224
    %v2477 = vunpack.c.l.b16 %v2225
    %v2478 = vunpack.c.h.b16 %v2225
    %v2479 = vunpack.c.l.b16 %v2226
    %v2480 = vunpack.c.h.b16 %v2226
    %v2481 = vunpack.c.l.b16 %v2227
    %v2482 = vunpack.c.h.b16 %v2227
    %v2483 = vunpack.c.l.b16 %v2228
    %v2484 = vunpack.c.h.b16 %v2228
    %v2485 = vunpack.c.l.b16 %v2229
    %v2486 = vunpack.c.h.b16 %v2229
    %v2487 = vunpack.c.l.b16 %v2230
    %v2488 = vunpack.c.h.b16 %v2230
    %v2489 = vunpack.c.l.b16 %v2231
    %v2490 = vunpack.c.h.b16 %v2231
    %v2491 = vunpack.c.l.b16 %v2232
    %v2492 = vunpack.c.h.b16 %v2232
    %v2493 = vunpack.c.l.b16 %v2233
    %v2494 = vunpack.c.h.b16 %v2233
    %v2495 = vunpack.c.l.b16 %v2234
    %v2496 = vunpack.c.h.b16 %v2234
    %v2497 = vunpack.c.l.b16 %v2235
    %v2498 = vunpack.c.h.b16 %v2235
    %v2499 = vunpack.c.l.b16 %v2236
    %v2500 = vunpack.c.h.b16 %v2236
    %v2501 = vunpack.c.l.b16 %v2237
    %v2502 = vunpack.c.h.b16 %v2237
    %v2503 = vunpack.c.l.b16 %v2238
    %v2504 = vunpack.c.h.b16 %v2238
    %v2505 = vunpack.c.l.b16 %v2239
    %v2506 = vunpack.c.h.b16 %v2239
    %v2507 = vunpack.c.l.b16 %v2240
    %v2508 = vunpack.c.h.b16 %v2240
    %v2509 = vunpack.c.l.b16 %v2241
    %v2510 = vunpack.c.h.b16 %v2241
    %v2511 = vunpack.c.l.b16 %v2242
    %v2512 = vunpack.c.h.b16 %v2242
    %v2513 = vunpack.c.l.b16 %v2243
    %v2514 = vunpack.c.h.b16 %v2243
    %v2515 = vunpack.c.l.b16 %v2244
    %v2516 = vunpack.c.h.b16 %v2244
    %v2517 = vunpack.c.l.b16 %v2245
    %v2518 = vunpack.c.h.b16 %v2245
    %v2519 = vunpack.c.l.b16 %v2246
    %v2520 = vunpack.c.h.b16 %v2246
    %v2521 = vunpack.c.l.b16 %v2247
    %v2522 = vunpack.c.h.b16 %v2247
    %v2523 = vunpack.c.l.b16 %v2248
    %v2524 = vunpack.c.h.b16 %v2248
    %v2525 = vunpack.c.l.b16 %v2249
    %v2526 = vunpack.c.h.b16 %v2249
    %v2527 = vunpack.c.l.b16 %v2250
    %v2528 = vunpack.c.h.b16 %v2250
    %v2529 = vunpack.c.l.b16 %v2251
    %v2530 = vunpack.c.h.b16 %v2251
    %v2531 = vunpack.c.l.b16 %v2252
    %v2532 = vunpack.c.h.b16 %v2252
    %v2533 = vunpack.c.l.b16 %v2253
    %v2534 = vunpack.c.h.b16 %v2253
    %v2535 = vunpack.c.l.b16 %v2254
    %v2536 = vunpack.c.h.b16 %v2254
    %v2537 = vunpack.c.l.b16 %v2255
    %v2538 = vunpack.c.h.b16 %v2255
    %v2539 = vunpack.c.l.b16 %v2256
    %v2540 = vunpack.c.h.b16 %v2256
    %v2541 = vunpack.c.l.b16 %v2257
    %v2542 = vunpack.c.h.b16 %v2257
    %v2543 = vunpack.c.l.b16 %v2258
    %v2544 = vunpack.c.h.b16 %v2258
    %v2545 = vunpack.c.l.b16 %v2259
    %v2546 = vunpack.c.h.b16 %v2259
    %v2547 = vunpack.c.l.b16 %v2260
    %v2548 = vunpack.c.h.b16 %v2260
    %v2549 = vunpack.c.l.b16 %v2261
    %v2550 = vunpack.c.h.b16 %v2261
    %v2551 = vunpack.c.l.b16 %v2262
    %v2552 = vunpack.c.h.b16 %v2262
    %v2553 = vunpack.c.l.b16 %v2263
    %v2554 = vunpack.c.h.b16 %v2263
    %v2555 = vunpack.c.l.b16 %v2264
    %v2556 = vunpack.c.h.b16 %v2264
    %v2557 = vunpack.c.l.b16 %v2265
    %v2558 = vunpack.c.h.b16 %v2265
    %v2559 = vunpack.c.l.b16 %v2266
    %v2560 = vunpack.c.h.b16 %v2266
    %v2561 = vpack.c.b16 %v2371, %v2369
    %v2562 = vpack.c.b16 %v2372, %v2370
    %v2563 = vpack.c.b16 %v2375, %v2373
    %v2564 = vpack.c.b16 %v2376, %v2374
    %v2565 = vpack.c.b16 %v2379, %v2377
    %v2566 = vpack.c.b16 %v2380, %v2378
    %v2567 = vpack.c.b16 %v2383, %v2381
    %v2568 = vpack.c.b16 %v2384, %v2382
    %v2569 = vpack.c.b16 %v2387, %v2385
    %v2570 = vpack.c.b16 %v2388, %v2386
    %v2571 = vpack.c.b16 %v2391, %v2389
    %v2572 = vpack.c.b16 %v2392, %v2390
    %v2573 = vpack.c.b16 %v2395, %v2393
    %v2574 = vpack.c.b16 %v2396, %v2394
    %v2575 = vpack.c.b16 %v2399, %v2397
    %v2576 = vpack.c.b16 %v2400, %v2398
    %v2577 = vpack.c.b16 %v2403, %v2401
    %v2578 = vpack.c.b16 %v2404, %v2402
    %v2579 = vpack.c.b16 %v2407, %v2405
    %v2580 = vpack.c.b16 %v2408, %v2406
    %v2581 = vpack.c.b16 %v2411, %v2409
    %v2582 = vpack.c.b16 %v2412, %v2410
    %v2583 = vpack.c.b16 %v2415, %v2413
    %v2584 = vpack.c.b16 %v2416, %v2414
    %v2585 = vpack.c.b16 %v2419, %v2417
    %v2586 = vpack.c.b16 %v2420, %v2418
    %v2587 = vpack.c.b16 %v2423, %v2421
    %v2588 = vpack.c.b16 %v2424, %v2422
    %v2589 = vpack.c.b16 %v2427, %v2425
    %v2590 = vpack.c.b16 %v2428, %v2426
    %v2591 = vpack.c.b16 %v2431, %v2429
    %v2592 = vpack.c.b16 %v2432, %v2430
    %v2593 = vpack.c.b16 %v2435, %v2433
    %v2594 = vpack.c.b16 %v2436, %v2434
    %v2595 = vpack.c.b16 %v2439, %v2437
    %v2596 = vpack.c.b16 %v2440, %v2438
    %v2597 = vpack.c.b16 %v2443, %v2441
    %v2598 = vpack.c.b16 %v2444, %v2442
    %v2599 = vpack.c.b16 %v2447, %v2445
    %v2600 = vpack.c.b16 %v2448, %v2446
    %v2601 = vpack.c.b16 %v2451, %v2449
    %v2602 = vpack.c.b16 %v2452, %v2450
    %v2603 = vpack.c.b16 %v2455, %v2453
    %v2604 = vpack.c.b16 %v2456, %v2454
    %v2605 = vpack.c.b16 %v2459, %v2457
    %v2606 = vpack.c.b16 %v2460, %v2458
    %v2607 = vpack.c.b16 %v2463, %v2461
    %v2608 = vpack.c.b16 %v2464, %v2462
    %v2609 = vpack.c.b16 %v2467, %v2465
    %v2610 = vpack.c.b16 %v2468, %v2466
    %v2611 = vpack.c.b16 %v2471, %v2469
    %v2612 = vpack.c.b16 %v2472, %v2470
    %v2613 = vpack.c.b16 %v2475, %v2473
    %v2614 = vpack.c.b16 %v2476, %v2474
    %v2615 = vpack.c.b16 %v2479, %v2477
    %v2616 = vpack.c.b16 %v2480, %v2478
    %v2617 = vpack.c.b16 %v2483, %v2481
    %v2618 = vpack.c.b16 %v2484, %v2482
    %v2619 = vpack.c.b16 %v2487, %v2485
    %v2620 = vpack.c.b16 %v2488, %v2486
    %v2621 = vpack.c.b16 %v2491, %v2489
    %v2622 = vpack.c.b16 %v2492, %v2490
    %v2623 = vpack.c.b16 %v2495, %v2493
    %v2624 = vpack.c.b16 %v2496, %v2494
    %v2625 = vpack.c.b16 %v2499, %v2497
    %v2626 = vpack.c.b16 %v2500, %v2498
    %v2627 = vpack.c.b16 %v2503, %v2501
    %v2628 = vpack.c.b16 %v2504, %v2502
    %v2629 = vpack.c.b16 %v2507, %v2505
    %v2630 = vpack.c.b16 %v2508, %v2506
    %v2631 = vpack.c.b16 %v2511, %v2509
    %v2632 = vpack.c.b16 %v2512, %v2510
    %v2633 = vpack.c.b16 %v2515, %v2513
    %v2634 = vpack.c.b16 %v2516, %v2514
    %v2635 = vpack.c.b16 %v2519, %v2517
    %v2636 = vpack.c.b16 %v2520, %v2518
    %v2637 = vpack.c.b16 %v2523, %v2521
    %v2638 = vpack.c.b16 %v2524, %v2522
    %v2639 = vpack.c.b16 %v2527, %v2525
    %v2640 = vpack.c.b16 %v2528, %v2526
    %v2641 = vpack.c.b16 %v2531, %v2529
    %v2642 = vpack.c.b16 %v2532, %v2530
    %v2643 = vpack.c.b16 %v2535, %v2533
    %v2644 = vpack.c.b16 %v2536, %v2534
    %v2645 = vpack.c.b16 %v2539, %v2537
    %v2646 = vpack.c.b16 %v2540, %v2538
    %v2647 = vpack.c.b16 %v2543, %v2541
    %v2648 = vpack.c.b16 %v2544, %v2542
    %v2649 = vpack.c.b16 %v2547, %v2545
    %v2650 = vpack.c.b16 %v2548, %v2546
    %v2651 = vpack.c.b16 %v2551, %v2549
    %v2652 = vpack.c.b16 %v2552, %v2550
    %v2653 = vpack.c.b16 %v2555, %v2553
    %v2654 = vpack.c.b16 %v2556, %v2554
    %v2655 = vpack.c.b16 %v2559, %v2557
    %v2656 = vpack.c.b16 %v2560, %v2558
    %2753 = vmatpush.bf16.msra.mxu0 %v2575
    %2754 = vmatpush.bf16.msra.mxu0 %v2573
    %2755 = vmatpush.bf16.msra.mxu0 %v2571
    %2756 = vmatpush.bf16.msra.mxu0 %v2569
    %2757 = vmatpush.bf16.msra.mxu0 %v2567
    %2758 = vmatpush.bf16.msra.mxu0 %v2565
    %2759 = vmatpush.bf16.msra.mxu0 %v2563
    %2760 = vmatpush.bf16.msra.mxu0 %v2561
    %2761 = vmatmul.bf16.gmra.mxu0 %v1979
    %v2762 = vpop.f32.mrf.mxu0
    %v2763 = vadd.f32 %v2269, %v2762
    %v2764 = vpop.f32.mrf.mxu0
    %v2765 = vadd.f32 %v2269, %v2764
    %2766 = vmatmul.bf16.gmra.mxu0 %v1981
    %v2767 = vpop.f32.mrf.mxu0
    %v2768 = vadd.f32 %v2269, %v2767
    %v2769 = vpop.f32.mrf.mxu0
    %v2770 = vadd.f32 %v2269, %v2769
    %2771 = vmatmul.bf16.gmra.mxu0 %v1983
    %v2772 = vpop.f32.mrf.mxu0
    %v2773 = vadd.f32 %v2269, %v2772
    %v2774 = vpop.f32.mrf.mxu0
    %v2775 = vadd.f32 %v2269, %v2774
    %2776 = vmatmul.bf16.gmra.mxu0 %v1985
    %v2777 = vpop.f32.mrf.mxu0
    %v2778 = vadd.f32 %v2269, %v2777
    %v2779 = vpop.f32.mrf.mxu0
    %v2780 = vadd.f32 %v2269, %v2779
    %2781 = vmatmul.bf16.gmra.mxu0 %v1987
    %v2782 = vpop.f32.mrf.mxu0
    %v2783 = vadd.f32 %v2269, %v2782
    %v2784 = vpop.f32.mrf.mxu0
    %v2785 = vadd.f32 %v2269, %v2784
    %2786 = vmatmul.bf16.gmra.mxu0 %v1989
    %v2787 = vpop.f32.mrf.mxu0
    %v2788 = vadd.f32 %v2269, %v2787
    %v2789 = vpop.f32.mrf.mxu0
    %v2790 = vadd.f32 %v2269, %v2789
    %2791 = vmatmul.bf16.gmra.mxu0 %v1991
    %v2792 = vpop.f32.mrf.mxu0
    %v2793 = vadd.f32 %v2269, %v2792
    %v2794 = vpop.f32.mrf.mxu0
    %v2795 = vadd.f32 %v2269, %v2794
    %2796 = vmatmul.bf16.gmra.mxu0 %v1993
    %v2797 = vpop.f32.mrf.mxu0
    %v2798 = vadd.f32 %v2269, %v2797
    %v2799 = vpop.f32.mrf.mxu0
    %v2800 = vadd.f32 %v2269, %v2799
    %2801 = vdwg.mxu0
    %2802 = vmatpush.bf16.msra.mxu0 %v2591
    %2803 = vmatpush.bf16.msra.mxu0 %v2589
    %2804 = vmatpush.bf16.msra.mxu0 %v2587
    %2805 = vmatpush.bf16.msra.mxu0 %v2585
    %2806 = vmatpush.bf16.msra.mxu0 %v2583
    %2807 = vmatpush.bf16.msra.mxu0 %v2581
    %2808 = vmatpush.bf16.msra.mxu0 %v2579
    %2809 = vmatpush.bf16.msra.mxu0 %v2577
    %2810 = vmatmul.bf16.gmra.mxu0 %v1980
    %v2811 = vpop.f32.mrf.mxu0
    %v2812 = vadd.f32 %v2763, %v2811
    %v2813 = vpop.f32.mrf.mxu0
    %v2814 = vadd.f32 %v2765, %v2813
    %2815 = vmatmul.bf16.gmra.mxu0 %v1982
    %v2816 = vpop.f32.mrf.mxu0
    %v2817 = vadd.f32 %v2768, %v2816
    %v2818 = vpop.f32.mrf.mxu0
    %v2819 = vadd.f32 %v2770, %v2818
    %2820 = vmatmul.bf16.gmra.mxu0 %v1984
    %v2821 = vpop.f32.mrf.mxu0
    %v2822 = vadd.f32 %v2773, %v2821
    %v2823 = vpop.f32.mrf.mxu0
    %v2824 = vadd.f32 %v2775, %v2823
    %2825 = vmatmul.bf16.gmra.mxu0 %v1986
    %v2826 = vpop.f32.mrf.mxu0
    %v2827 = vadd.f32 %v2778, %v2826
    %v2828 = vpop.f32.mrf.mxu0
    %v2829 = vadd.f32 %v2780, %v2828
    %2830 = vmatmul.bf16.gmra.mxu0 %v1988
    %v2831 = vpop.f32.mrf.mxu0
    %v2832 = vadd.f32 %v2783, %v2831
    %v2833 = vpop.f32.mrf.mxu0
    %v2834 = vadd.f32 %v2785, %v2833
    %2835 = vmatmul.bf16.gmra.mxu0 %v1990
    %v2836 = vpop.f32.mrf.mxu0
    %v2837 = vadd.f32 %v2788, %v2836
    %v2838 = vpop.f32.mrf.mxu0
    %v2839 = vadd.f32 %v2790, %v2838
    %2840 = vmatmul.bf16.gmra.mxu0 %v1992
    %v2841 = vpop.f32.mrf.mxu0
    %v2842 = vadd.f32 %v2793, %v2841
    %v2843 = vpop.f32.mrf.mxu0
    %v2844 = vadd.f32 %v2795, %v2843
    %2845 = vmatmul.bf16.gmra.mxu0 %v1994
    %v2846 = vpop.f32.mrf.mxu0
    %v2847 = vadd.f32 %v2798, %v2846
    %v2848 = vpop.f32.mrf.mxu0
    %v2849 = vadd.f32 %v2800, %v2848
    %2850 = vdwg.mxu0
    %2851 = vmatpush.bf16.msra.mxu0 %v2607
    %2852 = vmatpush.bf16.msra.mxu0 %v2605
    %2853 = vmatpush.bf16.msra.mxu0 %v2603
    %2854 = vmatpush.bf16.msra.mxu0 %v2601
    %2855 = vmatpush.bf16.msra.mxu0 %v2599
    %2856 = vmatpush.bf16.msra.mxu0 %v2597
    %2857 = vmatpush.bf16.msra.mxu0 %v2595
    %2858 = vmatpush.bf16.msra.mxu0 %v2593
    %2859 = vmatmul.bf16.gmra.mxu0 %v2059
    %v2860 = vpop.f32.mrf.mxu0
    %v2861 = vadd.f32 %v2812, %v2860
    %v2862 = vpop.f32.mrf.mxu0
    %v2863 = vadd.f32 %v2814, %v2862
    %2864 = vmatmul.bf16.gmra.mxu0 %v2061
    %v2865 = vpop.f32.mrf.mxu0
    %v2866 = vadd.f32 %v2817, %v2865
    %v2867 = vpop.f32.mrf.mxu0
    %v2868 = vadd.f32 %v2819, %v2867
    %2869 = vmatmul.bf16.gmra.mxu0 %v2063
    %v2870 = vpop.f32.mrf.mxu0
    %v2871 = vadd.f32 %v2822, %v2870
    %v2872 = vpop.f32.mrf.mxu0
    %v2873 = vadd.f32 %v2824, %v2872
    %2874 = vmatmul.bf16.gmra.mxu0 %v2065
    %v2875 = vpop.f32.mrf.mxu0
    %v2876 = vadd.f32 %v2827, %v2875
    %v2877 = vpop.f32.mrf.mxu0
    %v2878 = vadd.f32 %v2829, %v2877
    %2879 = vmatmul.bf16.gmra.mxu0 %v2067
    %v2880 = vpop.f32.mrf.mxu0
    %v2881 = vadd.f32 %v2832, %v2880
    %v2882 = vpop.f32.mrf.mxu0
    %v2883 = vadd.f32 %v2834, %v2882
    %2884 = vmatmul.bf16.gmra.mxu0 %v2069
    %v2885 = vpop.f32.mrf.mxu0
    %v2886 = vadd.f32 %v2837, %v2885
    %v2887 = vpop.f32.mrf.mxu0
    %v2888 = vadd.f32 %v2839, %v2887
    %2889 = vmatmul.bf16.gmra.mxu0 %v2071
    %v2890 = vpop.f32.mrf.mxu0
    %v2891 = vadd.f32 %v2842, %v2890
    %v2892 = vpop.f32.mrf.mxu0
    %v2893 = vadd.f32 %v2844, %v2892
    %2894 = vmatmul.bf16.gmra.mxu0 %v2073
    %v2895 = vpop.f32.mrf.mxu0
    %v2896 = vadd.f32 %v2847, %v2895
    %v2897 = vpop.f32.mrf.mxu0
    %v2898 = vadd.f32 %v2849, %v2897
    %2899 = vdwg.mxu0
    %2900 = vmatpush.bf16.msra.mxu0 %v2623
    %2901 = vmatpush.bf16.msra.mxu0 %v2621
    %2902 = vmatpush.bf16.msra.mxu0 %v2619
    %2903 = vmatpush.bf16.msra.mxu0 %v2617
    %2904 = vmatpush.bf16.msra.mxu0 %v2615
    %2905 = vmatpush.bf16.msra.mxu0 %v2613
    %2906 = vmatpush.bf16.msra.mxu0 %v2611
    %2907 = vmatpush.bf16.msra.mxu0 %v2609
    %2908 = vmatmul.bf16.gmra.mxu0 %v2060
    %v2909 = vpop.f32.mrf.mxu0
    %v2910 = vadd.f32 %v2861, %v2909
    %v2911 = vpop.f32.mrf.mxu0
    %v2912 = vadd.f32 %v2863, %v2911
    %2913 = vmatmul.bf16.gmra.mxu0 %v2062
    %v2914 = vpop.f32.mrf.mxu0
    %v2915 = vadd.f32 %v2866, %v2914
    %v2916 = vpop.f32.mrf.mxu0
    %v2917 = vadd.f32 %v2868, %v2916
    %2918 = vmatmul.bf16.gmra.mxu0 %v2064
    %v2919 = vpop.f32.mrf.mxu0
    %v2920 = vadd.f32 %v2871, %v2919
    %v2921 = vpop.f32.mrf.mxu0
    %v2922 = vadd.f32 %v2873, %v2921
    %2923 = vmatmul.bf16.gmra.mxu0 %v2066
    %v2924 = vpop.f32.mrf.mxu0
    %v2925 = vadd.f32 %v2876, %v2924
    %v2926 = vpop.f32.mrf.mxu0
    %v2927 = vadd.f32 %v2878, %v2926
    %2928 = vmatmul.bf16.gmra.mxu0 %v2068
    %v2929 = vpop.f32.mrf.mxu0
    %v2930 = vadd.f32 %v2881, %v2929
    %v2931 = vpop.f32.mrf.mxu0
    %v2932 = vadd.f32 %v2883, %v2931
    %2933 = vmatmul.bf16.gmra.mxu0 %v2070
    %v2934 = vpop.f32.mrf.mxu0
    %v2935 = vadd.f32 %v2886, %v2934
    %v2936 = vpop.f32.mrf.mxu0
    %v2937 = vadd.f32 %v2888, %v2936
    %2938 = vmatmul.bf16.gmra.mxu0 %v2072
    %v2939 = vpop.f32.mrf.mxu0
    %v2940 = vadd.f32 %v2891, %v2939
    %v2941 = vpop.f32.mrf.mxu0
    %v2942 = vadd.f32 %v2893, %v2941
    %2943 = vmatmul.bf16.gmra.mxu0 %v2074
    %v2944 = vpop.f32.mrf.mxu0
    %v2945 = vadd.f32 %v2896, %v2944
    %v2946 = vpop.f32.mrf.mxu0
    %v2947 = vadd.f32 %v2898, %v2946
    %2948 = vdwg.mxu0
    %2949 = vmatpush.bf16.msra.mxu0 %v2639
    %2950 = vmatpush.bf16.msra.mxu0 %v2637
    %2951 = vmatpush.bf16.msra.mxu0 %v2635
    %2952 = vmatpush.bf16.msra.mxu0 %v2633
    %2953 = vmatpush.bf16.msra.mxu0 %v2631
    %2954 = vmatpush.bf16.msra.mxu0 %v2629
    %2955 = vmatpush.bf16.msra.mxu0 %v2627
    %2956 = vmatpush.bf16.msra.mxu0 %v2625
    %2957 = vmatmul.bf16.gmra.mxu0 %v2139
    %v2958 = vpop.f32.mrf.mxu0
    %v2959 = vadd.f32 %v2910, %v2958
    %v2960 = vpop.f32.mrf.mxu0
    %v2961 = vadd.f32 %v2912, %v2960
    %2962 = vmatmul.bf16.gmra.mxu0 %v2141
    %v2963 = vpop.f32.mrf.mxu0
    %v2964 = vadd.f32 %v2915, %v2963
    %v2965 = vpop.f32.mrf.mxu0
    %v2966 = vadd.f32 %v2917, %v2965
    %2967 = vmatmul.bf16.gmra.mxu0 %v2143
    %v2968 = vpop.f32.mrf.mxu0
    %v2969 = vadd.f32 %v2920, %v2968
    %v2970 = vpop.f32.mrf.mxu0
    %v2971 = vadd.f32 %v2922, %v2970
    %2972 = vmatmul.bf16.gmra.mxu0 %v2145
    %v2973 = vpop.f32.mrf.mxu0
    %v2974 = vadd.f32 %v2925, %v2973
    %v2975 = vpop.f32.mrf.mxu0
    %v2976 = vadd.f32 %v2927, %v2975
    %2977 = vmatmul.bf16.gmra.mxu0 %v2147
    %v2978 = vpop.f32.mrf.mxu0
    %v2979 = vadd.f32 %v2930, %v2978
    %v2980 = vpop.f32.mrf.mxu0
    %v2981 = vadd.f32 %v2932, %v2980
    %2982 = vmatmul.bf16.gmra.mxu0 %v2149
    %v2983 = vpop.f32.mrf.mxu0
    %v2984 = vadd.f32 %v2935, %v2983
    %v2985 = vpop.f32.mrf.mxu0
    %v2986 = vadd.f32 %v2937, %v2985
    %2987 = vmatmul.bf16.gmra.mxu0 %v2151
    %v2988 = vpop.f32.mrf.mxu0
    %v2989 = vadd.f32 %v2940, %v2988
    %v2990 = vpop.f32.mrf.mxu0
    %v2991 = vadd.f32 %v2942, %v2990
    %2992 = vmatmul.bf16.gmra.mxu0 %v2153
    %v2993 = vpop.f32.mrf.mxu0
    %v2994 = vadd.f32 %v2945, %v2993
    %v2995 = vpop.f32.mrf.mxu0
    %v2996 = vadd.f32 %v2947, %v2995
    %2997 = vdwg.mxu0
    %2998 = vmatpush.bf16.msra.mxu0 %v2655
    %2999 = vmatpush.bf16.msra.mxu0 %v2653
    %3000 = vmatpush.bf16.msra.mxu0 %v2651
    %3001 = vmatpush.bf16.msra.mxu0 %v2649
    %3002 = vmatpush.bf16.msra.mxu0 %v2647
    %3003 = vmatpush.bf16.msra.mxu0 %v2645
    %3004 = vmatpush.bf16.msra.mxu0 %v2643
    %3005 = vmatpush.bf16.msra.mxu0 %v2641
    %3006 = vmatmul.bf16.gmra.mxu0 %v2140
    %v3007 = vpop.f32.mrf.mxu0
    %v3008 = vadd.f32 %v2959, %v3007
    %v3009 = vpop.f32.mrf.mxu0
    %v3010 = vadd.f32 %v2961, %v3009
    %3011 = vmatmul.bf16.gmra.mxu0 %v2142
    %v3012 = vpop.f32.mrf.mxu0
    %v3013 = vadd.f32 %v2964, %v3012
    %v3014 = vpop.f32.mrf.mxu0
    %v3015 = vadd.f32 %v2966, %v3014
    %3016 = vmatmul.bf16.gmra.mxu0 %v2144
    %v3017 = vpop.f32.mrf.mxu0
    %v3018 = vadd.f32 %v2969, %v3017
    %v3019 = vpop.f32.mrf.mxu0
    %v3020 = vadd.f32 %v2971, %v3019
    %3021 = vmatmul.bf16.gmra.mxu0 %v2146
    %v3022 = vpop.f32.mrf.mxu0
    %v3023 = vadd.f32 %v2974, %v3022
    %v3024 = vpop.f32.mrf.mxu0
    %v3025 = vadd.f32 %v2976, %v3024
    %3026 = vmatmul.bf16.gmra.mxu0 %v2148
    %v3027 = vpop.f32.mrf.mxu0
    %v3028 = vadd.f32 %v2979, %v3027
    %v3029 = vpop.f32.mrf.mxu0
    %v3030 = vadd.f32 %v2981, %v3029
    %3031 = vmatmul.bf16.gmra.mxu0 %v2150
    %v3032 = vpop.f32.mrf.mxu0
    %v3033 = vadd.f32 %v2984, %v3032
    %v3034 = vpop.f32.mrf.mxu0
    %v3035 = vadd.f32 %v2986, %v3034
    %3036 = vmatmul.bf16.gmra.mxu0 %v2152
    %v3037 = vpop.f32.mrf.mxu0
    %v3038 = vadd.f32 %v2989, %v3037
    %v3039 = vpop.f32.mrf.mxu0
    %v3040 = vadd.f32 %v2991, %v3039
    %3041 = vmatmul.bf16.gmra.mxu0 %v2154
    %v3042 = vpop.f32.mrf.mxu0
    %v3043 = vadd.f32 %v2994, %v3042
    %v3044 = vpop.f32.mrf.mxu0
    %v3045 = vadd.f32 %v2996, %v3044
    %3046 = vdwg.mxu0
    %3047 = vmatpush.bf16.msra.mxu0 %v2576
    %3048 = vmatpush.bf16.msra.mxu0 %v2574
    %3049 = vmatpush.bf16.msra.mxu0 %v2572
    %3050 = vmatpush.bf16.msra.mxu0 %v2570
    %3051 = vmatpush.bf16.msra.mxu0 %v2568
    %3052 = vmatpush.bf16.msra.mxu0 %v2566
    %3053 = vmatpush.bf16.msra.mxu0 %v2564
    %3054 = vmatpush.bf16.msra.mxu0 %v2562
    %3055 = vmatmul.bf16.gmra.mxu0 %v1979
    %v3056 = vpop.f32.mrf.mxu0
    %v3057 = vadd.f32 %v2270, %v3056
    %v3058 = vpop.f32.mrf.mxu0
    %v3059 = vadd.f32 %v2270, %v3058
    %3060 = vmatmul.bf16.gmra.mxu0 %v1981
    %v3061 = vpop.f32.mrf.mxu0
    %v3062 = vadd.f32 %v2270, %v3061
    %v3063 = vpop.f32.mrf.mxu0
    %v3064 = vadd.f32 %v2270, %v3063
    %3065 = vmatmul.bf16.gmra.mxu0 %v1983
    %v3066 = vpop.f32.mrf.mxu0
    %v3067 = vadd.f32 %v2270, %v3066
    %v3068 = vpop.f32.mrf.mxu0
    %v3069 = vadd.f32 %v2270, %v3068
    %3070 = vmatmul.bf16.gmra.mxu0 %v1985
    %v3071 = vpop.f32.mrf.mxu0
    %v3072 = vadd.f32 %v2270, %v3071
    %v3073 = vpop.f32.mrf.mxu0
    %v3074 = vadd.f32 %v2270, %v3073
    %3075 = vmatmul.bf16.gmra.mxu0 %v1987
    %v3076 = vpop.f32.mrf.mxu0
    %v3077 = vadd.f32 %v2270, %v3076
    %v3078 = vpop.f32.mrf.mxu0
    %v3079 = vadd.f32 %v2270, %v3078
    %3080 = vmatmul.bf16.gmra.mxu0 %v1989
    %v3081 = vpop.f32.mrf.mxu0
    %v3082 = vadd.f32 %v2270, %v3081
    %v3083 = vpop.f32.mrf.mxu0
    %v3084 = vadd.f32 %v2270, %v3083
    %3085 = vmatmul.bf16.gmra.mxu0 %v1991
    %v3086 = vpop.f32.mrf.mxu0
    %v3087 = vadd.f32 %v2270, %v3086
    %v3088 = vpop.f32.mrf.mxu0
    %v3089 = vadd.f32 %v2270, %v3088
    %3090 = vmatmul.bf16.gmra.mxu0 %v1993
    %v3091 = vpop.f32.mrf.mxu0
    %v3092 = vadd.f32 %v2270, %v3091
    %v3093 = vpop.f32.mrf.mxu0
    %v3094 = vadd.f32 %v2270, %v3093
    %3095 = vdwg.mxu0
    %3096 = vmatpush.bf16.msra.mxu0 %v2592
    %3097 = vmatpush.bf16.msra.mxu0 %v2590
    %3098 = vmatpush.bf16.msra.mxu0 %v2588
    %3099 = vmatpush.bf16.msra.mxu0 %v2586
    %3100 = vmatpush.bf16.msra.mxu0 %v2584
    %3101 = vmatpush.bf16.msra.mxu0 %v2582
    %3102 = vmatpush.bf16.msra.mxu0 %v2580
    %3103 = vmatpush.bf16.msra.mxu0 %v2578
    %3104 = vmatmul.bf16.gmra.mxu0 %v1980
    %v3105 = vpop.f32.mrf.mxu0
    %v3106 = vadd.f32 %v3057, %v3105
    %v3107 = vpop.f32.mrf.mxu0
    %v3108 = vadd.f32 %v3059, %v3107
    %3109 = vmatmul.bf16.gmra.mxu0 %v1982
    %v3110 = vpop.f32.mrf.mxu0
    %v3111 = vadd.f32 %v3062, %v3110
    %v3112 = vpop.f32.mrf.mxu0
    %v3113 = vadd.f32 %v3064, %v3112
    %3114 = vmatmul.bf16.gmra.mxu0 %v1984
    %v3115 = vpop.f32.mrf.mxu0
    %v3116 = vadd.f32 %v3067, %v3115
    %v3117 = vpop.f32.mrf.mxu0
    %v3118 = vadd.f32 %v3069, %v3117
    %3119 = vmatmul.bf16.gmra.mxu0 %v1986
    %v3120 = vpop.f32.mrf.mxu0
    %v3121 = vadd.f32 %v3072, %v3120
    %v3122 = vpop.f32.mrf.mxu0
    %v3123 = vadd.f32 %v3074, %v3122
    %3124 = vmatmul.bf16.gmra.mxu0 %v1988
    %v3125 = vpop.f32.mrf.mxu0
    %v3126 = vadd.f32 %v3077, %v3125
    %v3127 = vpop.f32.mrf.mxu0
    %v3128 = vadd.f32 %v3079, %v3127
    %3129 = vmatmul.bf16.gmra.mxu0 %v1990
    %v3130 = vpop.f32.mrf.mxu0
    %v3131 = vadd.f32 %v3082, %v3130
    %v3132 = vpop.f32.mrf.mxu0
    %v3133 = vadd.f32 %v3084, %v3132
    %3134 = vmatmul.bf16.gmra.mxu0 %v1992
    %v3135 = vpop.f32.mrf.mxu0
    %v3136 = vadd.f32 %v3087, %v3135
    %v3137 = vpop.f32.mrf.mxu0
    %v3138 = vadd.f32 %v3089, %v3137
    %3139 = vmatmul.bf16.gmra.mxu0 %v1994
    %v3140 = vpop.f32.mrf.mxu0
    %v3141 = vadd.f32 %v3092, %v3140
    %v3142 = vpop.f32.mrf.mxu0
    %v3143 = vadd.f32 %v3094, %v3142
    %3144 = vdwg.mxu0
    %3145 = vmatpush.bf16.msra.mxu0 %v2608
    %3146 = vmatpush.bf16.msra.mxu0 %v2606
    %3147 = vmatpush.bf16.msra.mxu0 %v2604
    %3148 = vmatpush.bf16.msra.mxu0 %v2602
    %3149 = vmatpush.bf16.msra.mxu0 %v2600
    %3150 = vmatpush.bf16.msra.mxu0 %v2598
    %3151 = vmatpush.bf16.msra.mxu0 %v2596
    %3152 = vmatpush.bf16.msra.mxu0 %v2594
    %3153 = vmatmul.bf16.gmra.mxu0 %v2059
    %v3154 = vpop.f32.mrf.mxu0
    %v3155 = vadd.f32 %v3106, %v3154
    %v3156 = vpop.f32.mrf.mxu0
    %v3157 = vadd.f32 %v3108, %v3156
    %3158 = vmatmul.bf16.gmra.mxu0 %v2061
    %v3159 = vpop.f32.mrf.mxu0
    %v3160 = vadd.f32 %v3111, %v3159
    %v3161 = vpop.f32.mrf.mxu0
    %v3162 = vadd.f32 %v3113, %v3161
    %3163 = vmatmul.bf16.gmra.mxu0 %v2063
    %v3164 = vpop.f32.mrf.mxu0
    %v3165 = vadd.f32 %v3116, %v3164
    %v3166 = vpop.f32.mrf.mxu0
    %v3167 = vadd.f32 %v3118, %v3166
    %3168 = vmatmul.bf16.gmra.mxu0 %v2065
    %v3169 = vpop.f32.mrf.mxu0
    %v3170 = vadd.f32 %v3121, %v3169
    %v3171 = vpop.f32.mrf.mxu0
    %v3172 = vadd.f32 %v3123, %v3171
    %3173 = vmatmul.bf16.gmra.mxu0 %v2067
    %v3174 = vpop.f32.mrf.mxu0
    %v3175 = vadd.f32 %v3126, %v3174
    %v3176 = vpop.f32.mrf.mxu0
    %v3177 = vadd.f32 %v3128, %v3176
    %3178 = vmatmul.bf16.gmra.mxu0 %v2069
    %v3179 = vpop.f32.mrf.mxu0
    %v3180 = vadd.f32 %v3131, %v3179
    %v3181 = vpop.f32.mrf.mxu0
    %v3182 = vadd.f32 %v3133, %v3181
    %3183 = vmatmul.bf16.gmra.mxu0 %v2071
    %v3184 = vpop.f32.mrf.mxu0
    %v3185 = vadd.f32 %v3136, %v3184
    %v3186 = vpop.f32.mrf.mxu0
    %v3187 = vadd.f32 %v3138, %v3186
    %3188 = vmatmul.bf16.gmra.mxu0 %v2073
    %v3189 = vpop.f32.mrf.mxu0
    %v3190 = vadd.f32 %v3141, %v3189
    %v3191 = vpop.f32.mrf.mxu0
    %v3192 = vadd.f32 %v3143, %v3191
    %3193 = vdwg.mxu0
    %3194 = vmatpush.bf16.msra.mxu0 %v2624
    %3195 = vmatpush.bf16.msra.mxu0 %v2622
    %3196 = vmatpush.bf16.msra.mxu0 %v2620
    %3197 = vmatpush.bf16.msra.mxu0 %v2618
    %3198 = vmatpush.bf16.msra.mxu0 %v2616
    %3199 = vmatpush.bf16.msra.mxu0 %v2614
    %3200 = vmatpush.bf16.msra.mxu0 %v2612
    %3201 = vmatpush.bf16.msra.mxu0 %v2610
    %3202 = vmatmul.bf16.gmra.mxu0 %v2060
    %v3203 = vpop.f32.mrf.mxu0
    %v3204 = vadd.f32 %v3155, %v3203
    %v3205 = vpop.f32.mrf.mxu0
    %v3206 = vadd.f32 %v3157, %v3205
    %3207 = vmatmul.bf16.gmra.mxu0 %v2062
    %v3208 = vpop.f32.mrf.mxu0
    %v3209 = vadd.f32 %v3160, %v3208
    %v3210 = vpop.f32.mrf.mxu0
    %v3211 = vadd.f32 %v3162, %v3210
    %3212 = vmatmul.bf16.gmra.mxu0 %v2064
    %v3213 = vpop.f32.mrf.mxu0
    %v3214 = vadd.f32 %v3165, %v3213
    %v3215 = vpop.f32.mrf.mxu0
    %v3216 = vadd.f32 %v3167, %v3215
    %3217 = vmatmul.bf16.gmra.mxu0 %v2066
    %v3218 = vpop.f32.mrf.mxu0
    %v3219 = vadd.f32 %v3170, %v3218
    %v3220 = vpop.f32.mrf.mxu0
    %v3221 = vadd.f32 %v3172, %v3220
    %3222 = vmatmul.bf16.gmra.mxu0 %v2068
    %v3223 = vpop.f32.mrf.mxu0
    %v3224 = vadd.f32 %v3175, %v3223
    %v3225 = vpop.f32.mrf.mxu0
    %v3226 = vadd.f32 %v3177, %v3225
    %3227 = vmatmul.bf16.gmra.mxu0 %v2070
    %v3228 = vpop.f32.mrf.mxu0
    %v3229 = vadd.f32 %v3180, %v3228
    %v3230 = vpop.f32.mrf.mxu0
    %v3231 = vadd.f32 %v3182, %v3230
    %3232 = vmatmul.bf16.gmra.mxu0 %v2072
    %v3233 = vpop.f32.mrf.mxu0
    %v3234 = vadd.f32 %v3185, %v3233
    %v3235 = vpop.f32.mrf.mxu0
    %v3236 = vadd.f32 %v3187, %v3235
    %3237 = vmatmul.bf16.gmra.mxu0 %v2074
    %v3238 = vpop.f32.mrf.mxu0
    %v3239 = vadd.f32 %v3190, %v3238
    %v3240 = vpop.f32.mrf.mxu0
    %v3241 = vadd.f32 %v3192, %v3240
    %3242 = vdwg.mxu0
    %3243 = vmatpush.bf16.msra.mxu0 %v2640
    %3244 = vmatpush.bf16.msra.mxu0 %v2638
    %3245 = vmatpush.bf16.msra.mxu0 %v2636
    %3246 = vmatpush.bf16.msra.mxu0 %v2634
    %3247 = vmatpush.bf16.msra.mxu0 %v2632
    %3248 = vmatpush.bf16.msra.mxu0 %v2630
    %3249 = vmatpush.bf16.msra.mxu0 %v2628
    %3250 = vmatpush.bf16.msra.mxu0 %v2626
    %3251 = vmatmul.bf16.gmra.mxu0 %v2139
    %v3252 = vpop.f32.mrf.mxu0
    %v3253 = vadd.f32 %v3204, %v3252
    %v3254 = vpop.f32.mrf.mxu0
    %v3255 = vadd.f32 %v3206, %v3254
    %3256 = vmatmul.bf16.gmra.mxu0 %v2141
    %v3257 = vpop.f32.mrf.mxu0
    %v3258 = vadd.f32 %v3209, %v3257
    %v3259 = vpop.f32.mrf.mxu0
    %v3260 = vadd.f32 %v3211, %v3259
    %3261 = vmatmul.bf16.gmra.mxu0 %v2143
    %v3262 = vpop.f32.mrf.mxu0
    %v3263 = vadd.f32 %v3214, %v3262
    %v3264 = vpop.f32.mrf.mxu0
    %v3265 = vadd.f32 %v3216, %v3264
    %3266 = vmatmul.bf16.gmra.mxu0 %v2145
    %v3267 = vpop.f32.mrf.mxu0
    %v3268 = vadd.f32 %v3219, %v3267
    %v3269 = vpop.f32.mrf.mxu0
    %v3270 = vadd.f32 %v3221, %v3269
    %3271 = vmatmul.bf16.gmra.mxu0 %v2147
    %v3272 = vpop.f32.mrf.mxu0
    %v3273 = vadd.f32 %v3224, %v3272
    %v3274 = vpop.f32.mrf.mxu0
    %v3275 = vadd.f32 %v3226, %v3274
    %3276 = vmatmul.bf16.gmra.mxu0 %v2149
    %v3277 = vpop.f32.mrf.mxu0
    %v3278 = vadd.f32 %v3229, %v3277
    %v3279 = vpop.f32.mrf.mxu0
    %v3280 = vadd.f32 %v3231, %v3279
    %3281 = vmatmul.bf16.gmra.mxu0 %v2151
    %v3282 = vpop.f32.mrf.mxu0
    %v3283 = vadd.f32 %v3234, %v3282
    %v3284 = vpop.f32.mrf.mxu0
    %v3285 = vadd.f32 %v3236, %v3284
    %3286 = vmatmul.bf16.gmra.mxu0 %v2153
    %v3287 = vpop.f32.mrf.mxu0
    %v3288 = vadd.f32 %v3239, %v3287
    %v3289 = vpop.f32.mrf.mxu0
    %v3290 = vadd.f32 %v3241, %v3289
    %3291 = vdwg.mxu0
    %3292 = vmatpush.bf16.msra.mxu0 %v2656
    %3293 = vmatpush.bf16.msra.mxu0 %v2654
    %3294 = vmatpush.bf16.msra.mxu0 %v2652
    %3295 = vmatpush.bf16.msra.mxu0 %v2650
    %3296 = vmatpush.bf16.msra.mxu0 %v2648
    %3297 = vmatpush.bf16.msra.mxu0 %v2646
    %3298 = vmatpush.bf16.msra.mxu0 %v2644
    %3299 = vmatpush.bf16.msra.mxu0 %v2642
    %3300 = vmatmul.bf16.gmra.mxu0 %v2140
    %v3301 = vpop.f32.mrf.mxu0
    %v3302 = vadd.f32 %v3253, %v3301
    %v3303 = vpop.f32.mrf.mxu0
    %v3304 = vadd.f32 %v3255, %v3303
    %3305 = vmatmul.bf16.gmra.mxu0 %v2142
    %v3306 = vpop.f32.mrf.mxu0
    %v3307 = vadd.f32 %v3258, %v3306
    %v3308 = vpop.f32.mrf.mxu0
    %v3309 = vadd.f32 %v3260, %v3308
    %3310 = vmatmul.bf16.gmra.mxu0 %v2144
    %v3311 = vpop.f32.mrf.mxu0
    %v3312 = vadd.f32 %v3263, %v3311
    %v3313 = vpop.f32.mrf.mxu0
    %v3314 = vadd.f32 %v3265, %v3313
    %3315 = vmatmul.bf16.gmra.mxu0 %v2146
    %v3316 = vpop.f32.mrf.mxu0
    %v3317 = vadd.f32 %v3268, %v3316
    %v3318 = vpop.f32.mrf.mxu0
    %v3319 = vadd.f32 %v3270, %v3318
    %3320 = vmatmul.bf16.gmra.mxu0 %v2148
    %v3321 = vpop.f32.mrf.mxu0
    %v3322 = vadd.f32 %v3273, %v3321
    %v3323 = vpop.f32.mrf.mxu0
    %v3324 = vadd.f32 %v3275, %v3323
    %3325 = vmatmul.bf16.gmra.mxu0 %v2150
    %v3326 = vpop.f32.mrf.mxu0
    %v3327 = vadd.f32 %v3278, %v3326
    %v3328 = vpop.f32.mrf.mxu0
    %v3329 = vadd.f32 %v3280, %v3328
    %3330 = vmatmul.bf16.gmra.mxu0 %v2152
    %v3331 = vpop.f32.mrf.mxu0
    %v3332 = vadd.f32 %v3283, %v3331
    %v3333 = vpop.f32.mrf.mxu0
    %v3334 = vadd.f32 %v3285, %v3333
    %3335 = vmatmul.bf16.gmra.mxu0 %v2154
    %v3336 = vpop.f32.mrf.mxu0
    %v3337 = vadd.f32 %v3288, %v3336
    %v3338 = vpop.f32.mrf.mxu0
    %v3339 = vadd.f32 %v3290, %v3338
    %3340 = vdwg.mxu0
    %v3341 = vmax.f32 %v3008, 0.0
    %v3342 = vmax.f32 %v3302, 0.0
    %v3343 = vmax.f32 %v3010, 0.0
    %v3344 = vmax.f32 %v3304, 0.0
    %v3345 = vmax.f32 %v3013, 0.0
    %v3346 = vmax.f32 %v3307, 0.0
    %v3347 = vmax.f32 %v3015, 0.0
    %v3348 = vmax.f32 %v3309, 0.0
    %v3349 = vmax.f32 %v3018, 0.0
    %v3350 = vmax.f32 %v3312, 0.0
    %v3351 = vmax.f32 %v3020, 0.0
    %v3352 = vmax.f32 %v3314, 0.0
    %v3353 = vmax.f32 %v3023, 0.0
    %v3354 = vmax.f32 %v3317, 0.0
    %v3355 = vmax.f32 %v3025, 0.0
    %v3356 = vmax.f32 %v3319, 0.0
    %v3357 = vmax.f32 %v3028, 0.0
    %v3358 = vmax.f32 %v3322, 0.0
    %v3359 = vmax.f32 %v3030, 0.0
    %v3360 = vmax.f32 %v3324, 0.0
    %v3361 = vmax.f32 %v3033, 0.0
    %v3362 = vmax.f32 %v3327, 0.0
    %v3363 = vmax.f32 %v3035, 0.0
    %v3364 = vmax.f32 %v3329, 0.0
    %v3365 = vmax.f32 %v3038, 0.0
    %v3366 = vmax.f32 %v3332, 0.0
    %v3367 = vmax.f32 %v3040, 0.0
    %v3368 = vmax.f32 %v3334, 0.0
    %v3369 = vmax.f32 %v3043, 0.0
    %v3370 = vmax.f32 %v3337, 0.0
    %v3371 = vmax.f32 %v3045, 0.0
    %v3372 = vmax.f32 %v3339, 0.0
    %v3375 = vrot.slane %v3371, 7
    %v3376 = vrot.slane %v3372, 7
    %v3409 = vrot.slane %v3341, 7
    %v3410 = vrot.slane %v3342, 7
    %v3411 = vrot.slane %v3343, 7
    %v3412 = vsel %vm569, %v3409, %v3411
    %v3413 = vrot.slane %v3344, 7
    %v3414 = vsel %vm569, %v3410, %v3413
    %v3415 = vrot.slane %v3345, 7
    %v3416 = vsel %vm569, %v3411, %v3415
    %v3417 = vrot.slane %v3346, 7
    %v3418 = vsel %vm569, %v3413, %v3417
    %v3419 = vrot.slane %v3347, 7
    %v3420 = vsel %vm569, %v3415, %v3419
    %v3421 = vrot.slane %v3348, 7
    %v3422 = vsel %vm569, %v3417, %v3421
    %v3423 = vrot.slane %v3349, 7
    %v3424 = vsel %vm569, %v3419, %v3423
    %v3425 = vrot.slane %v3350, 7
    %v3426 = vsel %vm569, %v3421, %v3425
    %v3427 = vrot.slane %v3351, 7
    %v3428 = vsel %vm569, %v3423, %v3427
    %v3429 = vrot.slane %v3352, 7
    %v3430 = vsel %vm569, %v3425, %v3429
    %v3431 = vrot.slane %v3353, 7
    %v3432 = vsel %vm569, %v3427, %v3431
    %v3433 = vrot.slane %v3354, 7
    %v3434 = vsel %vm569, %v3429, %v3433
    %v3435 = vrot.slane %v3355, 7
    %v3436 = vsel %vm569, %v3431, %v3435
    %v3437 = vrot.slane %v3356, 7
    %v3438 = vsel %vm569, %v3433, %v3437
    %v3439 = vrot.slane %v3357, 7
    %v3440 = vsel %vm569, %v3435, %v3439
    %v3441 = vrot.slane %v3358, 7
    %v3442 = vsel %vm569, %v3437, %v3441
    %v3443 = vrot.slane %v3359, 7
    %v3444 = vsel %vm569, %v3439, %v3443
    %v3445 = vrot.slane %v3360, 7
    %v3446 = vsel %vm569, %v3441, %v3445
    %v3447 = vrot.slane %v3361, 7
    %v3448 = vsel %vm569, %v3443, %v3447
    %v3449 = vrot.slane %v3362, 7
    %v3450 = vsel %vm569, %v3445, %v3449
    %v3451 = vrot.slane %v3363, 7
    %v3452 = vsel %vm569, %v3447, %v3451
    %v3453 = vrot.slane %v3364, 7
    %v3454 = vsel %vm569, %v3449, %v3453
    %v3455 = vrot.slane %v3365, 7
    %v3456 = vsel %vm569, %v3451, %v3455
    %v3457 = vrot.slane %v3366, 7
    %v3458 = vsel %vm569, %v3453, %v3457
    %v3459 = vrot.slane %v3367, 7
    %v3460 = vsel %vm569, %v3455, %v3459
    %v3461 = vrot.slane %v3368, 7
    %v3462 = vsel %vm569, %v3457, %v3461
    %v3463 = vrot.slane %v3369, 7
    %v3464 = vsel %vm569, %v3459, %v3463
    %v3465 = vrot.slane %v3370, 7
    %v3466 = vsel %vm569, %v3461, %v3465
    %v3467 = vsel %vm569, %v3463, %v3375
    %v3468 = vsel %vm569, %v3465, %v3376
    %v3501 = vsel %vm569, %v3375, %v3409
    %v3502 = vsel %vm569, %v3376, %v3410
    %v3503 = vsel %vm633, %v3501, 0.0
    %v3504 = vsel %vm633, %v3502, 0.0
    %v3505 = vsel %vm634, %v3412, 0.0
    %v3506 = vsel %vm634, %v3414, 0.0
    %v3507 = vsel %vm635, %v3416, 0.0
    %v3508 = vsel %vm635, %v3418, 0.0
    %v3509 = vsel %vm636, %v3420, 0.0
    %v3510 = vsel %vm636, %v3422, 0.0
    %v3511 = vsel %vm637, %v3424, 0.0
    %v3512 = vsel %vm637, %v3426, 0.0
    %v3513 = vsel %vm638, %v3428, 0.0
    %v3514 = vsel %vm638, %v3430, 0.0
    %v3515 = vsel %vm639, %v3432, 0.0
    %v3516 = vsel %vm639, %v3434, 0.0
    %v3517 = vsel %vm640, %v3436, 0.0
    %v3518 = vsel %vm640, %v3438, 0.0
    %v3519 = vsel %vm641, %v3440, 0.0
    %v3520 = vsel %vm641, %v3442, 0.0
    %v3521 = vsel %vm642, %v3444, 0.0
    %v3522 = vsel %vm642, %v3446, 0.0
    %v3523 = vsel %vm643, %v3448, 0.0
    %v3524 = vsel %vm643, %v3450, 0.0
    %v3525 = vsel %vm644, %v3452, 0.0
    %v3526 = vsel %vm644, %v3454, 0.0
    %v3527 = vsel %vm645, %v3456, 0.0
    %v3528 = vsel %vm645, %v3458, 0.0
    %v3529 = vsel %vm646, %v3460, 0.0
    %v3530 = vsel %vm646, %v3462, 0.0
    %v3531 = vsel %vm647, %v3464, 0.0
    %v3532 = vsel %vm647, %v3466, 0.0
    %v3533 = vsel %vm648, %v3467, 0.0
    %v3534 = vsel %vm648, %v3468, 0.0
    %v3535 = vrot.slane %v3341, 1
    %v3536 = vrot.slane %v3343, 1
    %v3537 = vsel %vm681, %v3535, %v3536
    %v3538 = vrot.slane %v3342, 1
    %v3539 = vrot.slane %v3344, 1
    %v3540 = vsel %vm681, %v3538, %v3539
    %v3541 = vrot.slane %v3345, 1
    %v3542 = vsel %vm681, %v3536, %v3541
    %v3543 = vrot.slane %v3346, 1
    %v3544 = vsel %vm681, %v3539, %v3543
    %v3545 = vrot.slane %v3347, 1
    %v3546 = vsel %vm681, %v3541, %v3545
    %v3547 = vrot.slane %v3348, 1
    %v3548 = vsel %vm681, %v3543, %v3547
    %v3549 = vrot.slane %v3349, 1
    %v3550 = vsel %vm681, %v3545, %v3549
    %v3551 = vrot.slane %v3350, 1
    %v3552 = vsel %vm681, %v3547, %v3551
    %v3553 = vrot.slane %v3351, 1
    %v3554 = vsel %vm681, %v3549, %v3553
    %v3555 = vrot.slane %v3352, 1
    %v3556 = vsel %vm681, %v3551, %v3555
    %v3557 = vrot.slane %v3353, 1
    %v3558 = vsel %vm681, %v3553, %v3557
    %v3559 = vrot.slane %v3354, 1
    %v3560 = vsel %vm681, %v3555, %v3559
    %v3561 = vrot.slane %v3355, 1
    %v3562 = vsel %vm681, %v3557, %v3561
    %v3563 = vrot.slane %v3356, 1
    %v3564 = vsel %vm681, %v3559, %v3563
    %v3565 = vrot.slane %v3357, 1
    %v3566 = vsel %vm681, %v3561, %v3565
    %v3567 = vrot.slane %v3358, 1
    %v3568 = vsel %vm681, %v3563, %v3567
    %v3569 = vrot.slane %v3359, 1
    %v3570 = vsel %vm681, %v3565, %v3569
    %v3571 = vrot.slane %v3360, 1
    %v3572 = vsel %vm681, %v3567, %v3571
    %v3573 = vrot.slane %v3361, 1
    %v3574 = vsel %vm681, %v3569, %v3573
    %v3575 = vrot.slane %v3362, 1
    %v3576 = vsel %vm681, %v3571, %v3575
    %v3577 = vrot.slane %v3363, 1
    %v3578 = vsel %vm681, %v3573, %v3577
    %v3579 = vrot.slane %v3364, 1
    %v3580 = vsel %vm681, %v3575, %v3579
    %v3581 = vrot.slane %v3365, 1
    %v3582 = vsel %vm681, %v3577, %v3581
    %v3583 = vrot.slane %v3366, 1
    %v3584 = vsel %vm681, %v3579, %v3583
    %v3585 = vrot.slane %v3367, 1
    %v3586 = vsel %vm681, %v3581, %v3585
    %v3587 = vrot.slane %v3368, 1
    %v3588 = vsel %vm681, %v3583, %v3587
    %v3589 = vrot.slane %v3369, 1
    %v3590 = vsel %vm681, %v3585, %v3589
    %v3591 = vrot.slane %v3370, 1
    %v3592 = vsel %vm681, %v3587, %v3591
    %v3593 = vrot.slane %v3371, 1
    %v3594 = vsel %vm681, %v3589, %v3593
    %v3595 = vrot.slane %v3372, 1
    %v3596 = vsel %vm681, %v3591, %v3595
    %v3631 = vsel %vm681, %v3593, %v3535
    %v3632 = vsel %vm681, %v3595, %v3538
    %v3633 = vsel %vm747, %v3537, 0.0
    %v3634 = vsel %vm747, %v3540, 0.0
    %v3635 = vsel %vm748, %v3542, 0.0
    %v3636 = vsel %vm748, %v3544, 0.0
    %v3637 = vsel %vm749, %v3546, 0.0
    %v3638 = vsel %vm749, %v3548, 0.0
    %v3639 = vsel %vm750, %v3550, 0.0
    %v3640 = vsel %vm750, %v3552, 0.0
    %v3641 = vsel %vm751, %v3554, 0.0
    %v3642 = vsel %vm751, %v3556, 0.0
    %v3643 = vsel %vm752, %v3558, 0.0
    %v3644 = vsel %vm752, %v3560, 0.0
    %v3645 = vsel %vm753, %v3562, 0.0
    %v3646 = vsel %vm753, %v3564, 0.0
    %v3647 = vsel %vm754, %v3566, 0.0
    %v3648 = vsel %vm754, %v3568, 0.0
    %v3649 = vsel %vm755, %v3570, 0.0
    %v3650 = vsel %vm755, %v3572, 0.0
    %v3651 = vsel %vm756, %v3574, 0.0
    %v3652 = vsel %vm756, %v3576, 0.0
    %v3653 = vsel %vm757, %v3578, 0.0
    %v3654 = vsel %vm757, %v3580, 0.0
    %v3655 = vsel %vm758, %v3582, 0.0
    %v3656 = vsel %vm758, %v3584, 0.0
    %v3657 = vsel %vm759, %v3586, 0.0
    %v3658 = vsel %vm759, %v3588, 0.0
    %v3659 = vsel %vm760, %v3590, 0.0
    %v3660 = vsel %vm760, %v3592, 0.0
    %v3661 = vsel %vm761, %v3594, 0.0
    %v3662 = vsel %vm761, %v3596, 0.0
    %v3663 = vsel %vm762, %v3631, 0.0
    %v3664 = vsel %vm762, %v3632, 0.0
    %v3665 = vpack.c.bf16 %v3504, %v3503
    %v3666 = vpack.c.bf16 %v3506, %v3505
    %v3667 = vpack.c.bf16 %v3508, %v3507
    %v3668 = vpack.c.bf16 %v3510, %v3509
    %v3669 = vpack.c.bf16 %v3512, %v3511
    %v3670 = vpack.c.bf16 %v3514, %v3513
    %v3671 = vpack.c.bf16 %v3516, %v3515
    %v3672 = vpack.c.bf16 %v3518, %v3517
    %v3673 = vpack.c.bf16 %v3520, %v3519
    %v3674 = vpack.c.bf16 %v3522, %v3521
    %v3675 = vpack.c.bf16 %v3524, %v3523
    %v3676 = vpack.c.bf16 %v3526, %v3525
    %v3677 = vpack.c.bf16 %v3528, %v3527
    %v3678 = vpack.c.bf16 %v3530, %v3529
    %v3679 = vpack.c.bf16 %v3532, %v3531
    %v3680 = vpack.c.bf16 %v3534, %v3533
    %v3681 = vpack.c.bf16 %v3342, %v3341
    %v3682 = vpack.c.bf16 %v3344, %v3343
    %v3683 = vpack.c.bf16 %v3346, %v3345
    %v3684 = vpack.c.bf16 %v3348, %v3347
    %v3685 = vpack.c.bf16 %v3350, %v3349
    %v3686 = vpack.c.bf16 %v3352, %v3351
    %v3687 = vpack.c.bf16 %v3354, %v3353
    %v3688 = vpack.c.bf16 %v3356, %v3355
    %v3689 = vpack.c.bf16 %v3358, %v3357
    %v3690 = vpack.c.bf16 %v3360, %v3359
    %v3691 = vpack.c.bf16 %v3362, %v3361
    %v3692 = vpack.c.bf16 %v3364, %v3363
    %v3693 = vpack.c.bf16 %v3366, %v3365
    %v3694 = vpack.c.bf16 %v3368, %v3367
    %v3695 = vpack.c.bf16 %v3370, %v3369
    %v3696 = vpack.c.bf16 %v3372, %v3371
    %v3697 = vpack.c.bf16 %v3634, %v3633
    %v3698 = vpack.c.bf16 %v3636, %v3635
    %v3699 = vpack.c.bf16 %v3638, %v3637
    %v3700 = vpack.c.bf16 %v3640, %v3639
    %v3701 = vpack.c.bf16 %v3642, %v3641
    %v3702 = vpack.c.bf16 %v3644, %v3643
    %v3703 = vpack.c.bf16 %v3646, %v3645
    %v3704 = vpack.c.bf16 %v3648, %v3647
    %v3705 = vpack.c.bf16 %v3650, %v3649
    %v3706 = vpack.c.bf16 %v3652, %v3651
    %v3707 = vpack.c.bf16 %v3654, %v3653
    %v3708 = vpack.c.bf16 %v3656, %v3655
    %v3709 = vpack.c.bf16 %v3658, %v3657
    %v3710 = vpack.c.bf16 %v3660, %v3659
    %v3711 = vpack.c.bf16 %v3662, %v3661
    %v3712 = vpack.c.bf16 %v3664, %v3663
    %v3729 = vunpack.c.l.b16 %v3665
    %v3730 = vunpack.c.h.b16 %v3665
    %v3731 = vunpack.c.l.b16 %v3666
    %v3732 = vunpack.c.h.b16 %v3666
    %v3733 = vunpack.c.l.b16 %v3667
    %v3734 = vunpack.c.h.b16 %v3667
    %v3735 = vunpack.c.l.b16 %v3668
    %v3736 = vunpack.c.h.b16 %v3668
    %v3737 = vunpack.c.l.b16 %v3669
    %v3738 = vunpack.c.h.b16 %v3669
    %v3739 = vunpack.c.l.b16 %v3670
    %v3740 = vunpack.c.h.b16 %v3670
    %v3741 = vunpack.c.l.b16 %v3671
    %v3742 = vunpack.c.h.b16 %v3671
    %v3743 = vunpack.c.l.b16 %v3672
    %v3744 = vunpack.c.h.b16 %v3672
    %v3745 = vunpack.c.l.b16 %v3673
    %v3746 = vunpack.c.h.b16 %v3673
    %v3747 = vunpack.c.l.b16 %v3674
    %v3748 = vunpack.c.h.b16 %v3674
    %v3749 = vunpack.c.l.b16 %v3675
    %v3750 = vunpack.c.h.b16 %v3675
    %v3751 = vunpack.c.l.b16 %v3676
    %v3752 = vunpack.c.h.b16 %v3676
    %v3753 = vunpack.c.l.b16 %v3677
    %v3754 = vunpack.c.h.b16 %v3677
    %v3755 = vunpack.c.l.b16 %v3678
    %v3756 = vunpack.c.h.b16 %v3678
    %v3757 = vunpack.c.l.b16 %v3679
    %v3758 = vunpack.c.h.b16 %v3679
    %v3759 = vunpack.c.l.b16 %v3680
    %v3760 = vunpack.c.h.b16 %v3680
    %v3761 = vpack.c.b16 %v3731, %v3729
    %v3762 = vpack.c.b16 %v3732, %v3730
    %v3763 = vpack.c.b16 %v3735, %v3733
    %v3764 = vpack.c.b16 %v3736, %v3734
    %v3765 = vpack.c.b16 %v3739, %v3737
    %v3766 = vpack.c.b16 %v3740, %v3738
    %v3767 = vpack.c.b16 %v3743, %v3741
    %v3768 = vpack.c.b16 %v3744, %v3742
    %v3769 = vpack.c.b16 %v3747, %v3745
    %v3770 = vpack.c.b16 %v3748, %v3746
    %v3771 = vpack.c.b16 %v3751, %v3749
    %v3772 = vpack.c.b16 %v3752, %v3750
    %v3773 = vpack.c.b16 %v3755, %v3753
    %v3774 = vpack.c.b16 %v3756, %v3754
    %v3775 = vpack.c.b16 %v3759, %v3757
    %v3776 = vpack.c.b16 %v3760, %v3758
    %v3809 = vunpack.c.l.b16 %v3681
    %v3810 = vunpack.c.h.b16 %v3681
    %v3811 = vunpack.c.l.b16 %v3682
    %v3812 = vunpack.c.h.b16 %v3682
    %v3813 = vunpack.c.l.b16 %v3683
    %v3814 = vunpack.c.h.b16 %v3683
    %v3815 = vunpack.c.l.b16 %v3684
    %v3816 = vunpack.c.h.b16 %v3684
    %v3817 = vunpack.c.l.b16 %v3685
    %v3818 = vunpack.c.h.b16 %v3685
    %v3819 = vunpack.c.l.b16 %v3686
    %v3820 = vunpack.c.h.b16 %v3686
    %v3821 = vunpack.c.l.b16 %v3687
    %v3822 = vunpack.c.h.b16 %v3687
    %v3823 = vunpack.c.l.b16 %v3688
    %v3824 = vunpack.c.h.b16 %v3688
    %v3825 = vunpack.c.l.b16 %v3689
    %v3826 = vunpack.c.h.b16 %v3689
    %v3827 = vunpack.c.l.b16 %v3690
    %v3828 = vunpack.c.h.b16 %v3690
    %v3829 = vunpack.c.l.b16 %v3691
    %v3830 = vunpack.c.h.b16 %v3691
    %v3831 = vunpack.c.l.b16 %v3692
    %v3832 = vunpack.c.h.b16 %v3692
    %v3833 = vunpack.c.l.b16 %v3693
    %v3834 = vunpack.c.h.b16 %v3693
    %v3835 = vunpack.c.l.b16 %v3694
    %v3836 = vunpack.c.h.b16 %v3694
    %v3837 = vunpack.c.l.b16 %v3695
    %v3838 = vunpack.c.h.b16 %v3695
    %v3839 = vunpack.c.l.b16 %v3696
    %v3840 = vunpack.c.h.b16 %v3696
    %v3841 = vpack.c.b16 %v3811, %v3809
    %v3842 = vpack.c.b16 %v3812, %v3810
    %v3843 = vpack.c.b16 %v3815, %v3813
    %v3844 = vpack.c.b16 %v3816, %v3814
    %v3845 = vpack.c.b16 %v3819, %v3817
    %v3846 = vpack.c.b16 %v3820, %v3818
    %v3847 = vpack.c.b16 %v3823, %v3821
    %v3848 = vpack.c.b16 %v3824, %v3822
    %v3849 = vpack.c.b16 %v3827, %v3825
    %v3850 = vpack.c.b16 %v3828, %v3826
    %v3851 = vpack.c.b16 %v3831, %v3829
    %v3852 = vpack.c.b16 %v3832, %v3830
    %v3853 = vpack.c.b16 %v3835, %v3833
    %v3854 = vpack.c.b16 %v3836, %v3834
    %v3855 = vpack.c.b16 %v3839, %v3837
    %v3856 = vpack.c.b16 %v3840, %v3838
    %v3889 = vunpack.c.l.b16 %v3697
    %v3890 = vunpack.c.h.b16 %v3697
    %v3891 = vunpack.c.l.b16 %v3698
    %v3892 = vunpack.c.h.b16 %v3698
    %v3893 = vunpack.c.l.b16 %v3699
    %v3894 = vunpack.c.h.b16 %v3699
    %v3895 = vunpack.c.l.b16 %v3700
    %v3896 = vunpack.c.h.b16 %v3700
    %v3897 = vunpack.c.l.b16 %v3701
    %v3898 = vunpack.c.h.b16 %v3701
    %v3899 = vunpack.c.l.b16 %v3702
    %v3900 = vunpack.c.h.b16 %v3702
    %v3901 = vunpack.c.l.b16 %v3703
    %v3902 = vunpack.c.h.b16 %v3703
    %v3903 = vunpack.c.l.b16 %v3704
    %v3904 = vunpack.c.h.b16 %v3704
    %v3905 = vunpack.c.l.b16 %v3705
    %v3906 = vunpack.c.h.b16 %v3705
    %v3907 = vunpack.c.l.b16 %v3706
    %v3908 = vunpack.c.h.b16 %v3706
    %v3909 = vunpack.c.l.b16 %v3707
    %v3910 = vunpack.c.h.b16 %v3707
    %v3911 = vunpack.c.l.b16 %v3708
    %v3912 = vunpack.c.h.b16 %v3708
    %v3913 = vunpack.c.l.b16 %v3709
    %v3914 = vunpack.c.h.b16 %v3709
    %v3915 = vunpack.c.l.b16 %v3710
    %v3916 = vunpack.c.h.b16 %v3710
    %v3917 = vunpack.c.l.b16 %v3711
    %v3918 = vunpack.c.h.b16 %v3711
    %v3919 = vunpack.c.l.b16 %v3712
    %v3920 = vunpack.c.h.b16 %v3712
    %v3921 = vpack.c.b16 %v3891, %v3889
    %v3922 = vpack.c.b16 %v3892, %v3890
    %v3923 = vpack.c.b16 %v3895, %v3893
    %v3924 = vpack.c.b16 %v3896, %v3894
    %v3925 = vpack.c.b16 %v3899, %v3897
    %v3926 = vpack.c.b16 %v3900, %v3898
    %v3927 = vpack.c.b16 %v3903, %v3901
    %v3928 = vpack.c.b16 %v3904, %v3902
    %v3929 = vpack.c.b16 %v3907, %v3905
    %v3930 = vpack.c.b16 %v3908, %v3906
    %v3931 = vpack.c.b16 %v3911, %v3909
    %v3932 = vpack.c.b16 %v3912, %v3910
    %v3933 = vpack.c.b16 %v3915, %v3913
    %v3934 = vpack.c.b16 %v3916, %v3914
    %v3935 = vpack.c.b16 %v3919, %v3917
    %v3936 = vpack.c.b16 %v3920, %v3918
    %v3953 = vld [vmem:[%s6] sm:$0xff]
    %v3954 = vld [vmem:[%s6 + $0x8] sm:$0xff]
    %v3955 = vld [vmem:[%s6 + $0x10] sm:$0xff]
    %v3956 = vld [vmem:[%s6 + $0x18] sm:$0xff]
    %v3957 = vld [vmem:[%s6 + $0x20] sm:$0xff]
    %v3958 = vld [vmem:[%s6 + $0x28] sm:$0xff]
    %v3959 = vld [vmem:[%s6 + $0x30] sm:$0xff]
    %v3960 = vld [vmem:[%s6 + $0x38] sm:$0xff]
    %v3961 = vld [vmem:[%s6 + $0x40] sm:$0xff]
    %v3962 = vld [vmem:[%s6 + $0x48] sm:$0xff]
    %v3963 = vld [vmem:[%s6 + $0x50] sm:$0xff]
    %v3964 = vld [vmem:[%s6 + $0x58] sm:$0xff]
    %v3965 = vld [vmem:[%s6 + $0x60] sm:$0xff]
    %v3966 = vld [vmem:[%s6 + $0x68] sm:$0xff]
    %v3967 = vld [vmem:[%s6 + $0x70] sm:$0xff]
    %v3968 = vld [vmem:[%s6 + $0x78] sm:$0xff]
    %v3969 = vld [vmem:[%s6 + $0x80] sm:$0xff]
    %v3970 = vld [vmem:[%s6 + $0x88] sm:$0xff]
    %v3971 = vld [vmem:[%s6 + $0x90] sm:$0xff]
    %v3972 = vld [vmem:[%s6 + $0x98] sm:$0xff]
    %v3973 = vld [vmem:[%s6 + $0xa0] sm:$0xff]
    %v3974 = vld [vmem:[%s6 + $0xa8] sm:$0xff]
    %v3975 = vld [vmem:[%s6 + $0xb0] sm:$0xff]
    %v3976 = vld [vmem:[%s6 + $0xb8] sm:$0xff]
    %v3977 = vld [vmem:[%s6 + $0xc0] sm:$0xff]
    %v3978 = vld [vmem:[%s6 + $0xc8] sm:$0xff]
    %v3979 = vld [vmem:[%s6 + $0xd0] sm:$0xff]
    %v3980 = vld [vmem:[%s6 + $0xd8] sm:$0xff]
    %v3981 = vld [vmem:[%s6 + $0xe0] sm:$0xff]
    %v3982 = vld [vmem:[%s6 + $0xe8] sm:$0xff]
    %v3983 = vld [vmem:[%s6 + $0xf0] sm:$0xff]
    %v3984 = vld [vmem:[%s6 + $0xf8] sm:$0xff]
    %v3985 = vld [vmem:[%s6 + $0x100] sm:$0xff]
    %v3986 = vld [vmem:[%s6 + $0x108] sm:$0xff]
    %v3987 = vld [vmem:[%s6 + $0x110] sm:$0xff]
    %v3988 = vld [vmem:[%s6 + $0x118] sm:$0xff]
    %v3989 = vld [vmem:[%s6 + $0x120] sm:$0xff]
    %v3990 = vld [vmem:[%s6 + $0x128] sm:$0xff]
    %v3991 = vld [vmem:[%s6 + $0x130] sm:$0xff]
    %v3992 = vld [vmem:[%s6 + $0x138] sm:$0xff]
    %v3993 = vld [vmem:[%s6 + $0x140] sm:$0xff]
    %v3994 = vld [vmem:[%s6 + $0x148] sm:$0xff]
    %v3995 = vld [vmem:[%s6 + $0x150] sm:$0xff]
    %v3996 = vld [vmem:[%s6 + $0x158] sm:$0xff]
    %v3997 = vld [vmem:[%s6 + $0x160] sm:$0xff]
    %v3998 = vld [vmem:[%s6 + $0x168] sm:$0xff]
    %v3999 = vld [vmem:[%s6 + $0x170] sm:$0xff]
    %v4000 = vld [vmem:[%s6 + $0x178] sm:$0xff]
    %v4001 = vld [vmem:[%s6 + $0x180] sm:$0xff]
    %v4002 = vld [vmem:[%s6 + $0x188] sm:$0xff]
    %v4003 = vld [vmem:[%s6 + $0x190] sm:$0xff]
    %v4004 = vld [vmem:[%s6 + $0x198] sm:$0xff]
    %v4005 = vld [vmem:[%s6 + $0x1a0] sm:$0xff]
    %v4006 = vld [vmem:[%s6 + $0x1a8] sm:$0xff]
    %v4007 = vld [vmem:[%s6 + $0x1b0] sm:$0xff]
    %v4008 = vld [vmem:[%s6 + $0x1b8] sm:$0xff]
    %v4009 = vld [vmem:[%s6 + $0x1c0] sm:$0xff]
    %v4010 = vld [vmem:[%s6 + $0x1c8] sm:$0xff]
    %v4011 = vld [vmem:[%s6 + $0x1d0] sm:$0xff]
    %v4012 = vld [vmem:[%s6 + $0x1d8] sm:$0xff]
    %v4013 = vld [vmem:[%s6 + $0x1e0] sm:$0xff]
    %v4014 = vld [vmem:[%s6 + $0x1e8] sm:$0xff]
    %v4015 = vld [vmem:[%s6 + $0x1f0] sm:$0xff]
    %v4016 = vld [vmem:[%s6 + $0x1f8] sm:$0xff]
    %v4017 = vld [vmem:[%s6 + $0x200] sm:$0xff]
    %v4018 = vld [vmem:[%s6 + $0x208] sm:$0xff]
    %v4019 = vld [vmem:[%s6 + $0x210] sm:$0xff]
    %v4020 = vld [vmem:[%s6 + $0x218] sm:$0xff]
    %v4021 = vld [vmem:[%s6 + $0x220] sm:$0xff]
    %v4022 = vld [vmem:[%s6 + $0x228] sm:$0xff]
    %v4023 = vld [vmem:[%s6 + $0x230] sm:$0xff]
    %v4024 = vld [vmem:[%s6 + $0x238] sm:$0xff]
    %v4025 = vld [vmem:[%s6 + $0x240] sm:$0xff]
    %v4026 = vld [vmem:[%s6 + $0x248] sm:$0xff]
    %v4027 = vld [vmem:[%s6 + $0x250] sm:$0xff]
    %v4028 = vld [vmem:[%s6 + $0x258] sm:$0xff]
    %v4029 = vld [vmem:[%s6 + $0x260] sm:$0xff]
    %v4030 = vld [vmem:[%s6 + $0x268] sm:$0xff]
    %v4031 = vld [vmem:[%s6 + $0x270] sm:$0xff]
    %v4032 = vld [vmem:[%s6 + $0x278] sm:$0xff]
    %v4033 = vld [vmem:[%s6 + $0x280] sm:$0xff]
    %v4034 = vld [vmem:[%s6 + $0x288] sm:$0xff]
    %v4035 = vld [vmem:[%s6 + $0x290] sm:$0xff]
    %v4036 = vld [vmem:[%s6 + $0x298] sm:$0xff]
    %v4037 = vld [vmem:[%s6 + $0x2a0] sm:$0xff]
    %v4038 = vld [vmem:[%s6 + $0x2a8] sm:$0xff]
    %v4039 = vld [vmem:[%s6 + $0x2b0] sm:$0xff]
    %v4040 = vld [vmem:[%s6 + $0x2b8] sm:$0xff]
    %v4041 = vld [vmem:[%s6 + $0x2c0] sm:$0xff]
    %v4042 = vld [vmem:[%s6 + $0x2c8] sm:$0xff]
    %v4043 = vld [vmem:[%s6 + $0x2d0] sm:$0xff]
    %v4044 = vld [vmem:[%s6 + $0x2d8] sm:$0xff]
    %v4045 = vld [vmem:[%s6 + $0x2e0] sm:$0xff]
    %v4046 = vld [vmem:[%s6 + $0x2e8] sm:$0xff]
    %v4047 = vld [vmem:[%s6 + $0x2f0] sm:$0xff]
    %v4048 = vld [vmem:[%s6 + $0x2f8] sm:$0xff]
    %v4049 = vld [vmem:[#allocation2] sm:$0x3]
    %v4051 = vperm.slane %v4049, 0
    %v4052 = vperm.slane %v4049, 1
    %v4151 = vunpack.c.l.b16 %v3953
    %v4152 = vunpack.c.h.b16 %v3953
    %v4153 = vunpack.c.l.b16 %v3954
    %v4154 = vunpack.c.h.b16 %v3954
    %v4155 = vunpack.c.l.b16 %v3955
    %v4156 = vunpack.c.h.b16 %v3955
    %v4157 = vunpack.c.l.b16 %v3956
    %v4158 = vunpack.c.h.b16 %v3956
    %v4159 = vunpack.c.l.b16 %v3957
    %v4160 = vunpack.c.h.b16 %v3957
    %v4161 = vunpack.c.l.b16 %v3958
    %v4162 = vunpack.c.h.b16 %v3958
    %v4163 = vunpack.c.l.b16 %v3959
    %v4164 = vunpack.c.h.b16 %v3959
    %v4165 = vunpack.c.l.b16 %v3960
    %v4166 = vunpack.c.h.b16 %v3960
    %v4167 = vunpack.c.l.b16 %v3961
    %v4168 = vunpack.c.h.b16 %v3961
    %v4169 = vunpack.c.l.b16 %v3962
    %v4170 = vunpack.c.h.b16 %v3962
    %v4171 = vunpack.c.l.b16 %v3963
    %v4172 = vunpack.c.h.b16 %v3963
    %v4173 = vunpack.c.l.b16 %v3964
    %v4174 = vunpack.c.h.b16 %v3964
    %v4175 = vunpack.c.l.b16 %v3965
    %v4176 = vunpack.c.h.b16 %v3965
    %v4177 = vunpack.c.l.b16 %v3966
    %v4178 = vunpack.c.h.b16 %v3966
    %v4179 = vunpack.c.l.b16 %v3967
    %v4180 = vunpack.c.h.b16 %v3967
    %v4181 = vunpack.c.l.b16 %v3968
    %v4182 = vunpack.c.h.b16 %v3968
    %v4183 = vunpack.c.l.b16 %v3969
    %v4184 = vunpack.c.h.b16 %v3969
    %v4185 = vunpack.c.l.b16 %v3970
    %v4186 = vunpack.c.h.b16 %v3970
    %v4187 = vunpack.c.l.b16 %v3971
    %v4188 = vunpack.c.h.b16 %v3971
    %v4189 = vunpack.c.l.b16 %v3972
    %v4190 = vunpack.c.h.b16 %v3972
    %v4191 = vunpack.c.l.b16 %v3973
    %v4192 = vunpack.c.h.b16 %v3973
    %v4193 = vunpack.c.l.b16 %v3974
    %v4194 = vunpack.c.h.b16 %v3974
    %v4195 = vunpack.c.l.b16 %v3975
    %v4196 = vunpack.c.h.b16 %v3975
    %v4197 = vunpack.c.l.b16 %v3976
    %v4198 = vunpack.c.h.b16 %v3976
    %v4199 = vunpack.c.l.b16 %v3977
    %v4200 = vunpack.c.h.b16 %v3977
    %v4201 = vunpack.c.l.b16 %v3978
    %v4202 = vunpack.c.h.b16 %v3978
    %v4203 = vunpack.c.l.b16 %v3979
    %v4204 = vunpack.c.h.b16 %v3979
    %v4205 = vunpack.c.l.b16 %v3980
    %v4206 = vunpack.c.h.b16 %v3980
    %v4207 = vunpack.c.l.b16 %v3981
    %v4208 = vunpack.c.h.b16 %v3981
    %v4209 = vunpack.c.l.b16 %v3982
    %v4210 = vunpack.c.h.b16 %v3982
    %v4211 = vunpack.c.l.b16 %v3983
    %v4212 = vunpack.c.h.b16 %v3983
    %v4213 = vunpack.c.l.b16 %v3984
    %v4214 = vunpack.c.h.b16 %v3984
    %v4215 = vunpack.c.l.b16 %v3985
    %v4216 = vunpack.c.h.b16 %v3985
    %v4217 = vunpack.c.l.b16 %v3986
    %v4218 = vunpack.c.h.b16 %v3986
    %v4219 = vunpack.c.l.b16 %v3987
    %v4220 = vunpack.c.h.b16 %v3987
    %v4221 = vunpack.c.l.b16 %v3988
    %v4222 = vunpack.c.h.b16 %v3988
    %v4223 = vunpack.c.l.b16 %v3989
    %v4224 = vunpack.c.h.b16 %v3989
    %v4225 = vunpack.c.l.b16 %v3990
    %v4226 = vunpack.c.h.b16 %v3990
    %v4227 = vunpack.c.l.b16 %v3991
    %v4228 = vunpack.c.h.b16 %v3991
    %v4229 = vunpack.c.l.b16 %v3992
    %v4230 = vunpack.c.h.b16 %v3992
    %v4231 = vunpack.c.l.b16 %v3993
    %v4232 = vunpack.c.h.b16 %v3993
    %v4233 = vunpack.c.l.b16 %v3994
    %v4234 = vunpack.c.h.b16 %v3994
    %v4235 = vunpack.c.l.b16 %v3995
    %v4236 = vunpack.c.h.b16 %v3995
    %v4237 = vunpack.c.l.b16 %v3996
    %v4238 = vunpack.c.h.b16 %v3996
    %v4239 = vunpack.c.l.b16 %v3997
    %v4240 = vunpack.c.h.b16 %v3997
    %v4241 = vunpack.c.l.b16 %v3998
    %v4242 = vunpack.c.h.b16 %v3998
    %v4243 = vunpack.c.l.b16 %v3999
    %v4244 = vunpack.c.h.b16 %v3999
    %v4245 = vunpack.c.l.b16 %v4000
    %v4246 = vunpack.c.h.b16 %v4000
    %v4247 = vunpack.c.l.b16 %v4001
    %v4248 = vunpack.c.h.b16 %v4001
    %v4249 = vunpack.c.l.b16 %v4002
    %v4250 = vunpack.c.h.b16 %v4002
    %v4251 = vunpack.c.l.b16 %v4003
    %v4252 = vunpack.c.h.b16 %v4003
    %v4253 = vunpack.c.l.b16 %v4004
    %v4254 = vunpack.c.h.b16 %v4004
    %v4255 = vunpack.c.l.b16 %v4005
    %v4256 = vunpack.c.h.b16 %v4005
    %v4257 = vunpack.c.l.b16 %v4006
    %v4258 = vunpack.c.h.b16 %v4006
    %v4259 = vunpack.c.l.b16 %v4007
    %v4260 = vunpack.c.h.b16 %v4007
    %v4261 = vunpack.c.l.b16 %v4008
    %v4262 = vunpack.c.h.b16 %v4008
    %v4263 = vunpack.c.l.b16 %v4009
    %v4264 = vunpack.c.h.b16 %v4009
    %v4265 = vunpack.c.l.b16 %v4010
    %v4266 = vunpack.c.h.b16 %v4010
    %v4267 = vunpack.c.l.b16 %v4011
    %v4268 = vunpack.c.h.b16 %v4011
    %v4269 = vunpack.c.l.b16 %v4012
    %v4270 = vunpack.c.h.b16 %v4012
    %v4271 = vunpack.c.l.b16 %v4013
    %v4272 = vunpack.c.h.b16 %v4013
    %v4273 = vunpack.c.l.b16 %v4014
    %v4274 = vunpack.c.h.b16 %v4014
    %v4275 = vunpack.c.l.b16 %v4015
    %v4276 = vunpack.c.h.b16 %v4015
    %v4277 = vunpack.c.l.b16 %v4016
    %v4278 = vunpack.c.h.b16 %v4016
    %v4279 = vunpack.c.l.b16 %v4017
    %v4280 = vunpack.c.h.b16 %v4017
    %v4281 = vunpack.c.l.b16 %v4018
    %v4282 = vunpack.c.h.b16 %v4018
    %v4283 = vunpack.c.l.b16 %v4019
    %v4284 = vunpack.c.h.b16 %v4019
    %v4285 = vunpack.c.l.b16 %v4020
    %v4286 = vunpack.c.h.b16 %v4020
    %v4287 = vunpack.c.l.b16 %v4021
    %v4288 = vunpack.c.h.b16 %v4021
    %v4289 = vunpack.c.l.b16 %v4022
    %v4290 = vunpack.c.h.b16 %v4022
    %v4291 = vunpack.c.l.b16 %v4023
    %v4292 = vunpack.c.h.b16 %v4023
    %v4293 = vunpack.c.l.b16 %v4024
    %v4294 = vunpack.c.h.b16 %v4024
    %v4295 = vunpack.c.l.b16 %v4025
    %v4296 = vunpack.c.h.b16 %v4025
    %v4297 = vunpack.c.l.b16 %v4026
    %v4298 = vunpack.c.h.b16 %v4026
    %v4299 = vunpack.c.l.b16 %v4027
    %v4300 = vunpack.c.h.b16 %v4027
    %v4301 = vunpack.c.l.b16 %v4028
    %v4302 = vunpack.c.h.b16 %v4028
    %v4303 = vunpack.c.l.b16 %v4029
    %v4304 = vunpack.c.h.b16 %v4029
    %v4305 = vunpack.c.l.b16 %v4030
    %v4306 = vunpack.c.h.b16 %v4030
    %v4307 = vunpack.c.l.b16 %v4031
    %v4308 = vunpack.c.h.b16 %v4031
    %v4309 = vunpack.c.l.b16 %v4032
    %v4310 = vunpack.c.h.b16 %v4032
    %v4311 = vunpack.c.l.b16 %v4033
    %v4312 = vunpack.c.h.b16 %v4033
    %v4313 = vunpack.c.l.b16 %v4034
    %v4314 = vunpack.c.h.b16 %v4034
    %v4315 = vunpack.c.l.b16 %v4035
    %v4316 = vunpack.c.h.b16 %v4035
    %v4317 = vunpack.c.l.b16 %v4036
    %v4318 = vunpack.c.h.b16 %v4036
    %v4319 = vunpack.c.l.b16 %v4037
    %v4320 = vunpack.c.h.b16 %v4037
    %v4321 = vunpack.c.l.b16 %v4038
    %v4322 = vunpack.c.h.b16 %v4038
    %v4323 = vunpack.c.l.b16 %v4039
    %v4324 = vunpack.c.h.b16 %v4039
    %v4325 = vunpack.c.l.b16 %v4040
    %v4326 = vunpack.c.h.b16 %v4040
    %v4327 = vunpack.c.l.b16 %v4041
    %v4328 = vunpack.c.h.b16 %v4041
    %v4329 = vunpack.c.l.b16 %v4042
    %v4330 = vunpack.c.h.b16 %v4042
    %v4331 = vunpack.c.l.b16 %v4043
    %v4332 = vunpack.c.h.b16 %v4043
    %v4333 = vunpack.c.l.b16 %v4044
    %v4334 = vunpack.c.h.b16 %v4044
    %v4335 = vunpack.c.l.b16 %v4045
    %v4336 = vunpack.c.h.b16 %v4045
    %v4337 = vunpack.c.l.b16 %v4046
    %v4338 = vunpack.c.h.b16 %v4046
    %v4339 = vunpack.c.l.b16 %v4047
    %v4340 = vunpack.c.h.b16 %v4047
    %v4341 = vunpack.c.l.b16 %v4048
    %v4342 = vunpack.c.h.b16 %v4048
    %v4343 = vpack.c.b16 %v4153, %v4151
    %v4344 = vpack.c.b16 %v4154, %v4152
    %v4345 = vpack.c.b16 %v4157, %v4155
    %v4346 = vpack.c.b16 %v4158, %v4156
    %v4347 = vpack.c.b16 %v4161, %v4159
    %v4348 = vpack.c.b16 %v4162, %v4160
    %v4349 = vpack.c.b16 %v4165, %v4163
    %v4350 = vpack.c.b16 %v4166, %v4164
    %v4351 = vpack.c.b16 %v4169, %v4167
    %v4352 = vpack.c.b16 %v4170, %v4168
    %v4353 = vpack.c.b16 %v4173, %v4171
    %v4354 = vpack.c.b16 %v4174, %v4172
    %v4355 = vpack.c.b16 %v4177, %v4175
    %v4356 = vpack.c.b16 %v4178, %v4176
    %v4357 = vpack.c.b16 %v4181, %v4179
    %v4358 = vpack.c.b16 %v4182, %v4180
    %v4359 = vpack.c.b16 %v4185, %v4183
    %v4360 = vpack.c.b16 %v4186, %v4184
    %v4361 = vpack.c.b16 %v4189, %v4187
    %v4362 = vpack.c.b16 %v4190, %v4188
    %v4363 = vpack.c.b16 %v4193, %v4191
    %v4364 = vpack.c.b16 %v4194, %v4192
    %v4365 = vpack.c.b16 %v4197, %v4195
    %v4366 = vpack.c.b16 %v4198, %v4196
    %v4367 = vpack.c.b16 %v4201, %v4199
    %v4368 = vpack.c.b16 %v4202, %v4200
    %v4369 = vpack.c.b16 %v4205, %v4203
    %v4370 = vpack.c.b16 %v4206, %v4204
    %v4371 = vpack.c.b16 %v4209, %v4207
    %v4372 = vpack.c.b16 %v4210, %v4208
    %v4373 = vpack.c.b16 %v4213, %v4211
    %v4374 = vpack.c.b16 %v4214, %v4212
    %v4375 = vpack.c.b16 %v4217, %v4215
    %v4376 = vpack.c.b16 %v4218, %v4216
    %v4377 = vpack.c.b16 %v4221, %v4219
    %v4378 = vpack.c.b16 %v4222, %v4220
    %v4379 = vpack.c.b16 %v4225, %v4223
    %v4380 = vpack.c.b16 %v4226, %v4224
    %v4381 = vpack.c.b16 %v4229, %v4227
    %v4382 = vpack.c.b16 %v4230, %v4228
    %v4383 = vpack.c.b16 %v4233, %v4231
    %v4384 = vpack.c.b16 %v4234, %v4232
    %v4385 = vpack.c.b16 %v4237, %v4235
    %v4386 = vpack.c.b16 %v4238, %v4236
    %v4387 = vpack.c.b16 %v4241, %v4239
    %v4388 = vpack.c.b16 %v4242, %v4240
    %v4389 = vpack.c.b16 %v4245, %v4243
    %v4390 = vpack.c.b16 %v4246, %v4244
    %v4391 = vpack.c.b16 %v4249, %v4247
    %v4392 = vpack.c.b16 %v4250, %v4248
    %v4393 = vpack.c.b16 %v4253, %v4251
    %v4394 = vpack.c.b16 %v4254, %v4252
    %v4395 = vpack.c.b16 %v4257, %v4255
    %v4396 = vpack.c.b16 %v4258, %v4256
    %v4397 = vpack.c.b16 %v4261, %v4259
    %v4398 = vpack.c.b16 %v4262, %v4260
    %v4399 = vpack.c.b16 %v4265, %v4263
    %v4400 = vpack.c.b16 %v4266, %v4264
    %v4401 = vpack.c.b16 %v4269, %v4267
    %v4402 = vpack.c.b16 %v4270, %v4268
    %v4403 = vpack.c.b16 %v4273, %v4271
    %v4404 = vpack.c.b16 %v4274, %v4272
    %v4405 = vpack.c.b16 %v4277, %v4275
    %v4406 = vpack.c.b16 %v4278, %v4276
    %v4407 = vpack.c.b16 %v4281, %v4279
    %v4408 = vpack.c.b16 %v4282, %v4280
    %v4409 = vpack.c.b16 %v4285, %v4283
    %v4410 = vpack.c.b16 %v4286, %v4284
    %v4411 = vpack.c.b16 %v4289, %v4287
    %v4412 = vpack.c.b16 %v4290, %v4288
    %v4413 = vpack.c.b16 %v4293, %v4291
    %v4414 = vpack.c.b16 %v4294, %v4292
    %v4415 = vpack.c.b16 %v4297, %v4295
    %v4416 = vpack.c.b16 %v4298, %v4296
    %v4417 = vpack.c.b16 %v4301, %v4299
    %v4418 = vpack.c.b16 %v4302, %v4300
    %v4419 = vpack.c.b16 %v4305, %v4303
    %v4420 = vpack.c.b16 %v4306, %v4304
    %v4421 = vpack.c.b16 %v4309, %v4307
    %v4422 = vpack.c.b16 %v4310, %v4308
    %v4423 = vpack.c.b16 %v4313, %v4311
    %v4424 = vpack.c.b16 %v4314, %v4312
    %v4425 = vpack.c.b16 %v4317, %v4315
    %v4426 = vpack.c.b16 %v4318, %v4316
    %v4427 = vpack.c.b16 %v4321, %v4319
    %v4428 = vpack.c.b16 %v4322, %v4320
    %v4429 = vpack.c.b16 %v4325, %v4323
    %v4430 = vpack.c.b16 %v4326, %v4324
    %v4431 = vpack.c.b16 %v4329, %v4327
    %v4432 = vpack.c.b16 %v4330, %v4328
    %v4433 = vpack.c.b16 %v4333, %v4331
    %v4434 = vpack.c.b16 %v4334, %v4332
    %v4435 = vpack.c.b16 %v4337, %v4335
    %v4436 = vpack.c.b16 %v4338, %v4336
    %v4437 = vpack.c.b16 %v4341, %v4339
    %v4438 = vpack.c.b16 %v4342, %v4340
    %4535 = vmatpush.bf16.msra.mxu0 %v4357
    %4536 = vmatpush.bf16.msra.mxu0 %v4355
    %4537 = vmatpush.bf16.msra.mxu0 %v4353
    %4538 = vmatpush.bf16.msra.mxu0 %v4351
    %4539 = vmatpush.bf16.msra.mxu0 %v4349
    %4540 = vmatpush.bf16.msra.mxu0 %v4347
    %4541 = vmatpush.bf16.msra.mxu0 %v4345
    %4542 = vmatpush.bf16.msra.mxu0 %v4343
    %4543 = vmatmul.bf16.gmra.mxu0 %v3761
    %v4544 = vpop.f32.mrf.mxu0
    %v4545 = vadd.f32 %v4051, %v4544
    %v4546 = vpop.f32.mrf.mxu0
    %v4547 = vadd.f32 %v4051, %v4546
    %4548 = vmatmul.bf16.gmra.mxu0 %v3763
    %v4549 = vpop.f32.mrf.mxu0
    %v4550 = vadd.f32 %v4051, %v4549
    %v4551 = vpop.f32.mrf.mxu0
    %v4552 = vadd.f32 %v4051, %v4551
    %4553 = vmatmul.bf16.gmra.mxu0 %v3765
    %v4554 = vpop.f32.mrf.mxu0
    %v4555 = vadd.f32 %v4051, %v4554
    %v4556 = vpop.f32.mrf.mxu0
    %v4557 = vadd.f32 %v4051, %v4556
    %4558 = vmatmul.bf16.gmra.mxu0 %v3767
    %v4559 = vpop.f32.mrf.mxu0
    %v4560 = vadd.f32 %v4051, %v4559
    %v4561 = vpop.f32.mrf.mxu0
    %v4562 = vadd.f32 %v4051, %v4561
    %4563 = vmatmul.bf16.gmra.mxu0 %v3769
    %v4564 = vpop.f32.mrf.mxu0
    %v4565 = vadd.f32 %v4051, %v4564
    %v4566 = vpop.f32.mrf.mxu0
    %v4567 = vadd.f32 %v4051, %v4566
    %4568 = vmatmul.bf16.gmra.mxu0 %v3771
    %v4569 = vpop.f32.mrf.mxu0
    %v4570 = vadd.f32 %v4051, %v4569
    %v4571 = vpop.f32.mrf.mxu0
    %v4572 = vadd.f32 %v4051, %v4571
    %4573 = vmatmul.bf16.gmra.mxu0 %v3773
    %v4574 = vpop.f32.mrf.mxu0
    %v4575 = vadd.f32 %v4051, %v4574
    %v4576 = vpop.f32.mrf.mxu0
    %v4577 = vadd.f32 %v4051, %v4576
    %4578 = vmatmul.bf16.gmra.mxu0 %v3775
    %v4579 = vpop.f32.mrf.mxu0
    %v4580 = vadd.f32 %v4051, %v4579
    %v4581 = vpop.f32.mrf.mxu0
    %v4582 = vadd.f32 %v4051, %v4581
    %4583 = vdwg.mxu0
    %4584 = vmatpush.bf16.msra.mxu0 %v4373
    %4585 = vmatpush.bf16.msra.mxu0 %v4371
    %4586 = vmatpush.bf16.msra.mxu0 %v4369
    %4587 = vmatpush.bf16.msra.mxu0 %v4367
    %4588 = vmatpush.bf16.msra.mxu0 %v4365
    %4589 = vmatpush.bf16.msra.mxu0 %v4363
    %4590 = vmatpush.bf16.msra.mxu0 %v4361
    %4591 = vmatpush.bf16.msra.mxu0 %v4359
    %4592 = vmatmul.bf16.gmra.mxu0 %v3762
    %v4593 = vpop.f32.mrf.mxu0
    %v4594 = vadd.f32 %v4545, %v4593
    %v4595 = vpop.f32.mrf.mxu0
    %v4596 = vadd.f32 %v4547, %v4595
    %4597 = vmatmul.bf16.gmra.mxu0 %v3764
    %v4598 = vpop.f32.mrf.mxu0
    %v4599 = vadd.f32 %v4550, %v4598
    %v4600 = vpop.f32.mrf.mxu0
    %v4601 = vadd.f32 %v4552, %v4600
    %4602 = vmatmul.bf16.gmra.mxu0 %v3766
    %v4603 = vpop.f32.mrf.mxu0
    %v4604 = vadd.f32 %v4555, %v4603
    %v4605 = vpop.f32.mrf.mxu0
    %v4606 = vadd.f32 %v4557, %v4605
    %4607 = vmatmul.bf16.gmra.mxu0 %v3768
    %v4608 = vpop.f32.mrf.mxu0
    %v4609 = vadd.f32 %v4560, %v4608
    %v4610 = vpop.f32.mrf.mxu0
    %v4611 = vadd.f32 %v4562, %v4610
    %4612 = vmatmul.bf16.gmra.mxu0 %v3770
    %v4613 = vpop.f32.mrf.mxu0
    %v4614 = vadd.f32 %v4565, %v4613
    %v4615 = vpop.f32.mrf.mxu0
    %v4616 = vadd.f32 %v4567, %v4615
    %4617 = vmatmul.bf16.gmra.mxu0 %v3772
    %v4618 = vpop.f32.mrf.mxu0
    %v4619 = vadd.f32 %v4570, %v4618
    %v4620 = vpop.f32.mrf.mxu0
    %v4621 = vadd.f32 %v4572, %v4620
    %4622 = vmatmul.bf16.gmra.mxu0 %v3774
    %v4623 = vpop.f32.mrf.mxu0
    %v4624 = vadd.f32 %v4575, %v4623
    %v4625 = vpop.f32.mrf.mxu0
    %v4626 = vadd.f32 %v4577, %v4625
    %4627 = vmatmul.bf16.gmra.mxu0 %v3776
    %v4628 = vpop.f32.mrf.mxu0
    %v4629 = vadd.f32 %v4580, %v4628
    %v4630 = vpop.f32.mrf.mxu0
    %v4631 = vadd.f32 %v4582, %v4630
    %4632 = vdwg.mxu0
    %4633 = vmatpush.bf16.msra.mxu0 %v4389
    %4634 = vmatpush.bf16.msra.mxu0 %v4387
    %4635 = vmatpush.bf16.msra.mxu0 %v4385
    %4636 = vmatpush.bf16.msra.mxu0 %v4383
    %4637 = vmatpush.bf16.msra.mxu0 %v4381
    %4638 = vmatpush.bf16.msra.mxu0 %v4379
    %4639 = vmatpush.bf16.msra.mxu0 %v4377
    %4640 = vmatpush.bf16.msra.mxu0 %v4375
    %4641 = vmatmul.bf16.gmra.mxu0 %v3841
    %v4642 = vpop.f32.mrf.mxu0
    %v4643 = vadd.f32 %v4594, %v4642
    %v4644 = vpop.f32.mrf.mxu0
    %v4645 = vadd.f32 %v4596, %v4644
    %4646 = vmatmul.bf16.gmra.mxu0 %v3843
    %v4647 = vpop.f32.mrf.mxu0
    %v4648 = vadd.f32 %v4599, %v4647
    %v4649 = vpop.f32.mrf.mxu0
    %v4650 = vadd.f32 %v4601, %v4649
    %4651 = vmatmul.bf16.gmra.mxu0 %v3845
    %v4652 = vpop.f32.mrf.mxu0
    %v4653 = vadd.f32 %v4604, %v4652
    %v4654 = vpop.f32.mrf.mxu0
    %v4655 = vadd.f32 %v4606, %v4654
    %4656 = vmatmul.bf16.gmra.mxu0 %v3847
    %v4657 = vpop.f32.mrf.mxu0
    %v4658 = vadd.f32 %v4609, %v4657
    %v4659 = vpop.f32.mrf.mxu0
    %v4660 = vadd.f32 %v4611, %v4659
    %4661 = vmatmul.bf16.gmra.mxu0 %v3849
    %v4662 = vpop.f32.mrf.mxu0
    %v4663 = vadd.f32 %v4614, %v4662
    %v4664 = vpop.f32.mrf.mxu0
    %v4665 = vadd.f32 %v4616, %v4664
    %4666 = vmatmul.bf16.gmra.mxu0 %v3851
    %v4667 = vpop.f32.mrf.mxu0
    %v4668 = vadd.f32 %v4619, %v4667
    %v4669 = vpop.f32.mrf.mxu0
    %v4670 = vadd.f32 %v4621, %v4669
    %4671 = vmatmul.bf16.gmra.mxu0 %v3853
    %v4672 = vpop.f32.mrf.mxu0
    %v4673 = vadd.f32 %v4624, %v4672
    %v4674 = vpop.f32.mrf.mxu0
    %v4675 = vadd.f32 %v4626, %v4674
    %4676 = vmatmul.bf16.gmra.mxu0 %v3855
    %v4677 = vpop.f32.mrf.mxu0
    %v4678 = vadd.f32 %v4629, %v4677
    %v4679 = vpop.f32.mrf.mxu0
    %v4680 = vadd.f32 %v4631, %v4679
    %4681 = vdwg.mxu0
    %4682 = vmatpush.bf16.msra.mxu0 %v4405
    %4683 = vmatpush.bf16.msra.mxu0 %v4403
    %4684 = vmatpush.bf16.msra.mxu0 %v4401
    %4685 = vmatpush.bf16.msra.mxu0 %v4399
    %4686 = vmatpush.bf16.msra.mxu0 %v4397
    %4687 = vmatpush.bf16.msra.mxu0 %v4395
    %4688 = vmatpush.bf16.msra.mxu0 %v4393
    %4689 = vmatpush.bf16.msra.mxu0 %v4391
    %4690 = vmatmul.bf16.gmra.mxu0 %v3842
    %v4691 = vpop.f32.mrf.mxu0
    %v4692 = vadd.f32 %v4643, %v4691
    %v4693 = vpop.f32.mrf.mxu0
    %v4694 = vadd.f32 %v4645, %v4693
    %4695 = vmatmul.bf16.gmra.mxu0 %v3844
    %v4696 = vpop.f32.mrf.mxu0
    %v4697 = vadd.f32 %v4648, %v4696
    %v4698 = vpop.f32.mrf.mxu0
    %v4699 = vadd.f32 %v4650, %v4698
    %4700 = vmatmul.bf16.gmra.mxu0 %v3846
    %v4701 = vpop.f32.mrf.mxu0
    %v4702 = vadd.f32 %v4653, %v4701
    %v4703 = vpop.f32.mrf.mxu0
    %v4704 = vadd.f32 %v4655, %v4703
    %4705 = vmatmul.bf16.gmra.mxu0 %v3848
    %v4706 = vpop.f32.mrf.mxu0
    %v4707 = vadd.f32 %v4658, %v4706
    %v4708 = vpop.f32.mrf.mxu0
    %v4709 = vadd.f32 %v4660, %v4708
    %4710 = vmatmul.bf16.gmra.mxu0 %v3850
    %v4711 = vpop.f32.mrf.mxu0
    %v4712 = vadd.f32 %v4663, %v4711
    %v4713 = vpop.f32.mrf.mxu0
    %v4714 = vadd.f32 %v4665, %v4713
    %4715 = vmatmul.bf16.gmra.mxu0 %v3852
    %v4716 = vpop.f32.mrf.mxu0
    %v4717 = vadd.f32 %v4668, %v4716
    %v4718 = vpop.f32.mrf.mxu0
    %v4719 = vadd.f32 %v4670, %v4718
    %4720 = vmatmul.bf16.gmra.mxu0 %v3854
    %v4721 = vpop.f32.mrf.mxu0
    %v4722 = vadd.f32 %v4673, %v4721
    %v4723 = vpop.f32.mrf.mxu0
    %v4724 = vadd.f32 %v4675, %v4723
    %4725 = vmatmul.bf16.gmra.mxu0 %v3856
    %v4726 = vpop.f32.mrf.mxu0
    %v4727 = vadd.f32 %v4678, %v4726
    %v4728 = vpop.f32.mrf.mxu0
    %v4729 = vadd.f32 %v4680, %v4728
    %4730 = vdwg.mxu0
    %4731 = vmatpush.bf16.msra.mxu0 %v4421
    %4732 = vmatpush.bf16.msra.mxu0 %v4419
    %4733 = vmatpush.bf16.msra.mxu0 %v4417
    %4734 = vmatpush.bf16.msra.mxu0 %v4415
    %4735 = vmatpush.bf16.msra.mxu0 %v4413
    %4736 = vmatpush.bf16.msra.mxu0 %v4411
    %4737 = vmatpush.bf16.msra.mxu0 %v4409
    %4738 = vmatpush.bf16.msra.mxu0 %v4407
    %4739 = vmatmul.bf16.gmra.mxu0 %v3921
    %v4740 = vpop.f32.mrf.mxu0
    %v4741 = vadd.f32 %v4692, %v4740
    %v4742 = vpop.f32.mrf.mxu0
    %v4743 = vadd.f32 %v4694, %v4742
    %4744 = vmatmul.bf16.gmra.mxu0 %v3923
    %v4745 = vpop.f32.mrf.mxu0
    %v4746 = vadd.f32 %v4697, %v4745
    %v4747 = vpop.f32.mrf.mxu0
    %v4748 = vadd.f32 %v4699, %v4747
    %4749 = vmatmul.bf16.gmra.mxu0 %v3925
    %v4750 = vpop.f32.mrf.mxu0
    %v4751 = vadd.f32 %v4702, %v4750
    %v4752 = vpop.f32.mrf.mxu0
    %v4753 = vadd.f32 %v4704, %v4752
    %4754 = vmatmul.bf16.gmra.mxu0 %v3927
    %v4755 = vpop.f32.mrf.mxu0
    %v4756 = vadd.f32 %v4707, %v4755
    %v4757 = vpop.f32.mrf.mxu0
    %v4758 = vadd.f32 %v4709, %v4757
    %4759 = vmatmul.bf16.gmra.mxu0 %v3929
    %v4760 = vpop.f32.mrf.mxu0
    %v4761 = vadd.f32 %v4712, %v4760
    %v4762 = vpop.f32.mrf.mxu0
    %v4763 = vadd.f32 %v4714, %v4762
    %4764 = vmatmul.bf16.gmra.mxu0 %v3931
    %v4765 = vpop.f32.mrf.mxu0
    %v4766 = vadd.f32 %v4717, %v4765
    %v4767 = vpop.f32.mrf.mxu0
    %v4768 = vadd.f32 %v4719, %v4767
    %4769 = vmatmul.bf16.gmra.mxu0 %v3933
    %v4770 = vpop.f32.mrf.mxu0
    %v4771 = vadd.f32 %v4722, %v4770
    %v4772 = vpop.f32.mrf.mxu0
    %v4773 = vadd.f32 %v4724, %v4772
    %4774 = vmatmul.bf16.gmra.mxu0 %v3935
    %v4775 = vpop.f32.mrf.mxu0
    %v4776 = vadd.f32 %v4727, %v4775
    %v4777 = vpop.f32.mrf.mxu0
    %v4778 = vadd.f32 %v4729, %v4777
    %4779 = vdwg.mxu0
    %4780 = vmatpush.bf16.msra.mxu0 %v4437
    %4781 = vmatpush.bf16.msra.mxu0 %v4435
    %4782 = vmatpush.bf16.msra.mxu0 %v4433
    %4783 = vmatpush.bf16.msra.mxu0 %v4431
    %4784 = vmatpush.bf16.msra.mxu0 %v4429
    %4785 = vmatpush.bf16.msra.mxu0 %v4427
    %4786 = vmatpush.bf16.msra.mxu0 %v4425
    %4787 = vmatpush.bf16.msra.mxu0 %v4423
    %4788 = vmatmul.bf16.gmra.mxu0 %v3922
    %v4789 = vpop.f32.mrf.mxu0
    %v4790 = vadd.f32 %v4741, %v4789
    %v4791 = vpop.f32.mrf.mxu0
    %v4792 = vadd.f32 %v4743, %v4791
    %4793 = vmatmul.bf16.gmra.mxu0 %v3924
    %v4794 = vpop.f32.mrf.mxu0
    %v4795 = vadd.f32 %v4746, %v4794
    %v4796 = vpop.f32.mrf.mxu0
    %v4797 = vadd.f32 %v4748, %v4796
    %4798 = vmatmul.bf16.gmra.mxu0 %v3926
    %v4799 = vpop.f32.mrf.mxu0
    %v4800 = vadd.f32 %v4751, %v4799
    %v4801 = vpop.f32.mrf.mxu0
    %v4802 = vadd.f32 %v4753, %v4801
    %4803 = vmatmul.bf16.gmra.mxu0 %v3928
    %v4804 = vpop.f32.mrf.mxu0
    %v4805 = vadd.f32 %v4756, %v4804
    %v4806 = vpop.f32.mrf.mxu0
    %v4807 = vadd.f32 %v4758, %v4806
    %4808 = vmatmul.bf16.gmra.mxu0 %v3930
    %v4809 = vpop.f32.mrf.mxu0
    %v4810 = vadd.f32 %v4761, %v4809
    %v4811 = vpop.f32.mrf.mxu0
    %v4812 = vadd.f32 %v4763, %v4811
    %4813 = vmatmul.bf16.gmra.mxu0 %v3932
    %v4814 = vpop.f32.mrf.mxu0
    %v4815 = vadd.f32 %v4766, %v4814
    %v4816 = vpop.f32.mrf.mxu0
    %v4817 = vadd.f32 %v4768, %v4816
    %4818 = vmatmul.bf16.gmra.mxu0 %v3934
    %v4819 = vpop.f32.mrf.mxu0
    %v4820 = vadd.f32 %v4771, %v4819
    %v4821 = vpop.f32.mrf.mxu0
    %v4822 = vadd.f32 %v4773, %v4821
    %4823 = vmatmul.bf16.gmra.mxu0 %v3936
    %v4824 = vpop.f32.mrf.mxu0
    %v4825 = vadd.f32 %v4776, %v4824
    %v4826 = vpop.f32.mrf.mxu0
    %v4827 = vadd.f32 %v4778, %v4826
    %4828 = vdwg.mxu0
    %4829 = vmatpush.bf16.msra.mxu0 %v4358
    %4830 = vmatpush.bf16.msra.mxu0 %v4356
    %4831 = vmatpush.bf16.msra.mxu0 %v4354
    %4832 = vmatpush.bf16.msra.mxu0 %v4352
    %4833 = vmatpush.bf16.msra.mxu0 %v4350
    %4834 = vmatpush.bf16.msra.mxu0 %v4348
    %4835 = vmatpush.bf16.msra.mxu0 %v4346
    %4836 = vmatpush.bf16.msra.mxu0 %v4344
    %4837 = vmatmul.bf16.gmra.mxu0 %v3761
    %v4838 = vpop.f32.mrf.mxu0
    %v4839 = vadd.f32 %v4052, %v4838
    %v4840 = vpop.f32.mrf.mxu0
    %v4841 = vadd.f32 %v4052, %v4840
    %4842 = vmatmul.bf16.gmra.mxu0 %v3763
    %v4843 = vpop.f32.mrf.mxu0
    %v4844 = vadd.f32 %v4052, %v4843
    %v4845 = vpop.f32.mrf.mxu0
    %v4846 = vadd.f32 %v4052, %v4845
    %4847 = vmatmul.bf16.gmra.mxu0 %v3765
    %v4848 = vpop.f32.mrf.mxu0
    %v4849 = vadd.f32 %v4052, %v4848
    %v4850 = vpop.f32.mrf.mxu0
    %v4851 = vadd.f32 %v4052, %v4850
    %4852 = vmatmul.bf16.gmra.mxu0 %v3767
    %v4853 = vpop.f32.mrf.mxu0
    %v4854 = vadd.f32 %v4052, %v4853
    %v4855 = vpop.f32.mrf.mxu0
    %v4856 = vadd.f32 %v4052, %v4855
    %4857 = vmatmul.bf16.gmra.mxu0 %v3769
    %v4858 = vpop.f32.mrf.mxu0
    %v4859 = vadd.f32 %v4052, %v4858
    %v4860 = vpop.f32.mrf.mxu0
    %v4861 = vadd.f32 %v4052, %v4860
    %4862 = vmatmul.bf16.gmra.mxu0 %v3771
    %v4863 = vpop.f32.mrf.mxu0
    %v4864 = vadd.f32 %v4052, %v4863
    %v4865 = vpop.f32.mrf.mxu0
    %v4866 = vadd.f32 %v4052, %v4865
    %4867 = vmatmul.bf16.gmra.mxu0 %v3773
    %v4868 = vpop.f32.mrf.mxu0
    %v4869 = vadd.f32 %v4052, %v4868
    %v4870 = vpop.f32.mrf.mxu0
    %v4871 = vadd.f32 %v4052, %v4870
    %4872 = vmatmul.bf16.gmra.mxu0 %v3775
    %v4873 = vpop.f32.mrf.mxu0
    %v4874 = vadd.f32 %v4052, %v4873
    %v4875 = vpop.f32.mrf.mxu0
    %v4876 = vadd.f32 %v4052, %v4875
    %4877 = vdwg.mxu0
    %4878 = vmatpush.bf16.msra.mxu0 %v4374
    %4879 = vmatpush.bf16.msra.mxu0 %v4372
    %4880 = vmatpush.bf16.msra.mxu0 %v4370
    %4881 = vmatpush.bf16.msra.mxu0 %v4368
    %4882 = vmatpush.bf16.msra.mxu0 %v4366
    %4883 = vmatpush.bf16.msra.mxu0 %v4364
    %4884 = vmatpush.bf16.msra.mxu0 %v4362
    %4885 = vmatpush.bf16.msra.mxu0 %v4360
    %4886 = vmatmul.bf16.gmra.mxu0 %v3762
    %v4887 = vpop.f32.mrf.mxu0
    %v4888 = vadd.f32 %v4839, %v4887
    %v4889 = vpop.f32.mrf.mxu0
    %v4890 = vadd.f32 %v4841, %v4889
    %4891 = vmatmul.bf16.gmra.mxu0 %v3764
    %v4892 = vpop.f32.mrf.mxu0
    %v4893 = vadd.f32 %v4844, %v4892
    %v4894 = vpop.f32.mrf.mxu0
    %v4895 = vadd.f32 %v4846, %v4894
    %4896 = vmatmul.bf16.gmra.mxu0 %v3766
    %v4897 = vpop.f32.mrf.mxu0
    %v4898 = vadd.f32 %v4849, %v4897
    %v4899 = vpop.f32.mrf.mxu0
    %v4900 = vadd.f32 %v4851, %v4899
    %4901 = vmatmul.bf16.gmra.mxu0 %v3768
    %v4902 = vpop.f32.mrf.mxu0
    %v4903 = vadd.f32 %v4854, %v4902
    %v4904 = vpop.f32.mrf.mxu0
    %v4905 = vadd.f32 %v4856, %v4904
    %4906 = vmatmul.bf16.gmra.mxu0 %v3770
    %v4907 = vpop.f32.mrf.mxu0
    %v4908 = vadd.f32 %v4859, %v4907
    %v4909 = vpop.f32.mrf.mxu0
    %v4910 = vadd.f32 %v4861, %v4909
    %4911 = vmatmul.bf16.gmra.mxu0 %v3772
    %v4912 = vpop.f32.mrf.mxu0
    %v4913 = vadd.f32 %v4864, %v4912
    %v4914 = vpop.f32.mrf.mxu0
    %v4915 = vadd.f32 %v4866, %v4914
    %4916 = vmatmul.bf16.gmra.mxu0 %v3774
    %v4917 = vpop.f32.mrf.mxu0
    %v4918 = vadd.f32 %v4869, %v4917
    %v4919 = vpop.f32.mrf.mxu0
    %v4920 = vadd.f32 %v4871, %v4919
    %4921 = vmatmul.bf16.gmra.mxu0 %v3776
    %v4922 = vpop.f32.mrf.mxu0
    %v4923 = vadd.f32 %v4874, %v4922
    %v4924 = vpop.f32.mrf.mxu0
    %v4925 = vadd.f32 %v4876, %v4924
    %4926 = vdwg.mxu0
    %4927 = vmatpush.bf16.msra.mxu0 %v4390
    %4928 = vmatpush.bf16.msra.mxu0 %v4388
    %4929 = vmatpush.bf16.msra.mxu0 %v4386
    %4930 = vmatpush.bf16.msra.mxu0 %v4384
    %4931 = vmatpush.bf16.msra.mxu0 %v4382
    %4932 = vmatpush.bf16.msra.mxu0 %v4380
    %4933 = vmatpush.bf16.msra.mxu0 %v4378
    %4934 = vmatpush.bf16.msra.mxu0 %v4376
    %4935 = vmatmul.bf16.gmra.mxu0 %v3841
    %v4936 = vpop.f32.mrf.mxu0
    %v4937 = vadd.f32 %v4888, %v4936
    %v4938 = vpop.f32.mrf.mxu0
    %v4939 = vadd.f32 %v4890, %v4938
    %4940 = vmatmul.bf16.gmra.mxu0 %v3843
    %v4941 = vpop.f32.mrf.mxu0
    %v4942 = vadd.f32 %v4893, %v4941
    %v4943 = vpop.f32.mrf.mxu0
    %v4944 = vadd.f32 %v4895, %v4943
    %4945 = vmatmul.bf16.gmra.mxu0 %v3845
    %v4946 = vpop.f32.mrf.mxu0
    %v4947 = vadd.f32 %v4898, %v4946
    %v4948 = vpop.f32.mrf.mxu0
    %v4949 = vadd.f32 %v4900, %v4948
    %4950 = vmatmul.bf16.gmra.mxu0 %v3847
    %v4951 = vpop.f32.mrf.mxu0
    %v4952 = vadd.f32 %v4903, %v4951
    %v4953 = vpop.f32.mrf.mxu0
    %v4954 = vadd.f32 %v4905, %v4953
    %4955 = vmatmul.bf16.gmra.mxu0 %v3849
    %v4956 = vpop.f32.mrf.mxu0
    %v4957 = vadd.f32 %v4908, %v4956
    %v4958 = vpop.f32.mrf.mxu0
    %v4959 = vadd.f32 %v4910, %v4958
    %4960 = vmatmul.bf16.gmra.mxu0 %v3851
    %v4961 = vpop.f32.mrf.mxu0
    %v4962 = vadd.f32 %v4913, %v4961
    %v4963 = vpop.f32.mrf.mxu0
    %v4964 = vadd.f32 %v4915, %v4963
    %4965 = vmatmul.bf16.gmra.mxu0 %v3853
    %v4966 = vpop.f32.mrf.mxu0
    %v4967 = vadd.f32 %v4918, %v4966
    %v4968 = vpop.f32.mrf.mxu0
    %v4969 = vadd.f32 %v4920, %v4968
    %4970 = vmatmul.bf16.gmra.mxu0 %v3855
    %v4971 = vpop.f32.mrf.mxu0
    %v4972 = vadd.f32 %v4923, %v4971
    %v4973 = vpop.f32.mrf.mxu0
    %v4974 = vadd.f32 %v4925, %v4973
    %4975 = vdwg.mxu0
    %4976 = vmatpush.bf16.msra.mxu0 %v4406
    %4977 = vmatpush.bf16.msra.mxu0 %v4404
    %4978 = vmatpush.bf16.msra.mxu0 %v4402
    %4979 = vmatpush.bf16.msra.mxu0 %v4400
    %4980 = vmatpush.bf16.msra.mxu0 %v4398
    %4981 = vmatpush.bf16.msra.mxu0 %v4396
    %4982 = vmatpush.bf16.msra.mxu0 %v4394
    %4983 = vmatpush.bf16.msra.mxu0 %v4392
    %4984 = vmatmul.bf16.gmra.mxu0 %v3842
    %v4985 = vpop.f32.mrf.mxu0
    %v4986 = vadd.f32 %v4937, %v4985
    %v4987 = vpop.f32.mrf.mxu0
    %v4988 = vadd.f32 %v4939, %v4987
    %4989 = vmatmul.bf16.gmra.mxu0 %v3844
    %v4990 = vpop.f32.mrf.mxu0
    %v4991 = vadd.f32 %v4942, %v4990
    %v4992 = vpop.f32.mrf.mxu0
    %v4993 = vadd.f32 %v4944, %v4992
    %4994 = vmatmul.bf16.gmra.mxu0 %v3846
    %v4995 = vpop.f32.mrf.mxu0
    %v4996 = vadd.f32 %v4947, %v4995
    %v4997 = vpop.f32.mrf.mxu0
    %v4998 = vadd.f32 %v4949, %v4997
    %4999 = vmatmul.bf16.gmra.mxu0 %v3848
    %v5000 = vpop.f32.mrf.mxu0
    %v5001 = vadd.f32 %v4952, %v5000
    %v5002 = vpop.f32.mrf.mxu0
    %v5003 = vadd.f32 %v4954, %v5002
    %5004 = vmatmul.bf16.gmra.mxu0 %v3850
    %v5005 = vpop.f32.mrf.mxu0
    %v5006 = vadd.f32 %v4957, %v5005
    %v5007 = vpop.f32.mrf.mxu0
    %v5008 = vadd.f32 %v4959, %v5007
    %5009 = vmatmul.bf16.gmra.mxu0 %v3852
    %v5010 = vpop.f32.mrf.mxu0
    %v5011 = vadd.f32 %v4962, %v5010
    %v5012 = vpop.f32.mrf.mxu0
    %v5013 = vadd.f32 %v4964, %v5012
    %5014 = vmatmul.bf16.gmra.mxu0 %v3854
    %v5015 = vpop.f32.mrf.mxu0
    %v5016 = vadd.f32 %v4967, %v5015
    %v5017 = vpop.f32.mrf.mxu0
    %v5018 = vadd.f32 %v4969, %v5017
    %5019 = vmatmul.bf16.gmra.mxu0 %v3856
    %v5020 = vpop.f32.mrf.mxu0
    %v5021 = vadd.f32 %v4972, %v5020
    %v5022 = vpop.f32.mrf.mxu0
    %v5023 = vadd.f32 %v4974, %v5022
    %5024 = vdwg.mxu0
    %5025 = vmatpush.bf16.msra.mxu0 %v4422
    %5026 = vmatpush.bf16.msra.mxu0 %v4420
    %5027 = vmatpush.bf16.msra.mxu0 %v4418
    %5028 = vmatpush.bf16.msra.mxu0 %v4416
    %5029 = vmatpush.bf16.msra.mxu0 %v4414
    %5030 = vmatpush.bf16.msra.mxu0 %v4412
    %5031 = vmatpush.bf16.msra.mxu0 %v4410
    %5032 = vmatpush.bf16.msra.mxu0 %v4408
    %5033 = vmatmul.bf16.gmra.mxu0 %v3921
    %v5034 = vpop.f32.mrf.mxu0
    %v5035 = vadd.f32 %v4986, %v5034
    %v5036 = vpop.f32.mrf.mxu0
    %v5037 = vadd.f32 %v4988, %v5036
    %5038 = vmatmul.bf16.gmra.mxu0 %v3923
    %v5039 = vpop.f32.mrf.mxu0
    %v5040 = vadd.f32 %v4991, %v5039
    %v5041 = vpop.f32.mrf.mxu0
    %v5042 = vadd.f32 %v4993, %v5041
    %5043 = vmatmul.bf16.gmra.mxu0 %v3925
    %v5044 = vpop.f32.mrf.mxu0
    %v5045 = vadd.f32 %v4996, %v5044
    %v5046 = vpop.f32.mrf.mxu0
    %v5047 = vadd.f32 %v4998, %v5046
    %5048 = vmatmul.bf16.gmra.mxu0 %v3927
    %v5049 = vpop.f32.mrf.mxu0
    %v5050 = vadd.f32 %v5001, %v5049
    %v5051 = vpop.f32.mrf.mxu0
    %v5052 = vadd.f32 %v5003, %v5051
    %5053 = vmatmul.bf16.gmra.mxu0 %v3929
    %v5054 = vpop.f32.mrf.mxu0
    %v5055 = vadd.f32 %v5006, %v5054
    %v5056 = vpop.f32.mrf.mxu0
    %v5057 = vadd.f32 %v5008, %v5056
    %5058 = vmatmul.bf16.gmra.mxu0 %v3931
    %v5059 = vpop.f32.mrf.mxu0
    %v5060 = vadd.f32 %v5011, %v5059
    %v5061 = vpop.f32.mrf.mxu0
    %v5062 = vadd.f32 %v5013, %v5061
    %5063 = vmatmul.bf16.gmra.mxu0 %v3933
    %v5064 = vpop.f32.mrf.mxu0
    %v5065 = vadd.f32 %v5016, %v5064
    %v5066 = vpop.f32.mrf.mxu0
    %v5067 = vadd.f32 %v5018, %v5066
    %5068 = vmatmul.bf16.gmra.mxu0 %v3935
    %v5069 = vpop.f32.mrf.mxu0
    %v5070 = vadd.f32 %v5021, %v5069
    %v5071 = vpop.f32.mrf.mxu0
    %v5072 = vadd.f32 %v5023, %v5071
    %5073 = vdwg.mxu0
    %5074 = vmatpush.bf16.msra.mxu0 %v4438
    %5075 = vmatpush.bf16.msra.mxu0 %v4436
    %5076 = vmatpush.bf16.msra.mxu0 %v4434
    %5077 = vmatpush.bf16.msra.mxu0 %v4432
    %5078 = vmatpush.bf16.msra.mxu0 %v4430
    %5079 = vmatpush.bf16.msra.mxu0 %v4428
    %5080 = vmatpush.bf16.msra.mxu0 %v4426
    %5081 = vmatpush.bf16.msra.mxu0 %v4424
    %5082 = vmatmul.bf16.gmra.mxu0 %v3922
    %v5083 = vpop.f32.mrf.mxu0
    %v5084 = vadd.f32 %v5035, %v5083
    %v5085 = vpop.f32.mrf.mxu0
    %v5086 = vadd.f32 %v5037, %v5085
    %5087 = vmatmul.bf16.gmra.mxu0 %v3924
    %v5088 = vpop.f32.mrf.mxu0
    %v5089 = vadd.f32 %v5040, %v5088
    %v5090 = vpop.f32.mrf.mxu0
    %v5091 = vadd.f32 %v5042, %v5090
    %5092 = vmatmul.bf16.gmra.mxu0 %v3926
    %v5093 = vpop.f32.mrf.mxu0
    %v5094 = vadd.f32 %v5045, %v5093
    %v5095 = vpop.f32.mrf.mxu0
    %v5096 = vadd.f32 %v5047, %v5095
    %5097 = vmatmul.bf16.gmra.mxu0 %v3928
    %v5098 = vpop.f32.mrf.mxu0
    %v5099 = vadd.f32 %v5050, %v5098
    %v5100 = vpop.f32.mrf.mxu0
    %v5101 = vadd.f32 %v5052, %v5100
    %5102 = vmatmul.bf16.gmra.mxu0 %v3930
    %v5103 = vpop.f32.mrf.mxu0
    %v5104 = vadd.f32 %v5055, %v5103
    %v5105 = vpop.f32.mrf.mxu0
    %v5106 = vadd.f32 %v5057, %v5105
    %5107 = vmatmul.bf16.gmra.mxu0 %v3932
    %v5108 = vpop.f32.mrf.mxu0
    %v5109 = vadd.f32 %v5060, %v5108
    %v5110 = vpop.f32.mrf.mxu0
    %v5111 = vadd.f32 %v5062, %v5110
    %5112 = vmatmul.bf16.gmra.mxu0 %v3934
    %v5113 = vpop.f32.mrf.mxu0
    %v5114 = vadd.f32 %v5065, %v5113
    %v5115 = vpop.f32.mrf.mxu0
    %v5116 = vadd.f32 %v5067, %v5115
    %5117 = vmatmul.bf16.gmra.mxu0 %v3936
    %v5118 = vpop.f32.mrf.mxu0
    %v5119 = vadd.f32 %v5070, %v5118
    %v5120 = vpop.f32.mrf.mxu0
    %v5121 = vadd.f32 %v5072, %v5120
    %5122 = vdwg.mxu0
    %v5123 = vadd.f32 %v4790, %v1559
    %v5124 = vadd.f32 %v5084, %v1560
    %v5125 = vadd.f32 %v4792, %v1561
    %v5126 = vadd.f32 %v5086, %v1562
    %v5127 = vadd.f32 %v4795, %v1563
    %v5128 = vadd.f32 %v5089, %v1564
    %v5129 = vadd.f32 %v4797, %v1565
    %v5130 = vadd.f32 %v5091, %v1566
    %v5131 = vadd.f32 %v4800, %v1567
    %v5132 = vadd.f32 %v5094, %v1568
    %v5133 = vadd.f32 %v4802, %v1569
    %v5134 = vadd.f32 %v5096, %v1570
    %v5135 = vadd.f32 %v4805, %v1571
    %v5136 = vadd.f32 %v5099, %v1572
    %v5137 = vadd.f32 %v4807, %v1573
    %v5138 = vadd.f32 %v5101, %v1574
    %v5139 = vadd.f32 %v4810, %v1575
    %v5140 = vadd.f32 %v5104, %v1576
    %v5141 = vadd.f32 %v4812, %v1577
    %v5142 = vadd.f32 %v5106, %v1578
    %v5143 = vadd.f32 %v4815, %v1579
    %v5144 = vadd.f32 %v5109, %v1580
    %v5145 = vadd.f32 %v4817, %v1581
    %v5146 = vadd.f32 %v5111, %v1582
    %v5147 = vadd.f32 %v4820, %v1583
    %v5148 = vadd.f32 %v5114, %v1584
    %v5149 = vadd.f32 %v4822, %v1585
    %v5150 = vadd.f32 %v5116, %v1586
    %v5151 = vadd.f32 %v4825, %v1587
    %v5152 = vadd.f32 %v5119, %v1588
    %v5153 = vadd.f32 %v4827, %v1589
    %v5154 = vadd.f32 %v5121, %v1590
    %v5155 = vmax.f32 %v5123, 0.0
    %v5156 = vmax.f32 %v5124, 0.0
    %v5157 = vmax.f32 %v5125, 0.0
    %v5158 = vmax.f32 %v5126, 0.0
    %v5159 = vmax.f32 %v5127, 0.0
    %v5160 = vmax.f32 %v5128, 0.0
    %v5161 = vmax.f32 %v5129, 0.0
    %v5162 = vmax.f32 %v5130, 0.0
    %v5163 = vmax.f32 %v5131, 0.0
    %v5164 = vmax.f32 %v5132, 0.0
    %v5165 = vmax.f32 %v5133, 0.0
    %v5166 = vmax.f32 %v5134, 0.0
    %v5167 = vmax.f32 %v5135, 0.0
    %v5168 = vmax.f32 %v5136, 0.0
    %v5169 = vmax.f32 %v5137, 0.0
    %v5170 = vmax.f32 %v5138, 0.0
    %v5171 = vmax.f32 %v5139, 0.0
    %v5172 = vmax.f32 %v5140, 0.0
    %v5173 = vmax.f32 %v5141, 0.0
    %v5174 = vmax.f32 %v5142, 0.0
    %v5175 = vmax.f32 %v5143, 0.0
    %v5176 = vmax.f32 %v5144, 0.0
    %v5177 = vmax.f32 %v5145, 0.0
    %v5178 = vmax.f32 %v5146, 0.0
    %v5179 = vmax.f32 %v5147, 0.0
    %v5180 = vmax.f32 %v5148, 0.0
    %v5181 = vmax.f32 %v5149, 0.0
    %v5182 = vmax.f32 %v5150, 0.0
    %v5183 = vmax.f32 %v5151, 0.0
    %v5184 = vmax.f32 %v5152, 0.0
    %v5185 = vmax.f32 %v5153, 0.0
    %v5186 = vmax.f32 %v5154, 0.0
    %v5187 = vpack.c.bf16 %v5157, %v5155
    %v5188 = vpack.c.bf16 %v5158, %v5156
    %v5189 = vpack.c.bf16 %v5161, %v5159
    %v5190 = vpack.c.bf16 %v5162, %v5160
    %v5191 = vpack.c.bf16 %v5165, %v5163
    %v5192 = vpack.c.bf16 %v5166, %v5164
    %v5193 = vpack.c.bf16 %v5169, %v5167
    %v5194 = vpack.c.bf16 %v5170, %v5168
    %v5195 = vpack.c.bf16 %v5173, %v5171
    %v5196 = vpack.c.bf16 %v5174, %v5172
    %v5197 = vpack.c.bf16 %v5177, %v5175
    %v5198 = vpack.c.bf16 %v5178, %v5176
    %v5199 = vpack.c.bf16 %v5181, %v5179
    %v5200 = vpack.c.bf16 %v5182, %v5180
    %v5201 = vpack.c.bf16 %v5185, %v5183
    %v5202 = vpack.c.bf16 %v5186, %v5184
    %v5203 = vld [vmem:[#allocation5] sm:$0xf]
    %v5204 = vld [vmem:[#allocation5 + $0x4] sm:$0xf]
    %v5205 = vld [vmem:[#allocation5 + $0x8] sm:$0xf]
    %v5206 = vld [vmem:[#allocation5 + $0xc] sm:$0xf]
    %v5207 = vld [vmem:[#allocation5 + $0x10] sm:$0xf]
    %v5208 = vld [vmem:[#allocation5 + $0x14] sm:$0xf]
    %v5209 = vld [vmem:[#allocation5 + $0x18] sm:$0xf]
    %v5210 = vld [vmem:[#allocation5 + $0x1c] sm:$0xf]
    %v5219 = vunpack.c.l.b16 %v5203
    %v5220 = vunpack.c.l.b16 %v5204
    %v5221 = vunpack.c.l.b16 %v5205
    %v5222 = vunpack.c.l.b16 %v5206
    %v5223 = vunpack.c.l.b16 %v5207
    %v5224 = vunpack.c.l.b16 %v5208
    %v5225 = vunpack.c.l.b16 %v5209
    %v5226 = vunpack.c.l.b16 %v5210
    %v5227 = vpack.c.b16 %v5220, %v5219
    %v5228 = vpack.c.b16 %v5222, %v5221
    %v5229 = vpack.c.b16 %v5224, %v5223
    %v5230 = vpack.c.b16 %v5226, %v5225
    %5235 = vmatpush.bf16.msra.mxu0 %v5201
    %5236 = vmatpush.bf16.msra.mxu0 %v5199
    %5237 = vmatpush.bf16.msra.mxu0 %v5197
    %5238 = vmatpush.bf16.msra.mxu0 %v5195
    %5239 = vmatpush.bf16.msra.mxu0 %v5193
    %5240 = vmatpush.bf16.msra.mxu0 %v5191
    %5241 = vmatpush.bf16.msra.mxu0 %v5189
    %5242 = vmatpush.bf16.msra.mxu0 %v5187
    %5243 = vmatmul.bf16.gmra.mxu0 %v5227
    %v5244 = vpop.f32.mrf.mxu0
    %v5245 = vadd.f32 0.0, %v5244
    %v5246 = vpop.f32.mrf.mxu0
    %v5247 = vadd.f32 0.0, %v5246
    %5248 = vmatmul.bf16.gmra.mxu0 %v5228
    %v5249 = vpop.f32.mrf.mxu0
    %v5250 = vadd.f32 0.0, %v5249
    %v5251 = vpop.f32.mrf.mxu0
    %v5252 = vadd.f32 0.0, %v5251
    %5253 = vmatmul.bf16.gmra.mxu0 %v5229
    %v5254 = vpop.f32.mrf.mxu0
    %v5255 = vadd.f32 0.0, %v5254
    %v5256 = vpop.f32.mrf.mxu0
    %v5257 = vadd.f32 0.0, %v5256
    %5258 = vmatmul.bf16.gmra.mxu0 %v5230
    %v5259 = vpop.f32.mrf.mxu0
    %v5260 = vadd.f32 0.0, %v5259
    %v5261 = vpop.f32.mrf.mxu0
    %v5262 = vadd.f32 0.0, %v5261
    %5263 = vdwg.mxu0
    %5264 = vmatpush.bf16.msra.mxu0 %v5202
    %5265 = vmatpush.bf16.msra.mxu0 %v5200
    %5266 = vmatpush.bf16.msra.mxu0 %v5198
    %5267 = vmatpush.bf16.msra.mxu0 %v5196
    %5268 = vmatpush.bf16.msra.mxu0 %v5194
    %5269 = vmatpush.bf16.msra.mxu0 %v5192
    %5270 = vmatpush.bf16.msra.mxu0 %v5190
    %5271 = vmatpush.bf16.msra.mxu0 %v5188
    %5272 = vmatmul.bf16.gmra.mxu0 %v5227
    %v5273 = vpop.f32.mrf.mxu0
    %v5274 = vadd.f32 0.0, %v5273
    %v5275 = vpop.f32.mrf.mxu0
    %v5276 = vadd.f32 0.0, %v5275
    %5277 = vmatmul.bf16.gmra.mxu0 %v5228
    %v5278 = vpop.f32.mrf.mxu0
    %v5279 = vadd.f32 0.0, %v5278
    %v5280 = vpop.f32.mrf.mxu0
    %v5281 = vadd.f32 0.0, %v5280
    %5282 = vmatmul.bf16.gmra.mxu0 %v5229
    %v5283 = vpop.f32.mrf.mxu0
    %v5284 = vadd.f32 0.0, %v5283
    %v5285 = vpop.f32.mrf.mxu0
    %v5286 = vadd.f32 0.0, %v5285
    %5287 = vmatmul.bf16.gmra.mxu0 %v5230
    %v5288 = vpop.f32.mrf.mxu0
    %v5289 = vadd.f32 0.0, %v5288
    %v5290 = vpop.f32.mrf.mxu0
    %v5291 = vadd.f32 0.0, %v5290
    %5292 = vdwg.mxu0
    %v5293 = vpack.c.bf16 %v5247, %v5245
    %v5294 = vpack.c.bf16 %v5276, %v5274
    %v5295 = vpack.c.bf16 %v5252, %v5250
    %v5296 = vpack.c.bf16 %v5281, %v5279
    %v5297 = vpack.c.bf16 %v5257, %v5255
    %v5298 = vpack.c.bf16 %v5286, %v5284
    %v5299 = vpack.c.bf16 %v5262, %v5260
    %v5300 = vpack.c.bf16 %v5291, %v5289
    %v5301 = vld [vmem:[#allocation7] sm:$0xff]
    %v5302 = vld [vmem:[#allocation7 + $0x8] sm:$0xff]
    %v5303 = vld [vmem:[#allocation7 + $0x10] sm:$0xff]
    %v5304 = vld [vmem:[#allocation7 + $0x18] sm:$0xff]
    %v5305 = vld [vmem:[#allocation7 + $0x20] sm:$0xff]
    %v5306 = vld [vmem:[#allocation7 + $0x28] sm:$0xff]
    %v5307 = vld [vmem:[#allocation7 + $0x30] sm:$0xff]
    %v5308 = vld [vmem:[#allocation7 + $0x38] sm:$0xff]
    %v5309 = vld [vmem:[#allocation7 + $0x40] sm:$0xff]
    %v5310 = vld [vmem:[#allocation7 + $0x48] sm:$0xff]
    %v5311 = vld [vmem:[#allocation7 + $0x50] sm:$0xff]
    %v5312 = vld [vmem:[#allocation7 + $0x58] sm:$0xff]
    %v5313 = vld [vmem:[#allocation7 + $0x60] sm:$0xff]
    %v5314 = vld [vmem:[#allocation7 + $0x68] sm:$0xff]
    %v5315 = vld [vmem:[#allocation7 + $0x70] sm:$0xff]
    %v5316 = vld [vmem:[#allocation7 + $0x78] sm:$0xff]
    %v5317 = vld [vmem:[#allocation7 + $0x80] sm:$0xff]
    %v5318 = vld [vmem:[#allocation7 + $0x88] sm:$0xff]
    %v5319 = vld [vmem:[#allocation7 + $0x90] sm:$0xff]
    %v5320 = vld [vmem:[#allocation7 + $0x98] sm:$0xff]
    %v5321 = vld [vmem:[#allocation7 + $0xa0] sm:$0xff]
    %v5322 = vld [vmem:[#allocation7 + $0xa8] sm:$0xff]
    %v5323 = vld [vmem:[#allocation7 + $0xb0] sm:$0xff]
    %v5324 = vld [vmem:[#allocation7 + $0xb8] sm:$0xff]
    %v5325 = vld [vmem:[#allocation7 + $0xc0] sm:$0xff]
    %v5326 = vld [vmem:[#allocation7 + $0xc8] sm:$0xff]
    %v5327 = vld [vmem:[#allocation7 + $0xd0] sm:$0xff]
    %v5328 = vld [vmem:[#allocation7 + $0xd8] sm:$0xff]
    %v5329 = vld [vmem:[#allocation7 + $0xe0] sm:$0xff]
    %v5330 = vld [vmem:[#allocation7 + $0xe8] sm:$0xff]
    %v5331 = vld [vmem:[#allocation7 + $0xf0] sm:$0xff]
    %v5332 = vld [vmem:[#allocation7 + $0xf8] sm:$0xff]
    %v5333 = vld [vmem:[#allocation8] sm:$0x3]
    %v5335 = vperm.slane %v5333, 0
    %v5336 = vperm.slane %v5333, 1
    %v5371 = vunpack.c.l.b16 %v5301
    %v5372 = vunpack.c.h.b16 %v5301
    %v5373 = vunpack.c.l.b16 %v5302
    %v5374 = vunpack.c.h.b16 %v5302
    %v5375 = vunpack.c.l.b16 %v5303
    %v5376 = vunpack.c.h.b16 %v5303
    %v5377 = vunpack.c.l.b16 %v5304
    %v5378 = vunpack.c.h.b16 %v5304
    %v5379 = vunpack.c.l.b16 %v5305
    %v5380 = vunpack.c.h.b16 %v5305
    %v5381 = vunpack.c.l.b16 %v5306
    %v5382 = vunpack.c.h.b16 %v5306
    %v5383 = vunpack.c.l.b16 %v5307
    %v5384 = vunpack.c.h.b16 %v5307
    %v5385 = vunpack.c.l.b16 %v5308
    %v5386 = vunpack.c.h.b16 %v5308
    %v5387 = vunpack.c.l.b16 %v5309
    %v5388 = vunpack.c.h.b16 %v5309
    %v5389 = vunpack.c.l.b16 %v5310
    %v5390 = vunpack.c.h.b16 %v5310
    %v5391 = vunpack.c.l.b16 %v5311
    %v5392 = vunpack.c.h.b16 %v5311
    %v5393 = vunpack.c.l.b16 %v5312
    %v5394 = vunpack.c.h.b16 %v5312
    %v5395 = vunpack.c.l.b16 %v5313
    %v5396 = vunpack.c.h.b16 %v5313
    %v5397 = vunpack.c.l.b16 %v5314
    %v5398 = vunpack.c.h.b16 %v5314
    %v5399 = vunpack.c.l.b16 %v5315
    %v5400 = vunpack.c.h.b16 %v5315
    %v5401 = vunpack.c.l.b16 %v5316
    %v5402 = vunpack.c.h.b16 %v5316
    %v5403 = vunpack.c.l.b16 %v5317
    %v5404 = vunpack.c.h.b16 %v5317
    %v5405 = vunpack.c.l.b16 %v5318
    %v5406 = vunpack.c.h.b16 %v5318
    %v5407 = vunpack.c.l.b16 %v5319
    %v5408 = vunpack.c.h.b16 %v5319
    %v5409 = vunpack.c.l.b16 %v5320
    %v5410 = vunpack.c.h.b16 %v5320
    %v5411 = vunpack.c.l.b16 %v5321
    %v5412 = vunpack.c.h.b16 %v5321
    %v5413 = vunpack.c.l.b16 %v5322
    %v5414 = vunpack.c.h.b16 %v5322
    %v5415 = vunpack.c.l.b16 %v5323
    %v5416 = vunpack.c.h.b16 %v5323
    %v5417 = vunpack.c.l.b16 %v5324
    %v5418 = vunpack.c.h.b16 %v5324
    %v5419 = vunpack.c.l.b16 %v5325
    %v5420 = vunpack.c.h.b16 %v5325
    %v5421 = vunpack.c.l.b16 %v5326
    %v5422 = vunpack.c.h.b16 %v5326
    %v5423 = vunpack.c.l.b16 %v5327
    %v5424 = vunpack.c.h.b16 %v5327
    %v5425 = vunpack.c.l.b16 %v5328
    %v5426 = vunpack.c.h.b16 %v5328
    %v5427 = vunpack.c.l.b16 %v5329
    %v5428 = vunpack.c.h.b16 %v5329
    %v5429 = vunpack.c.l.b16 %v5330
    %v5430 = vunpack.c.h.b16 %v5330
    %v5431 = vunpack.c.l.b16 %v5331
    %v5432 = vunpack.c.h.b16 %v5331
    %v5433 = vunpack.c.l.b16 %v5332
    %v5434 = vunpack.c.h.b16 %v5332
    %v5435 = vpack.c.b16 %v5373, %v5371
    %v5436 = vpack.c.b16 %v5374, %v5372
    %v5437 = vpack.c.b16 %v5377, %v5375
    %v5438 = vpack.c.b16 %v5378, %v5376
    %v5439 = vpack.c.b16 %v5381, %v5379
    %v5440 = vpack.c.b16 %v5382, %v5380
    %v5441 = vpack.c.b16 %v5385, %v5383
    %v5442 = vpack.c.b16 %v5386, %v5384
    %v5443 = vpack.c.b16 %v5389, %v5387
    %v5444 = vpack.c.b16 %v5390, %v5388
    %v5445 = vpack.c.b16 %v5393, %v5391
    %v5446 = vpack.c.b16 %v5394, %v5392
    %v5447 = vpack.c.b16 %v5397, %v5395
    %v5448 = vpack.c.b16 %v5398, %v5396
    %v5449 = vpack.c.b16 %v5401, %v5399
    %v5450 = vpack.c.b16 %v5402, %v5400
    %v5451 = vpack.c.b16 %v5405, %v5403
    %v5452 = vpack.c.b16 %v5406, %v5404
    %v5453 = vpack.c.b16 %v5409, %v5407
    %v5454 = vpack.c.b16 %v5410, %v5408
    %v5455 = vpack.c.b16 %v5413, %v5411
    %v5456 = vpack.c.b16 %v5414, %v5412
    %v5457 = vpack.c.b16 %v5417, %v5415
    %v5458 = vpack.c.b16 %v5418, %v5416
    %v5459 = vpack.c.b16 %v5421, %v5419
    %v5460 = vpack.c.b16 %v5422, %v5420
    %v5461 = vpack.c.b16 %v5425, %v5423
    %v5462 = vpack.c.b16 %v5426, %v5424
    %v5463 = vpack.c.b16 %v5429, %v5427
    %v5464 = vpack.c.b16 %v5430, %v5428
    %v5465 = vpack.c.b16 %v5433, %v5431
    %v5466 = vpack.c.b16 %v5434, %v5432
    %5499 = vmatpush.bf16.msra.mxu0 %v5449
    %5500 = vmatpush.bf16.msra.mxu0 %v5447
    %5501 = vmatpush.bf16.msra.mxu0 %v5445
    %5502 = vmatpush.bf16.msra.mxu0 %v5443
    %5503 = vmatpush.bf16.msra.mxu0 %v5441
    %5504 = vmatpush.bf16.msra.mxu0 %v5439
    %5505 = vmatpush.bf16.msra.mxu0 %v5437
    %5506 = vmatpush.bf16.msra.mxu0 %v5435
    %5507 = vmatmul.bf16.gmra.mxu0 %v5293
    %v5508 = vpop.f32.mrf.mxu0
    %v5509 = vadd.f32 %v5335, %v5508
    %v5510 = vpop.f32.mrf.mxu0
    %v5511 = vadd.f32 %v5335, %v5510
    %5512 = vmatmul.bf16.gmra.mxu0 %v5295
    %v5513 = vpop.f32.mrf.mxu0
    %v5514 = vadd.f32 %v5335, %v5513
    %v5515 = vpop.f32.mrf.mxu0
    %v5516 = vadd.f32 %v5335, %v5515
    %5517 = vmatmul.bf16.gmra.mxu0 %v5297
    %v5518 = vpop.f32.mrf.mxu0
    %v5519 = vadd.f32 %v5335, %v5518
    %v5520 = vpop.f32.mrf.mxu0
    %v5521 = vadd.f32 %v5335, %v5520
    %5522 = vmatmul.bf16.gmra.mxu0 %v5299
    %v5523 = vpop.f32.mrf.mxu0
    %v5524 = vadd.f32 %v5335, %v5523
    %v5525 = vpop.f32.mrf.mxu0
    %v5526 = vadd.f32 %v5335, %v5525
    %5527 = vdwg.mxu0
    %5528 = vmatpush.bf16.msra.mxu0 %v5465
    %5529 = vmatpush.bf16.msra.mxu0 %v5463
    %5530 = vmatpush.bf16.msra.mxu0 %v5461
    %5531 = vmatpush.bf16.msra.mxu0 %v5459
    %5532 = vmatpush.bf16.msra.mxu0 %v5457
    %5533 = vmatpush.bf16.msra.mxu0 %v5455
    %5534 = vmatpush.bf16.msra.mxu0 %v5453
    %5535 = vmatpush.bf16.msra.mxu0 %v5451
    %5536 = vmatmul.bf16.gmra.mxu0 %v5294
    %v5537 = vpop.f32.mrf.mxu0
    %v5538 = vadd.f32 %v5509, %v5537
    %v5539 = vpop.f32.mrf.mxu0
    %v5540 = vadd.f32 %v5511, %v5539
    %5541 = vmatmul.bf16.gmra.mxu0 %v5296
    %v5542 = vpop.f32.mrf.mxu0
    %v5543 = vadd.f32 %v5514, %v5542
    %v5544 = vpop.f32.mrf.mxu0
    %v5545 = vadd.f32 %v5516, %v5544
    %5546 = vmatmul.bf16.gmra.mxu0 %v5298
    %v5547 = vpop.f32.mrf.mxu0
    %v5548 = vadd.f32 %v5519, %v5547
    %v5549 = vpop.f32.mrf.mxu0
    %v5550 = vadd.f32 %v5521, %v5549
    %5551 = vmatmul.bf16.gmra.mxu0 %v5300
    %v5552 = vpop.f32.mrf.mxu0
    %v5553 = vadd.f32 %v5524, %v5552
    %v5554 = vpop.f32.mrf.mxu0
    %v5555 = vadd.f32 %v5526, %v5554
    %5556 = vdwg.mxu0
    %5557 = vmatpush.bf16.msra.mxu0 %v5450
    %5558 = vmatpush.bf16.msra.mxu0 %v5448
    %5559 = vmatpush.bf16.msra.mxu0 %v5446
    %5560 = vmatpush.bf16.msra.mxu0 %v5444
    %5561 = vmatpush.bf16.msra.mxu0 %v5442
    %5562 = vmatpush.bf16.msra.mxu0 %v5440
    %5563 = vmatpush.bf16.msra.mxu0 %v5438
    %5564 = vmatpush.bf16.msra.mxu0 %v5436
    %5565 = vmatmul.bf16.gmra.mxu0 %v5293
    %v5566 = vpop.f32.mrf.mxu0
    %v5567 = vadd.f32 %v5336, %v5566
    %v5568 = vpop.f32.mrf.mxu0
    %v5569 = vadd.f32 %v5336, %v5568
    %5570 = vmatmul.bf16.gmra.mxu0 %v5295
    %v5571 = vpop.f32.mrf.mxu0
    %v5572 = vadd.f32 %v5336, %v5571
    %v5573 = vpop.f32.mrf.mxu0
    %v5574 = vadd.f32 %v5336, %v5573
    %5575 = vmatmul.bf16.gmra.mxu0 %v5297
    %v5576 = vpop.f32.mrf.mxu0
    %v5577 = vadd.f32 %v5336, %v5576
    %v5578 = vpop.f32.mrf.mxu0
    %v5579 = vadd.f32 %v5336, %v5578
    %5580 = vmatmul.bf16.gmra.mxu0 %v5299
    %v5581 = vpop.f32.mrf.mxu0
    %v5582 = vadd.f32 %v5336, %v5581
    %v5583 = vpop.f32.mrf.mxu0
    %v5584 = vadd.f32 %v5336, %v5583
    %5585 = vdwg.mxu0
    %5586 = vmatpush.bf16.msra.mxu0 %v5466
    %5587 = vmatpush.bf16.msra.mxu0 %v5464
    %5588 = vmatpush.bf16.msra.mxu0 %v5462
    %5589 = vmatpush.bf16.msra.mxu0 %v5460
    %5590 = vmatpush.bf16.msra.mxu0 %v5458
    %5591 = vmatpush.bf16.msra.mxu0 %v5456
    %5592 = vmatpush.bf16.msra.mxu0 %v5454
    %5593 = vmatpush.bf16.msra.mxu0 %v5452
    %5594 = vmatmul.bf16.gmra.mxu0 %v5294
    %v5595 = vpop.f32.mrf.mxu0
    %v5596 = vadd.f32 %v5567, %v5595
    %v5597 = vpop.f32.mrf.mxu0
    %v5598 = vadd.f32 %v5569, %v5597
    %5599 = vmatmul.bf16.gmra.mxu0 %v5296
    %v5600 = vpop.f32.mrf.mxu0
    %v5601 = vadd.f32 %v5572, %v5600
    %v5602 = vpop.f32.mrf.mxu0
    %v5603 = vadd.f32 %v5574, %v5602
    %5604 = vmatmul.bf16.gmra.mxu0 %v5298
    %v5605 = vpop.f32.mrf.mxu0
    %v5606 = vadd.f32 %v5577, %v5605
    %v5607 = vpop.f32.mrf.mxu0
    %v5608 = vadd.f32 %v5579, %v5607
    %5609 = vmatmul.bf16.gmra.mxu0 %v5300
    %v5610 = vpop.f32.mrf.mxu0
    %v5611 = vadd.f32 %v5582, %v5610
    %v5612 = vpop.f32.mrf.mxu0
    %v5613 = vadd.f32 %v5584, %v5612
    %5614 = vdwg.mxu0
    %v5615 = vld [vmem:[#allocation10] sm:$0xf]
    %v5616 = vld [vmem:[#allocation10 + $0x4] sm:$0xf]
    %v5617 = vld [vmem:[#allocation10 + $0x8] sm:$0xf]
    %v5618 = vld [vmem:[#allocation10 + $0xc] sm:$0xf]
    %v5619 = vld [vmem:[#allocation10 + $0x10] sm:$0xf]
    %v5620 = vld [vmem:[#allocation10 + $0x14] sm:$0xf]
    %v5621 = vld [vmem:[#allocation10 + $0x18] sm:$0xf]
    %v5622 = vld [vmem:[#allocation10 + $0x1c] sm:$0xf]
    %v5631 = vunpack.c.l.b16 %v5615
    %v5632 = vunpack.c.l.b16 %v5616
    %v5633 = vunpack.c.l.b16 %v5617
    %v5634 = vunpack.c.l.b16 %v5618
    %v5635 = vunpack.c.l.b16 %v5619
    %v5636 = vunpack.c.l.b16 %v5620
    %v5637 = vunpack.c.l.b16 %v5621
    %v5638 = vunpack.c.l.b16 %v5622
    %v5639 = vpack.c.b16 %v5632, %v5631
    %v5640 = vpack.c.b16 %v5634, %v5633
    %v5641 = vpack.c.b16 %v5636, %v5635
    %v5642 = vpack.c.b16 %v5638, %v5637
    %5647 = vmatpush.bf16.msra.mxu0 %v5201
    %5648 = vmatpush.bf16.msra.mxu0 %v5199
    %5649 = vmatpush.bf16.msra.mxu0 %v5197
    %5650 = vmatpush.bf16.msra.mxu0 %v5195
    %5651 = vmatpush.bf16.msra.mxu0 %v5193
    %5652 = vmatpush.bf16.msra.mxu0 %v5191
    %5653 = vmatpush.bf16.msra.mxu0 %v5189
    %5654 = vmatpush.bf16.msra.mxu0 %v5187
    %5655 = vmatmul.bf16.gmra.mxu0 %v5639
    %v5656 = vpop.f32.mrf.mxu0
    %v5657 = vadd.f32 0.0, %v5656
    %v5658 = vpop.f32.mrf.mxu0
    %v5659 = vadd.f32 0.0, %v5658
    %5660 = vmatmul.bf16.gmra.mxu0 %v5640
    %v5661 = vpop.f32.mrf.mxu0
    %v5662 = vadd.f32 0.0, %v5661
    %v5663 = vpop.f32.mrf.mxu0
    %v5664 = vadd.f32 0.0, %v5663
    %5665 = vmatmul.bf16.gmra.mxu0 %v5641
    %v5666 = vpop.f32.mrf.mxu0
    %v5667 = vadd.f32 0.0, %v5666
    %v5668 = vpop.f32.mrf.mxu0
    %v5669 = vadd.f32 0.0, %v5668
    %5670 = vmatmul.bf16.gmra.mxu0 %v5642
    %v5671 = vpop.f32.mrf.mxu0
    %v5672 = vadd.f32 0.0, %v5671
    %v5673 = vpop.f32.mrf.mxu0
    %v5674 = vadd.f32 0.0, %v5673
    %5675 = vdwg.mxu0
    %5676 = vmatpush.bf16.msra.mxu0 %v5202
    %5677 = vmatpush.bf16.msra.mxu0 %v5200
    %5678 = vmatpush.bf16.msra.mxu0 %v5198
    %5679 = vmatpush.bf16.msra.mxu0 %v5196
    %5680 = vmatpush.bf16.msra.mxu0 %v5194
    %5681 = vmatpush.bf16.msra.mxu0 %v5192
    %5682 = vmatpush.bf16.msra.mxu0 %v5190
    %5683 = vmatpush.bf16.msra.mxu0 %v5188
    %5684 = vmatmul.bf16.gmra.mxu0 %v5639
    %v5685 = vpop.f32.mrf.mxu0
    %v5686 = vadd.f32 0.0, %v5685
    %v5687 = vpop.f32.mrf.mxu0
    %v5688 = vadd.f32 0.0, %v5687
    %5689 = vmatmul.bf16.gmra.mxu0 %v5640
    %v5690 = vpop.f32.mrf.mxu0
    %v5691 = vadd.f32 0.0, %v5690
    %v5692 = vpop.f32.mrf.mxu0
    %v5693 = vadd.f32 0.0, %v5692
    %5694 = vmatmul.bf16.gmra.mxu0 %v5641
    %v5695 = vpop.f32.mrf.mxu0
    %v5696 = vadd.f32 0.0, %v5695
    %v5697 = vpop.f32.mrf.mxu0
    %v5698 = vadd.f32 0.0, %v5697
    %5699 = vmatmul.bf16.gmra.mxu0 %v5642
    %v5700 = vpop.f32.mrf.mxu0
    %v5701 = vadd.f32 0.0, %v5700
    %v5702 = vpop.f32.mrf.mxu0
    %v5703 = vadd.f32 0.0, %v5702
    %5704 = vdwg.mxu0
    %v5705 = vpack.c.bf16 %v5686, %v5657
    %v5706 = vpack.c.bf16 %v5688, %v5659
    %v5707 = vpack.c.bf16 %v5691, %v5662
    %v5708 = vpack.c.bf16 %v5693, %v5664
    %v5709 = vpack.c.bf16 %v5696, %v5667
    %v5710 = vpack.c.bf16 %v5698, %v5669
    %v5711 = vpack.c.bf16 %v5701, %v5672
    %v5712 = vpack.c.bf16 %v5703, %v5674
    %s5713 = scalar_lea.vmem [#allocation10], 32
    %v5714 = vld [vmem:[%s5713] sm:$0xf]
    %v5715 = vld [vmem:[%s5713 + $0x4] sm:$0xf]
    %v5716 = vld [vmem:[%s5713 + $0x8] sm:$0xf]
    %v5717 = vld [vmem:[%s5713 + $0xc] sm:$0xf]
    %v5718 = vld [vmem:[%s5713 + $0x10] sm:$0xf]
    %v5719 = vld [vmem:[%s5713 + $0x14] sm:$0xf]
    %v5720 = vld [vmem:[%s5713 + $0x18] sm:$0xf]
    %v5721 = vld [vmem:[%s5713 + $0x1c] sm:$0xf]
    %v5730 = vunpack.c.l.b16 %v5714
    %v5731 = vunpack.c.l.b16 %v5715
    %v5732 = vunpack.c.l.b16 %v5716
    %v5733 = vunpack.c.l.b16 %v5717
    %v5734 = vunpack.c.l.b16 %v5718
    %v5735 = vunpack.c.l.b16 %v5719
    %v5736 = vunpack.c.l.b16 %v5720
    %v5737 = vunpack.c.l.b16 %v5721
    %v5738 = vpack.c.b16 %v5731, %v5730
    %v5739 = vpack.c.b16 %v5733, %v5732
    %v5740 = vpack.c.b16 %v5735, %v5734
    %v5741 = vpack.c.b16 %v5737, %v5736
    %5746 = vmatpush.bf16.msra.mxu0 %v5201
    %5747 = vmatpush.bf16.msra.mxu0 %v5199
    %5748 = vmatpush.bf16.msra.mxu0 %v5197
    %5749 = vmatpush.bf16.msra.mxu0 %v5195
    %5750 = vmatpush.bf16.msra.mxu0 %v5193
    %5751 = vmatpush.bf16.msra.mxu0 %v5191
    %5752 = vmatpush.bf16.msra.mxu0 %v5189
    %5753 = vmatpush.bf16.msra.mxu0 %v5187
    %5754 = vmatmul.bf16.gmra.mxu0 %v5738
    %v5755 = vpop.f32.mrf.mxu0
    %v5756 = vadd.f32 0.0, %v5755
    %v5757 = vpop.f32.mrf.mxu0
    %v5758 = vadd.f32 0.0, %v5757
    %5759 = vmatmul.bf16.gmra.mxu0 %v5739
    %v5760 = vpop.f32.mrf.mxu0
    %v5761 = vadd.f32 0.0, %v5760
    %v5762 = vpop.f32.mrf.mxu0
    %v5763 = vadd.f32 0.0, %v5762
    %5764 = vmatmul.bf16.gmra.mxu0 %v5740
    %v5765 = vpop.f32.mrf.mxu0
    %v5766 = vadd.f32 0.0, %v5765
    %v5767 = vpop.f32.mrf.mxu0
    %v5768 = vadd.f32 0.0, %v5767
    %5769 = vmatmul.bf16.gmra.mxu0 %v5741
    %v5770 = vpop.f32.mrf.mxu0
    %v5771 = vadd.f32 0.0, %v5770
    %v5772 = vpop.f32.mrf.mxu0
    %v5773 = vadd.f32 0.0, %v5772
    %5774 = vdwg.mxu0
    %5775 = vmatpush.bf16.msra.mxu0 %v5202
    %5776 = vmatpush.bf16.msra.mxu0 %v5200
    %5777 = vmatpush.bf16.msra.mxu0 %v5198
    %5778 = vmatpush.bf16.msra.mxu0 %v5196
    %5779 = vmatpush.bf16.msra.mxu0 %v5194
    %5780 = vmatpush.bf16.msra.mxu0 %v5192
    %5781 = vmatpush.bf16.msra.mxu0 %v5190
    %5782 = vmatpush.bf16.msra.mxu0 %v5188
    %5783 = vmatmul.bf16.gmra.mxu0 %v5738
    %v5784 = vpop.f32.mrf.mxu0
    %v5785 = vadd.f32 0.0, %v5784
    %v5786 = vpop.f32.mrf.mxu0
    %v5787 = vadd.f32 0.0, %v5786
    %5788 = vmatmul.bf16.gmra.mxu0 %v5739
    %v5789 = vpop.f32.mrf.mxu0
    %v5790 = vadd.f32 0.0, %v5789
    %v5791 = vpop.f32.mrf.mxu0
    %v5792 = vadd.f32 0.0, %v5791
    %5793 = vmatmul.bf16.gmra.mxu0 %v5740
    %v5794 = vpop.f32.mrf.mxu0
    %v5795 = vadd.f32 0.0, %v5794
    %v5796 = vpop.f32.mrf.mxu0
    %v5797 = vadd.f32 0.0, %v5796
    %5798 = vmatmul.bf16.gmra.mxu0 %v5741
    %v5799 = vpop.f32.mrf.mxu0
    %v5800 = vadd.f32 0.0, %v5799
    %v5801 = vpop.f32.mrf.mxu0
    %v5802 = vadd.f32 0.0, %v5801
    %5803 = vdwg.mxu0
    %v5804 = vpack.c.bf16 %v5785, %v5756
    %v5805 = vpack.c.bf16 %v5787, %v5758
    %v5806 = vpack.c.bf16 %v5790, %v5761
    %v5807 = vpack.c.bf16 %v5792, %v5763
    %v5808 = vpack.c.bf16 %v5795, %v5766
    %v5809 = vpack.c.bf16 %v5797, %v5768
    %v5810 = vpack.c.bf16 %v5800, %v5771
    %v5811 = vpack.c.bf16 %v5802, %v5773
    %s5812 = scalar_lea.vmem [#allocation10], 64
    %v5813 = vld [vmem:[%s5812] sm:$0xf]
    %v5814 = vld [vmem:[%s5812 + $0x4] sm:$0xf]
    %v5815 = vld [vmem:[%s5812 + $0x8] sm:$0xf]
    %v5816 = vld [vmem:[%s5812 + $0xc] sm:$0xf]
    %v5817 = vld [vmem:[%s5812 + $0x10] sm:$0xf]
    %v5818 = vld [vmem:[%s5812 + $0x14] sm:$0xf]
    %v5819 = vld [vmem:[%s5812 + $0x18] sm:$0xf]
    %v5820 = vld [vmem:[%s5812 + $0x1c] sm:$0xf]
    %v5829 = vunpack.c.l.b16 %v5813
    %v5830 = vunpack.c.l.b16 %v5814
    %v5831 = vunpack.c.l.b16 %v5815
    %v5832 = vunpack.c.l.b16 %v5816
    %v5833 = vunpack.c.l.b16 %v5817
    %v5834 = vunpack.c.l.b16 %v5818
    %v5835 = vunpack.c.l.b16 %v5819
    %v5836 = vunpack.c.l.b16 %v5820
    %v5837 = vpack.c.b16 %v5830, %v5829
    %v5838 = vpack.c.b16 %v5832, %v5831
    %v5839 = vpack.c.b16 %v5834, %v5833
    %v5840 = vpack.c.b16 %v5836, %v5835
    %5845 = vmatpush.bf16.msra.mxu0 %v5201
    %5846 = vmatpush.bf16.msra.mxu0 %v5199
    %5847 = vmatpush.bf16.msra.mxu0 %v5197
    %5848 = vmatpush.bf16.msra.mxu0 %v5195
    %5849 = vmatpush.bf16.msra.mxu0 %v5193
    %5850 = vmatpush.bf16.msra.mxu0 %v5191
    %5851 = vmatpush.bf16.msra.mxu0 %v5189
    %5852 = vmatpush.bf16.msra.mxu0 %v5187
    %5853 = vmatmul.bf16.gmra.mxu0 %v5837
    %v5854 = vpop.f32.mrf.mxu0
    %v5855 = vadd.f32 0.0, %v5854
    %v5856 = vpop.f32.mrf.mxu0
    %v5857 = vadd.f32 0.0, %v5856
    %5858 = vmatmul.bf16.gmra.mxu0 %v5838
    %v5859 = vpop.f32.mrf.mxu0
    %v5860 = vadd.f32 0.0, %v5859
    %v5861 = vpop.f32.mrf.mxu0
    %v5862 = vadd.f32 0.0, %v5861
    %5863 = vmatmul.bf16.gmra.mxu0 %v5839
    %v5864 = vpop.f32.mrf.mxu0
    %v5865 = vadd.f32 0.0, %v5864
    %v5866 = vpop.f32.mrf.mxu0
    %v5867 = vadd.f32 0.0, %v5866
    %5868 = vmatmul.bf16.gmra.mxu0 %v5840
    %v5869 = vpop.f32.mrf.mxu0
    %v5870 = vadd.f32 0.0, %v5869
    %v5871 = vpop.f32.mrf.mxu0
    %v5872 = vadd.f32 0.0, %v5871
    %5873 = vdwg.mxu0
    %5874 = vmatpush.bf16.msra.mxu0 %v5202
    %5875 = vmatpush.bf16.msra.mxu0 %v5200
    %5876 = vmatpush.bf16.msra.mxu0 %v5198
    %5877 = vmatpush.bf16.msra.mxu0 %v5196
    %5878 = vmatpush.bf16.msra.mxu0 %v5194
    %5879 = vmatpush.bf16.msra.mxu0 %v5192
    %5880 = vmatpush.bf16.msra.mxu0 %v5190
    %5881 = vmatpush.bf16.msra.mxu0 %v5188
    %5882 = vmatmul.bf16.gmra.mxu0 %v5837
    %v5883 = vpop.f32.mrf.mxu0
    %v5884 = vadd.f32 0.0, %v5883
    %v5885 = vpop.f32.mrf.mxu0
    %v5886 = vadd.f32 0.0, %v5885
    %5887 = vmatmul.bf16.gmra.mxu0 %v5838
    %v5888 = vpop.f32.mrf.mxu0
    %v5889 = vadd.f32 0.0, %v5888
    %v5890 = vpop.f32.mrf.mxu0
    %v5891 = vadd.f32 0.0, %v5890
    %5892 = vmatmul.bf16.gmra.mxu0 %v5839
    %v5893 = vpop.f32.mrf.mxu0
    %v5894 = vadd.f32 0.0, %v5893
    %v5895 = vpop.f32.mrf.mxu0
    %v5896 = vadd.f32 0.0, %v5895
    %5897 = vmatmul.bf16.gmra.mxu0 %v5840
    %v5898 = vpop.f32.mrf.mxu0
    %v5899 = vadd.f32 0.0, %v5898
    %v5900 = vpop.f32.mrf.mxu0
    %v5901 = vadd.f32 0.0, %v5900
    %5902 = vdwg.mxu0
    %v5903 = vpack.c.bf16 %v5884, %v5855
    %v5904 = vpack.c.bf16 %v5886, %v5857
    %v5905 = vpack.c.bf16 %v5889, %v5860
    %v5906 = vpack.c.bf16 %v5891, %v5862
    %v5907 = vpack.c.bf16 %v5894, %v5865
    %v5908 = vpack.c.bf16 %v5896, %v5867
    %v5909 = vpack.c.bf16 %v5899, %v5870
    %v5910 = vpack.c.bf16 %v5901, %v5872
    %v5919 = vunpack.c.l.b16 %v5705
    %v5920 = vunpack.c.h.b16 %v5705
    %v5921 = vunpack.c.l.b16 %v5706
    %v5922 = vunpack.c.h.b16 %v5706
    %v5923 = vunpack.c.l.b16 %v5707
    %v5924 = vunpack.c.h.b16 %v5707
    %v5925 = vunpack.c.l.b16 %v5708
    %v5926 = vunpack.c.h.b16 %v5708
    %v5927 = vunpack.c.l.b16 %v5709
    %v5928 = vunpack.c.h.b16 %v5709
    %v5929 = vunpack.c.l.b16 %v5710
    %v5930 = vunpack.c.h.b16 %v5710
    %v5931 = vunpack.c.l.b16 %v5711
    %v5932 = vunpack.c.h.b16 %v5711
    %v5933 = vunpack.c.l.b16 %v5712
    %v5934 = vunpack.c.h.b16 %v5712
    %v5935 = vpack.c.b16 %v5921, %v5919
    %v5936 = vpack.c.b16 %v5922, %v5920
    %v5937 = vpack.c.b16 %v5925, %v5923
    %v5938 = vpack.c.b16 %v5926, %v5924
    %v5939 = vpack.c.b16 %v5929, %v5927
    %v5940 = vpack.c.b16 %v5930, %v5928
    %v5941 = vpack.c.b16 %v5933, %v5931
    %v5942 = vpack.c.b16 %v5934, %v5932
    %v5959 = vunpack.c.l.b16 %v5804
    %v5960 = vunpack.c.h.b16 %v5804
    %v5961 = vunpack.c.l.b16 %v5805
    %v5962 = vunpack.c.h.b16 %v5805
    %v5963 = vunpack.c.l.b16 %v5806
    %v5964 = vunpack.c.h.b16 %v5806
    %v5965 = vunpack.c.l.b16 %v5807
    %v5966 = vunpack.c.h.b16 %v5807
    %v5967 = vunpack.c.l.b16 %v5808
    %v5968 = vunpack.c.h.b16 %v5808
    %v5969 = vunpack.c.l.b16 %v5809
    %v5970 = vunpack.c.h.b16 %v5809
    %v5971 = vunpack.c.l.b16 %v5810
    %v5972 = vunpack.c.h.b16 %v5810
    %v5973 = vunpack.c.l.b16 %v5811
    %v5974 = vunpack.c.h.b16 %v5811
    %v5975 = vpack.c.b16 %v5961, %v5959
    %v5976 = vpack.c.b16 %v5962, %v5960
    %v5977 = vpack.c.b16 %v5965, %v5963
    %v5978 = vpack.c.b16 %v5966, %v5964
    %v5979 = vpack.c.b16 %v5969, %v5967
    %v5980 = vpack.c.b16 %v5970, %v5968
    %v5981 = vpack.c.b16 %v5973, %v5971
    %v5982 = vpack.c.b16 %v5974, %v5972
    %v5999 = vunpack.c.l.b16 %v5903
    %v6000 = vunpack.c.h.b16 %v5903
    %v6001 = vunpack.c.l.b16 %v5904
    %v6002 = vunpack.c.h.b16 %v5904
    %v6003 = vunpack.c.l.b16 %v5905
    %v6004 = vunpack.c.h.b16 %v5905
    %v6005 = vunpack.c.l.b16 %v5906
    %v6006 = vunpack.c.h.b16 %v5906
    %v6007 = vunpack.c.l.b16 %v5907
    %v6008 = vunpack.c.h.b16 %v5907
    %v6009 = vunpack.c.l.b16 %v5908
    %v6010 = vunpack.c.h.b16 %v5908
    %v6011 = vunpack.c.l.b16 %v5909
    %v6012 = vunpack.c.h.b16 %v5909
    %v6013 = vunpack.c.l.b16 %v5910
    %v6014 = vunpack.c.h.b16 %v5910
    %v6015 = vpack.c.b16 %v6001, %v5999
    %v6016 = vpack.c.b16 %v6002, %v6000
    %v6017 = vpack.c.b16 %v6005, %v6003
    %v6018 = vpack.c.b16 %v6006, %v6004
    %v6019 = vpack.c.b16 %v6009, %v6007
    %v6020 = vpack.c.b16 %v6010, %v6008
    %v6021 = vpack.c.b16 %v6013, %v6011
    %v6022 = vpack.c.b16 %v6014, %v6012
    %v6031 = vld [vmem:[%s12] sm:$0xff]
    %v6032 = vld [vmem:[%s12 + $0x8] sm:$0xff]
    %v6033 = vld [vmem:[%s12 + $0x10] sm:$0xff]
    %v6034 = vld [vmem:[%s12 + $0x18] sm:$0xff]
    %v6035 = vld [vmem:[%s12 + $0x20] sm:$0xff]
    %v6036 = vld [vmem:[%s12 + $0x28] sm:$0xff]
    %v6037 = vld [vmem:[%s12 + $0x30] sm:$0xff]
    %v6038 = vld [vmem:[%s12 + $0x38] sm:$0xff]
    %v6039 = vld [vmem:[%s12 + $0x40] sm:$0xff]
    %v6040 = vld [vmem:[%s12 + $0x48] sm:$0xff]
    %v6041 = vld [vmem:[%s12 + $0x50] sm:$0xff]
    %v6042 = vld [vmem:[%s12 + $0x58] sm:$0xff]
    %v6043 = vld [vmem:[%s12 + $0x60] sm:$0xff]
    %v6044 = vld [vmem:[%s12 + $0x68] sm:$0xff]
    %v6045 = vld [vmem:[%s12 + $0x70] sm:$0xff]
    %v6046 = vld [vmem:[%s12 + $0x78] sm:$0xff]
    %v6047 = vld [vmem:[%s12 + $0x80] sm:$0xff]
    %v6048 = vld [vmem:[%s12 + $0x88] sm:$0xff]
    %v6049 = vld [vmem:[%s12 + $0x90] sm:$0xff]
    %v6050 = vld [vmem:[%s12 + $0x98] sm:$0xff]
    %v6051 = vld [vmem:[%s12 + $0xa0] sm:$0xff]
    %v6052 = vld [vmem:[%s12 + $0xa8] sm:$0xff]
    %v6053 = vld [vmem:[%s12 + $0xb0] sm:$0xff]
    %v6054 = vld [vmem:[%s12 + $0xb8] sm:$0xff]
    %v6055 = vld [vmem:[%s12 + $0xc0] sm:$0xff]
    %v6056 = vld [vmem:[%s12 + $0xc8] sm:$0xff]
    %v6057 = vld [vmem:[%s12 + $0xd0] sm:$0xff]
    %v6058 = vld [vmem:[%s12 + $0xd8] sm:$0xff]
    %v6059 = vld [vmem:[%s12 + $0xe0] sm:$0xff]
    %v6060 = vld [vmem:[%s12 + $0xe8] sm:$0xff]
    %v6061 = vld [vmem:[%s12 + $0xf0] sm:$0xff]
    %v6062 = vld [vmem:[%s12 + $0xf8] sm:$0xff]
    %v6063 = vld [vmem:[%s12 + $0x100] sm:$0xff]
    %v6064 = vld [vmem:[%s12 + $0x108] sm:$0xff]
    %v6065 = vld [vmem:[%s12 + $0x110] sm:$0xff]
    %v6066 = vld [vmem:[%s12 + $0x118] sm:$0xff]
    %v6067 = vld [vmem:[%s12 + $0x120] sm:$0xff]
    %v6068 = vld [vmem:[%s12 + $0x128] sm:$0xff]
    %v6069 = vld [vmem:[%s12 + $0x130] sm:$0xff]
    %v6070 = vld [vmem:[%s12 + $0x138] sm:$0xff]
    %v6071 = vld [vmem:[%s12 + $0x140] sm:$0xff]
    %v6072 = vld [vmem:[%s12 + $0x148] sm:$0xff]
    %v6073 = vld [vmem:[%s12 + $0x150] sm:$0xff]
    %v6074 = vld [vmem:[%s12 + $0x158] sm:$0xff]
    %v6075 = vld [vmem:[%s12 + $0x160] sm:$0xff]
    %v6076 = vld [vmem:[%s12 + $0x168] sm:$0xff]
    %v6077 = vld [vmem:[%s12 + $0x170] sm:$0xff]
    %v6078 = vld [vmem:[%s12 + $0x178] sm:$0xff]
    %v6079 = vld [vmem:[%s12 + $0x180] sm:$0xff]
    %v6080 = vld [vmem:[%s12 + $0x188] sm:$0xff]
    %v6081 = vld [vmem:[%s12 + $0x190] sm:$0xff]
    %v6082 = vld [vmem:[%s12 + $0x198] sm:$0xff]
    %v6083 = vld [vmem:[%s12 + $0x1a0] sm:$0xff]
    %v6084 = vld [vmem:[%s12 + $0x1a8] sm:$0xff]
    %v6085 = vld [vmem:[%s12 + $0x1b0] sm:$0xff]
    %v6086 = vld [vmem:[%s12 + $0x1b8] sm:$0xff]
    %v6087 = vld [vmem:[%s12 + $0x1c0] sm:$0xff]
    %v6088 = vld [vmem:[%s12 + $0x1c8] sm:$0xff]
    %v6089 = vld [vmem:[%s12 + $0x1d0] sm:$0xff]
    %v6090 = vld [vmem:[%s12 + $0x1d8] sm:$0xff]
    %v6091 = vld [vmem:[%s12 + $0x1e0] sm:$0xff]
    %v6092 = vld [vmem:[%s12 + $0x1e8] sm:$0xff]
    %v6093 = vld [vmem:[%s12 + $0x1f0] sm:$0xff]
    %v6094 = vld [vmem:[%s12 + $0x1f8] sm:$0xff]
    %v6095 = vld [vmem:[%s12 + $0x200] sm:$0xff]
    %v6096 = vld [vmem:[%s12 + $0x208] sm:$0xff]
    %v6097 = vld [vmem:[%s12 + $0x210] sm:$0xff]
    %v6098 = vld [vmem:[%s12 + $0x218] sm:$0xff]
    %v6099 = vld [vmem:[%s12 + $0x220] sm:$0xff]
    %v6100 = vld [vmem:[%s12 + $0x228] sm:$0xff]
    %v6101 = vld [vmem:[%s12 + $0x230] sm:$0xff]
    %v6102 = vld [vmem:[%s12 + $0x238] sm:$0xff]
    %v6103 = vld [vmem:[%s12 + $0x240] sm:$0xff]
    %v6104 = vld [vmem:[%s12 + $0x248] sm:$0xff]
    %v6105 = vld [vmem:[%s12 + $0x250] sm:$0xff]
    %v6106 = vld [vmem:[%s12 + $0x258] sm:$0xff]
    %v6107 = vld [vmem:[%s12 + $0x260] sm:$0xff]
    %v6108 = vld [vmem:[%s12 + $0x268] sm:$0xff]
    %v6109 = vld [vmem:[%s12 + $0x270] sm:$0xff]
    %v6110 = vld [vmem:[%s12 + $0x278] sm:$0xff]
    %v6111 = vld [vmem:[%s12 + $0x280] sm:$0xff]
    %v6112 = vld [vmem:[%s12 + $0x288] sm:$0xff]
    %v6113 = vld [vmem:[%s12 + $0x290] sm:$0xff]
    %v6114 = vld [vmem:[%s12 + $0x298] sm:$0xff]
    %v6115 = vld [vmem:[%s12 + $0x2a0] sm:$0xff]
    %v6116 = vld [vmem:[%s12 + $0x2a8] sm:$0xff]
    %v6117 = vld [vmem:[%s12 + $0x2b0] sm:$0xff]
    %v6118 = vld [vmem:[%s12 + $0x2b8] sm:$0xff]
    %v6119 = vld [vmem:[%s12 + $0x2c0] sm:$0xff]
    %v6120 = vld [vmem:[%s12 + $0x2c8] sm:$0xff]
    %v6121 = vld [vmem:[%s12 + $0x2d0] sm:$0xff]
    %v6122 = vld [vmem:[%s12 + $0x2d8] sm:$0xff]
    %v6123 = vld [vmem:[%s12 + $0x2e0] sm:$0xff]
    %v6124 = vld [vmem:[%s12 + $0x2e8] sm:$0xff]
    %v6125 = vld [vmem:[%s12 + $0x2f0] sm:$0xff]
    %v6126 = vld [vmem:[%s12 + $0x2f8] sm:$0xff]
    %v6127 = vld [vmem:[#allocation11] sm:$0x3]
    %v6129 = vperm.slane %v6127, 0
    %v6130 = vperm.slane %v6127, 1
    %v6229 = vunpack.c.l.b16 %v6031
    %v6230 = vunpack.c.h.b16 %v6031
    %v6231 = vunpack.c.l.b16 %v6032
    %v6232 = vunpack.c.h.b16 %v6032
    %v6233 = vunpack.c.l.b16 %v6033
    %v6234 = vunpack.c.h.b16 %v6033
    %v6235 = vunpack.c.l.b16 %v6034
    %v6236 = vunpack.c.h.b16 %v6034
    %v6237 = vunpack.c.l.b16 %v6035
    %v6238 = vunpack.c.h.b16 %v6035
    %v6239 = vunpack.c.l.b16 %v6036
    %v6240 = vunpack.c.h.b16 %v6036
    %v6241 = vunpack.c.l.b16 %v6037
    %v6242 = vunpack.c.h.b16 %v6037
    %v6243 = vunpack.c.l.b16 %v6038
    %v6244 = vunpack.c.h.b16 %v6038
    %v6245 = vunpack.c.l.b16 %v6039
    %v6246 = vunpack.c.h.b16 %v6039
    %v6247 = vunpack.c.l.b16 %v6040
    %v6248 = vunpack.c.h.b16 %v6040
    %v6249 = vunpack.c.l.b16 %v6041
    %v6250 = vunpack.c.h.b16 %v6041
    %v6251 = vunpack.c.l.b16 %v6042
    %v6252 = vunpack.c.h.b16 %v6042
    %v6253 = vunpack.c.l.b16 %v6043
    %v6254 = vunpack.c.h.b16 %v6043
    %v6255 = vunpack.c.l.b16 %v6044
    %v6256 = vunpack.c.h.b16 %v6044
    %v6257 = vunpack.c.l.b16 %v6045
    %v6258 = vunpack.c.h.b16 %v6045
    %v6259 = vunpack.c.l.b16 %v6046
    %v6260 = vunpack.c.h.b16 %v6046
    %v6261 = vunpack.c.l.b16 %v6047
    %v6262 = vunpack.c.h.b16 %v6047
    %v6263 = vunpack.c.l.b16 %v6048
    %v6264 = vunpack.c.h.b16 %v6048
    %v6265 = vunpack.c.l.b16 %v6049
    %v6266 = vunpack.c.h.b16 %v6049
    %v6267 = vunpack.c.l.b16 %v6050
    %v6268 = vunpack.c.h.b16 %v6050
    %v6269 = vunpack.c.l.b16 %v6051
    %v6270 = vunpack.c.h.b16 %v6051
    %v6271 = vunpack.c.l.b16 %v6052
    %v6272 = vunpack.c.h.b16 %v6052
    %v6273 = vunpack.c.l.b16 %v6053
    %v6274 = vunpack.c.h.b16 %v6053
    %v6275 = vunpack.c.l.b16 %v6054
    %v6276 = vunpack.c.h.b16 %v6054
    %v6277 = vunpack.c.l.b16 %v6055
    %v6278 = vunpack.c.h.b16 %v6055
    %v6279 = vunpack.c.l.b16 %v6056
    %v6280 = vunpack.c.h.b16 %v6056
    %v6281 = vunpack.c.l.b16 %v6057
    %v6282 = vunpack.c.h.b16 %v6057
    %v6283 = vunpack.c.l.b16 %v6058
    %v6284 = vunpack.c.h.b16 %v6058
    %v6285 = vunpack.c.l.b16 %v6059
    %v6286 = vunpack.c.h.b16 %v6059
    %v6287 = vunpack.c.l.b16 %v6060
    %v6288 = vunpack.c.h.b16 %v6060
    %v6289 = vunpack.c.l.b16 %v6061
    %v6290 = vunpack.c.h.b16 %v6061
    %v6291 = vunpack.c.l.b16 %v6062
    %v6292 = vunpack.c.h.b16 %v6062
    %v6293 = vunpack.c.l.b16 %v6063
    %v6294 = vunpack.c.h.b16 %v6063
    %v6295 = vunpack.c.l.b16 %v6064
    %v6296 = vunpack.c.h.b16 %v6064
    %v6297 = vunpack.c.l.b16 %v6065
    %v6298 = vunpack.c.h.b16 %v6065
    %v6299 = vunpack.c.l.b16 %v6066
    %v6300 = vunpack.c.h.b16 %v6066
    %v6301 = vunpack.c.l.b16 %v6067
    %v6302 = vunpack.c.h.b16 %v6067
    %v6303 = vunpack.c.l.b16 %v6068
    %v6304 = vunpack.c.h.b16 %v6068
    %v6305 = vunpack.c.l.b16 %v6069
    %v6306 = vunpack.c.h.b16 %v6069
    %v6307 = vunpack.c.l.b16 %v6070
    %v6308 = vunpack.c.h.b16 %v6070
    %v6309 = vunpack.c.l.b16 %v6071
    %v6310 = vunpack.c.h.b16 %v6071
    %v6311 = vunpack.c.l.b16 %v6072
    %v6312 = vunpack.c.h.b16 %v6072
    %v6313 = vunpack.c.l.b16 %v6073
    %v6314 = vunpack.c.h.b16 %v6073
    %v6315 = vunpack.c.l.b16 %v6074
    %v6316 = vunpack.c.h.b16 %v6074
    %v6317 = vunpack.c.l.b16 %v6075
    %v6318 = vunpack.c.h.b16 %v6075
    %v6319 = vunpack.c.l.b16 %v6076
    %v6320 = vunpack.c.h.b16 %v6076
    %v6321 = vunpack.c.l.b16 %v6077
    %v6322 = vunpack.c.h.b16 %v6077
    %v6323 = vunpack.c.l.b16 %v6078
    %v6324 = vunpack.c.h.b16 %v6078
    %v6325 = vunpack.c.l.b16 %v6079
    %v6326 = vunpack.c.h.b16 %v6079
    %v6327 = vunpack.c.l.b16 %v6080
    %v6328 = vunpack.c.h.b16 %v6080
    %v6329 = vunpack.c.l.b16 %v6081
    %v6330 = vunpack.c.h.b16 %v6081
    %v6331 = vunpack.c.l.b16 %v6082
    %v6332 = vunpack.c.h.b16 %v6082
    %v6333 = vunpack.c.l.b16 %v6083
    %v6334 = vunpack.c.h.b16 %v6083
    %v6335 = vunpack.c.l.b16 %v6084
    %v6336 = vunpack.c.h.b16 %v6084
    %v6337 = vunpack.c.l.b16 %v6085
    %v6338 = vunpack.c.h.b16 %v6085
    %v6339 = vunpack.c.l.b16 %v6086
    %v6340 = vunpack.c.h.b16 %v6086
    %v6341 = vunpack.c.l.b16 %v6087
    %v6342 = vunpack.c.h.b16 %v6087
    %v6343 = vunpack.c.l.b16 %v6088
    %v6344 = vunpack.c.h.b16 %v6088
    %v6345 = vunpack.c.l.b16 %v6089
    %v6346 = vunpack.c.h.b16 %v6089
    %v6347 = vunpack.c.l.b16 %v6090
    %v6348 = vunpack.c.h.b16 %v6090
    %v6349 = vunpack.c.l.b16 %v6091
    %v6350 = vunpack.c.h.b16 %v6091
    %v6351 = vunpack.c.l.b16 %v6092
    %v6352 = vunpack.c.h.b16 %v6092
    %v6353 = vunpack.c.l.b16 %v6093
    %v6354 = vunpack.c.h.b16 %v6093
    %v6355 = vunpack.c.l.b16 %v6094
    %v6356 = vunpack.c.h.b16 %v6094
    %v6357 = vunpack.c.l.b16 %v6095
    %v6358 = vunpack.c.h.b16 %v6095
    %v6359 = vunpack.c.l.b16 %v6096
    %v6360 = vunpack.c.h.b16 %v6096
    %v6361 = vunpack.c.l.b16 %v6097
    %v6362 = vunpack.c.h.b16 %v6097
    %v6363 = vunpack.c.l.b16 %v6098
    %v6364 = vunpack.c.h.b16 %v6098
    %v6365 = vunpack.c.l.b16 %v6099
    %v6366 = vunpack.c.h.b16 %v6099
    %v6367 = vunpack.c.l.b16 %v6100
    %v6368 = vunpack.c.h.b16 %v6100
    %v6369 = vunpack.c.l.b16 %v6101
    %v6370 = vunpack.c.h.b16 %v6101
    %v6371 = vunpack.c.l.b16 %v6102
    %v6372 = vunpack.c.h.b16 %v6102
    %v6373 = vunpack.c.l.b16 %v6103
    %v6374 = vunpack.c.h.b16 %v6103
    %v6375 = vunpack.c.l.b16 %v6104
    %v6376 = vunpack.c.h.b16 %v6104
    %v6377 = vunpack.c.l.b16 %v6105
    %v6378 = vunpack.c.h.b16 %v6105
    %v6379 = vunpack.c.l.b16 %v6106
    %v6380 = vunpack.c.h.b16 %v6106
    %v6381 = vunpack.c.l.b16 %v6107
    %v6382 = vunpack.c.h.b16 %v6107
    %v6383 = vunpack.c.l.b16 %v6108
    %v6384 = vunpack.c.h.b16 %v6108
    %v6385 = vunpack.c.l.b16 %v6109
    %v6386 = vunpack.c.h.b16 %v6109
    %v6387 = vunpack.c.l.b16 %v6110
    %v6388 = vunpack.c.h.b16 %v6110
    %v6389 = vunpack.c.l.b16 %v6111
    %v6390 = vunpack.c.h.b16 %v6111
    %v6391 = vunpack.c.l.b16 %v6112
    %v6392 = vunpack.c.h.b16 %v6112
    %v6393 = vunpack.c.l.b16 %v6113
    %v6394 = vunpack.c.h.b16 %v6113
    %v6395 = vunpack.c.l.b16 %v6114
    %v6396 = vunpack.c.h.b16 %v6114
    %v6397 = vunpack.c.l.b16 %v6115
    %v6398 = vunpack.c.h.b16 %v6115
    %v6399 = vunpack.c.l.b16 %v6116
    %v6400 = vunpack.c.h.b16 %v6116
    %v6401 = vunpack.c.l.b16 %v6117
    %v6402 = vunpack.c.h.b16 %v6117
    %v6403 = vunpack.c.l.b16 %v6118
    %v6404 = vunpack.c.h.b16 %v6118
    %v6405 = vunpack.c.l.b16 %v6119
    %v6406 = vunpack.c.h.b16 %v6119
    %v6407 = vunpack.c.l.b16 %v6120
    %v6408 = vunpack.c.h.b16 %v6120
    %v6409 = vunpack.c.l.b16 %v6121
    %v6410 = vunpack.c.h.b16 %v6121
    %v6411 = vunpack.c.l.b16 %v6122
    %v6412 = vunpack.c.h.b16 %v6122
    %v6413 = vunpack.c.l.b16 %v6123
    %v6414 = vunpack.c.h.b16 %v6123
    %v6415 = vunpack.c.l.b16 %v6124
    %v6416 = vunpack.c.h.b16 %v6124
    %v6417 = vunpack.c.l.b16 %v6125
    %v6418 = vunpack.c.h.b16 %v6125
    %v6419 = vunpack.c.l.b16 %v6126
    %v6420 = vunpack.c.h.b16 %v6126
    %v6421 = vpack.c.b16 %v6231, %v6229
    %v6422 = vpack.c.b16 %v6232, %v6230
    %v6423 = vpack.c.b16 %v6235, %v6233
    %v6424 = vpack.c.b16 %v6236, %v6234
    %v6425 = vpack.c.b16 %v6239, %v6237
    %v6426 = vpack.c.b16 %v6240, %v6238
    %v6427 = vpack.c.b16 %v6243, %v6241
    %v6428 = vpack.c.b16 %v6244, %v6242
    %v6429 = vpack.c.b16 %v6247, %v6245
    %v6430 = vpack.c.b16 %v6248, %v6246
    %v6431 = vpack.c.b16 %v6251, %v6249
    %v6432 = vpack.c.b16 %v6252, %v6250
    %v6433 = vpack.c.b16 %v6255, %v6253
    %v6434 = vpack.c.b16 %v6256, %v6254
    %v6435 = vpack.c.b16 %v6259, %v6257
    %v6436 = vpack.c.b16 %v6260, %v6258
    %v6437 = vpack.c.b16 %v6263, %v6261
    %v6438 = vpack.c.b16 %v6264, %v6262
    %v6439 = vpack.c.b16 %v6267, %v6265
    %v6440 = vpack.c.b16 %v6268, %v6266
    %v6441 = vpack.c.b16 %v6271, %v6269
    %v6442 = vpack.c.b16 %v6272, %v6270
    %v6443 = vpack.c.b16 %v6275, %v6273
    %v6444 = vpack.c.b16 %v6276, %v6274
    %v6445 = vpack.c.b16 %v6279, %v6277
    %v6446 = vpack.c.b16 %v6280, %v6278
    %v6447 = vpack.c.b16 %v6283, %v6281
    %v6448 = vpack.c.b16 %v6284, %v6282
    %v6449 = vpack.c.b16 %v6287, %v6285
    %v6450 = vpack.c.b16 %v6288, %v6286
    %v6451 = vpack.c.b16 %v6291, %v6289
    %v6452 = vpack.c.b16 %v6292, %v6290
    %v6453 = vpack.c.b16 %v6295, %v6293
    %v6454 = vpack.c.b16 %v6296, %v6294
    %v6455 = vpack.c.b16 %v6299, %v6297
    %v6456 = vpack.c.b16 %v6300, %v6298
    %v6457 = vpack.c.b16 %v6303, %v6301
    %v6458 = vpack.c.b16 %v6304, %v6302
    %v6459 = vpack.c.b16 %v6307, %v6305
    %v6460 = vpack.c.b16 %v6308, %v6306
    %v6461 = vpack.c.b16 %v6311, %v6309
    %v6462 = vpack.c.b16 %v6312, %v6310
    %v6463 = vpack.c.b16 %v6315, %v6313
    %v6464 = vpack.c.b16 %v6316, %v6314
    %v6465 = vpack.c.b16 %v6319, %v6317
    %v6466 = vpack.c.b16 %v6320, %v6318
    %v6467 = vpack.c.b16 %v6323, %v6321
    %v6468 = vpack.c.b16 %v6324, %v6322
    %v6469 = vpack.c.b16 %v6327, %v6325
    %v6470 = vpack.c.b16 %v6328, %v6326
    %v6471 = vpack.c.b16 %v6331, %v6329
    %v6472 = vpack.c.b16 %v6332, %v6330
    %v6473 = vpack.c.b16 %v6335, %v6333
    %v6474 = vpack.c.b16 %v6336, %v6334
    %v6475 = vpack.c.b16 %v6339, %v6337
    %v6476 = vpack.c.b16 %v6340, %v6338
    %v6477 = vpack.c.b16 %v6343, %v6341
    %v6478 = vpack.c.b16 %v6344, %v6342
    %v6479 = vpack.c.b16 %v6347, %v6345
    %v6480 = vpack.c.b16 %v6348, %v6346
    %v6481 = vpack.c.b16 %v6351, %v6349
    %v6482 = vpack.c.b16 %v6352, %v6350
    %v6483 = vpack.c.b16 %v6355, %v6353
    %v6484 = vpack.c.b16 %v6356, %v6354
    %v6485 = vpack.c.b16 %v6359, %v6357
    %v6486 = vpack.c.b16 %v6360, %v6358
    %v6487 = vpack.c.b16 %v6363, %v6361
    %v6488 = vpack.c.b16 %v6364, %v6362
    %v6489 = vpack.c.b16 %v6367, %v6365
    %v6490 = vpack.c.b16 %v6368, %v6366
    %v6491 = vpack.c.b16 %v6371, %v6369
    %v6492 = vpack.c.b16 %v6372, %v6370
    %v6493 = vpack.c.b16 %v6375, %v6373
    %v6494 = vpack.c.b16 %v6376, %v6374
    %v6495 = vpack.c.b16 %v6379, %v6377
    %v6496 = vpack.c.b16 %v6380, %v6378
    %v6497 = vpack.c.b16 %v6383, %v6381
    %v6498 = vpack.c.b16 %v6384, %v6382
    %v6499 = vpack.c.b16 %v6387, %v6385
    %v6500 = vpack.c.b16 %v6388, %v6386
    %v6501 = vpack.c.b16 %v6391, %v6389
    %v6502 = vpack.c.b16 %v6392, %v6390
    %v6503 = vpack.c.b16 %v6395, %v6393
    %v6504 = vpack.c.b16 %v6396, %v6394
    %v6505 = vpack.c.b16 %v6399, %v6397
    %v6506 = vpack.c.b16 %v6400, %v6398
    %v6507 = vpack.c.b16 %v6403, %v6401
    %v6508 = vpack.c.b16 %v6404, %v6402
    %v6509 = vpack.c.b16 %v6407, %v6405
    %v6510 = vpack.c.b16 %v6408, %v6406
    %v6511 = vpack.c.b16 %v6411, %v6409
    %v6512 = vpack.c.b16 %v6412, %v6410
    %v6513 = vpack.c.b16 %v6415, %v6413
    %v6514 = vpack.c.b16 %v6416, %v6414
    %v6515 = vpack.c.b16 %v6419, %v6417
    %v6516 = vpack.c.b16 %v6420, %v6418
    %6613 = vmatpush.bf16.msra.mxu0 %v6435
    %6614 = vmatpush.bf16.msra.mxu0 %v6433
    %6615 = vmatpush.bf16.msra.mxu0 %v6431
    %6616 = vmatpush.bf16.msra.mxu0 %v6429
    %6617 = vmatpush.bf16.msra.mxu0 %v6427
    %6618 = vmatpush.bf16.msra.mxu0 %v6425
    %6619 = vmatpush.bf16.msra.mxu0 %v6423
    %6620 = vmatpush.bf16.msra.mxu0 %v6421
    %6621 = vmatmul.bf16.gmra.mxu0 %v5935
    %v6622 = vpop.f32.mrf.mxu0
    %v6623 = vadd.f32 %v6129, %v6622
    %v6624 = vpop.f32.mrf.mxu0
    %v6625 = vadd.f32 %v6129, %v6624
    %6626 = vmatmul.bf16.gmra.mxu0 %v5937
    %v6627 = vpop.f32.mrf.mxu0
    %v6628 = vadd.f32 %v6129, %v6627
    %v6629 = vpop.f32.mrf.mxu0
    %v6630 = vadd.f32 %v6129, %v6629
    %6631 = vmatmul.bf16.gmra.mxu0 %v5939
    %v6632 = vpop.f32.mrf.mxu0
    %v6633 = vadd.f32 %v6129, %v6632
    %v6634 = vpop.f32.mrf.mxu0
    %v6635 = vadd.f32 %v6129, %v6634
    %6636 = vmatmul.bf16.gmra.mxu0 %v5941
    %v6637 = vpop.f32.mrf.mxu0
    %v6638 = vadd.f32 %v6129, %v6637
    %v6639 = vpop.f32.mrf.mxu0
    %v6640 = vadd.f32 %v6129, %v6639
    %6641 = vdwg.mxu0
    %6642 = vmatpush.bf16.msra.mxu0 %v6451
    %6643 = vmatpush.bf16.msra.mxu0 %v6449
    %6644 = vmatpush.bf16.msra.mxu0 %v6447
    %6645 = vmatpush.bf16.msra.mxu0 %v6445
    %6646 = vmatpush.bf16.msra.mxu0 %v6443
    %6647 = vmatpush.bf16.msra.mxu0 %v6441
    %6648 = vmatpush.bf16.msra.mxu0 %v6439
    %6649 = vmatpush.bf16.msra.mxu0 %v6437
    %6650 = vmatmul.bf16.gmra.mxu0 %v5936
    %v6651 = vpop.f32.mrf.mxu0
    %v6652 = vadd.f32 %v6623, %v6651
    %v6653 = vpop.f32.mrf.mxu0
    %v6654 = vadd.f32 %v6625, %v6653
    %6655 = vmatmul.bf16.gmra.mxu0 %v5938
    %v6656 = vpop.f32.mrf.mxu0
    %v6657 = vadd.f32 %v6628, %v6656
    %v6658 = vpop.f32.mrf.mxu0
    %v6659 = vadd.f32 %v6630, %v6658
    %6660 = vmatmul.bf16.gmra.mxu0 %v5940
    %v6661 = vpop.f32.mrf.mxu0
    %v6662 = vadd.f32 %v6633, %v6661
    %v6663 = vpop.f32.mrf.mxu0
    %v6664 = vadd.f32 %v6635, %v6663
    %6665 = vmatmul.bf16.gmra.mxu0 %v5942
    %v6666 = vpop.f32.mrf.mxu0
    %v6667 = vadd.f32 %v6638, %v6666
    %v6668 = vpop.f32.mrf.mxu0
    %v6669 = vadd.f32 %v6640, %v6668
    %6670 = vdwg.mxu0
    %6671 = vmatpush.bf16.msra.mxu0 %v6467
    %6672 = vmatpush.bf16.msra.mxu0 %v6465
    %6673 = vmatpush.bf16.msra.mxu0 %v6463
    %6674 = vmatpush.bf16.msra.mxu0 %v6461
    %6675 = vmatpush.bf16.msra.mxu0 %v6459
    %6676 = vmatpush.bf16.msra.mxu0 %v6457
    %6677 = vmatpush.bf16.msra.mxu0 %v6455
    %6678 = vmatpush.bf16.msra.mxu0 %v6453
    %6679 = vmatmul.bf16.gmra.mxu0 %v5975
    %v6680 = vpop.f32.mrf.mxu0
    %v6681 = vadd.f32 %v6652, %v6680
    %v6682 = vpop.f32.mrf.mxu0
    %v6683 = vadd.f32 %v6654, %v6682
    %6684 = vmatmul.bf16.gmra.mxu0 %v5977
    %v6685 = vpop.f32.mrf.mxu0
    %v6686 = vadd.f32 %v6657, %v6685
    %v6687 = vpop.f32.mrf.mxu0
    %v6688 = vadd.f32 %v6659, %v6687
    %6689 = vmatmul.bf16.gmra.mxu0 %v5979
    %v6690 = vpop.f32.mrf.mxu0
    %v6691 = vadd.f32 %v6662, %v6690
    %v6692 = vpop.f32.mrf.mxu0
    %v6693 = vadd.f32 %v6664, %v6692
    %6694 = vmatmul.bf16.gmra.mxu0 %v5981
    %v6695 = vpop.f32.mrf.mxu0
    %v6696 = vadd.f32 %v6667, %v6695
    %v6697 = vpop.f32.mrf.mxu0
    %v6698 = vadd.f32 %v6669, %v6697
    %6699 = vdwg.mxu0
    %6700 = vmatpush.bf16.msra.mxu0 %v6483
    %6701 = vmatpush.bf16.msra.mxu0 %v6481
    %6702 = vmatpush.bf16.msra.mxu0 %v6479
    %6703 = vmatpush.bf16.msra.mxu0 %v6477
    %6704 = vmatpush.bf16.msra.mxu0 %v6475
    %6705 = vmatpush.bf16.msra.mxu0 %v6473
    %6706 = vmatpush.bf16.msra.mxu0 %v6471
    %6707 = vmatpush.bf16.msra.mxu0 %v6469
    %6708 = vmatmul.bf16.gmra.mxu0 %v5976
    %v6709 = vpop.f32.mrf.mxu0
    %v6710 = vadd.f32 %v6681, %v6709
    %v6711 = vpop.f32.mrf.mxu0
    %v6712 = vadd.f32 %v6683, %v6711
    %6713 = vmatmul.bf16.gmra.mxu0 %v5978
    %v6714 = vpop.f32.mrf.mxu0
    %v6715 = vadd.f32 %v6686, %v6714
    %v6716 = vpop.f32.mrf.mxu0
    %v6717 = vadd.f32 %v6688, %v6716
    %6718 = vmatmul.bf16.gmra.mxu0 %v5980
    %v6719 = vpop.f32.mrf.mxu0
    %v6720 = vadd.f32 %v6691, %v6719
    %v6721 = vpop.f32.mrf.mxu0
    %v6722 = vadd.f32 %v6693, %v6721
    %6723 = vmatmul.bf16.gmra.mxu0 %v5982
    %v6724 = vpop.f32.mrf.mxu0
    %v6725 = vadd.f32 %v6696, %v6724
    %v6726 = vpop.f32.mrf.mxu0
    %v6727 = vadd.f32 %v6698, %v6726
    %6728 = vdwg.mxu0
    %6729 = vmatpush.bf16.msra.mxu0 %v6499
    %6730 = vmatpush.bf16.msra.mxu0 %v6497
    %6731 = vmatpush.bf16.msra.mxu0 %v6495
    %6732 = vmatpush.bf16.msra.mxu0 %v6493
    %6733 = vmatpush.bf16.msra.mxu0 %v6491
    %6734 = vmatpush.bf16.msra.mxu0 %v6489
    %6735 = vmatpush.bf16.msra.mxu0 %v6487
    %6736 = vmatpush.bf16.msra.mxu0 %v6485
    %6737 = vmatmul.bf16.gmra.mxu0 %v6015
    %v6738 = vpop.f32.mrf.mxu0
    %v6739 = vadd.f32 %v6710, %v6738
    %v6740 = vpop.f32.mrf.mxu0
    %v6741 = vadd.f32 %v6712, %v6740
    %6742 = vmatmul.bf16.gmra.mxu0 %v6017
    %v6743 = vpop.f32.mrf.mxu0
    %v6744 = vadd.f32 %v6715, %v6743
    %v6745 = vpop.f32.mrf.mxu0
    %v6746 = vadd.f32 %v6717, %v6745
    %6747 = vmatmul.bf16.gmra.mxu0 %v6019
    %v6748 = vpop.f32.mrf.mxu0
    %v6749 = vadd.f32 %v6720, %v6748
    %v6750 = vpop.f32.mrf.mxu0
    %v6751 = vadd.f32 %v6722, %v6750
    %6752 = vmatmul.bf16.gmra.mxu0 %v6021
    %v6753 = vpop.f32.mrf.mxu0
    %v6754 = vadd.f32 %v6725, %v6753
    %v6755 = vpop.f32.mrf.mxu0
    %v6756 = vadd.f32 %v6727, %v6755
    %6757 = vdwg.mxu0
    %6758 = vmatpush.bf16.msra.mxu0 %v6515
    %6759 = vmatpush.bf16.msra.mxu0 %v6513
    %6760 = vmatpush.bf16.msra.mxu0 %v6511
    %6761 = vmatpush.bf16.msra.mxu0 %v6509
    %6762 = vmatpush.bf16.msra.mxu0 %v6507
    %6763 = vmatpush.bf16.msra.mxu0 %v6505
    %6764 = vmatpush.bf16.msra.mxu0 %v6503
    %6765 = vmatpush.bf16.msra.mxu0 %v6501
    %6766 = vmatmul.bf16.gmra.mxu0 %v6016
    %v6767 = vpop.f32.mrf.mxu0
    %v6768 = vadd.f32 %v6739, %v6767
    %v6769 = vpop.f32.mrf.mxu0
    %v6770 = vadd.f32 %v6741, %v6769
    %6771 = vmatmul.bf16.gmra.mxu0 %v6018
    %v6772 = vpop.f32.mrf.mxu0
    %v6773 = vadd.f32 %v6744, %v6772
    %v6774 = vpop.f32.mrf.mxu0
    %v6775 = vadd.f32 %v6746, %v6774
    %6776 = vmatmul.bf16.gmra.mxu0 %v6020
    %v6777 = vpop.f32.mrf.mxu0
    %v6778 = vadd.f32 %v6749, %v6777
    %v6779 = vpop.f32.mrf.mxu0
    %v6780 = vadd.f32 %v6751, %v6779
    %6781 = vmatmul.bf16.gmra.mxu0 %v6022
    %v6782 = vpop.f32.mrf.mxu0
    %v6783 = vadd.f32 %v6754, %v6782
    %v6784 = vpop.f32.mrf.mxu0
    %v6785 = vadd.f32 %v6756, %v6784
    %6786 = vdwg.mxu0
    %6787 = vmatpush.bf16.msra.mxu0 %v6436
    %6788 = vmatpush.bf16.msra.mxu0 %v6434
    %6789 = vmatpush.bf16.msra.mxu0 %v6432
    %6790 = vmatpush.bf16.msra.mxu0 %v6430
    %6791 = vmatpush.bf16.msra.mxu0 %v6428
    %6792 = vmatpush.bf16.msra.mxu0 %v6426
    %6793 = vmatpush.bf16.msra.mxu0 %v6424
    %6794 = vmatpush.bf16.msra.mxu0 %v6422
    %6795 = vmatmul.bf16.gmra.mxu0 %v5935
    %v6796 = vpop.f32.mrf.mxu0
    %v6797 = vadd.f32 %v6130, %v6796
    %v6798 = vpop.f32.mrf.mxu0
    %v6799 = vadd.f32 %v6130, %v6798
    %6800 = vmatmul.bf16.gmra.mxu0 %v5937
    %v6801 = vpop.f32.mrf.mxu0
    %v6802 = vadd.f32 %v6130, %v6801
    %v6803 = vpop.f32.mrf.mxu0
    %v6804 = vadd.f32 %v6130, %v6803
    %6805 = vmatmul.bf16.gmra.mxu0 %v5939
    %v6806 = vpop.f32.mrf.mxu0
    %v6807 = vadd.f32 %v6130, %v6806
    %v6808 = vpop.f32.mrf.mxu0
    %v6809 = vadd.f32 %v6130, %v6808
    %6810 = vmatmul.bf16.gmra.mxu0 %v5941
    %v6811 = vpop.f32.mrf.mxu0
    %v6812 = vadd.f32 %v6130, %v6811
    %v6813 = vpop.f32.mrf.mxu0
    %v6814 = vadd.f32 %v6130, %v6813
    %6815 = vdwg.mxu0
    %6816 = vmatpush.bf16.msra.mxu0 %v6452
    %6817 = vmatpush.bf16.msra.mxu0 %v6450
    %6818 = vmatpush.bf16.msra.mxu0 %v6448
    %6819 = vmatpush.bf16.msra.mxu0 %v6446
    %6820 = vmatpush.bf16.msra.mxu0 %v6444
    %6821 = vmatpush.bf16.msra.mxu0 %v6442
    %6822 = vmatpush.bf16.msra.mxu0 %v6440
    %6823 = vmatpush.bf16.msra.mxu0 %v6438
    %6824 = vmatmul.bf16.gmra.mxu0 %v5936
    %v6825 = vpop.f32.mrf.mxu0
    %v6826 = vadd.f32 %v6797, %v6825
    %v6827 = vpop.f32.mrf.mxu0
    %v6828 = vadd.f32 %v6799, %v6827
    %6829 = vmatmul.bf16.gmra.mxu0 %v5938
    %v6830 = vpop.f32.mrf.mxu0
    %v6831 = vadd.f32 %v6802, %v6830
    %v6832 = vpop.f32.mrf.mxu0
    %v6833 = vadd.f32 %v6804, %v6832
    %6834 = vmatmul.bf16.gmra.mxu0 %v5940
    %v6835 = vpop.f32.mrf.mxu0
    %v6836 = vadd.f32 %v6807, %v6835
    %v6837 = vpop.f32.mrf.mxu0
    %v6838 = vadd.f32 %v6809, %v6837
    %6839 = vmatmul.bf16.gmra.mxu0 %v5942
    %v6840 = vpop.f32.mrf.mxu0
    %v6841 = vadd.f32 %v6812, %v6840
    %v6842 = vpop.f32.mrf.mxu0
    %v6843 = vadd.f32 %v6814, %v6842
    %6844 = vdwg.mxu0
    %6845 = vmatpush.bf16.msra.mxu0 %v6468
    %6846 = vmatpush.bf16.msra.mxu0 %v6466
    %6847 = vmatpush.bf16.msra.mxu0 %v6464
    %6848 = vmatpush.bf16.msra.mxu0 %v6462
    %6849 = vmatpush.bf16.msra.mxu0 %v6460
    %6850 = vmatpush.bf16.msra.mxu0 %v6458
    %6851 = vmatpush.bf16.msra.mxu0 %v6456
    %6852 = vmatpush.bf16.msra.mxu0 %v6454
    %6853 = vmatmul.bf16.gmra.mxu0 %v5975
    %v6854 = vpop.f32.mrf.mxu0
    %v6855 = vadd.f32 %v6826, %v6854
    %v6856 = vpop.f32.mrf.mxu0
    %v6857 = vadd.f32 %v6828, %v6856
    %6858 = vmatmul.bf16.gmra.mxu0 %v5977
    %v6859 = vpop.f32.mrf.mxu0
    %v6860 = vadd.f32 %v6831, %v6859
    %v6861 = vpop.f32.mrf.mxu0
    %v6862 = vadd.f32 %v6833, %v6861
    %6863 = vmatmul.bf16.gmra.mxu0 %v5979
    %v6864 = vpop.f32.mrf.mxu0
    %v6865 = vadd.f32 %v6836, %v6864
    %v6866 = vpop.f32.mrf.mxu0
    %v6867 = vadd.f32 %v6838, %v6866
    %6868 = vmatmul.bf16.gmra.mxu0 %v5981
    %v6869 = vpop.f32.mrf.mxu0
    %v6870 = vadd.f32 %v6841, %v6869
    %v6871 = vpop.f32.mrf.mxu0
    %v6872 = vadd.f32 %v6843, %v6871
    %6873 = vdwg.mxu0
    %6874 = vmatpush.bf16.msra.mxu0 %v6484
    %6875 = vmatpush.bf16.msra.mxu0 %v6482
    %6876 = vmatpush.bf16.msra.mxu0 %v6480
    %6877 = vmatpush.bf16.msra.mxu0 %v6478
    %6878 = vmatpush.bf16.msra.mxu0 %v6476
    %6879 = vmatpush.bf16.msra.mxu0 %v6474
    %6880 = vmatpush.bf16.msra.mxu0 %v6472
    %6881 = vmatpush.bf16.msra.mxu0 %v6470
    %6882 = vmatmul.bf16.gmra.mxu0 %v5976
    %v6883 = vpop.f32.mrf.mxu0
    %v6884 = vadd.f32 %v6855, %v6883
    %v6885 = vpop.f32.mrf.mxu0
    %v6886 = vadd.f32 %v6857, %v6885
    %6887 = vmatmul.bf16.gmra.mxu0 %v5978
    %v6888 = vpop.f32.mrf.mxu0
    %v6889 = vadd.f32 %v6860, %v6888
    %v6890 = vpop.f32.mrf.mxu0
    %v6891 = vadd.f32 %v6862, %v6890
    %6892 = vmatmul.bf16.gmra.mxu0 %v5980
    %v6893 = vpop.f32.mrf.mxu0
    %v6894 = vadd.f32 %v6865, %v6893
    %v6895 = vpop.f32.mrf.mxu0
    %v6896 = vadd.f32 %v6867, %v6895
    %6897 = vmatmul.bf16.gmra.mxu0 %v5982
    %v6898 = vpop.f32.mrf.mxu0
    %v6899 = vadd.f32 %v6870, %v6898
    %v6900 = vpop.f32.mrf.mxu0
    %v6901 = vadd.f32 %v6872, %v6900
    %6902 = vdwg.mxu0
    %6903 = vmatpush.bf16.msra.mxu0 %v6500
    %6904 = vmatpush.bf16.msra.mxu0 %v6498
    %6905 = vmatpush.bf16.msra.mxu0 %v6496
    %6906 = vmatpush.bf16.msra.mxu0 %v6494
    %6907 = vmatpush.bf16.msra.mxu0 %v6492
    %6908 = vmatpush.bf16.msra.mxu0 %v6490
    %6909 = vmatpush.bf16.msra.mxu0 %v6488
    %6910 = vmatpush.bf16.msra.mxu0 %v6486
    %6911 = vmatmul.bf16.gmra.mxu0 %v6015
    %v6912 = vpop.f32.mrf.mxu0
    %v6913 = vadd.f32 %v6884, %v6912
    %v6914 = vpop.f32.mrf.mxu0
    %v6915 = vadd.f32 %v6886, %v6914
    %6916 = vmatmul.bf16.gmra.mxu0 %v6017
    %v6917 = vpop.f32.mrf.mxu0
    %v6918 = vadd.f32 %v6889, %v6917
    %v6919 = vpop.f32.mrf.mxu0
    %v6920 = vadd.f32 %v6891, %v6919
    %6921 = vmatmul.bf16.gmra.mxu0 %v6019
    %v6922 = vpop.f32.mrf.mxu0
    %v6923 = vadd.f32 %v6894, %v6922
    %v6924 = vpop.f32.mrf.mxu0
    %v6925 = vadd.f32 %v6896, %v6924
    %6926 = vmatmul.bf16.gmra.mxu0 %v6021
    %v6927 = vpop.f32.mrf.mxu0
    %v6928 = vadd.f32 %v6899, %v6927
    %v6929 = vpop.f32.mrf.mxu0
    %v6930 = vadd.f32 %v6901, %v6929
    %6931 = vdwg.mxu0
    %6932 = vmatpush.bf16.msra.mxu0 %v6516
    %6933 = vmatpush.bf16.msra.mxu0 %v6514
    %6934 = vmatpush.bf16.msra.mxu0 %v6512
    %6935 = vmatpush.bf16.msra.mxu0 %v6510
    %6936 = vmatpush.bf16.msra.mxu0 %v6508
    %6937 = vmatpush.bf16.msra.mxu0 %v6506
    %6938 = vmatpush.bf16.msra.mxu0 %v6504
    %6939 = vmatpush.bf16.msra.mxu0 %v6502
    %6940 = vmatmul.bf16.gmra.mxu0 %v6016
    %v6941 = vpop.f32.mrf.mxu0
    %v6942 = vadd.f32 %v6913, %v6941
    %v6943 = vpop.f32.mrf.mxu0
    %v6944 = vadd.f32 %v6915, %v6943
    %6945 = vmatmul.bf16.gmra.mxu0 %v6018
    %v6946 = vpop.f32.mrf.mxu0
    %v6947 = vadd.f32 %v6918, %v6946
    %v6948 = vpop.f32.mrf.mxu0
    %v6949 = vadd.f32 %v6920, %v6948
    %6950 = vmatmul.bf16.gmra.mxu0 %v6020
    %v6951 = vpop.f32.mrf.mxu0
    %v6952 = vadd.f32 %v6923, %v6951
    %v6953 = vpop.f32.mrf.mxu0
    %v6954 = vadd.f32 %v6925, %v6953
    %6955 = vmatmul.bf16.gmra.mxu0 %v6022
    %v6956 = vpop.f32.mrf.mxu0
    %v6957 = vadd.f32 %v6928, %v6956
    %v6958 = vpop.f32.mrf.mxu0
    %v6959 = vadd.f32 %v6930, %v6958
    %6960 = vdwg.mxu0
    %v6961 = vmax.f32 %v6768, 0.0
    %v6962 = vmax.f32 %v6942, 0.0
    %v6963 = vmax.f32 %v6770, 0.0
    %v6964 = vmax.f32 %v6944, 0.0
    %v6965 = vmax.f32 %v6773, 0.0
    %v6966 = vmax.f32 %v6947, 0.0
    %v6967 = vmax.f32 %v6775, 0.0
    %v6968 = vmax.f32 %v6949, 0.0
    %v6969 = vmax.f32 %v6778, 0.0
    %v6970 = vmax.f32 %v6952, 0.0
    %v6971 = vmax.f32 %v6780, 0.0
    %v6972 = vmax.f32 %v6954, 0.0
    %v6973 = vmax.f32 %v6783, 0.0
    %v6974 = vmax.f32 %v6957, 0.0
    %v6975 = vmax.f32 %v6785, 0.0
    %v6976 = vmax.f32 %v6959, 0.0
    %vm6977 = vcmp.lt.s32.totalorder %v327, 0
    %v6978 = vsub.s32 0, %v327
    %v6979 = vsel %vm6977, %v6978, %v327
    %v6980 = vshrl.u32 %v6979, 3
    %v6981 = vand.u32 %v6979, 7
    %v6982 = vsub.s32 0, %v6981
    %v6983 = vsel %vm6977, %v6982, %v6981
    %vm6984 = vcmp.lt.s32.totalorder %v328, 0
    %v6985 = vsub.s32 0, %v328
    %v6986 = vsel %vm6984, %v6985, %v328
    %v6987 = vshrl.u32 %v6986, 3
    %v6988 = vand.u32 %v6986, 7
    %v6989 = vsub.s32 0, %v6988
    %v6990 = vsel %vm6984, %v6989, %v6988
    %vm6991 = vcmp.lt.s32.totalorder %v329, 0
    %v6992 = vsub.s32 0, %v329
    %v6993 = vsel %vm6991, %v6992, %v329
    %v6994 = vshrl.u32 %v6993, 3
    %v6995 = vand.u32 %v6993, 7
    %v6996 = vsub.s32 0, %v6995
    %v6997 = vsel %vm6991, %v6996, %v6995
    %vm6998 = vcmp.lt.s32.totalorder %v330, 0
    %v6999 = vsub.s32 0, %v330
    %v7000 = vsel %vm6998, %v6999, %v330
    %v7001 = vshrl.u32 %v7000, 3
    %v7002 = vand.u32 %v7000, 7
    %v7003 = vsub.s32 0, %v7002
    %v7004 = vsel %vm6998, %v7003, %v7002
    %vm7005 = vcmp.lt.s32.totalorder %v331, 0
    %v7006 = vsub.s32 0, %v331
    %v7007 = vsel %vm7005, %v7006, %v331
    %v7008 = vshrl.u32 %v7007, 3
    %v7009 = vand.u32 %v7007, 7
    %v7010 = vsub.s32 0, %v7009
    %v7011 = vsel %vm7005, %v7010, %v7009
    %vm7012 = vcmp.lt.s32.totalorder %v332, 0
    %v7013 = vsub.s32 0, %v332
    %v7014 = vsel %vm7012, %v7013, %v332
    %v7015 = vshrl.u32 %v7014, 3
    %v7016 = vand.u32 %v7014, 7
    %v7017 = vsub.s32 0, %v7016
    %v7018 = vsel %vm7012, %v7017, %v7016
    %vm7019 = vcmp.lt.s32.totalorder %v333, 0
    %v7020 = vsub.s32 0, %v333
    %v7021 = vsel %vm7019, %v7020, %v333
    %v7022 = vshrl.u32 %v7021, 3
    %v7023 = vand.u32 %v7021, 7
    %v7024 = vsub.s32 0, %v7023
    %v7025 = vsel %vm7019, %v7024, %v7023
    %vm7026 = vcmp.lt.s32.totalorder %v334, 0
    %v7027 = vsub.s32 0, %v334
    %v7028 = vsel %vm7026, %v7027, %v334
    %v7029 = vshrl.u32 %v7028, 3
    %v7030 = vand.u32 %v7028, 7
    %v7031 = vsub.s32 0, %v7030
    %v7032 = vsel %vm7026, %v7031, %v7030
    %vm7033 = vcmp.ne.s32.totalorder %v6983, 0
    %vm7034 = vcmp.ne.s32.totalorder %v6990, 0
    %vm7035 = vcmp.ne.s32.totalorder %v6997, 0
    %vm7036 = vcmp.ne.s32.totalorder %v7004, 0
    %vm7037 = vcmp.ne.s32.totalorder %v7011, 0
    %vm7038 = vcmp.ne.s32.totalorder %v7018, 0
    %vm7039 = vcmp.ne.s32.totalorder %v7025, 0
    %vm7040 = vcmp.ne.s32.totalorder %v7032, 0
    %vm7041 = vcmp.lt.s32.totalorder %v6983, 0
    %vm7042 = vcmp.lt.s32.totalorder %v6990, 0
    %vm7043 = vcmp.lt.s32.totalorder %v6997, 0
    %vm7044 = vcmp.lt.s32.totalorder %v7004, 0
    %vm7045 = vcmp.lt.s32.totalorder %v7011, 0
    %vm7046 = vcmp.lt.s32.totalorder %v7018, 0
    %vm7047 = vcmp.lt.s32.totalorder %v7025, 0
    %vm7048 = vcmp.lt.s32.totalorder %v7032, 0
    %vm7049 = vmand %vm7041, %vm7033
    %vm7050 = vmand %vm7042, %vm7034
    %vm7051 = vmand %vm7043, %vm7035
    %vm7052 = vmand %vm7044, %vm7036
    %vm7053 = vmand %vm7045, %vm7037
    %vm7054 = vmand %vm7046, %vm7038
    %vm7055 = vmand %vm7047, %vm7039
    %vm7056 = vmand %vm7048, %vm7040
    %v7057 = vadd.s32 %v6983, 8
    %v7058 = vadd.s32 %v6990, 8
    %v7059 = vadd.s32 %v6997, 8
    %v7060 = vadd.s32 %v7004, 8
    %v7061 = vadd.s32 %v7011, 8
    %v7062 = vadd.s32 %v7018, 8
    %v7063 = vadd.s32 %v7025, 8
    %v7064 = vadd.s32 %v7032, 8
    %v7065 = vsel %vm7049, %v7057, %v6983
    %v7066 = vsel %vm7050, %v7058, %v6990
    %v7067 = vsel %vm7051, %v7059, %v6997
    %v7068 = vsel %vm7052, %v7060, %v7004
    %v7069 = vsel %vm7053, %v7061, %v7011
    %v7070 = vsel %vm7054, %v7062, %v7018
    %v7071 = vsel %vm7055, %v7063, %v7025
    %v7072 = vsel %vm7056, %v7064, %v7032
    %vm7073 = vcmp.ne.s32.totalorder %v7065, 0
    %vm7074 = vcmp.ne.s32.totalorder %v7066, 0
    %vm7075 = vcmp.ne.s32.totalorder %v7067, 0
    %vm7076 = vcmp.ne.s32.totalorder %v7068, 0
    %vm7077 = vcmp.ne.s32.totalorder %v7069, 0
    %vm7078 = vcmp.ne.s32.totalorder %v7070, 0
    %vm7079 = vcmp.ne.s32.totalorder %v7071, 0
    %vm7080 = vcmp.ne.s32.totalorder %v7072, 0
    %v7083 = vrot.slane %v6975, 7
    %v7084 = vrot.slane %v6976, 7
    %v7101 = vrot.slane %v6961, 7
    %v7102 = vrot.slane %v6962, 7
    %v7103 = vrot.slane %v6963, 7
    %v7104 = vsel %vm569, %v7101, %v7103
    %v7105 = vrot.slane %v6964, 7
    %v7106 = vsel %vm569, %v7102, %v7105
    %v7107 = vrot.slane %v6965, 7
    %v7108 = vsel %vm569, %v7103, %v7107
    %v7109 = vrot.slane %v6966, 7
    %v7110 = vsel %vm569, %v7105, %v7109
    %v7111 = vrot.slane %v6967, 7
    %v7112 = vsel %vm569, %v7107, %v7111
    %v7113 = vrot.slane %v6968, 7
    %v7114 = vsel %vm569, %v7109, %v7113
    %v7115 = vrot.slane %v6969, 7
    %v7116 = vsel %vm569, %v7111, %v7115
    %v7117 = vrot.slane %v6970, 7
    %v7118 = vsel %vm569, %v7113, %v7117
    %v7119 = vrot.slane %v6971, 7
    %v7120 = vsel %vm569, %v7115, %v7119
    %v7121 = vrot.slane %v6972, 7
    %v7122 = vsel %vm569, %v7117, %v7121
    %v7123 = vrot.slane %v6973, 7
    %v7124 = vsel %vm569, %v7119, %v7123
    %v7125 = vrot.slane %v6974, 7
    %v7126 = vsel %vm569, %v7121, %v7125
    %v7127 = vsel %vm569, %v7123, %v7083
    %v7128 = vsel %vm569, %v7125, %v7084
    %v7145 = vsel %vm569, %v7083, %v7101
    %v7146 = vsel %vm569, %v7084, %v7102
    %v7147 = vsel %vm7073, 1, 0
    %v7148 = vsel %vm7074, 1, 0
    %v7149 = vsel %vm7075, 1, 0
    %v7150 = vsel %vm7076, 1, 0
    %v7151 = vsel %vm7077, 1, 0
    %v7152 = vsel %vm7078, 1, 0
    %v7153 = vsel %vm7079, 1, 0
    %v7154 = vsel %vm7080, 1, 0
    %vm7155 = vcmp.eq.s32.totalorder %v7147, 1
    %vm7156 = vcmp.eq.s32.totalorder %v7148, 1
    %vm7157 = vcmp.eq.s32.totalorder %v7149, 1
    %vm7158 = vcmp.eq.s32.totalorder %v7150, 1
    %vm7159 = vcmp.eq.s32.totalorder %v7151, 1
    %vm7160 = vcmp.eq.s32.totalorder %v7152, 1
    %vm7161 = vcmp.eq.s32.totalorder %v7153, 1
    %vm7162 = vcmp.eq.s32.totalorder %v7154, 1
    %v7163 = vsel %vm7155, %v7145, 0.0
    %v7164 = vsel %vm7155, %v7146, 0.0
    %v7165 = vsel %vm7156, %v7104, 0.0
    %v7166 = vsel %vm7156, %v7106, 0.0
    %v7167 = vsel %vm7157, %v7108, 0.0
    %v7168 = vsel %vm7157, %v7110, 0.0
    %v7169 = vsel %vm7158, %v7112, 0.0
    %v7170 = vsel %vm7158, %v7114, 0.0
    %v7171 = vsel %vm7159, %v7116, 0.0
    %v7172 = vsel %vm7159, %v7118, 0.0
    %v7173 = vsel %vm7160, %v7120, 0.0
    %v7174 = vsel %vm7160, %v7122, 0.0
    %v7175 = vsel %vm7161, %v7124, 0.0
    %v7176 = vsel %vm7161, %v7126, 0.0
    %v7177 = vsel %vm7162, %v7127, 0.0
    %v7178 = vsel %vm7162, %v7128, 0.0
    %vm7179 = vcmp.ne.s32.totalorder %v7065, 7
    %vm7180 = vcmp.ne.s32.totalorder %v7066, 7
    %vm7181 = vcmp.ne.s32.totalorder %v7067, 7
    %vm7182 = vcmp.ne.s32.totalorder %v7068, 7
    %vm7183 = vcmp.ne.s32.totalorder %v7069, 7
    %vm7184 = vcmp.ne.s32.totalorder %v7070, 7
    %vm7185 = vcmp.ne.s32.totalorder %v7071, 7
    %vm7186 = vcmp.ne.s32.totalorder %v7072, 7
    %v7187 = vrot.slane %v6961, 1
    %v7188 = vrot.slane %v6963, 1
    %v7189 = vsel %vm681, %v7187, %v7188
    %v7190 = vrot.slane %v6962, 1
    %v7191 = vrot.slane %v6964, 1
    %v7192 = vsel %vm681, %v7190, %v7191
    %v7193 = vrot.slane %v6965, 1
    %v7194 = vsel %vm681, %v7188, %v7193
    %v7195 = vrot.slane %v6966, 1
    %v7196 = vsel %vm681, %v7191, %v7195
    %v7197 = vrot.slane %v6967, 1
    %v7198 = vsel %vm681, %v7193, %v7197
    %v7199 = vrot.slane %v6968, 1
    %v7200 = vsel %vm681, %v7195, %v7199
    %v7201 = vrot.slane %v6969, 1
    %v7202 = vsel %vm681, %v7197, %v7201
    %v7203 = vrot.slane %v6970, 1
    %v7204 = vsel %vm681, %v7199, %v7203
    %v7205 = vrot.slane %v6971, 1
    %v7206 = vsel %vm681, %v7201, %v7205
    %v7207 = vrot.slane %v6972, 1
    %v7208 = vsel %vm681, %v7203, %v7207
    %v7209 = vrot.slane %v6973, 1
    %v7210 = vsel %vm681, %v7205, %v7209
    %v7211 = vrot.slane %v6974, 1
    %v7212 = vsel %vm681, %v7207, %v7211
    %v7213 = vrot.slane %v6975, 1
    %v7214 = vsel %vm681, %v7209, %v7213
    %v7215 = vrot.slane %v6976, 1
    %v7216 = vsel %vm681, %v7211, %v7215
    %v7235 = vsel %vm681, %v7213, %v7187
    %v7236 = vsel %vm681, %v7215, %v7190
    %v7237 = vsel %vm7179, 1, 0
    %v7238 = vsel %vm7180, 1, 0
    %v7239 = vsel %vm7181, 1, 0
    %v7240 = vsel %vm7182, 1, 0
    %v7241 = vsel %vm7183, 1, 0
    %v7242 = vsel %vm7184, 1, 0
    %v7243 = vsel %vm7185, 1, 0
    %v7244 = vsel %vm7186, 1, 0
    %vm7245 = vcmp.eq.s32.totalorder %v7237, 1
    %vm7246 = vcmp.eq.s32.totalorder %v7238, 1
    %vm7247 = vcmp.eq.s32.totalorder %v7239, 1
    %vm7248 = vcmp.eq.s32.totalorder %v7240, 1
    %vm7249 = vcmp.eq.s32.totalorder %v7241, 1
    %vm7250 = vcmp.eq.s32.totalorder %v7242, 1
    %vm7251 = vcmp.eq.s32.totalorder %v7243, 1
    %vm7252 = vcmp.eq.s32.totalorder %v7244, 1
    %v7253 = vsel %vm7245, %v7189, 0.0
    %v7254 = vsel %vm7245, %v7192, 0.0
    %v7255 = vsel %vm7246, %v7194, 0.0
    %v7256 = vsel %vm7246, %v7196, 0.0
    %v7257 = vsel %vm7247, %v7198, 0.0
    %v7258 = vsel %vm7247, %v7200, 0.0
    %v7259 = vsel %vm7248, %v7202, 0.0
    %v7260 = vsel %vm7248, %v7204, 0.0
    %v7261 = vsel %vm7249, %v7206, 0.0
    %v7262 = vsel %vm7249, %v7208, 0.0
    %v7263 = vsel %vm7250, %v7210, 0.0
    %v7264 = vsel %vm7250, %v7212, 0.0
    %v7265 = vsel %vm7251, %v7214, 0.0
    %v7266 = vsel %vm7251, %v7216, 0.0
    %v7267 = vsel %vm7252, %v7235, 0.0
    %v7268 = vsel %vm7252, %v7236, 0.0
    %v7269 = vpack.c.bf16 %v7164, %v7163
    %v7270 = vpack.c.bf16 %v7166, %v7165
    %v7271 = vpack.c.bf16 %v7168, %v7167
    %v7272 = vpack.c.bf16 %v7170, %v7169
    %v7273 = vpack.c.bf16 %v7172, %v7171
    %v7274 = vpack.c.bf16 %v7174, %v7173
    %v7275 = vpack.c.bf16 %v7176, %v7175
    %v7276 = vpack.c.bf16 %v7178, %v7177
    %v7277 = vpack.c.bf16 %v6962, %v6961
    %v7278 = vpack.c.bf16 %v6964, %v6963
    %v7279 = vpack.c.bf16 %v6966, %v6965
    %v7280 = vpack.c.bf16 %v6968, %v6967
    %v7281 = vpack.c.bf16 %v6970, %v6969
    %v7282 = vpack.c.bf16 %v6972, %v6971
    %v7283 = vpack.c.bf16 %v6974, %v6973
    %v7284 = vpack.c.bf16 %v6976, %v6975
    %v7285 = vpack.c.bf16 %v7254, %v7253
    %v7286 = vpack.c.bf16 %v7256, %v7255
    %v7287 = vpack.c.bf16 %v7258, %v7257
    %v7288 = vpack.c.bf16 %v7260, %v7259
    %v7289 = vpack.c.bf16 %v7262, %v7261
    %v7290 = vpack.c.bf16 %v7264, %v7263
    %v7291 = vpack.c.bf16 %v7266, %v7265
    %v7292 = vpack.c.bf16 %v7268, %v7267
    %v7301 = vunpack.c.l.b16 %v7269
    %v7302 = vunpack.c.h.b16 %v7269
    %v7303 = vunpack.c.l.b16 %v7270
    %v7304 = vunpack.c.h.b16 %v7270
    %v7305 = vunpack.c.l.b16 %v7271
    %v7306 = vunpack.c.h.b16 %v7271
    %v7307 = vunpack.c.l.b16 %v7272
    %v7308 = vunpack.c.h.b16 %v7272
    %v7309 = vunpack.c.l.b16 %v7273
    %v7310 = vunpack.c.h.b16 %v7273
    %v7311 = vunpack.c.l.b16 %v7274
    %v7312 = vunpack.c.h.b16 %v7274
    %v7313 = vunpack.c.l.b16 %v7275
    %v7314 = vunpack.c.h.b16 %v7275
    %v7315 = vunpack.c.l.b16 %v7276
    %v7316 = vunpack.c.h.b16 %v7276
    %v7317 = vpack.c.b16 %v7303, %v7301
    %v7318 = vpack.c.b16 %v7304, %v7302
    %v7319 = vpack.c.b16 %v7307, %v7305
    %v7320 = vpack.c.b16 %v7308, %v7306
    %v7321 = vpack.c.b16 %v7311, %v7309
    %v7322 = vpack.c.b16 %v7312, %v7310
    %v7323 = vpack.c.b16 %v7315, %v7313
    %v7324 = vpack.c.b16 %v7316, %v7314
    %v7341 = vunpack.c.l.b16 %v7277
    %v7342 = vunpack.c.h.b16 %v7277
    %v7343 = vunpack.c.l.b16 %v7278
    %v7344 = vunpack.c.h.b16 %v7278
    %v7345 = vunpack.c.l.b16 %v7279
    %v7346 = vunpack.c.h.b16 %v7279
    %v7347 = vunpack.c.l.b16 %v7280
    %v7348 = vunpack.c.h.b16 %v7280
    %v7349 = vunpack.c.l.b16 %v7281
    %v7350 = vunpack.c.h.b16 %v7281
    %v7351 = vunpack.c.l.b16 %v7282
    %v7352 = vunpack.c.h.b16 %v7282
    %v7353 = vunpack.c.l.b16 %v7283
    %v7354 = vunpack.c.h.b16 %v7283
    %v7355 = vunpack.c.l.b16 %v7284
    %v7356 = vunpack.c.h.b16 %v7284
    %v7357 = vpack.c.b16 %v7343, %v7341
    %v7358 = vpack.c.b16 %v7344, %v7342
    %v7359 = vpack.c.b16 %v7347, %v7345
    %v7360 = vpack.c.b16 %v7348, %v7346
    %v7361 = vpack.c.b16 %v7351, %v7349
    %v7362 = vpack.c.b16 %v7352, %v7350
    %v7363 = vpack.c.b16 %v7355, %v7353
    %v7364 = vpack.c.b16 %v7356, %v7354
    %v7381 = vunpack.c.l.b16 %v7285
    %v7382 = vunpack.c.h.b16 %v7285
    %v7383 = vunpack.c.l.b16 %v7286
    %v7384 = vunpack.c.h.b16 %v7286
    %v7385 = vunpack.c.l.b16 %v7287
    %v7386 = vunpack.c.h.b16 %v7287
    %v7387 = vunpack.c.l.b16 %v7288
    %v7388 = vunpack.c.h.b16 %v7288
    %v7389 = vunpack.c.l.b16 %v7289
    %v7390 = vunpack.c.h.b16 %v7289
    %v7391 = vunpack.c.l.b16 %v7290
    %v7392 = vunpack.c.h.b16 %v7290
    %v7393 = vunpack.c.l.b16 %v7291
    %v7394 = vunpack.c.h.b16 %v7291
    %v7395 = vunpack.c.l.b16 %v7292
    %v7396 = vunpack.c.h.b16 %v7292
    %v7397 = vpack.c.b16 %v7383, %v7381
    %v7398 = vpack.c.b16 %v7384, %v7382
    %v7399 = vpack.c.b16 %v7387, %v7385
    %v7400 = vpack.c.b16 %v7388, %v7386
    %v7401 = vpack.c.b16 %v7391, %v7389
    %v7402 = vpack.c.b16 %v7392, %v7390
    %v7403 = vpack.c.b16 %v7395, %v7393
    %v7404 = vpack.c.b16 %v7396, %v7394
    %v7413 = vld [vmem:[%s14] sm:$0xff]
    %v7414 = vld [vmem:[%s14 + $0x8] sm:$0xff]
    %v7415 = vld [vmem:[%s14 + $0x10] sm:$0xff]
    %v7416 = vld [vmem:[%s14 + $0x18] sm:$0xff]
    %v7417 = vld [vmem:[%s14 + $0x20] sm:$0xff]
    %v7418 = vld [vmem:[%s14 + $0x28] sm:$0xff]
    %v7419 = vld [vmem:[%s14 + $0x30] sm:$0xff]
    %v7420 = vld [vmem:[%s14 + $0x38] sm:$0xff]
    %v7421 = vld [vmem:[%s14 + $0x40] sm:$0xff]
    %v7422 = vld [vmem:[%s14 + $0x48] sm:$0xff]
    %v7423 = vld [vmem:[%s14 + $0x50] sm:$0xff]
    %v7424 = vld [vmem:[%s14 + $0x58] sm:$0xff]
    %v7425 = vld [vmem:[%s14 + $0x60] sm:$0xff]
    %v7426 = vld [vmem:[%s14 + $0x68] sm:$0xff]
    %v7427 = vld [vmem:[%s14 + $0x70] sm:$0xff]
    %v7428 = vld [vmem:[%s14 + $0x78] sm:$0xff]
    %v7429 = vld [vmem:[%s14 + $0x80] sm:$0xff]
    %v7430 = vld [vmem:[%s14 + $0x88] sm:$0xff]
    %v7431 = vld [vmem:[%s14 + $0x90] sm:$0xff]
    %v7432 = vld [vmem:[%s14 + $0x98] sm:$0xff]
    %v7433 = vld [vmem:[%s14 + $0xa0] sm:$0xff]
    %v7434 = vld [vmem:[%s14 + $0xa8] sm:$0xff]
    %v7435 = vld [vmem:[%s14 + $0xb0] sm:$0xff]
    %v7436 = vld [vmem:[%s14 + $0xb8] sm:$0xff]
    %v7437 = vld [vmem:[%s14 + $0xc0] sm:$0xff]
    %v7438 = vld [vmem:[%s14 + $0xc8] sm:$0xff]
    %v7439 = vld [vmem:[%s14 + $0xd0] sm:$0xff]
    %v7440 = vld [vmem:[%s14 + $0xd8] sm:$0xff]
    %v7441 = vld [vmem:[%s14 + $0xe0] sm:$0xff]
    %v7442 = vld [vmem:[%s14 + $0xe8] sm:$0xff]
    %v7443 = vld [vmem:[%s14 + $0xf0] sm:$0xff]
    %v7444 = vld [vmem:[%s14 + $0xf8] sm:$0xff]
    %v7445 = vld [vmem:[%s14 + $0x100] sm:$0xff]
    %v7446 = vld [vmem:[%s14 + $0x108] sm:$0xff]
    %v7447 = vld [vmem:[%s14 + $0x110] sm:$0xff]
    %v7448 = vld [vmem:[%s14 + $0x118] sm:$0xff]
    %v7449 = vld [vmem:[%s14 + $0x120] sm:$0xff]
    %v7450 = vld [vmem:[%s14 + $0x128] sm:$0xff]
    %v7451 = vld [vmem:[%s14 + $0x130] sm:$0xff]
    %v7452 = vld [vmem:[%s14 + $0x138] sm:$0xff]
    %v7453 = vld [vmem:[%s14 + $0x140] sm:$0xff]
    %v7454 = vld [vmem:[%s14 + $0x148] sm:$0xff]
    %v7455 = vld [vmem:[%s14 + $0x150] sm:$0xff]
    %v7456 = vld [vmem:[%s14 + $0x158] sm:$0xff]
    %v7457 = vld [vmem:[%s14 + $0x160] sm:$0xff]
    %v7458 = vld [vmem:[%s14 + $0x168] sm:$0xff]
    %v7459 = vld [vmem:[%s14 + $0x170] sm:$0xff]
    %v7460 = vld [vmem:[%s14 + $0x178] sm:$0xff]
    %v7461 = vld [vmem:[%s14 + $0x180] sm:$0xff]
    %v7462 = vld [vmem:[%s14 + $0x188] sm:$0xff]
    %v7463 = vld [vmem:[%s14 + $0x190] sm:$0xff]
    %v7464 = vld [vmem:[%s14 + $0x198] sm:$0xff]
    %v7465 = vld [vmem:[%s14 + $0x1a0] sm:$0xff]
    %v7466 = vld [vmem:[%s14 + $0x1a8] sm:$0xff]
    %v7467 = vld [vmem:[%s14 + $0x1b0] sm:$0xff]
    %v7468 = vld [vmem:[%s14 + $0x1b8] sm:$0xff]
    %v7469 = vld [vmem:[%s14 + $0x1c0] sm:$0xff]
    %v7470 = vld [vmem:[%s14 + $0x1c8] sm:$0xff]
    %v7471 = vld [vmem:[%s14 + $0x1d0] sm:$0xff]
    %v7472 = vld [vmem:[%s14 + $0x1d8] sm:$0xff]
    %v7473 = vld [vmem:[%s14 + $0x1e0] sm:$0xff]
    %v7474 = vld [vmem:[%s14 + $0x1e8] sm:$0xff]
    %v7475 = vld [vmem:[%s14 + $0x1f0] sm:$0xff]
    %v7476 = vld [vmem:[%s14 + $0x1f8] sm:$0xff]
    %v7477 = vld [vmem:[%s14 + $0x200] sm:$0xff]
    %v7478 = vld [vmem:[%s14 + $0x208] sm:$0xff]
    %v7479 = vld [vmem:[%s14 + $0x210] sm:$0xff]
    %v7480 = vld [vmem:[%s14 + $0x218] sm:$0xff]
    %v7481 = vld [vmem:[%s14 + $0x220] sm:$0xff]
    %v7482 = vld [vmem:[%s14 + $0x228] sm:$0xff]
    %v7483 = vld [vmem:[%s14 + $0x230] sm:$0xff]
    %v7484 = vld [vmem:[%s14 + $0x238] sm:$0xff]
    %v7485 = vld [vmem:[%s14 + $0x240] sm:$0xff]
    %v7486 = vld [vmem:[%s14 + $0x248] sm:$0xff]
    %v7487 = vld [vmem:[%s14 + $0x250] sm:$0xff]
    %v7488 = vld [vmem:[%s14 + $0x258] sm:$0xff]
    %v7489 = vld [vmem:[%s14 + $0x260] sm:$0xff]
    %v7490 = vld [vmem:[%s14 + $0x268] sm:$0xff]
    %v7491 = vld [vmem:[%s14 + $0x270] sm:$0xff]
    %v7492 = vld [vmem:[%s14 + $0x278] sm:$0xff]
    %v7493 = vld [vmem:[%s14 + $0x280] sm:$0xff]
    %v7494 = vld [vmem:[%s14 + $0x288] sm:$0xff]
    %v7495 = vld [vmem:[%s14 + $0x290] sm:$0xff]
    %v7496 = vld [vmem:[%s14 + $0x298] sm:$0xff]
    %v7497 = vld [vmem:[%s14 + $0x2a0] sm:$0xff]
    %v7498 = vld [vmem:[%s14 + $0x2a8] sm:$0xff]
    %v7499 = vld [vmem:[%s14 + $0x2b0] sm:$0xff]
    %v7500 = vld [vmem:[%s14 + $0x2b8] sm:$0xff]
    %v7501 = vld [vmem:[%s14 + $0x2c0] sm:$0xff]
    %v7502 = vld [vmem:[%s14 + $0x2c8] sm:$0xff]
    %v7503 = vld [vmem:[%s14 + $0x2d0] sm:$0xff]
    %v7504 = vld [vmem:[%s14 + $0x2d8] sm:$0xff]
    %v7505 = vld [vmem:[%s14 + $0x2e0] sm:$0xff]
    %v7506 = vld [vmem:[%s14 + $0x2e8] sm:$0xff]
    %v7507 = vld [vmem:[%s14 + $0x2f0] sm:$0xff]
    %v7508 = vld [vmem:[%s14 + $0x2f8] sm:$0xff]
    %v7509 = vld [vmem:[#allocation13] sm:$0x3]
    %v7511 = vperm.slane %v7509, 0
    %v7512 = vperm.slane %v7509, 1
    %v7611 = vunpack.c.l.b16 %v7413
    %v7612 = vunpack.c.h.b16 %v7413
    %v7613 = vunpack.c.l.b16 %v7414
    %v7614 = vunpack.c.h.b16 %v7414
    %v7615 = vunpack.c.l.b16 %v7415
    %v7616 = vunpack.c.h.b16 %v7415
    %v7617 = vunpack.c.l.b16 %v7416
    %v7618 = vunpack.c.h.b16 %v7416
    %v7619 = vunpack.c.l.b16 %v7417
    %v7620 = vunpack.c.h.b16 %v7417
    %v7621 = vunpack.c.l.b16 %v7418
    %v7622 = vunpack.c.h.b16 %v7418
    %v7623 = vunpack.c.l.b16 %v7419
    %v7624 = vunpack.c.h.b16 %v7419
    %v7625 = vunpack.c.l.b16 %v7420
    %v7626 = vunpack.c.h.b16 %v7420
    %v7627 = vunpack.c.l.b16 %v7421
    %v7628 = vunpack.c.h.b16 %v7421
    %v7629 = vunpack.c.l.b16 %v7422
    %v7630 = vunpack.c.h.b16 %v7422
    %v7631 = vunpack.c.l.b16 %v7423
    %v7632 = vunpack.c.h.b16 %v7423
    %v7633 = vunpack.c.l.b16 %v7424
    %v7634 = vunpack.c.h.b16 %v7424
    %v7635 = vunpack.c.l.b16 %v7425
    %v7636 = vunpack.c.h.b16 %v7425
    %v7637 = vunpack.c.l.b16 %v7426
    %v7638 = vunpack.c.h.b16 %v7426
    %v7639 = vunpack.c.l.b16 %v7427
    %v7640 = vunpack.c.h.b16 %v7427
    %v7641 = vunpack.c.l.b16 %v7428
    %v7642 = vunpack.c.h.b16 %v7428
    %v7643 = vunpack.c.l.b16 %v7429
    %v7644 = vunpack.c.h.b16 %v7429
    %v7645 = vunpack.c.l.b16 %v7430
    %v7646 = vunpack.c.h.b16 %v7430
    %v7647 = vunpack.c.l.b16 %v7431
    %v7648 = vunpack.c.h.b16 %v7431
    %v7649 = vunpack.c.l.b16 %v7432
    %v7650 = vunpack.c.h.b16 %v7432
    %v7651 = vunpack.c.l.b16 %v7433
    %v7652 = vunpack.c.h.b16 %v7433
    %v7653 = vunpack.c.l.b16 %v7434
    %v7654 = vunpack.c.h.b16 %v7434
    %v7655 = vunpack.c.l.b16 %v7435
    %v7656 = vunpack.c.h.b16 %v7435
    %v7657 = vunpack.c.l.b16 %v7436
    %v7658 = vunpack.c.h.b16 %v7436
    %v7659 = vunpack.c.l.b16 %v7437
    %v7660 = vunpack.c.h.b16 %v7437
    %v7661 = vunpack.c.l.b16 %v7438
    %v7662 = vunpack.c.h.b16 %v7438
    %v7663 = vunpack.c.l.b16 %v7439
    %v7664 = vunpack.c.h.b16 %v7439
    %v7665 = vunpack.c.l.b16 %v7440
    %v7666 = vunpack.c.h.b16 %v7440
    %v7667 = vunpack.c.l.b16 %v7441
    %v7668 = vunpack.c.h.b16 %v7441
    %v7669 = vunpack.c.l.b16 %v7442
    %v7670 = vunpack.c.h.b16 %v7442
    %v7671 = vunpack.c.l.b16 %v7443
    %v7672 = vunpack.c.h.b16 %v7443
    %v7673 = vunpack.c.l.b16 %v7444
    %v7674 = vunpack.c.h.b16 %v7444
    %v7675 = vunpack.c.l.b16 %v7445
    %v7676 = vunpack.c.h.b16 %v7445
    %v7677 = vunpack.c.l.b16 %v7446
    %v7678 = vunpack.c.h.b16 %v7446
    %v7679 = vunpack.c.l.b16 %v7447
    %v7680 = vunpack.c.h.b16 %v7447
    %v7681 = vunpack.c.l.b16 %v7448
    %v7682 = vunpack.c.h.b16 %v7448
    %v7683 = vunpack.c.l.b16 %v7449
    %v7684 = vunpack.c.h.b16 %v7449
    %v7685 = vunpack.c.l.b16 %v7450
    %v7686 = vunpack.c.h.b16 %v7450
    %v7687 = vunpack.c.l.b16 %v7451
    %v7688 = vunpack.c.h.b16 %v7451
    %v7689 = vunpack.c.l.b16 %v7452
    %v7690 = vunpack.c.h.b16 %v7452
    %v7691 = vunpack.c.l.b16 %v7453
    %v7692 = vunpack.c.h.b16 %v7453
    %v7693 = vunpack.c.l.b16 %v7454
    %v7694 = vunpack.c.h.b16 %v7454
    %v7695 = vunpack.c.l.b16 %v7455
    %v7696 = vunpack.c.h.b16 %v7455
    %v7697 = vunpack.c.l.b16 %v7456
    %v7698 = vunpack.c.h.b16 %v7456
    %v7699 = vunpack.c.l.b16 %v7457
    %v7700 = vunpack.c.h.b16 %v7457
    %v7701 = vunpack.c.l.b16 %v7458
    %v7702 = vunpack.c.h.b16 %v7458
    %v7703 = vunpack.c.l.b16 %v7459
    %v7704 = vunpack.c.h.b16 %v7459
    %v7705 = vunpack.c.l.b16 %v7460
    %v7706 = vunpack.c.h.b16 %v7460
    %v7707 = vunpack.c.l.b16 %v7461
    %v7708 = vunpack.c.h.b16 %v7461
    %v7709 = vunpack.c.l.b16 %v7462
    %v7710 = vunpack.c.h.b16 %v7462
    %v7711 = vunpack.c.l.b16 %v7463
    %v7712 = vunpack.c.h.b16 %v7463
    %v7713 = vunpack.c.l.b16 %v7464
    %v7714 = vunpack.c.h.b16 %v7464
    %v7715 = vunpack.c.l.b16 %v7465
    %v7716 = vunpack.c.h.b16 %v7465
    %v7717 = vunpack.c.l.b16 %v7466
    %v7718 = vunpack.c.h.b16 %v7466
    %v7719 = vunpack.c.l.b16 %v7467
    %v7720 = vunpack.c.h.b16 %v7467
    %v7721 = vunpack.c.l.b16 %v7468
    %v7722 = vunpack.c.h.b16 %v7468
    %v7723 = vunpack.c.l.b16 %v7469
    %v7724 = vunpack.c.h.b16 %v7469
    %v7725 = vunpack.c.l.b16 %v7470
    %v7726 = vunpack.c.h.b16 %v7470
    %v7727 = vunpack.c.l.b16 %v7471
    %v7728 = vunpack.c.h.b16 %v7471
    %v7729 = vunpack.c.l.b16 %v7472
    %v7730 = vunpack.c.h.b16 %v7472
    %v7731 = vunpack.c.l.b16 %v7473
    %v7732 = vunpack.c.h.b16 %v7473
    %v7733 = vunpack.c.l.b16 %v7474
    %v7734 = vunpack.c.h.b16 %v7474
    %v7735 = vunpack.c.l.b16 %v7475
    %v7736 = vunpack.c.h.b16 %v7475
    %v7737 = vunpack.c.l.b16 %v7476
    %v7738 = vunpack.c.h.b16 %v7476
    %v7739 = vunpack.c.l.b16 %v7477
    %v7740 = vunpack.c.h.b16 %v7477
    %v7741 = vunpack.c.l.b16 %v7478
    %v7742 = vunpack.c.h.b16 %v7478
    %v7743 = vunpack.c.l.b16 %v7479
    %v7744 = vunpack.c.h.b16 %v7479
    %v7745 = vunpack.c.l.b16 %v7480
    %v7746 = vunpack.c.h.b16 %v7480
    %v7747 = vunpack.c.l.b16 %v7481
    %v7748 = vunpack.c.h.b16 %v7481
    %v7749 = vunpack.c.l.b16 %v7482
    %v7750 = vunpack.c.h.b16 %v7482
    %v7751 = vunpack.c.l.b16 %v7483
    %v7752 = vunpack.c.h.b16 %v7483
    %v7753 = vunpack.c.l.b16 %v7484
    %v7754 = vunpack.c.h.b16 %v7484
    %v7755 = vunpack.c.l.b16 %v7485
    %v7756 = vunpack.c.h.b16 %v7485
    %v7757 = vunpack.c.l.b16 %v7486
    %v7758 = vunpack.c.h.b16 %v7486
    %v7759 = vunpack.c.l.b16 %v7487
    %v7760 = vunpack.c.h.b16 %v7487
    %v7761 = vunpack.c.l.b16 %v7488
    %v7762 = vunpack.c.h.b16 %v7488
    %v7763 = vunpack.c.l.b16 %v7489
    %v7764 = vunpack.c.h.b16 %v7489
    %v7765 = vunpack.c.l.b16 %v7490
    %v7766 = vunpack.c.h.b16 %v7490
    %v7767 = vunpack.c.l.b16 %v7491
    %v7768 = vunpack.c.h.b16 %v7491
    %v7769 = vunpack.c.l.b16 %v7492
    %v7770 = vunpack.c.h.b16 %v7492
    %v7771 = vunpack.c.l.b16 %v7493
    %v7772 = vunpack.c.h.b16 %v7493
    %v7773 = vunpack.c.l.b16 %v7494
    %v7774 = vunpack.c.h.b16 %v7494
    %v7775 = vunpack.c.l.b16 %v7495
    %v7776 = vunpack.c.h.b16 %v7495
    %v7777 = vunpack.c.l.b16 %v7496
    %v7778 = vunpack.c.h.b16 %v7496
    %v7779 = vunpack.c.l.b16 %v7497
    %v7780 = vunpack.c.h.b16 %v7497
    %v7781 = vunpack.c.l.b16 %v7498
    %v7782 = vunpack.c.h.b16 %v7498
    %v7783 = vunpack.c.l.b16 %v7499
    %v7784 = vunpack.c.h.b16 %v7499
    %v7785 = vunpack.c.l.b16 %v7500
    %v7786 = vunpack.c.h.b16 %v7500
    %v7787 = vunpack.c.l.b16 %v7501
    %v7788 = vunpack.c.h.b16 %v7501
    %v7789 = vunpack.c.l.b16 %v7502
    %v7790 = vunpack.c.h.b16 %v7502
    %v7791 = vunpack.c.l.b16 %v7503
    %v7792 = vunpack.c.h.b16 %v7503
    %v7793 = vunpack.c.l.b16 %v7504
    %v7794 = vunpack.c.h.b16 %v7504
    %v7795 = vunpack.c.l.b16 %v7505
    %v7796 = vunpack.c.h.b16 %v7505
    %v7797 = vunpack.c.l.b16 %v7506
    %v7798 = vunpack.c.h.b16 %v7506
    %v7799 = vunpack.c.l.b16 %v7507
    %v7800 = vunpack.c.h.b16 %v7507
    %v7801 = vunpack.c.l.b16 %v7508
    %v7802 = vunpack.c.h.b16 %v7508
    %v7803 = vpack.c.b16 %v7613, %v7611
    %v7804 = vpack.c.b16 %v7614, %v7612
    %v7805 = vpack.c.b16 %v7617, %v7615
    %v7806 = vpack.c.b16 %v7618, %v7616
    %v7807 = vpack.c.b16 %v7621, %v7619
    %v7808 = vpack.c.b16 %v7622, %v7620
    %v7809 = vpack.c.b16 %v7625, %v7623
    %v7810 = vpack.c.b16 %v7626, %v7624
    %v7811 = vpack.c.b16 %v7629, %v7627
    %v7812 = vpack.c.b16 %v7630, %v7628
    %v7813 = vpack.c.b16 %v7633, %v7631
    %v7814 = vpack.c.b16 %v7634, %v7632
    %v7815 = vpack.c.b16 %v7637, %v7635
    %v7816 = vpack.c.b16 %v7638, %v7636
    %v7817 = vpack.c.b16 %v7641, %v7639
    %v7818 = vpack.c.b16 %v7642, %v7640
    %v7819 = vpack.c.b16 %v7645, %v7643
    %v7820 = vpack.c.b16 %v7646, %v7644
    %v7821 = vpack.c.b16 %v7649, %v7647
    %v7822 = vpack.c.b16 %v7650, %v7648
    %v7823 = vpack.c.b16 %v7653, %v7651
    %v7824 = vpack.c.b16 %v7654, %v7652
    %v7825 = vpack.c.b16 %v7657, %v7655
    %v7826 = vpack.c.b16 %v7658, %v7656
    %v7827 = vpack.c.b16 %v7661, %v7659
    %v7828 = vpack.c.b16 %v7662, %v7660
    %v7829 = vpack.c.b16 %v7665, %v7663
    %v7830 = vpack.c.b16 %v7666, %v7664
    %v7831 = vpack.c.b16 %v7669, %v7667
    %v7832 = vpack.c.b16 %v7670, %v7668
    %v7833 = vpack.c.b16 %v7673, %v7671
    %v7834 = vpack.c.b16 %v7674, %v7672
    %v7835 = vpack.c.b16 %v7677, %v7675
    %v7836 = vpack.c.b16 %v7678, %v7676
    %v7837 = vpack.c.b16 %v7681, %v7679
    %v7838 = vpack.c.b16 %v7682, %v7680
    %v7839 = vpack.c.b16 %v7685, %v7683
    %v7840 = vpack.c.b16 %v7686, %v7684
    %v7841 = vpack.c.b16 %v7689, %v7687
    %v7842 = vpack.c.b16 %v7690, %v7688
    %v7843 = vpack.c.b16 %v7693, %v7691
    %v7844 = vpack.c.b16 %v7694, %v7692
    %v7845 = vpack.c.b16 %v7697, %v7695
    %v7846 = vpack.c.b16 %v7698, %v7696
    %v7847 = vpack.c.b16 %v7701, %v7699
    %v7848 = vpack.c.b16 %v7702, %v7700
    %v7849 = vpack.c.b16 %v7705, %v7703
    %v7850 = vpack.c.b16 %v7706, %v7704
    %v7851 = vpack.c.b16 %v7709, %v7707
    %v7852 = vpack.c.b16 %v7710, %v7708
    %v7853 = vpack.c.b16 %v7713, %v7711
    %v7854 = vpack.c.b16 %v7714, %v7712
    %v7855 = vpack.c.b16 %v7717, %v7715
    %v7856 = vpack.c.b16 %v7718, %v7716
    %v7857 = vpack.c.b16 %v7721, %v7719
    %v7858 = vpack.c.b16 %v7722, %v7720
    %v7859 = vpack.c.b16 %v7725, %v7723
    %v7860 = vpack.c.b16 %v7726, %v7724
    %v7861 = vpack.c.b16 %v7729, %v7727
    %v7862 = vpack.c.b16 %v7730, %v7728
    %v7863 = vpack.c.b16 %v7733, %v7731
    %v7864 = vpack.c.b16 %v7734, %v7732
    %v7865 = vpack.c.b16 %v7737, %v7735
    %v7866 = vpack.c.b16 %v7738, %v7736
    %v7867 = vpack.c.b16 %v7741, %v7739
    %v7868 = vpack.c.b16 %v7742, %v7740
    %v7869 = vpack.c.b16 %v7745, %v7743
    %v7870 = vpack.c.b16 %v7746, %v7744
    %v7871 = vpack.c.b16 %v7749, %v7747
    %v7872 = vpack.c.b16 %v7750, %v7748
    %v7873 = vpack.c.b16 %v7753, %v7751
    %v7874 = vpack.c.b16 %v7754, %v7752
    %v7875 = vpack.c.b16 %v7757, %v7755
    %v7876 = vpack.c.b16 %v7758, %v7756
    %v7877 = vpack.c.b16 %v7761, %v7759
    %v7878 = vpack.c.b16 %v7762, %v7760
    %v7879 = vpack.c.b16 %v7765, %v7763
    %v7880 = vpack.c.b16 %v7766, %v7764
    %v7881 = vpack.c.b16 %v7769, %v7767
    %v7882 = vpack.c.b16 %v7770, %v7768
    %v7883 = vpack.c.b16 %v7773, %v7771
    %v7884 = vpack.c.b16 %v7774, %v7772
    %v7885 = vpack.c.b16 %v7777, %v7775
    %v7886 = vpack.c.b16 %v7778, %v7776
    %v7887 = vpack.c.b16 %v7781, %v7779
    %v7888 = vpack.c.b16 %v7782, %v7780
    %v7889 = vpack.c.b16 %v7785, %v7783
    %v7890 = vpack.c.b16 %v7786, %v7784
    %v7891 = vpack.c.b16 %v7789, %v7787
    %v7892 = vpack.c.b16 %v7790, %v7788
    %v7893 = vpack.c.b16 %v7793, %v7791
    %v7894 = vpack.c.b16 %v7794, %v7792
    %v7895 = vpack.c.b16 %v7797, %v7795
    %v7896 = vpack.c.b16 %v7798, %v7796
    %v7897 = vpack.c.b16 %v7801, %v7799
    %v7898 = vpack.c.b16 %v7802, %v7800
    %7995 = vmatpush.bf16.msra.mxu0 %v7817
    %7996 = vmatpush.bf16.msra.mxu0 %v7815
    %7997 = vmatpush.bf16.msra.mxu0 %v7813
    %7998 = vmatpush.bf16.msra.mxu0 %v7811
    %7999 = vmatpush.bf16.msra.mxu0 %v7809
    %8000 = vmatpush.bf16.msra.mxu0 %v7807
    %8001 = vmatpush.bf16.msra.mxu0 %v7805
    %8002 = vmatpush.bf16.msra.mxu0 %v7803
    %8003 = vmatmul.bf16.gmra.mxu0 %v7317
    %v8004 = vpop.f32.mrf.mxu0
    %v8005 = vadd.f32 %v7511, %v8004
    %v8006 = vpop.f32.mrf.mxu0
    %v8007 = vadd.f32 %v7511, %v8006
    %8008 = vmatmul.bf16.gmra.mxu0 %v7319
    %v8009 = vpop.f32.mrf.mxu0
    %v8010 = vadd.f32 %v7511, %v8009
    %v8011 = vpop.f32.mrf.mxu0
    %v8012 = vadd.f32 %v7511, %v8011
    %8013 = vmatmul.bf16.gmra.mxu0 %v7321
    %v8014 = vpop.f32.mrf.mxu0
    %v8015 = vadd.f32 %v7511, %v8014
    %v8016 = vpop.f32.mrf.mxu0
    %v8017 = vadd.f32 %v7511, %v8016
    %8018 = vmatmul.bf16.gmra.mxu0 %v7323
    %v8019 = vpop.f32.mrf.mxu0
    %v8020 = vadd.f32 %v7511, %v8019
    %v8021 = vpop.f32.mrf.mxu0
    %v8022 = vadd.f32 %v7511, %v8021
    %8023 = vdwg.mxu0
    %8024 = vmatpush.bf16.msra.mxu0 %v7833
    %8025 = vmatpush.bf16.msra.mxu0 %v7831
    %8026 = vmatpush.bf16.msra.mxu0 %v7829
    %8027 = vmatpush.bf16.msra.mxu0 %v7827
    %8028 = vmatpush.bf16.msra.mxu0 %v7825
    %8029 = vmatpush.bf16.msra.mxu0 %v7823
    %8030 = vmatpush.bf16.msra.mxu0 %v7821
    %8031 = vmatpush.bf16.msra.mxu0 %v7819
    %8032 = vmatmul.bf16.gmra.mxu0 %v7318
    %v8033 = vpop.f32.mrf.mxu0
    %v8034 = vadd.f32 %v8005, %v8033
    %v8035 = vpop.f32.mrf.mxu0
    %v8036 = vadd.f32 %v8007, %v8035
    %8037 = vmatmul.bf16.gmra.mxu0 %v7320
    %v8038 = vpop.f32.mrf.mxu0
    %v8039 = vadd.f32 %v8010, %v8038
    %v8040 = vpop.f32.mrf.mxu0
    %v8041 = vadd.f32 %v8012, %v8040
    %8042 = vmatmul.bf16.gmra.mxu0 %v7322
    %v8043 = vpop.f32.mrf.mxu0
    %v8044 = vadd.f32 %v8015, %v8043
    %v8045 = vpop.f32.mrf.mxu0
    %v8046 = vadd.f32 %v8017, %v8045
    %8047 = vmatmul.bf16.gmra.mxu0 %v7324
    %v8048 = vpop.f32.mrf.mxu0
    %v8049 = vadd.f32 %v8020, %v8048
    %v8050 = vpop.f32.mrf.mxu0
    %v8051 = vadd.f32 %v8022, %v8050
    %8052 = vdwg.mxu0
    %8053 = vmatpush.bf16.msra.mxu0 %v7849
    %8054 = vmatpush.bf16.msra.mxu0 %v7847
    %8055 = vmatpush.bf16.msra.mxu0 %v7845
    %8056 = vmatpush.bf16.msra.mxu0 %v7843
    %8057 = vmatpush.bf16.msra.mxu0 %v7841
    %8058 = vmatpush.bf16.msra.mxu0 %v7839
    %8059 = vmatpush.bf16.msra.mxu0 %v7837
    %8060 = vmatpush.bf16.msra.mxu0 %v7835
    %8061 = vmatmul.bf16.gmra.mxu0 %v7357
    %v8062 = vpop.f32.mrf.mxu0
    %v8063 = vadd.f32 %v8034, %v8062
    %v8064 = vpop.f32.mrf.mxu0
    %v8065 = vadd.f32 %v8036, %v8064
    %8066 = vmatmul.bf16.gmra.mxu0 %v7359
    %v8067 = vpop.f32.mrf.mxu0
    %v8068 = vadd.f32 %v8039, %v8067
    %v8069 = vpop.f32.mrf.mxu0
    %v8070 = vadd.f32 %v8041, %v8069
    %8071 = vmatmul.bf16.gmra.mxu0 %v7361
    %v8072 = vpop.f32.mrf.mxu0
    %v8073 = vadd.f32 %v8044, %v8072
    %v8074 = vpop.f32.mrf.mxu0
    %v8075 = vadd.f32 %v8046, %v8074
    %8076 = vmatmul.bf16.gmra.mxu0 %v7363
    %v8077 = vpop.f32.mrf.mxu0
    %v8078 = vadd.f32 %v8049, %v8077
    %v8079 = vpop.f32.mrf.mxu0
    %v8080 = vadd.f32 %v8051, %v8079
    %8081 = vdwg.mxu0
    %8082 = vmatpush.bf16.msra.mxu0 %v7865
    %8083 = vmatpush.bf16.msra.mxu0 %v7863
    %8084 = vmatpush.bf16.msra.mxu0 %v7861
    %8085 = vmatpush.bf16.msra.mxu0 %v7859
    %8086 = vmatpush.bf16.msra.mxu0 %v7857
    %8087 = vmatpush.bf16.msra.mxu0 %v7855
    %8088 = vmatpush.bf16.msra.mxu0 %v7853
    %8089 = vmatpush.bf16.msra.mxu0 %v7851
    %8090 = vmatmul.bf16.gmra.mxu0 %v7358
    %v8091 = vpop.f32.mrf.mxu0
    %v8092 = vadd.f32 %v8063, %v8091
    %v8093 = vpop.f32.mrf.mxu0
    %v8094 = vadd.f32 %v8065, %v8093
    %8095 = vmatmul.bf16.gmra.mxu0 %v7360
    %v8096 = vpop.f32.mrf.mxu0
    %v8097 = vadd.f32 %v8068, %v8096
    %v8098 = vpop.f32.mrf.mxu0
    %v8099 = vadd.f32 %v8070, %v8098
    %8100 = vmatmul.bf16.gmra.mxu0 %v7362
    %v8101 = vpop.f32.mrf.mxu0
    %v8102 = vadd.f32 %v8073, %v8101
    %v8103 = vpop.f32.mrf.mxu0
    %v8104 = vadd.f32 %v8075, %v8103
    %8105 = vmatmul.bf16.gmra.mxu0 %v7364
    %v8106 = vpop.f32.mrf.mxu0
    %v8107 = vadd.f32 %v8078, %v8106
    %v8108 = vpop.f32.mrf.mxu0
    %v8109 = vadd.f32 %v8080, %v8108
    %8110 = vdwg.mxu0
    %8111 = vmatpush.bf16.msra.mxu0 %v7881
    %8112 = vmatpush.bf16.msra.mxu0 %v7879
    %8113 = vmatpush.bf16.msra.mxu0 %v7877
    %8114 = vmatpush.bf16.msra.mxu0 %v7875
    %8115 = vmatpush.bf16.msra.mxu0 %v7873
    %8116 = vmatpush.bf16.msra.mxu0 %v7871
    %8117 = vmatpush.bf16.msra.mxu0 %v7869
    %8118 = vmatpush.bf16.msra.mxu0 %v7867
    %8119 = vmatmul.bf16.gmra.mxu0 %v7397
    %v8120 = vpop.f32.mrf.mxu0
    %v8121 = vadd.f32 %v8092, %v8120
    %v8122 = vpop.f32.mrf.mxu0
    %v8123 = vadd.f32 %v8094, %v8122
    %8124 = vmatmul.bf16.gmra.mxu0 %v7399
    %v8125 = vpop.f32.mrf.mxu0
    %v8126 = vadd.f32 %v8097, %v8125
    %v8127 = vpop.f32.mrf.mxu0
    %v8128 = vadd.f32 %v8099, %v8127
    %8129 = vmatmul.bf16.gmra.mxu0 %v7401
    %v8130 = vpop.f32.mrf.mxu0
    %v8131 = vadd.f32 %v8102, %v8130
    %v8132 = vpop.f32.mrf.mxu0
    %v8133 = vadd.f32 %v8104, %v8132
    %8134 = vmatmul.bf16.gmra.mxu0 %v7403
    %v8135 = vpop.f32.mrf.mxu0
    %v8136 = vadd.f32 %v8107, %v8135
    %v8137 = vpop.f32.mrf.mxu0
    %v8138 = vadd.f32 %v8109, %v8137
    %8139 = vdwg.mxu0
    %8140 = vmatpush.bf16.msra.mxu0 %v7897
    %8141 = vmatpush.bf16.msra.mxu0 %v7895
    %8142 = vmatpush.bf16.msra.mxu0 %v7893
    %8143 = vmatpush.bf16.msra.mxu0 %v7891
    %8144 = vmatpush.bf16.msra.mxu0 %v7889
    %8145 = vmatpush.bf16.msra.mxu0 %v7887
    %8146 = vmatpush.bf16.msra.mxu0 %v7885
    %8147 = vmatpush.bf16.msra.mxu0 %v7883
    %8148 = vmatmul.bf16.gmra.mxu0 %v7398
    %v8149 = vpop.f32.mrf.mxu0
    %v8150 = vadd.f32 %v8121, %v8149
    %v8151 = vpop.f32.mrf.mxu0
    %v8152 = vadd.f32 %v8123, %v8151
    %8153 = vmatmul.bf16.gmra.mxu0 %v7400
    %v8154 = vpop.f32.mrf.mxu0
    %v8155 = vadd.f32 %v8126, %v8154
    %v8156 = vpop.f32.mrf.mxu0
    %v8157 = vadd.f32 %v8128, %v8156
    %8158 = vmatmul.bf16.gmra.mxu0 %v7402
    %v8159 = vpop.f32.mrf.mxu0
    %v8160 = vadd.f32 %v8131, %v8159
    %v8161 = vpop.f32.mrf.mxu0
    %v8162 = vadd.f32 %v8133, %v8161
    %8163 = vmatmul.bf16.gmra.mxu0 %v7404
    %v8164 = vpop.f32.mrf.mxu0
    %v8165 = vadd.f32 %v8136, %v8164
    %v8166 = vpop.f32.mrf.mxu0
    %v8167 = vadd.f32 %v8138, %v8166
    %8168 = vdwg.mxu0
    %8169 = vmatpush.bf16.msra.mxu0 %v7818
    %8170 = vmatpush.bf16.msra.mxu0 %v7816
    %8171 = vmatpush.bf16.msra.mxu0 %v7814
    %8172 = vmatpush.bf16.msra.mxu0 %v7812
    %8173 = vmatpush.bf16.msra.mxu0 %v7810
    %8174 = vmatpush.bf16.msra.mxu0 %v7808
    %8175 = vmatpush.bf16.msra.mxu0 %v7806
    %8176 = vmatpush.bf16.msra.mxu0 %v7804
    %8177 = vmatmul.bf16.gmra.mxu0 %v7317
    %v8178 = vpop.f32.mrf.mxu0
    %v8179 = vadd.f32 %v7512, %v8178
    %v8180 = vpop.f32.mrf.mxu0
    %v8181 = vadd.f32 %v7512, %v8180
    %8182 = vmatmul.bf16.gmra.mxu0 %v7319
    %v8183 = vpop.f32.mrf.mxu0
    %v8184 = vadd.f32 %v7512, %v8183
    %v8185 = vpop.f32.mrf.mxu0
    %v8186 = vadd.f32 %v7512, %v8185
    %8187 = vmatmul.bf16.gmra.mxu0 %v7321
    %v8188 = vpop.f32.mrf.mxu0
    %v8189 = vadd.f32 %v7512, %v8188
    %v8190 = vpop.f32.mrf.mxu0
    %v8191 = vadd.f32 %v7512, %v8190
    %8192 = vmatmul.bf16.gmra.mxu0 %v7323
    %v8193 = vpop.f32.mrf.mxu0
    %v8194 = vadd.f32 %v7512, %v8193
    %v8195 = vpop.f32.mrf.mxu0
    %v8196 = vadd.f32 %v7512, %v8195
    %8197 = vdwg.mxu0
    %8198 = vmatpush.bf16.msra.mxu0 %v7834
    %8199 = vmatpush.bf16.msra.mxu0 %v7832
    %8200 = vmatpush.bf16.msra.mxu0 %v7830
    %8201 = vmatpush.bf16.msra.mxu0 %v7828
    %8202 = vmatpush.bf16.msra.mxu0 %v7826
    %8203 = vmatpush.bf16.msra.mxu0 %v7824
    %8204 = vmatpush.bf16.msra.mxu0 %v7822
    %8205 = vmatpush.bf16.msra.mxu0 %v7820
    %8206 = vmatmul.bf16.gmra.mxu0 %v7318
    %v8207 = vpop.f32.mrf.mxu0
    %v8208 = vadd.f32 %v8179, %v8207
    %v8209 = vpop.f32.mrf.mxu0
    %v8210 = vadd.f32 %v8181, %v8209
    %8211 = vmatmul.bf16.gmra.mxu0 %v7320
    %v8212 = vpop.f32.mrf.mxu0
    %v8213 = vadd.f32 %v8184, %v8212
    %v8214 = vpop.f32.mrf.mxu0
    %v8215 = vadd.f32 %v8186, %v8214
    %8216 = vmatmul.bf16.gmra.mxu0 %v7322
    %v8217 = vpop.f32.mrf.mxu0
    %v8218 = vadd.f32 %v8189, %v8217
    %v8219 = vpop.f32.mrf.mxu0
    %v8220 = vadd.f32 %v8191, %v8219
    %8221 = vmatmul.bf16.gmra.mxu0 %v7324
    %v8222 = vpop.f32.mrf.mxu0
    %v8223 = vadd.f32 %v8194, %v8222
    %v8224 = vpop.f32.mrf.mxu0
    %v8225 = vadd.f32 %v8196, %v8224
    %8226 = vdwg.mxu0
    %8227 = vmatpush.bf16.msra.mxu0 %v7850
    %8228 = vmatpush.bf16.msra.mxu0 %v7848
    %8229 = vmatpush.bf16.msra.mxu0 %v7846
    %8230 = vmatpush.bf16.msra.mxu0 %v7844
    %8231 = vmatpush.bf16.msra.mxu0 %v7842
    %8232 = vmatpush.bf16.msra.mxu0 %v7840
    %8233 = vmatpush.bf16.msra.mxu0 %v7838
    %8234 = vmatpush.bf16.msra.mxu0 %v7836
    %8235 = vmatmul.bf16.gmra.mxu0 %v7357
    %v8236 = vpop.f32.mrf.mxu0
    %v8237 = vadd.f32 %v8208, %v8236
    %v8238 = vpop.f32.mrf.mxu0
    %v8239 = vadd.f32 %v8210, %v8238
    %8240 = vmatmul.bf16.gmra.mxu0 %v7359
    %v8241 = vpop.f32.mrf.mxu0
    %v8242 = vadd.f32 %v8213, %v8241
    %v8243 = vpop.f32.mrf.mxu0
    %v8244 = vadd.f32 %v8215, %v8243
    %8245 = vmatmul.bf16.gmra.mxu0 %v7361
    %v8246 = vpop.f32.mrf.mxu0
    %v8247 = vadd.f32 %v8218, %v8246
    %v8248 = vpop.f32.mrf.mxu0
    %v8249 = vadd.f32 %v8220, %v8248
    %8250 = vmatmul.bf16.gmra.mxu0 %v7363
    %v8251 = vpop.f32.mrf.mxu0
    %v8252 = vadd.f32 %v8223, %v8251
    %v8253 = vpop.f32.mrf.mxu0
    %v8254 = vadd.f32 %v8225, %v8253
    %8255 = vdwg.mxu0
    %8256 = vmatpush.bf16.msra.mxu0 %v7866
    %8257 = vmatpush.bf16.msra.mxu0 %v7864
    %8258 = vmatpush.bf16.msra.mxu0 %v7862
    %8259 = vmatpush.bf16.msra.mxu0 %v7860
    %8260 = vmatpush.bf16.msra.mxu0 %v7858
    %8261 = vmatpush.bf16.msra.mxu0 %v7856
    %8262 = vmatpush.bf16.msra.mxu0 %v7854
    %8263 = vmatpush.bf16.msra.mxu0 %v7852
    %8264 = vmatmul.bf16.gmra.mxu0 %v7358
    %v8265 = vpop.f32.mrf.mxu0
    %v8266 = vadd.f32 %v8237, %v8265
    %v8267 = vpop.f32.mrf.mxu0
    %v8268 = vadd.f32 %v8239, %v8267
    %8269 = vmatmul.bf16.gmra.mxu0 %v7360
    %v8270 = vpop.f32.mrf.mxu0
    %v8271 = vadd.f32 %v8242, %v8270
    %v8272 = vpop.f32.mrf.mxu0
    %v8273 = vadd.f32 %v8244, %v8272
    %8274 = vmatmul.bf16.gmra.mxu0 %v7362
    %v8275 = vpop.f32.mrf.mxu0
    %v8276 = vadd.f32 %v8247, %v8275
    %v8277 = vpop.f32.mrf.mxu0
    %v8278 = vadd.f32 %v8249, %v8277
    %8279 = vmatmul.bf16.gmra.mxu0 %v7364
    %v8280 = vpop.f32.mrf.mxu0
    %v8281 = vadd.f32 %v8252, %v8280
    %v8282 = vpop.f32.mrf.mxu0
    %v8283 = vadd.f32 %v8254, %v8282
    %8284 = vdwg.mxu0
    %8285 = vmatpush.bf16.msra.mxu0 %v7882
    %8286 = vmatpush.bf16.msra.mxu0 %v7880
    %8287 = vmatpush.bf16.msra.mxu0 %v7878
    %8288 = vmatpush.bf16.msra.mxu0 %v7876
    %8289 = vmatpush.bf16.msra.mxu0 %v7874
    %8290 = vmatpush.bf16.msra.mxu0 %v7872
    %8291 = vmatpush.bf16.msra.mxu0 %v7870
    %8292 = vmatpush.bf16.msra.mxu0 %v7868
    %8293 = vmatmul.bf16.gmra.mxu0 %v7397
    %v8294 = vpop.f32.mrf.mxu0
    %v8295 = vadd.f32 %v8266, %v8294
    %v8296 = vpop.f32.mrf.mxu0
    %v8297 = vadd.f32 %v8268, %v8296
    %8298 = vmatmul.bf16.gmra.mxu0 %v7399
    %v8299 = vpop.f32.mrf.mxu0
    %v8300 = vadd.f32 %v8271, %v8299
    %v8301 = vpop.f32.mrf.mxu0
    %v8302 = vadd.f32 %v8273, %v8301
    %8303 = vmatmul.bf16.gmra.mxu0 %v7401
    %v8304 = vpop.f32.mrf.mxu0
    %v8305 = vadd.f32 %v8276, %v8304
    %v8306 = vpop.f32.mrf.mxu0
    %v8307 = vadd.f32 %v8278, %v8306
    %8308 = vmatmul.bf16.gmra.mxu0 %v7403
    %v8309 = vpop.f32.mrf.mxu0
    %v8310 = vadd.f32 %v8281, %v8309
    %v8311 = vpop.f32.mrf.mxu0
    %v8312 = vadd.f32 %v8283, %v8311
    %8313 = vdwg.mxu0
    %8314 = vmatpush.bf16.msra.mxu0 %v7898
    %8315 = vmatpush.bf16.msra.mxu0 %v7896
    %8316 = vmatpush.bf16.msra.mxu0 %v7894
    %8317 = vmatpush.bf16.msra.mxu0 %v7892
    %8318 = vmatpush.bf16.msra.mxu0 %v7890
    %8319 = vmatpush.bf16.msra.mxu0 %v7888
    %8320 = vmatpush.bf16.msra.mxu0 %v7886
    %8321 = vmatpush.bf16.msra.mxu0 %v7884
    %8322 = vmatmul.bf16.gmra.mxu0 %v7398
    %v8323 = vpop.f32.mrf.mxu0
    %v8324 = vadd.f32 %v8295, %v8323
    %v8325 = vpop.f32.mrf.mxu0
    %v8326 = vadd.f32 %v8297, %v8325
    %8327 = vmatmul.bf16.gmra.mxu0 %v7400
    %v8328 = vpop.f32.mrf.mxu0
    %v8329 = vadd.f32 %v8300, %v8328
    %v8330 = vpop.f32.mrf.mxu0
    %v8331 = vadd.f32 %v8302, %v8330
    %8332 = vmatmul.bf16.gmra.mxu0 %v7402
    %v8333 = vpop.f32.mrf.mxu0
    %v8334 = vadd.f32 %v8305, %v8333
    %v8335 = vpop.f32.mrf.mxu0
    %v8336 = vadd.f32 %v8307, %v8335
    %8337 = vmatmul.bf16.gmra.mxu0 %v7404
    %v8338 = vpop.f32.mrf.mxu0
    %v8339 = vadd.f32 %v8310, %v8338
    %v8340 = vpop.f32.mrf.mxu0
    %v8341 = vadd.f32 %v8312, %v8340
    %8342 = vdwg.mxu0
    %v8343 = vadd.f32 %v8150, %v5538
    %v8344 = vadd.f32 %v8324, %v5596
    %v8345 = vadd.f32 %v8152, %v5540
    %v8346 = vadd.f32 %v8326, %v5598
    %v8347 = vadd.f32 %v8155, %v5543
    %v8348 = vadd.f32 %v8329, %v5601
    %v8349 = vadd.f32 %v8157, %v5545
    %v8350 = vadd.f32 %v8331, %v5603
    %v8351 = vadd.f32 %v8160, %v5548
    %v8352 = vadd.f32 %v8334, %v5606
    %v8353 = vadd.f32 %v8162, %v5550
    %v8354 = vadd.f32 %v8336, %v5608
    %v8355 = vadd.f32 %v8165, %v5553
    %v8356 = vadd.f32 %v8339, %v5611
    %v8357 = vadd.f32 %v8167, %v5555
    %v8358 = vadd.f32 %v8341, %v5613
    %v8359 = vmax.f32 %v8343, 0.0
    %v8360 = vmax.f32 %v8344, 0.0
    %v8361 = vmax.f32 %v8345, 0.0
    %v8362 = vmax.f32 %v8346, 0.0
    %v8363 = vmax.f32 %v8347, 0.0
    %v8364 = vmax.f32 %v8348, 0.0
    %v8365 = vmax.f32 %v8349, 0.0
    %v8366 = vmax.f32 %v8350, 0.0
    %v8367 = vmax.f32 %v8351, 0.0
    %v8368 = vmax.f32 %v8352, 0.0
    %v8369 = vmax.f32 %v8353, 0.0
    %v8370 = vmax.f32 %v8354, 0.0
    %v8371 = vmax.f32 %v8355, 0.0
    %v8372 = vmax.f32 %v8356, 0.0
    %v8373 = vmax.f32 %v8357, 0.0
    %v8374 = vmax.f32 %v8358, 0.0
    %v8375 = vpack.c.bf16 %v8361, %v8359
    %v8376 = vpack.c.bf16 %v8362, %v8360
    %v8377 = vpack.c.bf16 %v8365, %v8363
    %v8378 = vpack.c.bf16 %v8366, %v8364
    %v8379 = vpack.c.bf16 %v8369, %v8367
    %v8380 = vpack.c.bf16 %v8370, %v8368
    %v8381 = vpack.c.bf16 %v8373, %v8371
    %v8382 = vpack.c.bf16 %v8374, %v8372
    %v8383 = vld [vmem:[#allocation14] sm:$0xf]
    %v8384 = vld [vmem:[#allocation14 + $0x4] sm:$0xf]
    %v8385 = vld [vmem:[#allocation14 + $0x8] sm:$0xf]
    %v8386 = vld [vmem:[#allocation14 + $0xc] sm:$0xf]
    %v8391 = vunpack.c.l.b16 %v8383
    %v8392 = vunpack.c.l.b16 %v8384
    %v8393 = vunpack.c.l.b16 %v8385
    %v8394 = vunpack.c.l.b16 %v8386
    %v8395 = vpack.c.b16 %v8392, %v8391
    %v8396 = vpack.c.b16 %v8394, %v8393
    %vm8397 = vcmask 523264
    %v8399 = vsel %vm8397, %v8395, 0
    %v8402 = vsel %vm8397, %v8396, 0
    %8404 = vmatpush.bf16.msra.mxu0 0
    %8405 = vmatpush.bf16.msra.mxu0 0
    %8406 = vmatpush.bf16.msra.mxu0 0
    %8407 = vmatpush.bf16.msra.mxu0 0
    %8408 = vmatpush.bf16.msra.mxu0 %v8381
    %8409 = vmatpush.bf16.msra.mxu0 %v8379
    %8410 = vmatpush.bf16.msra.mxu0 %v8377
    %8411 = vmatpush.bf16.msra.mxu0 %v8375
    %8412 = vmatmul.bf16.gmra.mxu0 %v8399
    %v8413 = vpop.f32.mrf.mxu0
    %v8414 = vadd.f32 0.0, %v8413
    %v8415 = vpop.f32.mrf.mxu0
    %v8416 = vadd.f32 0.0, %v8415
    %8417 = vmatmul.bf16.gmra.mxu0 %v8402
    %v8418 = vpop.f32.mrf.mxu0
    %v8419 = vadd.f32 0.0, %v8418
    %v8420 = vpop.f32.mrf.mxu0
    %v8421 = vadd.f32 0.0, %v8420
    %8422 = vdwg.mxu0
    %8423 = vmatpush.bf16.msra.mxu0 0
    %8424 = vmatpush.bf16.msra.mxu0 0
    %8425 = vmatpush.bf16.msra.mxu0 0
    %8426 = vmatpush.bf16.msra.mxu0 0
    %8427 = vmatpush.bf16.msra.mxu0 %v8382
    %8428 = vmatpush.bf16.msra.mxu0 %v8380
    %8429 = vmatpush.bf16.msra.mxu0 %v8378
    %8430 = vmatpush.bf16.msra.mxu0 %v8376
    %8431 = vmatmul.bf16.gmra.mxu0 %v8399
    %v8432 = vpop.f32.mrf.mxu0
    %v8433 = vadd.f32 0.0, %v8432
    %v8434 = vpop.f32.mrf.mxu0
    %v8435 = vadd.f32 0.0, %v8434
    %8436 = vmatmul.bf16.gmra.mxu0 %v8402
    %v8437 = vpop.f32.mrf.mxu0
    %v8438 = vadd.f32 0.0, %v8437
    %v8439 = vpop.f32.mrf.mxu0
    %v8440 = vadd.f32 0.0, %v8439
    %8441 = vdwg.mxu0
    %v8442 = vpack.c.bf16 %v8416, %v8414
    %v8443 = vpack.c.bf16 %v8435, %v8433
    %v8444 = vpack.c.bf16 %v8421, %v8419
    %v8445 = vpack.c.bf16 %v8440, %v8438
    %v8446 = vld [vmem:[#allocation16] sm:$0xff]
    %v8447 = vld [vmem:[#allocation16 + $0x8] sm:$0xff]
    %v8448 = vld [vmem:[#allocation16 + $0x10] sm:$0xff]
    %v8449 = vld [vmem:[#allocation16 + $0x18] sm:$0xff]
    %v8450 = vld [vmem:[#allocation16 + $0x20] sm:$0xff]
    %v8451 = vld [vmem:[#allocation16 + $0x28] sm:$0xff]
    %v8452 = vld [vmem:[#allocation16 + $0x30] sm:$0xff]
    %v8453 = vld [vmem:[#allocation16 + $0x38] sm:$0xff]
    %v8454 = vld [vmem:[#allocation16 + $0x40] sm:$0xff]
    %v8455 = vld [vmem:[#allocation16 + $0x48] sm:$0xff]
    %v8456 = vld [vmem:[#allocation16 + $0x50] sm:$0xff]
    %v8457 = vld [vmem:[#allocation16 + $0x58] sm:$0xff]
    %v8458 = vld [vmem:[#allocation16 + $0x60] sm:$0xff]
    %v8459 = vld [vmem:[#allocation16 + $0x68] sm:$0xff]
    %v8460 = vld [vmem:[#allocation16 + $0x70] sm:$0xff]
    %v8461 = vld [vmem:[#allocation16 + $0x78] sm:$0xff]
    %v8462 = vld [vmem:[#allocation16 + $0x80] sm:$0xff]
    %v8463 = vld [vmem:[#allocation16 + $0x88] sm:$0xff]
    %v8464 = vld [vmem:[#allocation16 + $0x90] sm:$0xff]
    %v8465 = vld [vmem:[#allocation16 + $0x98] sm:$0xff]
    %v8466 = vld [vmem:[#allocation16 + $0xa0] sm:$0xff]
    %v8467 = vld [vmem:[#allocation16 + $0xa8] sm:$0xff]
    %v8468 = vld [vmem:[#allocation16 + $0xb0] sm:$0xff]
    %v8469 = vld [vmem:[#allocation16 + $0xb8] sm:$0xff]
    %v8470 = vld [vmem:[#allocation16 + $0xc0] sm:$0xff]
    %v8471 = vld [vmem:[#allocation16 + $0xc8] sm:$0xff]
    %v8472 = vld [vmem:[#allocation16 + $0xd0] sm:$0xff]
    %v8473 = vld [vmem:[#allocation16 + $0xd8] sm:$0xff]
    %v8474 = vld [vmem:[#allocation16 + $0xe0] sm:$0xff]
    %v8475 = vld [vmem:[#allocation16 + $0xe8] sm:$0xff]
    %v8476 = vld [vmem:[#allocation16 + $0xf0] sm:$0xff]
    %v8477 = vld [vmem:[#allocation16 + $0xf8] sm:$0xff]
    %v8478 = vld [vmem:[#allocation17] sm:$0x3]
    %v8480 = vperm.slane %v8478, 0
    %v8481 = vperm.slane %v8478, 1
    %v8516 = vunpack.c.l.b16 %v8446
    %v8517 = vunpack.c.h.b16 %v8446
    %v8518 = vunpack.c.l.b16 %v8447
    %v8519 = vunpack.c.h.b16 %v8447
    %v8520 = vunpack.c.l.b16 %v8448
    %v8521 = vunpack.c.h.b16 %v8448
    %v8522 = vunpack.c.l.b16 %v8449
    %v8523 = vunpack.c.h.b16 %v8449
    %v8524 = vunpack.c.l.b16 %v8450
    %v8525 = vunpack.c.h.b16 %v8450
    %v8526 = vunpack.c.l.b16 %v8451
    %v8527 = vunpack.c.h.b16 %v8451
    %v8528 = vunpack.c.l.b16 %v8452
    %v8529 = vunpack.c.h.b16 %v8452
    %v8530 = vunpack.c.l.b16 %v8453
    %v8531 = vunpack.c.h.b16 %v8453
    %v8532 = vunpack.c.l.b16 %v8454
    %v8533 = vunpack.c.h.b16 %v8454
    %v8534 = vunpack.c.l.b16 %v8455
    %v8535 = vunpack.c.h.b16 %v8455
    %v8536 = vunpack.c.l.b16 %v8456
    %v8537 = vunpack.c.h.b16 %v8456
    %v8538 = vunpack.c.l.b16 %v8457
    %v8539 = vunpack.c.h.b16 %v8457
    %v8540 = vunpack.c.l.b16 %v8458
    %v8541 = vunpack.c.h.b16 %v8458
    %v8542 = vunpack.c.l.b16 %v8459
    %v8543 = vunpack.c.h.b16 %v8459
    %v8544 = vunpack.c.l.b16 %v8460
    %v8545 = vunpack.c.h.b16 %v8460
    %v8546 = vunpack.c.l.b16 %v8461
    %v8547 = vunpack.c.h.b16 %v8461
    %v8548 = vunpack.c.l.b16 %v8462
    %v8549 = vunpack.c.h.b16 %v8462
    %v8550 = vunpack.c.l.b16 %v8463
    %v8551 = vunpack.c.h.b16 %v8463
    %v8552 = vunpack.c.l.b16 %v8464
    %v8553 = vunpack.c.h.b16 %v8464
    %v8554 = vunpack.c.l.b16 %v8465
    %v8555 = vunpack.c.h.b16 %v8465
    %v8556 = vunpack.c.l.b16 %v8466
    %v8557 = vunpack.c.h.b16 %v8466
    %v8558 = vunpack.c.l.b16 %v8467
    %v8559 = vunpack.c.h.b16 %v8467
    %v8560 = vunpack.c.l.b16 %v8468
    %v8561 = vunpack.c.h.b16 %v8468
    %v8562 = vunpack.c.l.b16 %v8469
    %v8563 = vunpack.c.h.b16 %v8469
    %v8564 = vunpack.c.l.b16 %v8470
    %v8565 = vunpack.c.h.b16 %v8470
    %v8566 = vunpack.c.l.b16 %v8471
    %v8567 = vunpack.c.h.b16 %v8471
    %v8568 = vunpack.c.l.b16 %v8472
    %v8569 = vunpack.c.h.b16 %v8472
    %v8570 = vunpack.c.l.b16 %v8473
    %v8571 = vunpack.c.h.b16 %v8473
    %v8572 = vunpack.c.l.b16 %v8474
    %v8573 = vunpack.c.h.b16 %v8474
    %v8574 = vunpack.c.l.b16 %v8475
    %v8575 = vunpack.c.h.b16 %v8475
    %v8576 = vunpack.c.l.b16 %v8476
    %v8577 = vunpack.c.h.b16 %v8476
    %v8578 = vunpack.c.l.b16 %v8477
    %v8579 = vunpack.c.h.b16 %v8477
    %v8580 = vpack.c.b16 %v8518, %v8516
    %v8581 = vpack.c.b16 %v8519, %v8517
    %v8582 = vpack.c.b16 %v8522, %v8520
    %v8583 = vpack.c.b16 %v8523, %v8521
    %v8584 = vpack.c.b16 %v8526, %v8524
    %v8585 = vpack.c.b16 %v8527, %v8525
    %v8586 = vpack.c.b16 %v8530, %v8528
    %v8587 = vpack.c.b16 %v8531, %v8529
    %v8588 = vpack.c.b16 %v8534, %v8532
    %v8589 = vpack.c.b16 %v8535, %v8533
    %v8590 = vpack.c.b16 %v8538, %v8536
    %v8591 = vpack.c.b16 %v8539, %v8537
    %v8592 = vpack.c.b16 %v8542, %v8540
    %v8593 = vpack.c.b16 %v8543, %v8541
    %v8594 = vpack.c.b16 %v8546, %v8544
    %v8595 = vpack.c.b16 %v8547, %v8545
    %v8596 = vpack.c.b16 %v8550, %v8548
    %v8597 = vpack.c.b16 %v8551, %v8549
    %v8598 = vpack.c.b16 %v8554, %v8552
    %v8599 = vpack.c.b16 %v8555, %v8553
    %v8600 = vpack.c.b16 %v8558, %v8556
    %v8601 = vpack.c.b16 %v8559, %v8557
    %v8602 = vpack.c.b16 %v8562, %v8560
    %v8603 = vpack.c.b16 %v8563, %v8561
    %v8604 = vpack.c.b16 %v8566, %v8564
    %v8605 = vpack.c.b16 %v8567, %v8565
    %v8606 = vpack.c.b16 %v8570, %v8568
    %v8607 = vpack.c.b16 %v8571, %v8569
    %v8608 = vpack.c.b16 %v8574, %v8572
    %v8609 = vpack.c.b16 %v8575, %v8573
    %v8610 = vpack.c.b16 %v8578, %v8576
    %v8611 = vpack.c.b16 %v8579, %v8577
    %8644 = vmatpush.bf16.msra.mxu0 %v8594
    %8645 = vmatpush.bf16.msra.mxu0 %v8592
    %8646 = vmatpush.bf16.msra.mxu0 %v8590
    %8647 = vmatpush.bf16.msra.mxu0 %v8588
    %8648 = vmatpush.bf16.msra.mxu0 %v8586
    %8649 = vmatpush.bf16.msra.mxu0 %v8584
    %8650 = vmatpush.bf16.msra.mxu0 %v8582
    %8651 = vmatpush.bf16.msra.mxu0 %v8580
    %8652 = vmatmul.bf16.gmra.mxu0 %v8442
    %v8653 = vpop.f32.mrf.mxu0
    %v8654 = vadd.f32 %v8480, %v8653
    %v8655 = vpop.f32.mrf.mxu0
    %v8656 = vadd.f32 %v8480, %v8655
    %8657 = vmatmul.bf16.gmra.mxu0 %v8444
    %v8658 = vpop.f32.mrf.mxu0
    %v8659 = vadd.f32 %v8480, %v8658
    %v8660 = vpop.f32.mrf.mxu0
    %v8661 = vadd.f32 %v8480, %v8660
    %8662 = vdwg.mxu0
    %8663 = vmatpush.bf16.msra.mxu0 %v8610
    %8664 = vmatpush.bf16.msra.mxu0 %v8608
    %8665 = vmatpush.bf16.msra.mxu0 %v8606
    %8666 = vmatpush.bf16.msra.mxu0 %v8604
    %8667 = vmatpush.bf16.msra.mxu0 %v8602
    %8668 = vmatpush.bf16.msra.mxu0 %v8600
    %8669 = vmatpush.bf16.msra.mxu0 %v8598
    %8670 = vmatpush.bf16.msra.mxu0 %v8596
    %8671 = vmatmul.bf16.gmra.mxu0 %v8443
    %v8672 = vpop.f32.mrf.mxu0
    %v8673 = vadd.f32 %v8654, %v8672
    %v8674 = vpop.f32.mrf.mxu0
    %v8675 = vadd.f32 %v8656, %v8674
    %8676 = vmatmul.bf16.gmra.mxu0 %v8445
    %v8677 = vpop.f32.mrf.mxu0
    %v8678 = vadd.f32 %v8659, %v8677
    %v8679 = vpop.f32.mrf.mxu0
    %v8680 = vadd.f32 %v8661, %v8679
    %8681 = vdwg.mxu0
    %8682 = vmatpush.bf16.msra.mxu0 %v8595
    %8683 = vmatpush.bf16.msra.mxu0 %v8593
    %8684 = vmatpush.bf16.msra.mxu0 %v8591
    %8685 = vmatpush.bf16.msra.mxu0 %v8589
    %8686 = vmatpush.bf16.msra.mxu0 %v8587
    %8687 = vmatpush.bf16.msra.mxu0 %v8585
    %8688 = vmatpush.bf16.msra.mxu0 %v8583
    %8689 = vmatpush.bf16.msra.mxu0 %v8581
    %8690 = vmatmul.bf16.gmra.mxu0 %v8442
    %v8691 = vpop.f32.mrf.mxu0
    %v8692 = vadd.f32 %v8481, %v8691
    %v8693 = vpop.f32.mrf.mxu0
    %v8694 = vadd.f32 %v8481, %v8693
    %8695 = vmatmul.bf16.gmra.mxu0 %v8444
    %v8696 = vpop.f32.mrf.mxu0
    %v8697 = vadd.f32 %v8481, %v8696
    %v8698 = vpop.f32.mrf.mxu0
    %v8699 = vadd.f32 %v8481, %v8698
    %8700 = vdwg.mxu0
    %8701 = vmatpush.bf16.msra.mxu0 %v8611
    %8702 = vmatpush.bf16.msra.mxu0 %v8609
    %8703 = vmatpush.bf16.msra.mxu0 %v8607
    %8704 = vmatpush.bf16.msra.mxu0 %v8605
    %8705 = vmatpush.bf16.msra.mxu0 %v8603
    %8706 = vmatpush.bf16.msra.mxu0 %v8601
    %8707 = vmatpush.bf16.msra.mxu0 %v8599
    %8708 = vmatpush.bf16.msra.mxu0 %v8597
    %8709 = vmatmul.bf16.gmra.mxu0 %v8443
    %v8710 = vpop.f32.mrf.mxu0
    %v8711 = vadd.f32 %v8692, %v8710
    %v8712 = vpop.f32.mrf.mxu0
    %v8713 = vadd.f32 %v8694, %v8712
    %8714 = vmatmul.bf16.gmra.mxu0 %v8445
    %v8715 = vpop.f32.mrf.mxu0
    %v8716 = vadd.f32 %v8697, %v8715
    %v8717 = vpop.f32.mrf.mxu0
    %v8718 = vadd.f32 %v8699, %v8717
    %8719 = vdwg.mxu0
    %v8720 = vld [vmem:[#allocation19] sm:$0xf]
    %v8721 = vld [vmem:[#allocation19 + $0x4] sm:$0xf]
    %v8722 = vld [vmem:[#allocation19 + $0x8] sm:$0xf]
    %v8723 = vld [vmem:[#allocation19 + $0xc] sm:$0xf]
    %v8728 = vunpack.c.l.b16 %v8720
    %v8729 = vunpack.c.l.b16 %v8721
    %v8730 = vunpack.c.l.b16 %v8722
    %v8731 = vunpack.c.l.b16 %v8723
    %v8732 = vpack.c.b16 %v8729, %v8728
    %v8733 = vpack.c.b16 %v8731, %v8730
    %v8735 = vsel %vm8397, %v8732, 0
    %v8738 = vsel %vm8397, %v8733, 0
    %8740 = vmatpush.bf16.msra.mxu0 0
    %8741 = vmatpush.bf16.msra.mxu0 0
    %8742 = vmatpush.bf16.msra.mxu0 0
    %8743 = vmatpush.bf16.msra.mxu0 0
    %8744 = vmatpush.bf16.msra.mxu0 %v8381
    %8745 = vmatpush.bf16.msra.mxu0 %v8379
    %8746 = vmatpush.bf16.msra.mxu0 %v8377
    %8747 = vmatpush.bf16.msra.mxu0 %v8375
    %8748 = vmatmul.bf16.gmra.mxu0 %v8735
    %v8749 = vpop.f32.mrf.mxu0
    %v8750 = vadd.f32 0.0, %v8749
    %v8751 = vpop.f32.mrf.mxu0
    %v8752 = vadd.f32 0.0, %v8751
    %8753 = vmatmul.bf16.gmra.mxu0 %v8738
    %v8754 = vpop.f32.mrf.mxu0
    %v8755 = vadd.f32 0.0, %v8754
    %v8756 = vpop.f32.mrf.mxu0
    %v8757 = vadd.f32 0.0, %v8756
    %8758 = vdwg.mxu0
    %8759 = vmatpush.bf16.msra.mxu0 0
    %8760 = vmatpush.bf16.msra.mxu0 0
    %8761 = vmatpush.bf16.msra.mxu0 0
    %8762 = vmatpush.bf16.msra.mxu0 0
    %8763 = vmatpush.bf16.msra.mxu0 %v8382
    %8764 = vmatpush.bf16.msra.mxu0 %v8380
    %8765 = vmatpush.bf16.msra.mxu0 %v8378
    %8766 = vmatpush.bf16.msra.mxu0 %v8376
    %8767 = vmatmul.bf16.gmra.mxu0 %v8735
    %v8768 = vpop.f32.mrf.mxu0
    %v8769 = vadd.f32 0.0, %v8768
    %v8770 = vpop.f32.mrf.mxu0
    %v8771 = vadd.f32 0.0, %v8770
    %8772 = vmatmul.bf16.gmra.mxu0 %v8738
    %v8773 = vpop.f32.mrf.mxu0
    %v8774 = vadd.f32 0.0, %v8773
    %v8775 = vpop.f32.mrf.mxu0
    %v8776 = vadd.f32 0.0, %v8775
    %8777 = vdwg.mxu0
    %v8778 = vpack.c.bf16 %v8769, %v8750
    %v8779 = vpack.c.bf16 %v8771, %v8752
    %v8780 = vpack.c.bf16 %v8774, %v8755
    %v8781 = vpack.c.bf16 %v8776, %v8757
    %s8782 = scalar_lea.vmem [#allocation19], 16
    %v8783 = vld [vmem:[%s8782] sm:$0xf]
    %v8784 = vld [vmem:[%s8782 + $0x4] sm:$0xf]
    %v8785 = vld [vmem:[%s8782 + $0x8] sm:$0xf]
    %v8786 = vld [vmem:[%s8782 + $0xc] sm:$0xf]
    %v8791 = vunpack.c.l.b16 %v8783
    %v8792 = vunpack.c.l.b16 %v8784
    %v8793 = vunpack.c.l.b16 %v8785
    %v8794 = vunpack.c.l.b16 %v8786
    %v8795 = vpack.c.b16 %v8792, %v8791
    %v8796 = vpack.c.b16 %v8794, %v8793
    %v8798 = vsel %vm8397, %v8795, 0
    %v8801 = vsel %vm8397, %v8796, 0
    %8803 = vmatpush.bf16.msra.mxu0 0
    %8804 = vmatpush.bf16.msra.mxu0 0
    %8805 = vmatpush.bf16.msra.mxu0 0
    %8806 = vmatpush.bf16.msra.mxu0 0
    %8807 = vmatpush.bf16.msra.mxu0 %v8381
    %8808 = vmatpush.bf16.msra.mxu0 %v8379
    %8809 = vmatpush.bf16.msra.mxu0 %v8377
    %8810 = vmatpush.bf16.msra.mxu0 %v8375
    %8811 = vmatmul.bf16.gmra.mxu0 %v8798
    %v8812 = vpop.f32.mrf.mxu0
    %v8813 = vadd.f32 0.0, %v8812
    %v8814 = vpop.f32.mrf.mxu0
    %v8815 = vadd.f32 0.0, %v8814
    %8816 = vmatmul.bf16.gmra.mxu0 %v8801
    %v8817 = vpop.f32.mrf.mxu0
    %v8818 = vadd.f32 0.0, %v8817
    %v8819 = vpop.f32.mrf.mxu0
    %v8820 = vadd.f32 0.0, %v8819
    %8821 = vdwg.mxu0
    %8822 = vmatpush.bf16.msra.mxu0 0
    %8823 = vmatpush.bf16.msra.mxu0 0
    %8824 = vmatpush.bf16.msra.mxu0 0
    %8825 = vmatpush.bf16.msra.mxu0 0
    %8826 = vmatpush.bf16.msra.mxu0 %v8382
    %8827 = vmatpush.bf16.msra.mxu0 %v8380
    %8828 = vmatpush.bf16.msra.mxu0 %v8378
    %8829 = vmatpush.bf16.msra.mxu0 %v8376
    %8830 = vmatmul.bf16.gmra.mxu0 %v8798
    %v8831 = vpop.f32.mrf.mxu0
    %v8832 = vadd.f32 0.0, %v8831
    %v8833 = vpop.f32.mrf.mxu0
    %v8834 = vadd.f32 0.0, %v8833
    %8835 = vmatmul.bf16.gmra.mxu0 %v8801
    %v8836 = vpop.f32.mrf.mxu0
    %v8837 = vadd.f32 0.0, %v8836
    %v8838 = vpop.f32.mrf.mxu0
    %v8839 = vadd.f32 0.0, %v8838
    %8840 = vdwg.mxu0
    %v8841 = vpack.c.bf16 %v8832, %v8813
    %v8842 = vpack.c.bf16 %v8834, %v8815
    %v8843 = vpack.c.bf16 %v8837, %v8818
    %v8844 = vpack.c.bf16 %v8839, %v8820
    %s8845 = scalar_lea.vmem [#allocation19], 32
    %v8846 = vld [vmem:[%s8845] sm:$0xf]
    %v8847 = vld [vmem:[%s8845 + $0x4] sm:$0xf]
    %v8848 = vld [vmem:[%s8845 + $0x8] sm:$0xf]
    %v8849 = vld [vmem:[%s8845 + $0xc] sm:$0xf]
    %v8854 = vunpack.c.l.b16 %v8846
    %v8855 = vunpack.c.l.b16 %v8847
    %v8856 = vunpack.c.l.b16 %v8848
    %v8857 = vunpack.c.l.b16 %v8849
    %v8858 = vpack.c.b16 %v8855, %v8854
    %v8859 = vpack.c.b16 %v8857, %v8856
    %v8861 = vsel %vm8397, %v8858, 0
    %v8864 = vsel %vm8397, %v8859, 0
    %8866 = vmatpush.bf16.msra.mxu0 0
    %8867 = vmatpush.bf16.msra.mxu0 0
    %8868 = vmatpush.bf16.msra.mxu0 0
    %8869 = vmatpush.bf16.msra.mxu0 0
    %8870 = vmatpush.bf16.msra.mxu0 %v8381
    %8871 = vmatpush.bf16.msra.mxu0 %v8379
    %8872 = vmatpush.bf16.msra.mxu0 %v8377
    %8873 = vmatpush.bf16.msra.mxu0 %v8375
    %8874 = vmatmul.bf16.gmra.mxu0 %v8861
    %v8875 = vpop.f32.mrf.mxu0
    %v8876 = vadd.f32 0.0, %v8875
    %v8877 = vpop.f32.mrf.mxu0
    %v8878 = vadd.f32 0.0, %v8877
    %8879 = vmatmul.bf16.gmra.mxu0 %v8864
    %v8880 = vpop.f32.mrf.mxu0
    %v8881 = vadd.f32 0.0, %v8880
    %v8882 = vpop.f32.mrf.mxu0
    %v8883 = vadd.f32 0.0, %v8882
    %8884 = vdwg.mxu0
    %8885 = vmatpush.bf16.msra.mxu0 0
    %8886 = vmatpush.bf16.msra.mxu0 0
    %8887 = vmatpush.bf16.msra.mxu0 0
    %8888 = vmatpush.bf16.msra.mxu0 0
    %8889 = vmatpush.bf16.msra.mxu0 %v8382
    %8890 = vmatpush.bf16.msra.mxu0 %v8380
    %8891 = vmatpush.bf16.msra.mxu0 %v8378
    %8892 = vmatpush.bf16.msra.mxu0 %v8376
    %8893 = vmatmul.bf16.gmra.mxu0 %v8861
    %v8894 = vpop.f32.mrf.mxu0
    %v8895 = vadd.f32 0.0, %v8894
    %v8896 = vpop.f32.mrf.mxu0
    %v8897 = vadd.f32 0.0, %v8896
    %8898 = vmatmul.bf16.gmra.mxu0 %v8864
    %v8899 = vpop.f32.mrf.mxu0
    %v8900 = vadd.f32 0.0, %v8899
    %v8901 = vpop.f32.mrf.mxu0
    %v8902 = vadd.f32 0.0, %v8901
    %8903 = vdwg.mxu0
    %v8904 = vpack.c.bf16 %v8895, %v8876
    %v8905 = vpack.c.bf16 %v8897, %v8878
    %v8906 = vpack.c.bf16 %v8900, %v8881
    %v8907 = vpack.c.bf16 %v8902, %v8883
    %v8912 = vunpack.c.l.b16 %v8778
    %v8913 = vunpack.c.h.b16 %v8778
    %v8914 = vunpack.c.l.b16 %v8779
    %v8915 = vunpack.c.h.b16 %v8779
    %v8916 = vunpack.c.l.b16 %v8780
    %v8917 = vunpack.c.h.b16 %v8780
    %v8918 = vunpack.c.l.b16 %v8781
    %v8919 = vunpack.c.h.b16 %v8781
    %v8920 = vpack.c.b16 %v8914, %v8912
    %v8921 = vpack.c.b16 %v8915, %v8913
    %v8922 = vpack.c.b16 %v8918, %v8916
    %v8923 = vpack.c.b16 %v8919, %v8917
    %v8932 = vunpack.c.l.b16 %v8841
    %v8933 = vunpack.c.h.b16 %v8841
    %v8934 = vunpack.c.l.b16 %v8842
    %v8935 = vunpack.c.h.b16 %v8842
    %v8936 = vunpack.c.l.b16 %v8843
    %v8937 = vunpack.c.h.b16 %v8843
    %v8938 = vunpack.c.l.b16 %v8844
    %v8939 = vunpack.c.h.b16 %v8844
    %v8940 = vpack.c.b16 %v8934, %v8932
    %v8941 = vpack.c.b16 %v8935, %v8933
    %v8942 = vpack.c.b16 %v8938, %v8936
    %v8943 = vpack.c.b16 %v8939, %v8937
    %v8952 = vunpack.c.l.b16 %v8904
    %v8953 = vunpack.c.h.b16 %v8904
    %v8954 = vunpack.c.l.b16 %v8905
    %v8955 = vunpack.c.h.b16 %v8905
    %v8956 = vunpack.c.l.b16 %v8906
    %v8957 = vunpack.c.h.b16 %v8906
    %v8958 = vunpack.c.l.b16 %v8907
    %v8959 = vunpack.c.h.b16 %v8907
    %v8960 = vpack.c.b16 %v8954, %v8952
    %v8961 = vpack.c.b16 %v8955, %v8953
    %v8962 = vpack.c.b16 %v8958, %v8956
    %v8963 = vpack.c.b16 %v8959, %v8957
    %v8968 = vld [vmem:[#allocation20] sm:$0xff]
    %v8969 = vld [vmem:[#allocation20 + $0x8] sm:$0xff]
    %v8970 = vld [vmem:[#allocation20 + $0x10] sm:$0xff]
    %v8971 = vld [vmem:[#allocation20 + $0x18] sm:$0xff]
    %v8972 = vld [vmem:[#allocation20 + $0x20] sm:$0xff]
    %v8973 = vld [vmem:[#allocation20 + $0x28] sm:$0xff]
    %v8974 = vld [vmem:[#allocation20 + $0x30] sm:$0xff]
    %v8975 = vld [vmem:[#allocation20 + $0x38] sm:$0xff]
    %v8976 = vld [vmem:[#allocation20 + $0x40] sm:$0xff]
    %v8977 = vld [vmem:[#allocation20 + $0x48] sm:$0xff]
    %v8978 = vld [vmem:[#allocation20 + $0x50] sm:$0xff]
    %v8979 = vld [vmem:[#allocation20 + $0x58] sm:$0xff]
    %v8980 = vld [vmem:[#allocation20 + $0x60] sm:$0xff]
    %v8981 = vld [vmem:[#allocation20 + $0x68] sm:$0xff]
    %v8982 = vld [vmem:[#allocation20 + $0x70] sm:$0xff]
    %v8983 = vld [vmem:[#allocation20 + $0x78] sm:$0xff]
    %v8984 = vld [vmem:[#allocation20 + $0x80] sm:$0xff]
    %v8985 = vld [vmem:[#allocation20 + $0x88] sm:$0xff]
    %v8986 = vld [vmem:[#allocation20 + $0x90] sm:$0xff]
    %v8987 = vld [vmem:[#allocation20 + $0x98] sm:$0xff]
    %v8988 = vld [vmem:[#allocation20 + $0xa0] sm:$0xff]
    %v8989 = vld [vmem:[#allocation20 + $0xa8] sm:$0xff]
    %v8990 = vld [vmem:[#allocation20 + $0xb0] sm:$0xff]
    %v8991 = vld [vmem:[#allocation20 + $0xb8] sm:$0xff]
    %v8992 = vld [vmem:[#allocation20 + $0xc0] sm:$0xff]
    %v8993 = vld [vmem:[#allocation20 + $0xc8] sm:$0xff]
    %v8994 = vld [vmem:[#allocation20 + $0xd0] sm:$0xff]
    %v8995 = vld [vmem:[#allocation20 + $0xd8] sm:$0xff]
    %v8996 = vld [vmem:[#allocation20 + $0xe0] sm:$0xff]
    %v8997 = vld [vmem:[#allocation20 + $0xe8] sm:$0xff]
    %v8998 = vld [vmem:[#allocation20 + $0xf0] sm:$0xff]
    %v8999 = vld [vmem:[#allocation20 + $0xf8] sm:$0xff]
    %v9000 = vld [vmem:[#allocation20 + $0x100] sm:$0xff]
    %v9001 = vld [vmem:[#allocation20 + $0x108] sm:$0xff]
    %v9002 = vld [vmem:[#allocation20 + $0x110] sm:$0xff]
    %v9003 = vld [vmem:[#allocation20 + $0x118] sm:$0xff]
    %v9004 = vld [vmem:[#allocation20 + $0x120] sm:$0xff]
    %v9005 = vld [vmem:[#allocation20 + $0x128] sm:$0xff]
    %v9006 = vld [vmem:[#allocation20 + $0x130] sm:$0xff]
    %v9007 = vld [vmem:[#allocation20 + $0x138] sm:$0xff]
    %v9008 = vld [vmem:[#allocation20 + $0x140] sm:$0xff]
    %v9009 = vld [vmem:[#allocation20 + $0x148] sm:$0xff]
    %v9010 = vld [vmem:[#allocation20 + $0x150] sm:$0xff]
    %v9011 = vld [vmem:[#allocation20 + $0x158] sm:$0xff]
    %v9012 = vld [vmem:[#allocation20 + $0x160] sm:$0xff]
    %v9013 = vld [vmem:[#allocation20 + $0x168] sm:$0xff]
    %v9014 = vld [vmem:[#allocation20 + $0x170] sm:$0xff]
    %v9015 = vld [vmem:[#allocation20 + $0x178] sm:$0xff]
    %v9016 = vld [vmem:[#allocation20 + $0x180] sm:$0xff]
    %v9017 = vld [vmem:[#allocation20 + $0x188] sm:$0xff]
    %v9018 = vld [vmem:[#allocation20 + $0x190] sm:$0xff]
    %v9019 = vld [vmem:[#allocation20 + $0x198] sm:$0xff]
    %v9020 = vld [vmem:[#allocation20 + $0x1a0] sm:$0xff]
    %v9021 = vld [vmem:[#allocation20 + $0x1a8] sm:$0xff]
    %v9022 = vld [vmem:[#allocation20 + $0x1b0] sm:$0xff]
    %v9023 = vld [vmem:[#allocation20 + $0x1b8] sm:$0xff]
    %v9024 = vld [vmem:[#allocation20 + $0x1c0] sm:$0xff]
    %v9025 = vld [vmem:[#allocation20 + $0x1c8] sm:$0xff]
    %v9026 = vld [vmem:[#allocation20 + $0x1d0] sm:$0xff]
    %v9027 = vld [vmem:[#allocation20 + $0x1d8] sm:$0xff]
    %v9028 = vld [vmem:[#allocation20 + $0x1e0] sm:$0xff]
    %v9029 = vld [vmem:[#allocation20 + $0x1e8] sm:$0xff]
    %v9030 = vld [vmem:[#allocation20 + $0x1f0] sm:$0xff]
    %v9031 = vld [vmem:[#allocation20 + $0x1f8] sm:$0xff]
    %v9032 = vld [vmem:[#allocation20 + $0x200] sm:$0xff]
    %v9033 = vld [vmem:[#allocation20 + $0x208] sm:$0xff]
    %v9034 = vld [vmem:[#allocation20 + $0x210] sm:$0xff]
    %v9035 = vld [vmem:[#allocation20 + $0x218] sm:$0xff]
    %v9036 = vld [vmem:[#allocation20 + $0x220] sm:$0xff]
    %v9037 = vld [vmem:[#allocation20 + $0x228] sm:$0xff]
    %v9038 = vld [vmem:[#allocation20 + $0x230] sm:$0xff]
    %v9039 = vld [vmem:[#allocation20 + $0x238] sm:$0xff]
    %v9040 = vld [vmem:[#allocation20 + $0x240] sm:$0xff]
    %v9041 = vld [vmem:[#allocation20 + $0x248] sm:$0xff]
    %v9042 = vld [vmem:[#allocation20 + $0x250] sm:$0xff]
    %v9043 = vld [vmem:[#allocation20 + $0x258] sm:$0xff]
    %v9044 = vld [vmem:[#allocation20 + $0x260] sm:$0xff]
    %v9045 = vld [vmem:[#allocation20 + $0x268] sm:$0xff]
    %v9046 = vld [vmem:[#allocation20 + $0x270] sm:$0xff]
    %v9047 = vld [vmem:[#allocation20 + $0x278] sm:$0xff]
    %v9048 = vld [vmem:[#allocation20 + $0x280] sm:$0xff]
    %v9049 = vld [vmem:[#allocation20 + $0x288] sm:$0xff]
    %v9050 = vld [vmem:[#allocation20 + $0x290] sm:$0xff]
    %v9051 = vld [vmem:[#allocation20 + $0x298] sm:$0xff]
    %v9052 = vld [vmem:[#allocation20 + $0x2a0] sm:$0xff]
    %v9053 = vld [vmem:[#allocation20 + $0x2a8] sm:$0xff]
    %v9054 = vld [vmem:[#allocation20 + $0x2b0] sm:$0xff]
    %v9055 = vld [vmem:[#allocation20 + $0x2b8] sm:$0xff]
    %v9056 = vld [vmem:[#allocation20 + $0x2c0] sm:$0xff]
    %v9057 = vld [vmem:[#allocation20 + $0x2c8] sm:$0xff]
    %v9058 = vld [vmem:[#allocation20 + $0x2d0] sm:$0xff]
    %v9059 = vld [vmem:[#allocation20 + $0x2d8] sm:$0xff]
    %v9060 = vld [vmem:[#allocation20 + $0x2e0] sm:$0xff]
    %v9061 = vld [vmem:[#allocation20 + $0x2e8] sm:$0xff]
    %v9062 = vld [vmem:[#allocation20 + $0x2f0] sm:$0xff]
    %v9063 = vld [vmem:[#allocation20 + $0x2f8] sm:$0xff]
    %v9064 = vld [vmem:[#allocation22] sm:$0x3]
    %v9066 = vperm.slane %v9064, 0
    %v9067 = vperm.slane %v9064, 1
    %v9166 = vunpack.c.l.b16 %v8968
    %v9167 = vunpack.c.h.b16 %v8968
    %v9168 = vunpack.c.l.b16 %v8969
    %v9169 = vunpack.c.h.b16 %v8969
    %v9170 = vunpack.c.l.b16 %v8970
    %v9171 = vunpack.c.h.b16 %v8970
    %v9172 = vunpack.c.l.b16 %v8971
    %v9173 = vunpack.c.h.b16 %v8971
    %v9174 = vunpack.c.l.b16 %v8972
    %v9175 = vunpack.c.h.b16 %v8972
    %v9176 = vunpack.c.l.b16 %v8973
    %v9177 = vunpack.c.h.b16 %v8973
    %v9178 = vunpack.c.l.b16 %v8974
    %v9179 = vunpack.c.h.b16 %v8974
    %v9180 = vunpack.c.l.b16 %v8975
    %v9181 = vunpack.c.h.b16 %v8975
    %v9182 = vunpack.c.l.b16 %v8976
    %v9183 = vunpack.c.h.b16 %v8976
    %v9184 = vunpack.c.l.b16 %v8977
    %v9185 = vunpack.c.h.b16 %v8977
    %v9186 = vunpack.c.l.b16 %v8978
    %v9187 = vunpack.c.h.b16 %v8978
    %v9188 = vunpack.c.l.b16 %v8979
    %v9189 = vunpack.c.h.b16 %v8979
    %v9190 = vunpack.c.l.b16 %v8980
    %v9191 = vunpack.c.h.b16 %v8980
    %v9192 = vunpack.c.l.b16 %v8981
    %v9193 = vunpack.c.h.b16 %v8981
    %v9194 = vunpack.c.l.b16 %v8982
    %v9195 = vunpack.c.h.b16 %v8982
    %v9196 = vunpack.c.l.b16 %v8983
    %v9197 = vunpack.c.h.b16 %v8983
    %v9198 = vunpack.c.l.b16 %v8984
    %v9199 = vunpack.c.h.b16 %v8984
    %v9200 = vunpack.c.l.b16 %v8985
    %v9201 = vunpack.c.h.b16 %v8985
    %v9202 = vunpack.c.l.b16 %v8986
    %v9203 = vunpack.c.h.b16 %v8986
    %v9204 = vunpack.c.l.b16 %v8987
    %v9205 = vunpack.c.h.b16 %v8987
    %v9206 = vunpack.c.l.b16 %v8988
    %v9207 = vunpack.c.h.b16 %v8988
    %v9208 = vunpack.c.l.b16 %v8989
    %v9209 = vunpack.c.h.b16 %v8989
    %v9210 = vunpack.c.l.b16 %v8990
    %v9211 = vunpack.c.h.b16 %v8990
    %v9212 = vunpack.c.l.b16 %v8991
    %v9213 = vunpack.c.h.b16 %v8991
    %v9214 = vunpack.c.l.b16 %v8992
    %v9215 = vunpack.c.h.b16 %v8992
    %v9216 = vunpack.c.l.b16 %v8993
    %v9217 = vunpack.c.h.b16 %v8993
    %v9218 = vunpack.c.l.b16 %v8994
    %v9219 = vunpack.c.h.b16 %v8994
    %v9220 = vunpack.c.l.b16 %v8995
    %v9221 = vunpack.c.h.b16 %v8995
    %v9222 = vunpack.c.l.b16 %v8996
    %v9223 = vunpack.c.h.b16 %v8996
    %v9224 = vunpack.c.l.b16 %v8997
    %v9225 = vunpack.c.h.b16 %v8997
    %v9226 = vunpack.c.l.b16 %v8998
    %v9227 = vunpack.c.h.b16 %v8998
    %v9228 = vunpack.c.l.b16 %v8999
    %v9229 = vunpack.c.h.b16 %v8999
    %v9230 = vunpack.c.l.b16 %v9000
    %v9231 = vunpack.c.h.b16 %v9000
    %v9232 = vunpack.c.l.b16 %v9001
    %v9233 = vunpack.c.h.b16 %v9001
    %v9234 = vunpack.c.l.b16 %v9002
    %v9235 = vunpack.c.h.b16 %v9002
    %v9236 = vunpack.c.l.b16 %v9003
    %v9237 = vunpack.c.h.b16 %v9003
    %v9238 = vunpack.c.l.b16 %v9004
    %v9239 = vunpack.c.h.b16 %v9004
    %v9240 = vunpack.c.l.b16 %v9005
    %v9241 = vunpack.c.h.b16 %v9005
    %v9242 = vunpack.c.l.b16 %v9006
    %v9243 = vunpack.c.h.b16 %v9006
    %v9244 = vunpack.c.l.b16 %v9007
    %v9245 = vunpack.c.h.b16 %v9007
    %v9246 = vunpack.c.l.b16 %v9008
    %v9247 = vunpack.c.h.b16 %v9008
    %v9248 = vunpack.c.l.b16 %v9009
    %v9249 = vunpack.c.h.b16 %v9009
    %v9250 = vunpack.c.l.b16 %v9010
    %v9251 = vunpack.c.h.b16 %v9010
    %v9252 = vunpack.c.l.b16 %v9011
    %v9253 = vunpack.c.h.b16 %v9011
    %v9254 = vunpack.c.l.b16 %v9012
    %v9255 = vunpack.c.h.b16 %v9012
    %v9256 = vunpack.c.l.b16 %v9013
    %v9257 = vunpack.c.h.b16 %v9013
    %v9258 = vunpack.c.l.b16 %v9014
    %v9259 = vunpack.c.h.b16 %v9014
    %v9260 = vunpack.c.l.b16 %v9015
    %v9261 = vunpack.c.h.b16 %v9015
    %v9262 = vunpack.c.l.b16 %v9016
    %v9263 = vunpack.c.h.b16 %v9016
    %v9264 = vunpack.c.l.b16 %v9017
    %v9265 = vunpack.c.h.b16 %v9017
    %v9266 = vunpack.c.l.b16 %v9018
    %v9267 = vunpack.c.h.b16 %v9018
    %v9268 = vunpack.c.l.b16 %v9019
    %v9269 = vunpack.c.h.b16 %v9019
    %v9270 = vunpack.c.l.b16 %v9020
    %v9271 = vunpack.c.h.b16 %v9020
    %v9272 = vunpack.c.l.b16 %v9021
    %v9273 = vunpack.c.h.b16 %v9021
    %v9274 = vunpack.c.l.b16 %v9022
    %v9275 = vunpack.c.h.b16 %v9022
    %v9276 = vunpack.c.l.b16 %v9023
    %v9277 = vunpack.c.h.b16 %v9023
    %v9278 = vunpack.c.l.b16 %v9024
    %v9279 = vunpack.c.h.b16 %v9024
    %v9280 = vunpack.c.l.b16 %v9025
    %v9281 = vunpack.c.h.b16 %v9025
    %v9282 = vunpack.c.l.b16 %v9026
    %v9283 = vunpack.c.h.b16 %v9026
    %v9284 = vunpack.c.l.b16 %v9027
    %v9285 = vunpack.c.h.b16 %v9027
    %v9286 = vunpack.c.l.b16 %v9028
    %v9287 = vunpack.c.h.b16 %v9028
    %v9288 = vunpack.c.l.b16 %v9029
    %v9289 = vunpack.c.h.b16 %v9029
    %v9290 = vunpack.c.l.b16 %v9030
    %v9291 = vunpack.c.h.b16 %v9030
    %v9292 = vunpack.c.l.b16 %v9031
    %v9293 = vunpack.c.h.b16 %v9031
    %v9294 = vunpack.c.l.b16 %v9032
    %v9295 = vunpack.c.h.b16 %v9032
    %v9296 = vunpack.c.l.b16 %v9033
    %v9297 = vunpack.c.h.b16 %v9033
    %v9298 = vunpack.c.l.b16 %v9034
    %v9299 = vunpack.c.h.b16 %v9034
    %v9300 = vunpack.c.l.b16 %v9035
    %v9301 = vunpack.c.h.b16 %v9035
    %v9302 = vunpack.c.l.b16 %v9036
    %v9303 = vunpack.c.h.b16 %v9036
    %v9304 = vunpack.c.l.b16 %v9037
    %v9305 = vunpack.c.h.b16 %v9037
    %v9306 = vunpack.c.l.b16 %v9038
    %v9307 = vunpack.c.h.b16 %v9038
    %v9308 = vunpack.c.l.b16 %v9039
    %v9309 = vunpack.c.h.b16 %v9039
    %v9310 = vunpack.c.l.b16 %v9040
    %v9311 = vunpack.c.h.b16 %v9040
    %v9312 = vunpack.c.l.b16 %v9041
    %v9313 = vunpack.c.h.b16 %v9041
    %v9314 = vunpack.c.l.b16 %v9042
    %v9315 = vunpack.c.h.b16 %v9042
    %v9316 = vunpack.c.l.b16 %v9043
    %v9317 = vunpack.c.h.b16 %v9043
    %v9318 = vunpack.c.l.b16 %v9044
    %v9319 = vunpack.c.h.b16 %v9044
    %v9320 = vunpack.c.l.b16 %v9045
    %v9321 = vunpack.c.h.b16 %v9045
    %v9322 = vunpack.c.l.b16 %v9046
    %v9323 = vunpack.c.h.b16 %v9046
    %v9324 = vunpack.c.l.b16 %v9047
    %v9325 = vunpack.c.h.b16 %v9047
    %v9326 = vunpack.c.l.b16 %v9048
    %v9327 = vunpack.c.h.b16 %v9048
    %v9328 = vunpack.c.l.b16 %v9049
    %v9329 = vunpack.c.h.b16 %v9049
    %v9330 = vunpack.c.l.b16 %v9050
    %v9331 = vunpack.c.h.b16 %v9050
    %v9332 = vunpack.c.l.b16 %v9051
    %v9333 = vunpack.c.h.b16 %v9051
    %v9334 = vunpack.c.l.b16 %v9052
    %v9335 = vunpack.c.h.b16 %v9052
    %v9336 = vunpack.c.l.b16 %v9053
    %v9337 = vunpack.c.h.b16 %v9053
    %v9338 = vunpack.c.l.b16 %v9054
    %v9339 = vunpack.c.h.b16 %v9054
    %v9340 = vunpack.c.l.b16 %v9055
    %v9341 = vunpack.c.h.b16 %v9055
    %v9342 = vunpack.c.l.b16 %v9056
    %v9343 = vunpack.c.h.b16 %v9056
    %v9344 = vunpack.c.l.b16 %v9057
    %v9345 = vunpack.c.h.b16 %v9057
    %v9346 = vunpack.c.l.b16 %v9058
    %v9347 = vunpack.c.h.b16 %v9058
    %v9348 = vunpack.c.l.b16 %v9059
    %v9349 = vunpack.c.h.b16 %v9059
    %v9350 = vunpack.c.l.b16 %v9060
    %v9351 = vunpack.c.h.b16 %v9060
    %v9352 = vunpack.c.l.b16 %v9061
    %v9353 = vunpack.c.h.b16 %v9061
    %v9354 = vunpack.c.l.b16 %v9062
    %v9355 = vunpack.c.h.b16 %v9062
    %v9356 = vunpack.c.l.b16 %v9063
    %v9357 = vunpack.c.h.b16 %v9063
    %v9358 = vpack.c.b16 %v9168, %v9166
    %v9359 = vpack.c.b16 %v9169, %v9167
    %v9360 = vpack.c.b16 %v9172, %v9170
    %v9361 = vpack.c.b16 %v9173, %v9171
    %v9362 = vpack.c.b16 %v9176, %v9174
    %v9363 = vpack.c.b16 %v9177, %v9175
    %v9364 = vpack.c.b16 %v9180, %v9178
    %v9365 = vpack.c.b16 %v9181, %v9179
    %v9366 = vpack.c.b16 %v9184, %v9182
    %v9367 = vpack.c.b16 %v9185, %v9183
    %v9368 = vpack.c.b16 %v9188, %v9186
    %v9369 = vpack.c.b16 %v9189, %v9187
    %v9370 = vpack.c.b16 %v9192, %v9190
    %v9371 = vpack.c.b16 %v9193, %v9191
    %v9372 = vpack.c.b16 %v9196, %v9194
    %v9373 = vpack.c.b16 %v9197, %v9195
    %v9374 = vpack.c.b16 %v9200, %v9198
    %v9375 = vpack.c.b16 %v9201, %v9199
    %v9376 = vpack.c.b16 %v9204, %v9202
    %v9377 = vpack.c.b16 %v9205, %v9203
    %v9378 = vpack.c.b16 %v9208, %v9206
    %v9379 = vpack.c.b16 %v9209, %v9207
    %v9380 = vpack.c.b16 %v9212, %v9210
    %v9381 = vpack.c.b16 %v9213, %v9211
    %v9382 = vpack.c.b16 %v9216, %v9214
    %v9383 = vpack.c.b16 %v9217, %v9215
    %v9384 = vpack.c.b16 %v9220, %v9218
    %v9385 = vpack.c.b16 %v9221, %v9219
    %v9386 = vpack.c.b16 %v9224, %v9222
    %v9387 = vpack.c.b16 %v9225, %v9223
    %v9388 = vpack.c.b16 %v9228, %v9226
    %v9389 = vpack.c.b16 %v9229, %v9227
    %v9390 = vpack.c.b16 %v9232, %v9230
    %v9391 = vpack.c.b16 %v9233, %v9231
    %v9392 = vpack.c.b16 %v9236, %v9234
    %v9393 = vpack.c.b16 %v9237, %v9235
    %v9394 = vpack.c.b16 %v9240, %v9238
    %v9395 = vpack.c.b16 %v9241, %v9239
    %v9396 = vpack.c.b16 %v9244, %v9242
    %v9397 = vpack.c.b16 %v9245, %v9243
    %v9398 = vpack.c.b16 %v9248, %v9246
    %v9399 = vpack.c.b16 %v9249, %v9247
    %v9400 = vpack.c.b16 %v9252, %v9250
    %v9401 = vpack.c.b16 %v9253, %v9251
    %v9402 = vpack.c.b16 %v9256, %v9254
    %v9403 = vpack.c.b16 %v9257, %v9255
    %v9404 = vpack.c.b16 %v9260, %v9258
    %v9405 = vpack.c.b16 %v9261, %v9259
    %v9406 = vpack.c.b16 %v9264, %v9262
    %v9407 = vpack.c.b16 %v9265, %v9263
    %v9408 = vpack.c.b16 %v9268, %v9266
    %v9409 = vpack.c.b16 %v9269, %v9267
    %v9410 = vpack.c.b16 %v9272, %v9270
    %v9411 = vpack.c.b16 %v9273, %v9271
    %v9412 = vpack.c.b16 %v9276, %v9274
    %v9413 = vpack.c.b16 %v9277, %v9275
    %v9414 = vpack.c.b16 %v9280, %v9278
    %v9415 = vpack.c.b16 %v9281, %v9279
    %v9416 = vpack.c.b16 %v9284, %v9282
    %v9417 = vpack.c.b16 %v9285, %v9283
    %v9418 = vpack.c.b16 %v9288, %v9286
    %v9419 = vpack.c.b16 %v9289, %v9287
    %v9420 = vpack.c.b16 %v9292, %v9290
    %v9421 = vpack.c.b16 %v9293, %v9291
    %v9422 = vpack.c.b16 %v9296, %v9294
    %v9423 = vpack.c.b16 %v9297, %v9295
    %v9424 = vpack.c.b16 %v9300, %v9298
    %v9425 = vpack.c.b16 %v9301, %v9299
    %v9426 = vpack.c.b16 %v9304, %v9302
    %v9427 = vpack.c.b16 %v9305, %v9303
    %v9428 = vpack.c.b16 %v9308, %v9306
    %v9429 = vpack.c.b16 %v9309, %v9307
    %v9430 = vpack.c.b16 %v9312, %v9310
    %v9431 = vpack.c.b16 %v9313, %v9311
    %v9432 = vpack.c.b16 %v9316, %v9314
    %v9433 = vpack.c.b16 %v9317, %v9315
    %v9434 = vpack.c.b16 %v9320, %v9318
    %v9435 = vpack.c.b16 %v9321, %v9319
    %v9436 = vpack.c.b16 %v9324, %v9322
    %v9437 = vpack.c.b16 %v9325, %v9323
    %v9438 = vpack.c.b16 %v9328, %v9326
    %v9439 = vpack.c.b16 %v9329, %v9327
    %v9440 = vpack.c.b16 %v9332, %v9330
    %v9441 = vpack.c.b16 %v9333, %v9331
    %v9442 = vpack.c.b16 %v9336, %v9334
    %v9443 = vpack.c.b16 %v9337, %v9335
    %v9444 = vpack.c.b16 %v9340, %v9338
    %v9445 = vpack.c.b16 %v9341, %v9339
    %v9446 = vpack.c.b16 %v9344, %v9342
    %v9447 = vpack.c.b16 %v9345, %v9343
    %v9448 = vpack.c.b16 %v9348, %v9346
    %v9449 = vpack.c.b16 %v9349, %v9347
    %v9450 = vpack.c.b16 %v9352, %v9350
    %v9451 = vpack.c.b16 %v9353, %v9351
    %v9452 = vpack.c.b16 %v9356, %v9354
    %v9453 = vpack.c.b16 %v9357, %v9355
    %9550 = vmatpush.bf16.msra.mxu0 %v9372
    %9551 = vmatpush.bf16.msra.mxu0 %v9370
    %9552 = vmatpush.bf16.msra.mxu0 %v9368
    %9553 = vmatpush.bf16.msra.mxu0 %v9366
    %9554 = vmatpush.bf16.msra.mxu0 %v9364
    %9555 = vmatpush.bf16.msra.mxu0 %v9362
    %9556 = vmatpush.bf16.msra.mxu0 %v9360
    %9557 = vmatpush.bf16.msra.mxu0 %v9358
    %9558 = vmatmul.bf16.gmra.mxu0 %v8920
    %v9559 = vpop.f32.mrf.mxu0
    %v9560 = vadd.f32 %v9066, %v9559
    %v9561 = vpop.f32.mrf.mxu0
    %v9562 = vadd.f32 %v9066, %v9561
    %9563 = vmatmul.bf16.gmra.mxu0 %v8922
    %v9564 = vpop.f32.mrf.mxu0
    %v9565 = vadd.f32 %v9066, %v9564
    %v9566 = vpop.f32.mrf.mxu0
    %v9567 = vadd.f32 %v9066, %v9566
    %9568 = vdwg.mxu0
    %9569 = vmatpush.bf16.msra.mxu0 %v9388
    %9570 = vmatpush.bf16.msra.mxu0 %v9386
    %9571 = vmatpush.bf16.msra.mxu0 %v9384
    %9572 = vmatpush.bf16.msra.mxu0 %v9382
    %9573 = vmatpush.bf16.msra.mxu0 %v9380
    %9574 = vmatpush.bf16.msra.mxu0 %v9378
    %9575 = vmatpush.bf16.msra.mxu0 %v9376
    %9576 = vmatpush.bf16.msra.mxu0 %v9374
    %9577 = vmatmul.bf16.gmra.mxu0 %v8921
    %v9578 = vpop.f32.mrf.mxu0
    %v9579 = vadd.f32 %v9560, %v9578
    %v9580 = vpop.f32.mrf.mxu0
    %v9581 = vadd.f32 %v9562, %v9580
    %9582 = vmatmul.bf16.gmra.mxu0 %v8923
    %v9583 = vpop.f32.mrf.mxu0
    %v9584 = vadd.f32 %v9565, %v9583
    %v9585 = vpop.f32.mrf.mxu0
    %v9586 = vadd.f32 %v9567, %v9585
    %9587 = vdwg.mxu0
    %9588 = vmatpush.bf16.msra.mxu0 %v9404
    %9589 = vmatpush.bf16.msra.mxu0 %v9402
    %9590 = vmatpush.bf16.msra.mxu0 %v9400
    %9591 = vmatpush.bf16.msra.mxu0 %v9398
    %9592 = vmatpush.bf16.msra.mxu0 %v9396
    %9593 = vmatpush.bf16.msra.mxu0 %v9394
    %9594 = vmatpush.bf16.msra.mxu0 %v9392
    %9595 = vmatpush.bf16.msra.mxu0 %v9390
    %9596 = vmatmul.bf16.gmra.mxu0 %v8940
    %v9597 = vpop.f32.mrf.mxu0
    %v9598 = vadd.f32 %v9579, %v9597
    %v9599 = vpop.f32.mrf.mxu0
    %v9600 = vadd.f32 %v9581, %v9599
    %9601 = vmatmul.bf16.gmra.mxu0 %v8942
    %v9602 = vpop.f32.mrf.mxu0
    %v9603 = vadd.f32 %v9584, %v9602
    %v9604 = vpop.f32.mrf.mxu0
    %v9605 = vadd.f32 %v9586, %v9604
    %9606 = vdwg.mxu0
    %9607 = vmatpush.bf16.msra.mxu0 %v9420
    %9608 = vmatpush.bf16.msra.mxu0 %v9418
    %9609 = vmatpush.bf16.msra.mxu0 %v9416
    %9610 = vmatpush.bf16.msra.mxu0 %v9414
    %9611 = vmatpush.bf16.msra.mxu0 %v9412
    %9612 = vmatpush.bf16.msra.mxu0 %v9410
    %9613 = vmatpush.bf16.msra.mxu0 %v9408
    %9614 = vmatpush.bf16.msra.mxu0 %v9406
    %9615 = vmatmul.bf16.gmra.mxu0 %v8941
    %v9616 = vpop.f32.mrf.mxu0
    %v9617 = vadd.f32 %v9598, %v9616
    %v9618 = vpop.f32.mrf.mxu0
    %v9619 = vadd.f32 %v9600, %v9618
    %9620 = vmatmul.bf16.gmra.mxu0 %v8943
    %v9621 = vpop.f32.mrf.mxu0
    %v9622 = vadd.f32 %v9603, %v9621
    %v9623 = vpop.f32.mrf.mxu0
    %v9624 = vadd.f32 %v9605, %v9623
    %9625 = vdwg.mxu0
    %9626 = vmatpush.bf16.msra.mxu0 %v9436
    %9627 = vmatpush.bf16.msra.mxu0 %v9434
    %9628 = vmatpush.bf16.msra.mxu0 %v9432
    %9629 = vmatpush.bf16.msra.mxu0 %v9430
    %9630 = vmatpush.bf16.msra.mxu0 %v9428
    %9631 = vmatpush.bf16.msra.mxu0 %v9426
    %9632 = vmatpush.bf16.msra.mxu0 %v9424
    %9633 = vmatpush.bf16.msra.mxu0 %v9422
    %9634 = vmatmul.bf16.gmra.mxu0 %v8960
    %v9635 = vpop.f32.mrf.mxu0
    %v9636 = vadd.f32 %v9617, %v9635
    %v9637 = vpop.f32.mrf.mxu0
    %v9638 = vadd.f32 %v9619, %v9637
    %9639 = vmatmul.bf16.gmra.mxu0 %v8962
    %v9640 = vpop.f32.mrf.mxu0
    %v9641 = vadd.f32 %v9622, %v9640
    %v9642 = vpop.f32.mrf.mxu0
    %v9643 = vadd.f32 %v9624, %v9642
    %9644 = vdwg.mxu0
    %9645 = vmatpush.bf16.msra.mxu0 %v9452
    %9646 = vmatpush.bf16.msra.mxu0 %v9450
    %9647 = vmatpush.bf16.msra.mxu0 %v9448
    %9648 = vmatpush.bf16.msra.mxu0 %v9446
    %9649 = vmatpush.bf16.msra.mxu0 %v9444
    %9650 = vmatpush.bf16.msra.mxu0 %v9442
    %9651 = vmatpush.bf16.msra.mxu0 %v9440
    %9652 = vmatpush.bf16.msra.mxu0 %v9438
    %9653 = vmatmul.bf16.gmra.mxu0 %v8961
    %v9654 = vpop.f32.mrf.mxu0
    %v9655 = vadd.f32 %v9636, %v9654
    %v9656 = vpop.f32.mrf.mxu0
    %v9657 = vadd.f32 %v9638, %v9656
    %9658 = vmatmul.bf16.gmra.mxu0 %v8963
    %v9659 = vpop.f32.mrf.mxu0
    %v9660 = vadd.f32 %v9641, %v9659
    %v9661 = vpop.f32.mrf.mxu0
    %v9662 = vadd.f32 %v9643, %v9661
    %9663 = vdwg.mxu0
    %9664 = vmatpush.bf16.msra.mxu0 %v9373
    %9665 = vmatpush.bf16.msra.mxu0 %v9371
    %9666 = vmatpush.bf16.msra.mxu0 %v9369
    %9667 = vmatpush.bf16.msra.mxu0 %v9367
    %9668 = vmatpush.bf16.msra.mxu0 %v9365
    %9669 = vmatpush.bf16.msra.mxu0 %v9363
    %9670 = vmatpush.bf16.msra.mxu0 %v9361
    %9671 = vmatpush.bf16.msra.mxu0 %v9359
    %9672 = vmatmul.bf16.gmra.mxu0 %v8920
    %v9673 = vpop.f32.mrf.mxu0
    %v9674 = vadd.f32 %v9067, %v9673
    %v9675 = vpop.f32.mrf.mxu0
    %v9676 = vadd.f32 %v9067, %v9675
    %9677 = vmatmul.bf16.gmra.mxu0 %v8922
    %v9678 = vpop.f32.mrf.mxu0
    %v9679 = vadd.f32 %v9067, %v9678
    %v9680 = vpop.f32.mrf.mxu0
    %v9681 = vadd.f32 %v9067, %v9680
    %9682 = vdwg.mxu0
    %9683 = vmatpush.bf16.msra.mxu0 %v9389
    %9684 = vmatpush.bf16.msra.mxu0 %v9387
    %9685 = vmatpush.bf16.msra.mxu0 %v9385
    %9686 = vmatpush.bf16.msra.mxu0 %v9383
    %9687 = vmatpush.bf16.msra.mxu0 %v9381
    %9688 = vmatpush.bf16.msra.mxu0 %v9379
    %9689 = vmatpush.bf16.msra.mxu0 %v9377
    %9690 = vmatpush.bf16.msra.mxu0 %v9375
    %9691 = vmatmul.bf16.gmra.mxu0 %v8921
    %v9692 = vpop.f32.mrf.mxu0
    %v9693 = vadd.f32 %v9674, %v9692
    %v9694 = vpop.f32.mrf.mxu0
    %v9695 = vadd.f32 %v9676, %v9694
    %9696 = vmatmul.bf16.gmra.mxu0 %v8923
    %v9697 = vpop.f32.mrf.mxu0
    %v9698 = vadd.f32 %v9679, %v9697
    %v9699 = vpop.f32.mrf.mxu0
    %v9700 = vadd.f32 %v9681, %v9699
    %9701 = vdwg.mxu0
    %9702 = vmatpush.bf16.msra.mxu0 %v9405
    %9703 = vmatpush.bf16.msra.mxu0 %v9403
    %9704 = vmatpush.bf16.msra.mxu0 %v9401
    %9705 = vmatpush.bf16.msra.mxu0 %v9399
    %9706 = vmatpush.bf16.msra.mxu0 %v9397
    %9707 = vmatpush.bf16.msra.mxu0 %v9395
    %9708 = vmatpush.bf16.msra.mxu0 %v9393
    %9709 = vmatpush.bf16.msra.mxu0 %v9391
    %9710 = vmatmul.bf16.gmra.mxu0 %v8940
    %v9711 = vpop.f32.mrf.mxu0
    %v9712 = vadd.f32 %v9693, %v9711
    %v9713 = vpop.f32.mrf.mxu0
    %v9714 = vadd.f32 %v9695, %v9713
    %9715 = vmatmul.bf16.gmra.mxu0 %v8942
    %v9716 = vpop.f32.mrf.mxu0
    %v9717 = vadd.f32 %v9698, %v9716
    %v9718 = vpop.f32.mrf.mxu0
    %v9719 = vadd.f32 %v9700, %v9718
    %9720 = vdwg.mxu0
    %9721 = vmatpush.bf16.msra.mxu0 %v9421
    %9722 = vmatpush.bf16.msra.mxu0 %v9419
    %9723 = vmatpush.bf16.msra.mxu0 %v9417
    %9724 = vmatpush.bf16.msra.mxu0 %v9415
    %9725 = vmatpush.bf16.msra.mxu0 %v9413
    %9726 = vmatpush.bf16.msra.mxu0 %v9411
    %9727 = vmatpush.bf16.msra.mxu0 %v9409
    %9728 = vmatpush.bf16.msra.mxu0 %v9407
    %9729 = vmatmul.bf16.gmra.mxu0 %v8941
    %v9730 = vpop.f32.mrf.mxu0
    %v9731 = vadd.f32 %v9712, %v9730
    %v9732 = vpop.f32.mrf.mxu0
    %v9733 = vadd.f32 %v9714, %v9732
    %9734 = vmatmul.bf16.gmra.mxu0 %v8943
    %v9735 = vpop.f32.mrf.mxu0
    %v9736 = vadd.f32 %v9717, %v9735
    %v9737 = vpop.f32.mrf.mxu0
    %v9738 = vadd.f32 %v9719, %v9737
    %9739 = vdwg.mxu0
    %9740 = vmatpush.bf16.msra.mxu0 %v9437
    %9741 = vmatpush.bf16.msra.mxu0 %v9435
    %9742 = vmatpush.bf16.msra.mxu0 %v9433
    %9743 = vmatpush.bf16.msra.mxu0 %v9431
    %9744 = vmatpush.bf16.msra.mxu0 %v9429
    %9745 = vmatpush.bf16.msra.mxu0 %v9427
    %9746 = vmatpush.bf16.msra.mxu0 %v9425
    %9747 = vmatpush.bf16.msra.mxu0 %v9423
    %9748 = vmatmul.bf16.gmra.mxu0 %v8960
    %v9749 = vpop.f32.mrf.mxu0
    %v9750 = vadd.f32 %v9731, %v9749
    %v9751 = vpop.f32.mrf.mxu0
    %v9752 = vadd.f32 %v9733, %v9751
    %9753 = vmatmul.bf16.gmra.mxu0 %v8962
    %v9754 = vpop.f32.mrf.mxu0
    %v9755 = vadd.f32 %v9736, %v9754
    %v9756 = vpop.f32.mrf.mxu0
    %v9757 = vadd.f32 %v9738, %v9756
    %9758 = vdwg.mxu0
    %9759 = vmatpush.bf16.msra.mxu0 %v9453
    %9760 = vmatpush.bf16.msra.mxu0 %v9451
    %9761 = vmatpush.bf16.msra.mxu0 %v9449
    %9762 = vmatpush.bf16.msra.mxu0 %v9447
    %9763 = vmatpush.bf16.msra.mxu0 %v9445
    %9764 = vmatpush.bf16.msra.mxu0 %v9443
    %9765 = vmatpush.bf16.msra.mxu0 %v9441
    %9766 = vmatpush.bf16.msra.mxu0 %v9439
    %9767 = vmatmul.bf16.gmra.mxu0 %v8961
    %v9768 = vpop.f32.mrf.mxu0
    %v9769 = vadd.f32 %v9750, %v9768
    %v9770 = vpop.f32.mrf.mxu0
    %v9771 = vadd.f32 %v9752, %v9770
    %9772 = vmatmul.bf16.gmra.mxu0 %v8963
    %v9773 = vpop.f32.mrf.mxu0
    %v9774 = vadd.f32 %v9755, %v9773
    %v9775 = vpop.f32.mrf.mxu0
    %v9776 = vadd.f32 %v9757, %v9775
    %9777 = vdwg.mxu0
    %v9778 = vmax.f32 %v9655, 0.0
    %v9779 = vmax.f32 %v9769, 0.0
    %v9780 = vmax.f32 %v9657, 0.0
    %v9781 = vmax.f32 %v9771, 0.0
    %v9782 = vmax.f32 %v9660, 0.0
    %v9783 = vmax.f32 %v9774, 0.0
    %v9784 = vmax.f32 %v9662, 0.0
    %v9785 = vmax.f32 %v9776, 0.0
    %vm9786 = vcmp.lt.s32.totalorder %v327, 0
    %v9787 = vsub.s32 0, %v327
    %v9788 = vsel %vm9786, %v9787, %v327
    %v9789 = vshrl.u32 %v9788, 2
    %v9790 = vand.u32 %v9788, 3
    %v9791 = vsub.s32 0, %v9790
    %v9792 = vsel %vm9786, %v9791, %v9790
    %vm9793 = vcmp.lt.s32.totalorder %v328, 0
    %v9794 = vsub.s32 0, %v328
    %v9795 = vsel %vm9793, %v9794, %v328
    %v9796 = vshrl.u32 %v9795, 2
    %v9797 = vand.u32 %v9795, 3
    %v9798 = vsub.s32 0, %v9797
    %v9799 = vsel %vm9793, %v9798, %v9797
    %vm9800 = vcmp.lt.s32.totalorder %v329, 0
    %v9801 = vsub.s32 0, %v329
    %v9802 = vsel %vm9800, %v9801, %v329
    %v9803 = vshrl.u32 %v9802, 2
    %v9804 = vand.u32 %v9802, 3
    %v9805 = vsub.s32 0, %v9804
    %v9806 = vsel %vm9800, %v9805, %v9804
    %vm9807 = vcmp.lt.s32.totalorder %v330, 0
    %v9808 = vsub.s32 0, %v330
    %v9809 = vsel %vm9807, %v9808, %v330
    %v9810 = vshrl.u32 %v9809, 2
    %v9811 = vand.u32 %v9809, 3
    %v9812 = vsub.s32 0, %v9811
    %v9813 = vsel %vm9807, %v9812, %v9811
    %vm9814 = vcmp.ne.s32.totalorder %v9792, 0
    %vm9815 = vcmp.ne.s32.totalorder %v9799, 0
    %vm9816 = vcmp.ne.s32.totalorder %v9806, 0
    %vm9817 = vcmp.ne.s32.totalorder %v9813, 0
    %vm9818 = vcmp.lt.s32.totalorder %v9792, 0
    %vm9819 = vcmp.lt.s32.totalorder %v9799, 0
    %vm9820 = vcmp.lt.s32.totalorder %v9806, 0
    %vm9821 = vcmp.lt.s32.totalorder %v9813, 0
    %vm9822 = vmand %vm9818, %vm9814
    %vm9823 = vmand %vm9819, %vm9815
    %vm9824 = vmand %vm9820, %vm9816
    %vm9825 = vmand %vm9821, %vm9817
    %v9826 = vadd.s32 %v9792, 4
    %v9827 = vadd.s32 %v9799, 4
    %v9828 = vadd.s32 %v9806, 4
    %v9829 = vadd.s32 %v9813, 4
    %v9830 = vsel %vm9822, %v9826, %v9792
    %v9831 = vsel %vm9823, %v9827, %v9799
    %v9832 = vsel %vm9824, %v9828, %v9806
    %v9833 = vsel %vm9825, %v9829, %v9813
    %vm9834 = vcmp.ne.s32.totalorder %v9830, 0
    %vm9835 = vcmp.ne.s32.totalorder %v9831, 0
    %vm9836 = vcmp.ne.s32.totalorder %v9832, 0
    %vm9837 = vcmp.ne.s32.totalorder %v9833, 0
    %v9840 = vrot.slane %v9784, 7
    %v9841 = vrot.slane %v9785, 7
    %v9850 = vrot.slane %v9778, 7
    %v9851 = vrot.slane %v9779, 7
    %v9852 = vrot.slane %v9780, 7
    %v9853 = vsel %vm569, %v9850, %v9852
    %v9854 = vrot.slane %v9781, 7
    %v9855 = vsel %vm569, %v9851, %v9854
    %v9856 = vrot.slane %v9782, 7
    %v9857 = vsel %vm569, %v9852, %v9856
    %v9858 = vrot.slane %v9783, 7
    %v9859 = vsel %vm569, %v9854, %v9858
    %v9860 = vsel %vm569, %v9856, %v9840
    %v9861 = vsel %vm569, %v9858, %v9841
    %v9870 = vsel %vm569, %v9840, %v9850
    %v9871 = vsel %vm569, %v9841, %v9851
    %v9872 = vsel %vm9834, 1, 0
    %v9873 = vsel %vm9835, 1, 0
    %v9874 = vsel %vm9836, 1, 0
    %v9875 = vsel %vm9837, 1, 0
    %vm9876 = vcmp.eq.s32.totalorder %v9872, 1
    %vm9877 = vcmp.eq.s32.totalorder %v9873, 1
    %vm9878 = vcmp.eq.s32.totalorder %v9874, 1
    %vm9879 = vcmp.eq.s32.totalorder %v9875, 1
    %v9880 = vsel %vm9876, %v9870, 0.0
    %v9881 = vsel %vm9876, %v9871, 0.0
    %v9882 = vsel %vm9877, %v9853, 0.0
    %v9883 = vsel %vm9877, %v9855, 0.0
    %v9884 = vsel %vm9878, %v9857, 0.0
    %v9885 = vsel %vm9878, %v9859, 0.0
    %v9886 = vsel %vm9879, %v9860, 0.0
    %v9887 = vsel %vm9879, %v9861, 0.0
    %vm9888 = vcmp.ne.s32.totalorder %v9830, 3
    %vm9889 = vcmp.ne.s32.totalorder %v9831, 3
    %vm9890 = vcmp.ne.s32.totalorder %v9832, 3
    %vm9891 = vcmp.ne.s32.totalorder %v9833, 3
    %v9892 = vrot.slane %v9778, 1
    %v9893 = vrot.slane %v9780, 1
    %v9894 = vsel %vm681, %v9892, %v9893
    %v9895 = vrot.slane %v9779, 1
    %v9896 = vrot.slane %v9781, 1
    %v9897 = vsel %vm681, %v9895, %v9896
    %v9898 = vrot.slane %v9782, 1
    %v9899 = vsel %vm681, %v9893, %v9898
    %v9900 = vrot.slane %v9783, 1
    %v9901 = vsel %vm681, %v9896, %v9900
    %v9902 = vrot.slane %v9784, 1
    %v9903 = vsel %vm681, %v9898, %v9902
    %v9904 = vrot.slane %v9785, 1
    %v9905 = vsel %vm681, %v9900, %v9904
    %v9916 = vsel %vm681, %v9902, %v9892
    %v9917 = vsel %vm681, %v9904, %v9895
    %v9918 = vsel %vm9888, 1, 0
    %v9919 = vsel %vm9889, 1, 0
    %v9920 = vsel %vm9890, 1, 0
    %v9921 = vsel %vm9891, 1, 0
    %vm9922 = vcmp.eq.s32.totalorder %v9918, 1
    %vm9923 = vcmp.eq.s32.totalorder %v9919, 1
    %vm9924 = vcmp.eq.s32.totalorder %v9920, 1
    %vm9925 = vcmp.eq.s32.totalorder %v9921, 1
    %v9926 = vsel %vm9922, %v9894, 0.0
    %v9927 = vsel %vm9922, %v9897, 0.0
    %v9928 = vsel %vm9923, %v9899, 0.0
    %v9929 = vsel %vm9923, %v9901, 0.0
    %v9930 = vsel %vm9924, %v9903, 0.0
    %v9931 = vsel %vm9924, %v9905, 0.0
    %v9932 = vsel %vm9925, %v9916, 0.0
    %v9933 = vsel %vm9925, %v9917, 0.0
    %v9934 = vpack.c.bf16 %v9881, %v9880
    %v9935 = vpack.c.bf16 %v9883, %v9882
    %v9936 = vpack.c.bf16 %v9885, %v9884
    %v9937 = vpack.c.bf16 %v9887, %v9886
    %v9938 = vpack.c.bf16 %v9779, %v9778
    %v9939 = vpack.c.bf16 %v9781, %v9780
    %v9940 = vpack.c.bf16 %v9783, %v9782
    %v9941 = vpack.c.bf16 %v9785, %v9784
    %v9942 = vpack.c.bf16 %v9927, %v9926
    %v9943 = vpack.c.bf16 %v9929, %v9928
    %v9944 = vpack.c.bf16 %v9931, %v9930
    %v9945 = vpack.c.bf16 %v9933, %v9932
    %v9950 = vunpack.c.l.b16 %v9934
    %v9951 = vunpack.c.h.b16 %v9934
    %v9952 = vunpack.c.l.b16 %v9935
    %v9953 = vunpack.c.h.b16 %v9935
    %v9954 = vunpack.c.l.b16 %v9936
    %v9955 = vunpack.c.h.b16 %v9936
    %v9956 = vunpack.c.l.b16 %v9937
    %v9957 = vunpack.c.h.b16 %v9937
    %v9958 = vpack.c.b16 %v9952, %v9950
    %v9959 = vpack.c.b16 %v9953, %v9951
    %v9960 = vpack.c.b16 %v9956, %v9954
    %v9961 = vpack.c.b16 %v9957, %v9955
    %v9970 = vunpack.c.l.b16 %v9938
    %v9971 = vunpack.c.h.b16 %v9938
    %v9972 = vunpack.c.l.b16 %v9939
    %v9973 = vunpack.c.h.b16 %v9939
    %v9974 = vunpack.c.l.b16 %v9940
    %v9975 = vunpack.c.h.b16 %v9940
    %v9976 = vunpack.c.l.b16 %v9941
    %v9977 = vunpack.c.h.b16 %v9941
    %v9978 = vpack.c.b16 %v9972, %v9970
    %v9979 = vpack.c.b16 %v9973, %v9971
    %v9980 = vpack.c.b16 %v9976, %v9974
    %v9981 = vpack.c.b16 %v9977, %v9975
    %v9990 = vunpack.c.l.b16 %v9942
    %v9991 = vunpack.c.h.b16 %v9942
    %v9992 = vunpack.c.l.b16 %v9943
    %v9993 = vunpack.c.h.b16 %v9943
    %v9994 = vunpack.c.l.b16 %v9944
    %v9995 = vunpack.c.h.b16 %v9944
    %v9996 = vunpack.c.l.b16 %v9945
    %v9997 = vunpack.c.h.b16 %v9945
    %v9998 = vpack.c.b16 %v9992, %v9990
    %v9999 = vpack.c.b16 %v9993, %v9991
    %v10000 = vpack.c.b16 %v9996, %v9994
    %v10001 = vpack.c.b16 %v9997, %v9995
    %v10006 = vld [vmem:[#allocation23] sm:$0xff]
    %v10007 = vld [vmem:[#allocation23 + $0x8] sm:$0xff]
    %v10008 = vld [vmem:[#allocation23 + $0x10] sm:$0xff]
    %v10009 = vld [vmem:[#allocation23 + $0x18] sm:$0xff]
    %v10010 = vld [vmem:[#allocation23 + $0x20] sm:$0xff]
    %v10011 = vld [vmem:[#allocation23 + $0x28] sm:$0xff]
    %v10012 = vld [vmem:[#allocation23 + $0x30] sm:$0xff]
    %v10013 = vld [vmem:[#allocation23 + $0x38] sm:$0xff]
    %v10014 = vld [vmem:[#allocation23 + $0x40] sm:$0xff]
    %v10015 = vld [vmem:[#allocation23 + $0x48] sm:$0xff]
    %v10016 = vld [vmem:[#allocation23 + $0x50] sm:$0xff]
    %v10017 = vld [vmem:[#allocation23 + $0x58] sm:$0xff]
    %v10018 = vld [vmem:[#allocation23 + $0x60] sm:$0xff]
    %v10019 = vld [vmem:[#allocation23 + $0x68] sm:$0xff]
    %v10020 = vld [vmem:[#allocation23 + $0x70] sm:$0xff]
    %v10021 = vld [vmem:[#allocation23 + $0x78] sm:$0xff]
    %v10022 = vld [vmem:[#allocation23 + $0x80] sm:$0xff]
    %v10023 = vld [vmem:[#allocation23 + $0x88] sm:$0xff]
    %v10024 = vld [vmem:[#allocation23 + $0x90] sm:$0xff]
    %v10025 = vld [vmem:[#allocation23 + $0x98] sm:$0xff]
    %v10026 = vld [vmem:[#allocation23 + $0xa0] sm:$0xff]
    %v10027 = vld [vmem:[#allocation23 + $0xa8] sm:$0xff]
    %v10028 = vld [vmem:[#allocation23 + $0xb0] sm:$0xff]
    %v10029 = vld [vmem:[#allocation23 + $0xb8] sm:$0xff]
    %v10030 = vld [vmem:[#allocation23 + $0xc0] sm:$0xff]
    %v10031 = vld [vmem:[#allocation23 + $0xc8] sm:$0xff]
    %v10032 = vld [vmem:[#allocation23 + $0xd0] sm:$0xff]
    %v10033 = vld [vmem:[#allocation23 + $0xd8] sm:$0xff]
    %v10034 = vld [vmem:[#allocation23 + $0xe0] sm:$0xff]
    %v10035 = vld [vmem:[#allocation23 + $0xe8] sm:$0xff]
    %v10036 = vld [vmem:[#allocation23 + $0xf0] sm:$0xff]
    %v10037 = vld [vmem:[#allocation23 + $0xf8] sm:$0xff]
    %v10038 = vld [vmem:[#allocation23 + $0x100] sm:$0xff]
    %v10039 = vld [vmem:[#allocation23 + $0x108] sm:$0xff]
    %v10040 = vld [vmem:[#allocation23 + $0x110] sm:$0xff]
    %v10041 = vld [vmem:[#allocation23 + $0x118] sm:$0xff]
    %v10042 = vld [vmem:[#allocation23 + $0x120] sm:$0xff]
    %v10043 = vld [vmem:[#allocation23 + $0x128] sm:$0xff]
    %v10044 = vld [vmem:[#allocation23 + $0x130] sm:$0xff]
    %v10045 = vld [vmem:[#allocation23 + $0x138] sm:$0xff]
    %v10046 = vld [vmem:[#allocation23 + $0x140] sm:$0xff]
    %v10047 = vld [vmem:[#allocation23 + $0x148] sm:$0xff]
    %v10048 = vld [vmem:[#allocation23 + $0x150] sm:$0xff]
    %v10049 = vld [vmem:[#allocation23 + $0x158] sm:$0xff]
    %v10050 = vld [vmem:[#allocation23 + $0x160] sm:$0xff]
    %v10051 = vld [vmem:[#allocation23 + $0x168] sm:$0xff]
    %v10052 = vld [vmem:[#allocation23 + $0x170] sm:$0xff]
    %v10053 = vld [vmem:[#allocation23 + $0x178] sm:$0xff]
    %v10054 = vld [vmem:[#allocation23 + $0x180] sm:$0xff]
    %v10055 = vld [vmem:[#allocation23 + $0x188] sm:$0xff]
    %v10056 = vld [vmem:[#allocation23 + $0x190] sm:$0xff]
    %v10057 = vld [vmem:[#allocation23 + $0x198] sm:$0xff]
    %v10058 = vld [vmem:[#allocation23 + $0x1a0] sm:$0xff]
    %v10059 = vld [vmem:[#allocation23 + $0x1a8] sm:$0xff]
    %v10060 = vld [vmem:[#allocation23 + $0x1b0] sm:$0xff]
    %v10061 = vld [vmem:[#allocation23 + $0x1b8] sm:$0xff]
    %v10062 = vld [vmem:[#allocation23 + $0x1c0] sm:$0xff]
    %v10063 = vld [vmem:[#allocation23 + $0x1c8] sm:$0xff]
    %v10064 = vld [vmem:[#allocation23 + $0x1d0] sm:$0xff]
    %v10065 = vld [vmem:[#allocation23 + $0x1d8] sm:$0xff]
    %v10066 = vld [vmem:[#allocation23 + $0x1e0] sm:$0xff]
    %v10067 = vld [vmem:[#allocation23 + $0x1e8] sm:$0xff]
    %v10068 = vld [vmem:[#allocation23 + $0x1f0] sm:$0xff]
    %v10069 = vld [vmem:[#allocation23 + $0x1f8] sm:$0xff]
    %v10070 = vld [vmem:[#allocation23 + $0x200] sm:$0xff]
    %v10071 = vld [vmem:[#allocation23 + $0x208] sm:$0xff]
    %v10072 = vld [vmem:[#allocation23 + $0x210] sm:$0xff]
    %v10073 = vld [vmem:[#allocation23 + $0x218] sm:$0xff]
    %v10074 = vld [vmem:[#allocation23 + $0x220] sm:$0xff]
    %v10075 = vld [vmem:[#allocation23 + $0x228] sm:$0xff]
    %v10076 = vld [vmem:[#allocation23 + $0x230] sm:$0xff]
    %v10077 = vld [vmem:[#allocation23 + $0x238] sm:$0xff]
    %v10078 = vld [vmem:[#allocation23 + $0x240] sm:$0xff]
    %v10079 = vld [vmem:[#allocation23 + $0x248] sm:$0xff]
    %v10080 = vld [vmem:[#allocation23 + $0x250] sm:$0xff]
    %v10081 = vld [vmem:[#allocation23 + $0x258] sm:$0xff]
    %v10082 = vld [vmem:[#allocation23 + $0x260] sm:$0xff]
    %v10083 = vld [vmem:[#allocation23 + $0x268] sm:$0xff]
    %v10084 = vld [vmem:[#allocation23 + $0x270] sm:$0xff]
    %v10085 = vld [vmem:[#allocation23 + $0x278] sm:$0xff]
    %v10086 = vld [vmem:[#allocation23 + $0x280] sm:$0xff]
    %v10087 = vld [vmem:[#allocation23 + $0x288] sm:$0xff]
    %v10088 = vld [vmem:[#allocation23 + $0x290] sm:$0xff]
    %v10089 = vld [vmem:[#allocation23 + $0x298] sm:$0xff]
    %v10090 = vld [vmem:[#allocation23 + $0x2a0] sm:$0xff]
    %v10091 = vld [vmem:[#allocation23 + $0x2a8] sm:$0xff]
    %v10092 = vld [vmem:[#allocation23 + $0x2b0] sm:$0xff]
    %v10093 = vld [vmem:[#allocation23 + $0x2b8] sm:$0xff]
    %v10094 = vld [vmem:[#allocation23 + $0x2c0] sm:$0xff]
    %v10095 = vld [vmem:[#allocation23 + $0x2c8] sm:$0xff]
    %v10096 = vld [vmem:[#allocation23 + $0x2d0] sm:$0xff]
    %v10097 = vld [vmem:[#allocation23 + $0x2d8] sm:$0xff]
    %v10098 = vld [vmem:[#allocation23 + $0x2e0] sm:$0xff]
    %v10099 = vld [vmem:[#allocation23 + $0x2e8] sm:$0xff]
    %v10100 = vld [vmem:[#allocation23 + $0x2f0] sm:$0xff]
    %v10101 = vld [vmem:[#allocation23 + $0x2f8] sm:$0xff]
    %v10102 = vld [vmem:[#allocation25] sm:$0x3]
    %v10104 = vperm.slane %v10102, 0
    %v10105 = vperm.slane %v10102, 1
    %v10204 = vunpack.c.l.b16 %v10006
    %v10205 = vunpack.c.h.b16 %v10006
    %v10206 = vunpack.c.l.b16 %v10007
    %v10207 = vunpack.c.h.b16 %v10007
    %v10208 = vunpack.c.l.b16 %v10008
    %v10209 = vunpack.c.h.b16 %v10008
    %v10210 = vunpack.c.l.b16 %v10009
    %v10211 = vunpack.c.h.b16 %v10009
    %v10212 = vunpack.c.l.b16 %v10010
    %v10213 = vunpack.c.h.b16 %v10010
    %v10214 = vunpack.c.l.b16 %v10011
    %v10215 = vunpack.c.h.b16 %v10011
    %v10216 = vunpack.c.l.b16 %v10012
    %v10217 = vunpack.c.h.b16 %v10012
    %v10218 = vunpack.c.l.b16 %v10013
    %v10219 = vunpack.c.h.b16 %v10013
    %v10220 = vunpack.c.l.b16 %v10014
    %v10221 = vunpack.c.h.b16 %v10014
    %v10222 = vunpack.c.l.b16 %v10015
    %v10223 = vunpack.c.h.b16 %v10015
    %v10224 = vunpack.c.l.b16 %v10016
    %v10225 = vunpack.c.h.b16 %v10016
    %v10226 = vunpack.c.l.b16 %v10017
    %v10227 = vunpack.c.h.b16 %v10017
    %v10228 = vunpack.c.l.b16 %v10018
    %v10229 = vunpack.c.h.b16 %v10018
    %v10230 = vunpack.c.l.b16 %v10019
    %v10231 = vunpack.c.h.b16 %v10019
    %v10232 = vunpack.c.l.b16 %v10020
    %v10233 = vunpack.c.h.b16 %v10020
    %v10234 = vunpack.c.l.b16 %v10021
    %v10235 = vunpack.c.h.b16 %v10021
    %v10236 = vunpack.c.l.b16 %v10022
    %v10237 = vunpack.c.h.b16 %v10022
    %v10238 = vunpack.c.l.b16 %v10023
    %v10239 = vunpack.c.h.b16 %v10023
    %v10240 = vunpack.c.l.b16 %v10024
    %v10241 = vunpack.c.h.b16 %v10024
    %v10242 = vunpack.c.l.b16 %v10025
    %v10243 = vunpack.c.h.b16 %v10025
    %v10244 = vunpack.c.l.b16 %v10026
    %v10245 = vunpack.c.h.b16 %v10026
    %v10246 = vunpack.c.l.b16 %v10027
    %v10247 = vunpack.c.h.b16 %v10027
    %v10248 = vunpack.c.l.b16 %v10028
    %v10249 = vunpack.c.h.b16 %v10028
    %v10250 = vunpack.c.l.b16 %v10029
    %v10251 = vunpack.c.h.b16 %v10029
    %v10252 = vunpack.c.l.b16 %v10030
    %v10253 = vunpack.c.h.b16 %v10030
    %v10254 = vunpack.c.l.b16 %v10031
    %v10255 = vunpack.c.h.b16 %v10031
    %v10256 = vunpack.c.l.b16 %v10032
    %v10257 = vunpack.c.h.b16 %v10032
    %v10258 = vunpack.c.l.b16 %v10033
    %v10259 = vunpack.c.h.b16 %v10033
    %v10260 = vunpack.c.l.b16 %v10034
    %v10261 = vunpack.c.h.b16 %v10034
    %v10262 = vunpack.c.l.b16 %v10035
    %v10263 = vunpack.c.h.b16 %v10035
    %v10264 = vunpack.c.l.b16 %v10036
    %v10265 = vunpack.c.h.b16 %v10036
    %v10266 = vunpack.c.l.b16 %v10037
    %v10267 = vunpack.c.h.b16 %v10037
    %v10268 = vunpack.c.l.b16 %v10038
    %v10269 = vunpack.c.h.b16 %v10038
    %v10270 = vunpack.c.l.b16 %v10039
    %v10271 = vunpack.c.h.b16 %v10039
    %v10272 = vunpack.c.l.b16 %v10040
    %v10273 = vunpack.c.h.b16 %v10040
    %v10274 = vunpack.c.l.b16 %v10041
    %v10275 = vunpack.c.h.b16 %v10041
    %v10276 = vunpack.c.l.b16 %v10042
    %v10277 = vunpack.c.h.b16 %v10042
    %v10278 = vunpack.c.l.b16 %v10043
    %v10279 = vunpack.c.h.b16 %v10043
    %v10280 = vunpack.c.l.b16 %v10044
    %v10281 = vunpack.c.h.b16 %v10044
    %v10282 = vunpack.c.l.b16 %v10045
    %v10283 = vunpack.c.h.b16 %v10045
    %v10284 = vunpack.c.l.b16 %v10046
    %v10285 = vunpack.c.h.b16 %v10046
    %v10286 = vunpack.c.l.b16 %v10047
    %v10287 = vunpack.c.h.b16 %v10047
    %v10288 = vunpack.c.l.b16 %v10048
    %v10289 = vunpack.c.h.b16 %v10048
    %v10290 = vunpack.c.l.b16 %v10049
    %v10291 = vunpack.c.h.b16 %v10049
    %v10292 = vunpack.c.l.b16 %v10050
    %v10293 = vunpack.c.h.b16 %v10050
    %v10294 = vunpack.c.l.b16 %v10051
    %v10295 = vunpack.c.h.b16 %v10051
    %v10296 = vunpack.c.l.b16 %v10052
    %v10297 = vunpack.c.h.b16 %v10052
    %v10298 = vunpack.c.l.b16 %v10053
    %v10299 = vunpack.c.h.b16 %v10053
    %v10300 = vunpack.c.l.b16 %v10054
    %v10301 = vunpack.c.h.b16 %v10054
    %v10302 = vunpack.c.l.b16 %v10055
    %v10303 = vunpack.c.h.b16 %v10055
    %v10304 = vunpack.c.l.b16 %v10056
    %v10305 = vunpack.c.h.b16 %v10056
    %v10306 = vunpack.c.l.b16 %v10057
    %v10307 = vunpack.c.h.b16 %v10057
    %v10308 = vunpack.c.l.b16 %v10058
    %v10309 = vunpack.c.h.b16 %v10058
    %v10310 = vunpack.c.l.b16 %v10059
    %v10311 = vunpack.c.h.b16 %v10059
    %v10312 = vunpack.c.l.b16 %v10060
    %v10313 = vunpack.c.h.b16 %v10060
    %v10314 = vunpack.c.l.b16 %v10061
    %v10315 = vunpack.c.h.b16 %v10061
    %v10316 = vunpack.c.l.b16 %v10062
    %v10317 = vunpack.c.h.b16 %v10062
    %v10318 = vunpack.c.l.b16 %v10063
    %v10319 = vunpack.c.h.b16 %v10063
    %v10320 = vunpack.c.l.b16 %v10064
    %v10321 = vunpack.c.h.b16 %v10064
    %v10322 = vunpack.c.l.b16 %v10065
    %v10323 = vunpack.c.h.b16 %v10065
    %v10324 = vunpack.c.l.b16 %v10066
    %v10325 = vunpack.c.h.b16 %v10066
    %v10326 = vunpack.c.l.b16 %v10067
    %v10327 = vunpack.c.h.b16 %v10067
    %v10328 = vunpack.c.l.b16 %v10068
    %v10329 = vunpack.c.h.b16 %v10068
    %v10330 = vunpack.c.l.b16 %v10069
    %v10331 = vunpack.c.h.b16 %v10069
    %v10332 = vunpack.c.l.b16 %v10070
    %v10333 = vunpack.c.h.b16 %v10070
    %v10334 = vunpack.c.l.b16 %v10071
    %v10335 = vunpack.c.h.b16 %v10071
    %v10336 = vunpack.c.l.b16 %v10072
    %v10337 = vunpack.c.h.b16 %v10072
    %v10338 = vunpack.c.l.b16 %v10073
    %v10339 = vunpack.c.h.b16 %v10073
    %v10340 = vunpack.c.l.b16 %v10074
    %v10341 = vunpack.c.h.b16 %v10074
    %v10342 = vunpack.c.l.b16 %v10075
    %v10343 = vunpack.c.h.b16 %v10075
    %v10344 = vunpack.c.l.b16 %v10076
    %v10345 = vunpack.c.h.b16 %v10076
    %v10346 = vunpack.c.l.b16 %v10077
    %v10347 = vunpack.c.h.b16 %v10077
    %v10348 = vunpack.c.l.b16 %v10078
    %v10349 = vunpack.c.h.b16 %v10078
    %v10350 = vunpack.c.l.b16 %v10079
    %v10351 = vunpack.c.h.b16 %v10079
    %v10352 = vunpack.c.l.b16 %v10080
    %v10353 = vunpack.c.h.b16 %v10080
    %v10354 = vunpack.c.l.b16 %v10081
    %v10355 = vunpack.c.h.b16 %v10081
    %v10356 = vunpack.c.l.b16 %v10082
    %v10357 = vunpack.c.h.b16 %v10082
    %v10358 = vunpack.c.l.b16 %v10083
    %v10359 = vunpack.c.h.b16 %v10083
    %v10360 = vunpack.c.l.b16 %v10084
    %v10361 = vunpack.c.h.b16 %v10084
    %v10362 = vunpack.c.l.b16 %v10085
    %v10363 = vunpack.c.h.b16 %v10085
    %v10364 = vunpack.c.l.b16 %v10086
    %v10365 = vunpack.c.h.b16 %v10086
    %v10366 = vunpack.c.l.b16 %v10087
    %v10367 = vunpack.c.h.b16 %v10087
    %v10368 = vunpack.c.l.b16 %v10088
    %v10369 = vunpack.c.h.b16 %v10088
    %v10370 = vunpack.c.l.b16 %v10089
    %v10371 = vunpack.c.h.b16 %v10089
    %v10372 = vunpack.c.l.b16 %v10090
    %v10373 = vunpack.c.h.b16 %v10090
    %v10374 = vunpack.c.l.b16 %v10091
    %v10375 = vunpack.c.h.b16 %v10091
    %v10376 = vunpack.c.l.b16 %v10092
    %v10377 = vunpack.c.h.b16 %v10092
    %v10378 = vunpack.c.l.b16 %v10093
    %v10379 = vunpack.c.h.b16 %v10093
    %v10380 = vunpack.c.l.b16 %v10094
    %v10381 = vunpack.c.h.b16 %v10094
    %v10382 = vunpack.c.l.b16 %v10095
    %v10383 = vunpack.c.h.b16 %v10095
    %v10384 = vunpack.c.l.b16 %v10096
    %v10385 = vunpack.c.h.b16 %v10096
    %v10386 = vunpack.c.l.b16 %v10097
    %v10387 = vunpack.c.h.b16 %v10097
    %v10388 = vunpack.c.l.b16 %v10098
    %v10389 = vunpack.c.h.b16 %v10098
    %v10390 = vunpack.c.l.b16 %v10099
    %v10391 = vunpack.c.h.b16 %v10099
    %v10392 = vunpack.c.l.b16 %v10100
    %v10393 = vunpack.c.h.b16 %v10100
    %v10394 = vunpack.c.l.b16 %v10101
    %v10395 = vunpack.c.h.b16 %v10101
    %v10396 = vpack.c.b16 %v10206, %v10204
    %v10397 = vpack.c.b16 %v10207, %v10205
    %v10398 = vpack.c.b16 %v10210, %v10208
    %v10399 = vpack.c.b16 %v10211, %v10209
    %v10400 = vpack.c.b16 %v10214, %v10212
    %v10401 = vpack.c.b16 %v10215, %v10213
    %v10402 = vpack.c.b16 %v10218, %v10216
    %v10403 = vpack.c.b16 %v10219, %v10217
    %v10404 = vpack.c.b16 %v10222, %v10220
    %v10405 = vpack.c.b16 %v10223, %v10221
    %v10406 = vpack.c.b16 %v10226, %v10224
    %v10407 = vpack.c.b16 %v10227, %v10225
    %v10408 = vpack.c.b16 %v10230, %v10228
    %v10409 = vpack.c.b16 %v10231, %v10229
    %v10410 = vpack.c.b16 %v10234, %v10232
    %v10411 = vpack.c.b16 %v10235, %v10233
    %v10412 = vpack.c.b16 %v10238, %v10236
    %v10413 = vpack.c.b16 %v10239, %v10237
    %v10414 = vpack.c.b16 %v10242, %v10240
    %v10415 = vpack.c.b16 %v10243, %v10241
    %v10416 = vpack.c.b16 %v10246, %v10244
    %v10417 = vpack.c.b16 %v10247, %v10245
    %v10418 = vpack.c.b16 %v10250, %v10248
    %v10419 = vpack.c.b16 %v10251, %v10249
    %v10420 = vpack.c.b16 %v10254, %v10252
    %v10421 = vpack.c.b16 %v10255, %v10253
    %v10422 = vpack.c.b16 %v10258, %v10256
    %v10423 = vpack.c.b16 %v10259, %v10257
    %v10424 = vpack.c.b16 %v10262, %v10260
    %v10425 = vpack.c.b16 %v10263, %v10261
    %v10426 = vpack.c.b16 %v10266, %v10264
    %v10427 = vpack.c.b16 %v10267, %v10265
    %v10428 = vpack.c.b16 %v10270, %v10268
    %v10429 = vpack.c.b16 %v10271, %v10269
    %v10430 = vpack.c.b16 %v10274, %v10272
    %v10431 = vpack.c.b16 %v10275, %v10273
    %v10432 = vpack.c.b16 %v10278, %v10276
    %v10433 = vpack.c.b16 %v10279, %v10277
    %v10434 = vpack.c.b16 %v10282, %v10280
    %v10435 = vpack.c.b16 %v10283, %v10281
    %v10436 = vpack.c.b16 %v10286, %v10284
    %v10437 = vpack.c.b16 %v10287, %v10285
    %v10438 = vpack.c.b16 %v10290, %v10288
    %v10439 = vpack.c.b16 %v10291, %v10289
    %v10440 = vpack.c.b16 %v10294, %v10292
    %v10441 = vpack.c.b16 %v10295, %v10293
    %v10442 = vpack.c.b16 %v10298, %v10296
    %v10443 = vpack.c.b16 %v10299, %v10297
    %v10444 = vpack.c.b16 %v10302, %v10300
    %v10445 = vpack.c.b16 %v10303, %v10301
    %v10446 = vpack.c.b16 %v10306, %v10304
    %v10447 = vpack.c.b16 %v10307, %v10305
    %v10448 = vpack.c.b16 %v10310, %v10308
    %v10449 = vpack.c.b16 %v10311, %v10309
    %v10450 = vpack.c.b16 %v10314, %v10312
    %v10451 = vpack.c.b16 %v10315, %v10313
    %v10452 = vpack.c.b16 %v10318, %v10316
    %v10453 = vpack.c.b16 %v10319, %v10317
    %v10454 = vpack.c.b16 %v10322, %v10320
    %v10455 = vpack.c.b16 %v10323, %v10321
    %v10456 = vpack.c.b16 %v10326, %v10324
    %v10457 = vpack.c.b16 %v10327, %v10325
    %v10458 = vpack.c.b16 %v10330, %v10328
    %v10459 = vpack.c.b16 %v10331, %v10329
    %v10460 = vpack.c.b16 %v10334, %v10332
    %v10461 = vpack.c.b16 %v10335, %v10333
    %v10462 = vpack.c.b16 %v10338, %v10336
    %v10463 = vpack.c.b16 %v10339, %v10337
    %v10464 = vpack.c.b16 %v10342, %v10340
    %v10465 = vpack.c.b16 %v10343, %v10341
    %v10466 = vpack.c.b16 %v10346, %v10344
    %v10467 = vpack.c.b16 %v10347, %v10345
    %v10468 = vpack.c.b16 %v10350, %v10348
    %v10469 = vpack.c.b16 %v10351, %v10349
    %v10470 = vpack.c.b16 %v10354, %v10352
    %v10471 = vpack.c.b16 %v10355, %v10353
    %v10472 = vpack.c.b16 %v10358, %v10356
    %v10473 = vpack.c.b16 %v10359, %v10357
    %v10474 = vpack.c.b16 %v10362, %v10360
    %v10475 = vpack.c.b16 %v10363, %v10361
    %v10476 = vpack.c.b16 %v10366, %v10364
    %v10477 = vpack.c.b16 %v10367, %v10365
    %v10478 = vpack.c.b16 %v10370, %v10368
    %v10479 = vpack.c.b16 %v10371, %v10369
    %v10480 = vpack.c.b16 %v10374, %v10372
    %v10481 = vpack.c.b16 %v10375, %v10373
    %v10482 = vpack.c.b16 %v10378, %v10376
    %v10483 = vpack.c.b16 %v10379, %v10377
    %v10484 = vpack.c.b16 %v10382, %v10380
    %v10485 = vpack.c.b16 %v10383, %v10381
    %v10486 = vpack.c.b16 %v10386, %v10384
    %v10487 = vpack.c.b16 %v10387, %v10385
    %v10488 = vpack.c.b16 %v10390, %v10388
    %v10489 = vpack.c.b16 %v10391, %v10389
    %v10490 = vpack.c.b16 %v10394, %v10392
    %v10491 = vpack.c.b16 %v10395, %v10393
    %10588 = vmatpush.bf16.msra.mxu0 %v10410
    %10589 = vmatpush.bf16.msra.mxu0 %v10408
    %10590 = vmatpush.bf16.msra.mxu0 %v10406
    %10591 = vmatpush.bf16.msra.mxu0 %v10404
    %10592 = vmatpush.bf16.msra.mxu0 %v10402
    %10593 = vmatpush.bf16.msra.mxu0 %v10400
    %10594 = vmatpush.bf16.msra.mxu0 %v10398
    %10595 = vmatpush.bf16.msra.mxu0 %v10396
    %10596 = vmatmul.bf16.gmra.mxu0 %v9958
    %v10597 = vpop.f32.mrf.mxu0
    %v10598 = vadd.f32 %v10104, %v10597
    %v10599 = vpop.f32.mrf.mxu0
    %v10600 = vadd.f32 %v10104, %v10599
    %10601 = vmatmul.bf16.gmra.mxu0 %v9960
    %v10602 = vpop.f32.mrf.mxu0
    %v10603 = vadd.f32 %v10104, %v10602
    %v10604 = vpop.f32.mrf.mxu0
    %v10605 = vadd.f32 %v10104, %v10604
    %10606 = vdwg.mxu0
    %10607 = vmatpush.bf16.msra.mxu0 %v10426
    %10608 = vmatpush.bf16.msra.mxu0 %v10424
    %10609 = vmatpush.bf16.msra.mxu0 %v10422
    %10610 = vmatpush.bf16.msra.mxu0 %v10420
    %10611 = vmatpush.bf16.msra.mxu0 %v10418
    %10612 = vmatpush.bf16.msra.mxu0 %v10416
    %10613 = vmatpush.bf16.msra.mxu0 %v10414
    %10614 = vmatpush.bf16.msra.mxu0 %v10412
    %10615 = vmatmul.bf16.gmra.mxu0 %v9959
    %v10616 = vpop.f32.mrf.mxu0
    %v10617 = vadd.f32 %v10598, %v10616
    %v10618 = vpop.f32.mrf.mxu0
    %v10619 = vadd.f32 %v10600, %v10618
    %10620 = vmatmul.bf16.gmra.mxu0 %v9961
    %v10621 = vpop.f32.mrf.mxu0
    %v10622 = vadd.f32 %v10603, %v10621
    %v10623 = vpop.f32.mrf.mxu0
    %v10624 = vadd.f32 %v10605, %v10623
    %10625 = vdwg.mxu0
    %10626 = vmatpush.bf16.msra.mxu0 %v10442
    %10627 = vmatpush.bf16.msra.mxu0 %v10440
    %10628 = vmatpush.bf16.msra.mxu0 %v10438
    %10629 = vmatpush.bf16.msra.mxu0 %v10436
    %10630 = vmatpush.bf16.msra.mxu0 %v10434
    %10631 = vmatpush.bf16.msra.mxu0 %v10432
    %10632 = vmatpush.bf16.msra.mxu0 %v10430
    %10633 = vmatpush.bf16.msra.mxu0 %v10428
    %10634 = vmatmul.bf16.gmra.mxu0 %v9978
    %v10635 = vpop.f32.mrf.mxu0
    %v10636 = vadd.f32 %v10617, %v10635
    %v10637 = vpop.f32.mrf.mxu0
    %v10638 = vadd.f32 %v10619, %v10637
    %10639 = vmatmul.bf16.gmra.mxu0 %v9980
    %v10640 = vpop.f32.mrf.mxu0
    %v10641 = vadd.f32 %v10622, %v10640
    %v10642 = vpop.f32.mrf.mxu0
    %v10643 = vadd.f32 %v10624, %v10642
    %10644 = vdwg.mxu0
    %10645 = vmatpush.bf16.msra.mxu0 %v10458
    %10646 = vmatpush.bf16.msra.mxu0 %v10456
    %10647 = vmatpush.bf16.msra.mxu0 %v10454
    %10648 = vmatpush.bf16.msra.mxu0 %v10452
    %10649 = vmatpush.bf16.msra.mxu0 %v10450
    %10650 = vmatpush.bf16.msra.mxu0 %v10448
    %10651 = vmatpush.bf16.msra.mxu0 %v10446
    %10652 = vmatpush.bf16.msra.mxu0 %v10444
    %10653 = vmatmul.bf16.gmra.mxu0 %v9979
    %v10654 = vpop.f32.mrf.mxu0
    %v10655 = vadd.f32 %v10636, %v10654
    %v10656 = vpop.f32.mrf.mxu0
    %v10657 = vadd.f32 %v10638, %v10656
    %10658 = vmatmul.bf16.gmra.mxu0 %v9981
    %v10659 = vpop.f32.mrf.mxu0
    %v10660 = vadd.f32 %v10641, %v10659
    %v10661 = vpop.f32.mrf.mxu0
    %v10662 = vadd.f32 %v10643, %v10661
    %10663 = vdwg.mxu0
    %10664 = vmatpush.bf16.msra.mxu0 %v10474
    %10665 = vmatpush.bf16.msra.mxu0 %v10472
    %10666 = vmatpush.bf16.msra.mxu0 %v10470
    %10667 = vmatpush.bf16.msra.mxu0 %v10468
    %10668 = vmatpush.bf16.msra.mxu0 %v10466
    %10669 = vmatpush.bf16.msra.mxu0 %v10464
    %10670 = vmatpush.bf16.msra.mxu0 %v10462
    %10671 = vmatpush.bf16.msra.mxu0 %v10460
    %10672 = vmatmul.bf16.gmra.mxu0 %v9998
    %v10673 = vpop.f32.mrf.mxu0
    %v10674 = vadd.f32 %v10655, %v10673
    %v10675 = vpop.f32.mrf.mxu0
    %v10676 = vadd.f32 %v10657, %v10675
    %10677 = vmatmul.bf16.gmra.mxu0 %v10000
    %v10678 = vpop.f32.mrf.mxu0
    %v10679 = vadd.f32 %v10660, %v10678
    %v10680 = vpop.f32.mrf.mxu0
    %v10681 = vadd.f32 %v10662, %v10680
    %10682 = vdwg.mxu0
    %10683 = vmatpush.bf16.msra.mxu0 %v10490
    %10684 = vmatpush.bf16.msra.mxu0 %v10488
    %10685 = vmatpush.bf16.msra.mxu0 %v10486
    %10686 = vmatpush.bf16.msra.mxu0 %v10484
    %10687 = vmatpush.bf16.msra.mxu0 %v10482
    %10688 = vmatpush.bf16.msra.mxu0 %v10480
    %10689 = vmatpush.bf16.msra.mxu0 %v10478
    %10690 = vmatpush.bf16.msra.mxu0 %v10476
    %10691 = vmatmul.bf16.gmra.mxu0 %v9999
    %v10692 = vpop.f32.mrf.mxu0
    %v10693 = vadd.f32 %v10674, %v10692
    %v10694 = vpop.f32.mrf.mxu0
    %v10695 = vadd.f32 %v10676, %v10694
    %10696 = vmatmul.bf16.gmra.mxu0 %v10001
    %v10697 = vpop.f32.mrf.mxu0
    %v10698 = vadd.f32 %v10679, %v10697
    %v10699 = vpop.f32.mrf.mxu0
    %v10700 = vadd.f32 %v10681, %v10699
    %10701 = vdwg.mxu0
    %10702 = vmatpush.bf16.msra.mxu0 %v10411
    %10703 = vmatpush.bf16.msra.mxu0 %v10409
    %10704 = vmatpush.bf16.msra.mxu0 %v10407
    %10705 = vmatpush.bf16.msra.mxu0 %v10405
    %10706 = vmatpush.bf16.msra.mxu0 %v10403
    %10707 = vmatpush.bf16.msra.mxu0 %v10401
    %10708 = vmatpush.bf16.msra.mxu0 %v10399
    %10709 = vmatpush.bf16.msra.mxu0 %v10397
    %10710 = vmatmul.bf16.gmra.mxu0 %v9958
    %v10711 = vpop.f32.mrf.mxu0
    %v10712 = vadd.f32 %v10105, %v10711
    %v10713 = vpop.f32.mrf.mxu0
    %v10714 = vadd.f32 %v10105, %v10713
    %10715 = vmatmul.bf16.gmra.mxu0 %v9960
    %v10716 = vpop.f32.mrf.mxu0
    %v10717 = vadd.f32 %v10105, %v10716
    %v10718 = vpop.f32.mrf.mxu0
    %v10719 = vadd.f32 %v10105, %v10718
    %10720 = vdwg.mxu0
    %10721 = vmatpush.bf16.msra.mxu0 %v10427
    %10722 = vmatpush.bf16.msra.mxu0 %v10425
    %10723 = vmatpush.bf16.msra.mxu0 %v10423
    %10724 = vmatpush.bf16.msra.mxu0 %v10421
    %10725 = vmatpush.bf16.msra.mxu0 %v10419
    %10726 = vmatpush.bf16.msra.mxu0 %v10417
    %10727 = vmatpush.bf16.msra.mxu0 %v10415
    %10728 = vmatpush.bf16.msra.mxu0 %v10413
    %10729 = vmatmul.bf16.gmra.mxu0 %v9959
    %v10730 = vpop.f32.mrf.mxu0
    %v10731 = vadd.f32 %v10712, %v10730
    %v10732 = vpop.f32.mrf.mxu0
    %v10733 = vadd.f32 %v10714, %v10732
    %10734 = vmatmul.bf16.gmra.mxu0 %v9961
    %v10735 = vpop.f32.mrf.mxu0
    %v10736 = vadd.f32 %v10717, %v10735
    %v10737 = vpop.f32.mrf.mxu0
    %v10738 = vadd.f32 %v10719, %v10737
    %10739 = vdwg.mxu0
    %10740 = vmatpush.bf16.msra.mxu0 %v10443
    %10741 = vmatpush.bf16.msra.mxu0 %v10441
    %10742 = vmatpush.bf16.msra.mxu0 %v10439
    %10743 = vmatpush.bf16.msra.mxu0 %v10437
    %10744 = vmatpush.bf16.msra.mxu0 %v10435
    %10745 = vmatpush.bf16.msra.mxu0 %v10433
    %10746 = vmatpush.bf16.msra.mxu0 %v10431
    %10747 = vmatpush.bf16.msra.mxu0 %v10429
    %10748 = vmatmul.bf16.gmra.mxu0 %v9978
    %v10749 = vpop.f32.mrf.mxu0
    %v10750 = vadd.f32 %v10731, %v10749
    %v10751 = vpop.f32.mrf.mxu0
    %v10752 = vadd.f32 %v10733, %v10751
    %10753 = vmatmul.bf16.gmra.mxu0 %v9980
    %v10754 = vpop.f32.mrf.mxu0
    %v10755 = vadd.f32 %v10736, %v10754
    %v10756 = vpop.f32.mrf.mxu0
    %v10757 = vadd.f32 %v10738, %v10756
    %10758 = vdwg.mxu0
    %10759 = vmatpush.bf16.msra.mxu0 %v10459
    %10760 = vmatpush.bf16.msra.mxu0 %v10457
    %10761 = vmatpush.bf16.msra.mxu0 %v10455
    %10762 = vmatpush.bf16.msra.mxu0 %v10453
    %10763 = vmatpush.bf16.msra.mxu0 %v10451
    %10764 = vmatpush.bf16.msra.mxu0 %v10449
    %10765 = vmatpush.bf16.msra.mxu0 %v10447
    %10766 = vmatpush.bf16.msra.mxu0 %v10445
    %10767 = vmatmul.bf16.gmra.mxu0 %v9979
    %v10768 = vpop.f32.mrf.mxu0
    %v10769 = vadd.f32 %v10750, %v10768
    %v10770 = vpop.f32.mrf.mxu0
    %v10771 = vadd.f32 %v10752, %v10770
    %10772 = vmatmul.bf16.gmra.mxu0 %v9981
    %v10773 = vpop.f32.mrf.mxu0
    %v10774 = vadd.f32 %v10755, %v10773
    %v10775 = vpop.f32.mrf.mxu0
    %v10776 = vadd.f32 %v10757, %v10775
    %10777 = vdwg.mxu0
    %10778 = vmatpush.bf16.msra.mxu0 %v10475
    %10779 = vmatpush.bf16.msra.mxu0 %v10473
    %10780 = vmatpush.bf16.msra.mxu0 %v10471
    %10781 = vmatpush.bf16.msra.mxu0 %v10469
    %10782 = vmatpush.bf16.msra.mxu0 %v10467
    %10783 = vmatpush.bf16.msra.mxu0 %v10465
    %10784 = vmatpush.bf16.msra.mxu0 %v10463
    %10785 = vmatpush.bf16.msra.mxu0 %v10461
    %10786 = vmatmul.bf16.gmra.mxu0 %v9998
    %v10787 = vpop.f32.mrf.mxu0
    %v10788 = vadd.f32 %v10769, %v10787
    %v10789 = vpop.f32.mrf.mxu0
    %v10790 = vadd.f32 %v10771, %v10789
    %10791 = vmatmul.bf16.gmra.mxu0 %v10000
    %v10792 = vpop.f32.mrf.mxu0
    %v10793 = vadd.f32 %v10774, %v10792
    %v10794 = vpop.f32.mrf.mxu0
    %v10795 = vadd.f32 %v10776, %v10794
    %10796 = vdwg.mxu0
    %10797 = vmatpush.bf16.msra.mxu0 %v10491
    %10798 = vmatpush.bf16.msra.mxu0 %v10489
    %10799 = vmatpush.bf16.msra.mxu0 %v10487
    %10800 = vmatpush.bf16.msra.mxu0 %v10485
    %10801 = vmatpush.bf16.msra.mxu0 %v10483
    %10802 = vmatpush.bf16.msra.mxu0 %v10481
    %10803 = vmatpush.bf16.msra.mxu0 %v10479
    %10804 = vmatpush.bf16.msra.mxu0 %v10477
    %10805 = vmatmul.bf16.gmra.mxu0 %v9999
    %v10806 = vpop.f32.mrf.mxu0
    %v10807 = vadd.f32 %v10788, %v10806
    %v10808 = vpop.f32.mrf.mxu0
    %v10809 = vadd.f32 %v10790, %v10808
    %10810 = vmatmul.bf16.gmra.mxu0 %v10001
    %v10811 = vpop.f32.mrf.mxu0
    %v10812 = vadd.f32 %v10793, %v10811
    %v10813 = vpop.f32.mrf.mxu0
    %v10814 = vadd.f32 %v10795, %v10813
    %10815 = vdwg.mxu0
    %v10816 = vadd.f32 %v10693, %v8673
    %v10817 = vadd.f32 %v10807, %v8711
    %v10818 = vadd.f32 %v10695, %v8675
    %v10819 = vadd.f32 %v10809, %v8713
    %v10820 = vadd.f32 %v10698, %v8678
    %v10821 = vadd.f32 %v10812, %v8716
    %v10822 = vadd.f32 %v10700, %v8680
    %v10823 = vadd.f32 %v10814, %v8718
    %v10824 = vmax.f32 %v10816, 0.0
    %v10825 = vmax.f32 %v10817, 0.0
    %v10826 = vmax.f32 %v10818, 0.0
    %v10827 = vmax.f32 %v10819, 0.0
    %v10828 = vmax.f32 %v10820, 0.0
    %v10829 = vmax.f32 %v10821, 0.0
    %v10830 = vmax.f32 %v10822, 0.0
    %v10831 = vmax.f32 %v10823, 0.0
    %v10832 = vld [vmem:[%s24] sm:$0xf]
    %v10833 = vpack.c.bf16 %v10826, %v10824
    %v10834 = vpack.c.bf16 %v10827, %v10825
    %v10835 = vpack.c.bf16 %v10830, %v10828
    %v10836 = vpack.c.bf16 %v10831, %v10829
    %vm10837 = vcmask 261120
    %v10839 = vsel %vm10837, %v10832, 0
    %10841 = vmatpush.bf16.msra.mxu0 0
    %10842 = vmatpush.bf16.msra.mxu0 0
    %10843 = vmatpush.bf16.msra.mxu0 0
    %10844 = vmatpush.bf16.msra.mxu0 0
    %10845 = vmatpush.bf16.msra.mxu0 0
    %10846 = vmatpush.bf16.msra.mxu0 0
    %10847 = vmatpush.bf16.msra.mxu0 %v10835
    %10848 = vmatpush.bf16.msra.mxu0 %v10833
    %10849 = vmatmul.bf16.gmra.mxu0 %v10839
    %v10850 = vpop.f32.mrf.mxu0
    %v10851 = vadd.f32 0.0, %v10850
    %v10852 = vpop.f32.mrf.mxu0
    %10853 = vdwg.mxu0
    %10854 = vmatpush.bf16.msra.mxu0 0
    %10855 = vmatpush.bf16.msra.mxu0 0
    %10856 = vmatpush.bf16.msra.mxu0 0
    %10857 = vmatpush.bf16.msra.mxu0 0
    %10858 = vmatpush.bf16.msra.mxu0 0
    %10859 = vmatpush.bf16.msra.mxu0 0
    %10860 = vmatpush.bf16.msra.mxu0 %v10836
    %10861 = vmatpush.bf16.msra.mxu0 %v10834
    %10862 = vmatmul.bf16.gmra.mxu0 %v10839
    %v10863 = vpop.f32.mrf.mxu0
    %v10864 = vadd.f32 0.0, %v10863
    %v10865 = vpop.f32.mrf.mxu0
    %10866 = vdwg.mxu0
    %v10867 = vpack.c.bf16 %v10851, %v10851
    %v10868 = vpack.c.bf16 %v10864, %v10864
    %v10869 = vld [vmem:[%s25] sm:$0xf]
    %v10870 = vld [vmem:[%s25 + $0x4] sm:$0xf]
    %v10871 = vld [vmem:[%s25 + $0x8] sm:$0xf]
    %v10872 = vld [vmem:[%s25 + $0xc] sm:$0xf]
    %v10873 = vld [vmem:[%s25 + $0x10] sm:$0xf]
    %v10874 = vld [vmem:[%s25 + $0x14] sm:$0xf]
    %v10875 = vld [vmem:[%s25 + $0x18] sm:$0xf]
    %v10876 = vld [vmem:[%s25 + $0x1c] sm:$0xf]
    %v10877 = vld [vmem:[%s25 + $0x20] sm:$0xf]
    %v10878 = vld [vmem:[%s25 + $0x24] sm:$0xf]
    %v10879 = vld [vmem:[%s25 + $0x28] sm:$0xf]
    %v10880 = vld [vmem:[%s25 + $0x2c] sm:$0xf]
    %v10881 = vld [vmem:[%s25 + $0x30] sm:$0xf]
    %v10882 = vld [vmem:[%s25 + $0x34] sm:$0xf]
    %v10883 = vld [vmem:[%s25 + $0x38] sm:$0xf]
    %v10884 = vld [vmem:[%s25 + $0x3c] sm:$0xf]
    %v10885 = vld [vmem:[%s25 + $0x40] sm:$0xf]
    %v10886 = vld [vmem:[%s25 + $0x44] sm:$0xf]
    %v10887 = vld [vmem:[%s25 + $0x48] sm:$0xf]
    %v10888 = vld [vmem:[%s25 + $0x4c] sm:$0xf]
    %v10889 = vld [vmem:[%s25 + $0x50] sm:$0xf]
    %v10890 = vld [vmem:[%s25 + $0x54] sm:$0xf]
    %v10891 = vld [vmem:[%s25 + $0x58] sm:$0xf]
    %v10892 = vld [vmem:[%s25 + $0x5c] sm:$0xf]
    %v10893 = vld [vmem:[%s25 + $0x60] sm:$0xf]
    %v10894 = vld [vmem:[%s25 + $0x64] sm:$0xf]
    %v10895 = vld [vmem:[%s25 + $0x68] sm:$0xf]
    %v10896 = vld [vmem:[%s25 + $0x6c] sm:$0xf]
    %v10897 = vld [vmem:[%s25 + $0x70] sm:$0xf]
    %v10898 = vld [vmem:[%s25 + $0x74] sm:$0xf]
    %v10899 = vld [vmem:[%s25 + $0x78] sm:$0xf]
    %v10900 = vld [vmem:[%s25 + $0x7c] sm:$0xf]
    %v10901 = vld [vmem:[%s26] sm:$0x1]
    %v10903 = vperm.slane %v10901, 0
    %v10937 = vunpack.c.l.b16 %v10869
    %v10938 = vunpack.c.l.b16 %v10870
    %v10939 = vunpack.c.l.b16 %v10871
    %v10940 = vunpack.c.l.b16 %v10872
    %v10941 = vunpack.c.l.b16 %v10873
    %v10942 = vunpack.c.l.b16 %v10874
    %v10943 = vunpack.c.l.b16 %v10875
    %v10944 = vunpack.c.l.b16 %v10876
    %v10945 = vunpack.c.l.b16 %v10877
    %v10946 = vunpack.c.l.b16 %v10878
    %v10947 = vunpack.c.l.b16 %v10879
    %v10948 = vunpack.c.l.b16 %v10880
    %v10949 = vunpack.c.l.b16 %v10881
    %v10950 = vunpack.c.l.b16 %v10882
    %v10951 = vunpack.c.l.b16 %v10883
    %v10952 = vunpack.c.l.b16 %v10884
    %v10953 = vunpack.c.l.b16 %v10885
    %v10954 = vunpack.c.l.b16 %v10886
    %v10955 = vunpack.c.l.b16 %v10887
    %v10956 = vunpack.c.l.b16 %v10888
    %v10957 = vunpack.c.l.b16 %v10889
    %v10958 = vunpack.c.l.b16 %v10890
    %v10959 = vunpack.c.l.b16 %v10891
    %v10960 = vunpack.c.l.b16 %v10892
    %v10961 = vunpack.c.l.b16 %v10893
    %v10962 = vunpack.c.l.b16 %v10894
    %v10963 = vunpack.c.l.b16 %v10895
    %v10964 = vunpack.c.l.b16 %v10896
    %v10965 = vunpack.c.l.b16 %v10897
    %v10966 = vunpack.c.l.b16 %v10898
    %v10967 = vunpack.c.l.b16 %v10899
    %v10968 = vunpack.c.l.b16 %v10900
    %v10969 = vpack.c.b16 %v10938, %v10937
    %v10970 = vpack.c.b16 %v10940, %v10939
    %v10971 = vpack.c.b16 %v10942, %v10941
    %v10972 = vpack.c.b16 %v10944, %v10943
    %v10973 = vpack.c.b16 %v10946, %v10945
    %v10974 = vpack.c.b16 %v10948, %v10947
    %v10975 = vpack.c.b16 %v10950, %v10949
    %v10976 = vpack.c.b16 %v10952, %v10951
    %v10977 = vpack.c.b16 %v10954, %v10953
    %v10978 = vpack.c.b16 %v10956, %v10955
    %v10979 = vpack.c.b16 %v10958, %v10957
    %v10980 = vpack.c.b16 %v10960, %v10959
    %v10981 = vpack.c.b16 %v10962, %v10961
    %v10982 = vpack.c.b16 %v10964, %v10963
    %v10983 = vpack.c.b16 %v10966, %v10965
    %v10984 = vpack.c.b16 %v10968, %v10967
    %11001 = vmatpush.bf16.msra.mxu0 %v10976
    %11002 = vmatpush.bf16.msra.mxu0 %v10975
    %11003 = vmatpush.bf16.msra.mxu0 %v10974
    %11004 = vmatpush.bf16.msra.mxu0 %v10973
    %11005 = vmatpush.bf16.msra.mxu0 %v10972
    %11006 = vmatpush.bf16.msra.mxu0 %v10971
    %11007 = vmatpush.bf16.msra.mxu0 %v10970
    %11008 = vmatpush.bf16.msra.mxu0 %v10969
    %11009 = vmatmul.bf16.gmra.mxu0 %v10867
    %v11010 = vpop.f32.mrf.mxu0
    %v11011 = vadd.f32 %v10903, %v11010
    %v11012 = vpop.f32.mrf.mxu0
    %11013 = vdwg.mxu0
    %11014 = vmatpush.bf16.msra.mxu0 %v10984
    %11015 = vmatpush.bf16.msra.mxu0 %v10983
    %11016 = vmatpush.bf16.msra.mxu0 %v10982
    %11017 = vmatpush.bf16.msra.mxu0 %v10981
    %11018 = vmatpush.bf16.msra.mxu0 %v10980
    %11019 = vmatpush.bf16.msra.mxu0 %v10979
    %11020 = vmatpush.bf16.msra.mxu0 %v10978
    %11021 = vmatpush.bf16.msra.mxu0 %v10977
    %11022 = vmatmul.bf16.gmra.mxu0 %v10868
    %v11023 = vpop.f32.mrf.mxu0
    %v11024 = vadd.f32 %v11011, %v11023
    %v11025 = vpop.f32.mrf.mxu0
    %11026 = vdwg.mxu0
    %11027 = vst [vmem:[#allocation26] sm:$0xff] %v11024
    %11028 = vmax.xlane.f32.xlu0 %v11024
    %v11029 = vpop.xlane.xlu0 %11028
    %v11030 = vsub.f32 %v11024, %v11029
    %v11031 = vmul.f32 %v11030, 1.442695
    %v11032 = vpow.pop %v11031
    %11033 = vadd.xlane.f32.xlu0 %v11032
    %v11034 = vpop.xlane.xlu0 %11033
    %v11035 = vlog2.pop %v11034
    %v11036 = vmul.f32 %v11035, 0.6931472
    %v11037 = vadd.f32 %v11036, %v11029
    %v11038 = vld [vmem:[%s1] sm:$0xff]
    %v11039 = vmul.f32 %v11024, %v11038
    %11040 = vadd.xlane.f32.xlu0 %v11039
    %v11041 = vpop.xlane.xlu0 %11040
    %v11042 = vsub.f32 %v11037, %v11041
    %v11043 = vrot.slane %v11042, 4
    %v11044 = vadd.f32 %v11042, %v11043
    %v11045 = vrot.slane %v11044, 2
    %v11046 = vadd.f32 %v11044, %v11045
    %v11047 = vrot.slane %v11046, 1
    %v11048 = vadd.f32 %v11046, %v11047
    %v11049 = vrcp.pop 8.0
    %v11050 = vmul.f32 8.0, %v11049
    %v11051 = vsub.f32 1.0, %v11050
    %v11052 = vmul.f32 %v11049, %v11051
    %v11053 = vadd.f32 %v11049, %v11052
    %vm11054 = vweird.f32 %v11049
    %v11055 = vsel %vm11054, %v11049, %v11053
    %v11056 = vmul.f32 %v11048, %v11055
    %vm11057 = vcmask 0
    %11058 = vst.msk [vmem:[#allocation27] sm:$0x1] %vm11057, %v11056
    // Predicated region
    $region170: #{_forward.1} parent=1 // pred_check
      _
    $region171: #{_forward.1} parent=1 // pred_check_branch
      %11060 = sbr.rel (0) target = $region173
    $region172: #{_forward.1} parent=1 // pred_region
      %11062 = vsyncadd [#allocation4], 0
      %s11064 = sshll.u32 [#allocation26], 4
      %s11065 = int_to_ptr.vmem [resolvable:$true] %s11064
      %s11066 = sshll.u32 %s27, 4
      %s11067 = int_to_ptr.hbm [resolvable:$true] %s11066
      %11069 = dma.vmem_to_hbm [thread:$0]  %s11065, 128, %s11067, [#allocation4]
    $region173: #{_forward.1} parent=1 // pred_fallthru
      _
    // Predicated region
    $region174: #{_forward.1} parent=1 // pred_check
      _
    $region175: #{_forward.1} parent=1 // pred_check_branch
      %11071 = sbr.rel (0) target = $region177
    $region176: #{_forward.1} parent=1 // pred_region
      %11073 = vsyncadd [#allocation28], 0
      %s11075 = sshll.u32 [#allocation27], 4
      %s11076 = int_to_ptr.vmem [resolvable:$true] %s11075
      %s11077 = sshll.u32 %s28, 4
      %s11078 = int_to_ptr.hbm [resolvable:$true] %s11077
      %11080 = dma.vmem_to_hbm [thread:$0]  %s11076, 16, %s11078, [#allocation28]
    $region177: #{_forward.1} parent=1 // pred_fallthru
      _
    // Predicated region
    $region178: #{_forward.1} parent=1 // pred_check
      _
    $region179: #{_forward.1} parent=1 // pred_check_branch
      %11082 = sbr.rel (0) target = $region181
    $region180: #{_forward.1} parent=1 // pred_region
      %11084 = dma.done [#allocation4], 128
    $region181: #{_forward.1} parent=1 // pred_fallthru
      _
    // Predicated region
    $region182: #{_forward.1} parent=1 // pred_check
      _
    $region183: #{_forward.1} parent=1 // pred_check_branch
      %11086 = sbr.rel (0) target = $region185
    $region184: #{_forward.1} parent=1 // pred_region
      %11088 = dma.done [#allocation28], 16
    $region185: #{_forward.1} parent=1 // pred_fallthru
      _
    %11089 = vsyncpa [#allocation3], 1
    %11090 = vsyncpa [#allocation6], 1
    %11091 = vsyncpa [#allocation9], 1
    %11092 = vsyncpa [#allocation12], 1
    %11093 = vsyncpa [#allocation15], 1
    %11094 = vsyncpa [#allocation18], 1
    %11095 = vsyncpa [#allocation21], 1
    %11096 = vsyncpa [#allocation24], 1
    %11097 = vsyncpa [#allocation4], 1
    %11098 = vsyncpa [#allocation28], 1

</llo_original>
